<compile_context>
chip_gen: v7x
topology: tpu7x:2x2x1
jax: 0.10.0
libtpu: 0.0.40
codegen_flags: <defaults>
</compile_context>

<pallas_src>
import functools
import math

import jax
import jax.numpy as jnp
from jax.experimental import pallas as pl
from jax.experimental.pallas import tpu as pltpu


_LN_EPS = 1e-5

# Per-layer kernel-operand order (must match _luna_block_kernel's signature).
_LAYER_KEYS = (
    "w_in_qc", "b_in_qc",      # fused in_proj | in_proj_c   (E, 2D), (1, 2D)
    "w_in_p", "b_in_p",        # in_proj_p                   (E, D),  (1, D)
    "w_pq", "b_pq",            # pq_proj (p_scaling folded)  (D, D),  (1, D)
    "w_pkv", "b_pkv",          # fused pk_proj | pv_proj     (D, 2D), (1, 2D)
    "w_q", "b_q",              # q_proj  (scaling folded)    (D, D),  (1, D)
    "w_kv", "b_kv",            # fused k_proj | v_proj       (D, 2D), (1, 2D)
    "w_out", "b_out",          # out_proj                    (D, E),  (1, E)
    "w_outp", "b_outp",        # out_proj_p                  (D, E),  (1, E)
    "ln1_g", "ln1_b",          # lnorm_post                  (1, E) x2
    "ln1p_g", "ln1p_b",        # lnorm_post_p                (1, E) x2
    "w_ff1", "b_ff1",          # MLP dense1                  (E, F),  (1, F)
    "w_ff2", "b_ff2",          # MLP dense2                  (F, E),  (1, E)
    "ln2_g", "ln2_b",          # lnorm_ff_post               (1, E) x2
)


# ----------------------------------------------------------------------------
# In-kernel helpers
# ----------------------------------------------------------------------------
def _mm(a, w):
    """(M, K) @ (K, N) -> f32 on the MXU; bf16 operands, no transposes."""
    return jax.lax.dot_general(
        a.astype(jnp.bfloat16), w.astype(jnp.bfloat16),
        dimension_numbers=(((1,), (0,)), ((), ())),
        preferred_element_type=jnp.float32)


def _mm_t(a, b):
    """(M, K) x (N, K) -> (M, N): contract trailing dims of both operands
    (avoids materializing b.T through the XLU)."""
    return jax.lax.dot_general(
        a.astype(jnp.bfloat16), b.astype(jnp.bfloat16),
        dimension_numbers=(((1,), (1,)), ((), ())),
        preferred_element_type=jnp.float32)


def _layernorm(x, gamma, beta):
    mu = jnp.mean(x, axis=-1, keepdims=True)
    xc = x - mu
    var = jnp.mean(xc * xc, axis=-1, keepdims=True)
    return xc * jax.lax.rsqrt(var + _LN_EPS) * gamma + beta


def _attn_heads(q, k, v, num_heads):
    """Per-head softmax(q k^T) v.  q: (Sq, D), k/v: (Sk, D), all f32.
    Returns the list of per-head outputs [(Sq, dh)]; the head merge is deferred
    to _proj_heads so no lane-axis concatenation is ever materialized."""
    dh = q.shape[-1] // num_heads
    outs = []
    for h in range(num_heads):
        sl = slice(h * dh, (h + 1) * dh)
        scores = _mm_t(q[:, sl], k[:, sl])                        # (Sq, Sk) f32
        m = jnp.max(scores, axis=-1, keepdims=True)
        e = jnp.exp(scores - m)
        w = e * pl.reciprocal(jnp.sum(e, axis=-1, keepdims=True), approx=True)
        outs.append(_mm(w, v[:, sl]))                             # (Sq, dh) f32
    return outs


def _proj_heads(head_outs, w_ref, b_ref):
    """concat(head_outs, axis=-1) @ W + b, computed as the block-row sum
    sum_h head_h @ W[h*dh:(h+1)*dh, :]  (block-diagonal style, no concat)."""
    dh = head_outs[0].shape[-1]
    acc = None
    for h, oh in enumerate(head_outs):
        part = _mm(oh, w_ref[pl.ds(h * dh, dh), :])
        acc = part if acc is None else acc + part
    return acc + b_ref[...]


# ----------------------------------------------------------------------------
# Fused LunaTransformerBlock kernel (one grid step == one batch element)
# ----------------------------------------------------------------------------
def _luna_block_kernel(
    x_ref, p_ref,
    w_in_qc, b_in_qc, w_in_p, b_in_p, w_pq, b_pq, w_pkv, b_pkv,
    w_q, b_q, w_kv, b_kv, w_out, b_out, w_outp, b_outp,
    ln1_g, ln1_b, ln1p_g, ln1p_b, w_ff1, b_ff1, w_ff2, b_ff2, ln2_g, ln2_b,
    x_out_ref, p_out_ref,
    *, num_heads, num_pheads,
):
    d = w_q.shape[0]                      # qkv_dim
    x = x_ref[0]                          # (S, E) f32 -- query == context
    p = p_ref[0]                          # (P, E) f32 -- packed pquery

    # fused in_proj | in_proj_c on the shared input (one (E, 2D) GEMM)
    qc = _mm(x, w_in_qc[...]) + b_in_qc[...]               # (S, 2D)
    q_x, c_x = qc[:, :d], qc[:, d:]
    pq_x = _mm(p, w_in_p[...]) + b_in_p[...]               # (P, D)

    # ---- p-context ("pack") attention -----------------------------------
    # TODO(synk): dropout_pcontext skipped (eval-mode identity).
    pkv = _mm(c_x, w_pkv[...]) + b_pkv[...]                # (S, 2D) fused pk|pv
    pk, pv = pkv[:, :d], pkv[:, d:]
    pq = _mm(pq_x, w_pq[...]) + b_pq[...]                  # (P, D), p_scaling folded
    pc_heads = _attn_heads(pq, pk, pv, num_pheads)         # num_pheads x (P, dp)

    # ---- main ("unpack") attention over p_context ------------------------
    # TODO(synk): dropout_attn skipped (eval-mode identity).
    q = _mm(q_x, w_q[...]) + b_q[...]                      # (S, D), scaling folded
    kv = _proj_heads(pc_heads, w_kv, b_kv)                 # (P, 2D) fused k|v
    k, v = kv[:, :d], kv[:, d:]
    attn_heads = _attn_heads(q, k, v, num_heads)           # num_heads x (S, dh)

    attn = _proj_heads(attn_heads, w_out, b_out)           # (S, E)  out_proj
    p_out = _proj_heads(pc_heads, w_outp, b_outp)          # (P, E)  out_proj_p

    # ---- LunaTransformerBlock epilogue (pre_norm=False, eval mode) -------
    x1 = _layernorm(x + attn, ln1_g[...], ln1_b[...])
    p1 = _layernorm(p + p_out, ln1p_g[...], ln1p_b[...])

    hdn = _mm(x1, w_ff1[...]) + b_ff1[...]
    # TODO(synk): torch F.gelu uses the exact erf form; tanh approximation here.
    hdn = jax.nn.gelu(hdn, approximate=True)
    hdn = _mm(hdn, w_ff2[...]) + b_ff2[...]
    x2 = _layernorm(x1 + hdn, ln2_g[...], ln2_b[...])

    x_out_ref[0] = x2
    p_out_ref[0] = p1


def _luna_block_call(x, packed, layer_params, num_heads, num_pheads):
    B, S, E = x.shape
    P = packed.shape[1]
    weights = [layer_params[k] for k in _LAYER_KEYS]
    in_specs = [
        pl.BlockSpec((1, S, E), lambda b: (b, 0, 0)),
        pl.BlockSpec((1, P, E), lambda b: (b, 0, 0)),
    ] + [pl.BlockSpec(w.shape, lambda b: (0, 0)) for w in weights]
    out_specs = (
        pl.BlockSpec((1, S, E), lambda b: (b, 0, 0)),
        pl.BlockSpec((1, P, E), lambda b: (b, 0, 0)),
    )
    kernel = functools.partial(
        _luna_block_kernel, num_heads=num_heads, num_pheads=num_pheads)
    return pl.pallas_call(
        kernel,
        out_shape=(
            jax.ShapeDtypeStruct((B, S, E), jnp.float32),
            jax.ShapeDtypeStruct((B, P, E), jnp.float32),
        ),
        grid=(B,),
        in_specs=in_specs,
        out_specs=out_specs,
        compiler_params=pltpu.CompilerParams(
            dimension_semantics=("parallel",),
            vmem_limit_bytes=32 * 1024 * 1024,
        ),
    )(x, packed, *weights)


# ----------------------------------------------------------------------------
# Final head: LayerNorm -> mean over sequence (feat_select='mean') -> fc
# ----------------------------------------------------------------------------
def _head_kernel(x_ref, g_ref, b_ref, w_fc_ref, b_fc_ref, o_ref, *, batch):
    for bi in range(batch):
        xn = _layernorm(x_ref[bi], g_ref[...], b_ref[...])        # (S, E)
        feat = jnp.mean(xn, axis=0, keepdims=True)                # (1, E)
        o_ref[pl.ds(bi, 1), :] = _mm(feat, w_fc_ref[...]) + b_fc_ref[...]


def _luna_head_call(x, ln_g, ln_b, fc_w, fc_b):
    B = x.shape[0]
    out_dim = fc_w.shape[1]
    kernel = functools.partial(_head_kernel, batch=B)
    return pl.pallas_call(
        kernel,
        out_shape=jax.ShapeDtypeStruct((B, out_dim), jnp.float32),
    )(x, ln_g, ln_b, fc_w, fc_b)


# ----------------------------------------------------------------------------
# Parameter construction (deterministic, synthetic) in kernel-ready layout
# ----------------------------------------------------------------------------
def _xavier(key, dout, din, gain=1.0):
    bound = gain * math.sqrt(6.0 / (din + dout))
    return jax.random.uniform(key, (dout, din), jnp.float32, -bound, bound)


def _uniform_bias(key, din, dout):
    bound = 1.0 / math.sqrt(din)
    return jax.random.uniform(key, (dout,), jnp.float32, -bound, bound)


def _init_layer_params(key, emb_dim, qkv_dim, ff_dim, num_heads, num_pheads):
    E, D, F = emb_dim, qkv_dim, ff_dim
    dh, dp = D // num_heads, D // num_pheads
    scaling, p_scaling = dh ** -0.5, dp ** -0.5
    gain = 1.0 / math.sqrt(2.0)
    keys = iter(jax.random.split(key, 26))

    def lin(din, dout, g=1.0, zero_bias=False):
        w = _xavier(next(keys), dout, din, g)          # torch (out, in) layout
        if zero_bias:
            _ = next(keys)
            b = jnp.zeros((dout,), jnp.float32)
        else:
            b = _uniform_bias(next(keys), din, dout)
        return w, b

    in_w, in_b = lin(E, D)
    in_p_w, in_p_b = lin(E, D)
    in_c_w, in_c_b = lin(E, D)
    q_w, q_b = lin(D, D, gain)
    pq_w, pq_b = lin(D, D, gain)
    k_w, k_b = lin(D, D, gain)
    pk_w, pk_b = lin(D, D, gain)
    v_w, v_b = lin(D, D, gain)
    pv_w, pv_b = lin(D, D, gain)
    out_w, out_b = lin(D, E, zero_bias=True)           # out_proj bias = 0
    out_p_w, out_p_b = lin(D, E)
    ff1_w, ff1_b = lin(E, F)
    ff2_w, ff2_b = lin(F, E)

    T = jnp.transpose
    bf = lambda a: a.astype(jnp.bfloat16)
    row = lambda b: b.reshape(1, -1)
    ones = lambda n: jnp.ones((1, n), jnp.float32)
    zeros = lambda n: jnp.zeros((1, n), jnp.float32)

    return {
        # pre-transposed (Din, Dout) bf16 weights; fused where inputs are shared;
        # q / pq scaling folded into weights + biases; f32 row biases.
        "w_in_qc": bf(jnp.concatenate([T(in_w), T(in_c_w)], axis=1)),
        "b_in_qc": row(jnp.concatenate([in_b, in_c_b])),
        "w_in_p": bf(T(in_p_w)), "b_in_p": row(in_p_b),
        "w_pq": bf(T(pq_w) * p_scaling), "b_pq": row(pq_b * p_scaling),
        "w_pkv": bf(jnp.concatenate([T(pk_w), T(pv_w)], axis=1)),
        "b_pkv": row(jnp.concatenate([pk_b, pv_b])),
        "w_q": bf(T(q_w) * scaling), "b_q": row(q_b * scaling),
        "w_kv": bf(jnp.concatenate([T(k_w), T(v_w)], axis=1)),
        "b_kv": row(jnp.concatenate([k_b, v_b])),
        "w_out": bf(T(out_w)), "b_out": row(out_b),
        "w_outp": bf(T(out_p_w)), "b_outp": row(out_p_b),
        "ln1_g": ones(E), "ln1_b": zeros(E),
        "ln1p_g": ones(E), "ln1p_b": zeros(E),
        "w_ff1": bf(T(ff1_w)), "b_ff1": row(ff1_b),
        "w_ff2": bf(T(ff2_w)), "b_ff2": row(ff2_b),
        "ln2_g": ones(E), "ln2_b": zeros(E),
    }


def init_luna_model_params(key, *, num_layers, emb_dim, qkv_dim, ff_dim, out_dim,
                           context_length, num_heads, num_pheads):
    assert qkv_dim % num_heads == 0 and qkv_dim % num_pheads == 0
    keys = jax.random.split(key, num_layers + 2)
    layers = tuple(
        _init_layer_params(keys[i], emb_dim, qkv_dim, ff_dim, num_heads, num_pheads)
        for i in range(num_layers))
    k_pe, k_fc = keys[num_layers], keys[num_layers + 1]
    proj_embeds = jax.random.normal(
        k_pe, (context_length, emb_dim), jnp.float32) * (emb_dim ** -0.5)
    k_fcw, k_fcb = jax.random.split(k_fc)
    fc_w = _xavier(k_fcw, out_dim, emb_dim)
    fc_b = _uniform_bias(k_fcb, emb_dim, out_dim)
    return {
        "layers": layers,
        "proj_embeds": proj_embeds,
        "ln_g": jnp.ones((1, emb_dim), jnp.float32),
        "ln_b": jnp.zeros((1, emb_dim), jnp.float32),
        "fc_w": jnp.transpose(fc_w).astype(jnp.bfloat16),    # (E, out_dim)
        "fc_b": fc_b.reshape(1, -1),
    }


# ----------------------------------------------------------------------------
# Full model forward (batch_first=True, tie_kv=False, pre_norm=False, eval)
# ----------------------------------------------------------------------------
@functools.partial(jax.jit, static_argnames=("num_heads", "num_pheads"))
def luna_transformer_forward(params, feat, *, num_heads, num_pheads):
    B, S, E = feat.shape
    # projected_embeds * sqrt(emb_dim), expanded over the batch (batch_first).
    packed = jnp.broadcast_to(
        params["proj_embeds"][None] * math.sqrt(E),
        (B,) + params["proj_embeds"].shape)
    x = feat
    for layer in params["layers"]:
        x, packed = _luna_block_call(x, packed, layer, num_heads, num_pheads)
    return _luna_head_call(x, params["ln_g"], params["ln_b"],
                           params["fc_w"], params["fc_b"])


# ----------------------------------------------------------------------------
# Example run
# ----------------------------------------------------------------------------
if __name__ == "__main__":
    B, S, CTX = 2, 16, 8          # batch, sequence length, luna context length
    EMB, QKV, FF, OUT = 32, 64, 64, 8
    LAYERS, HEADS, PHEADS = 2, 4, 4   # head_dim = phead_dim = 16

    root = jax.random.PRNGKey(0)
    kparams, kfeat = jax.random.split(root)
    params = init_luna_model_params(
        kparams, num_layers=LAYERS, emb_dim=EMB, qkv_dim=QKV, ff_dim=FF,
        out_dim=OUT, context_length=CTX, num_heads=HEADS, num_pheads=PHEADS)
    feat = jax.random.normal(kfeat, (B, S, EMB), jnp.float32)

    out = luna_transformer_forward(params, feat, num_heads=HEADS, num_pheads=PHEADS)
    out = jax.block_until_ready(out)

    assert out.shape == (B, OUT), out.shape
    assert bool(jnp.all(jnp.isfinite(out)))
    print("KERNEL_OK")
</pallas_src>

<mosaic_0001>
module attributes {stable_mosaic.version = 11 : i64} {
  func.func @_luna_block_kernel(%arg0: i32, %arg1: memref<1x16x32xf32, #tpu.memory_space<vmem>>, %arg2: memref<1x8x32xf32, #tpu.memory_space<vmem>>, %arg3: memref<32x128xbf16, #tpu.memory_space<vmem>>, %arg4: memref<1x128xf32, #tpu.memory_space<vmem>>, %arg5: memref<32x64xbf16, #tpu.memory_space<vmem>>, %arg6: memref<1x64xf32, #tpu.memory_space<vmem>>, %arg7: memref<64x64xbf16, #tpu.memory_space<vmem>>, %arg8: memref<1x64xf32, #tpu.memory_space<vmem>>, %arg9: memref<64x128xbf16, #tpu.memory_space<vmem>>, %arg10: memref<1x128xf32, #tpu.memory_space<vmem>>, %arg11: memref<64x64xbf16, #tpu.memory_space<vmem>>, %arg12: memref<1x64xf32, #tpu.memory_space<vmem>>, %arg13: memref<64x128xbf16, #tpu.memory_space<vmem>>, %arg14: memref<1x128xf32, #tpu.memory_space<vmem>>, %arg15: memref<64x32xbf16, #tpu.memory_space<vmem>>, %arg16: memref<1x32xf32, #tpu.memory_space<vmem>>, %arg17: memref<64x32xbf16, #tpu.memory_space<vmem>>, %arg18: memref<1x32xf32, #tpu.memory_space<vmem>>, %arg19: memref<1x32xf32, #tpu.memory_space<vmem>>, %arg20: memref<1x32xf32, #tpu.memory_space<vmem>>, %arg21: memref<1x32xf32, #tpu.memory_space<vmem>>, %arg22: memref<1x32xf32, #tpu.memory_space<vmem>>, %arg23: memref<32x64xbf16, #tpu.memory_space<vmem>>, %arg24: memref<1x64xf32, #tpu.memory_space<vmem>>, %arg25: memref<64x32xbf16, #tpu.memory_space<vmem>>, %arg26: memref<1x32xf32, #tpu.memory_space<vmem>>, %arg27: memref<1x32xf32, #tpu.memory_space<vmem>>, %arg28: memref<1x32xf32, #tpu.memory_space<vmem>>, %arg29: memref<1x16x32xf32, #tpu.memory_space<vmem>>, %arg30: memref<1x8x32xf32, #tpu.memory_space<vmem>>) attributes {dimension_semantics = [#tpu.dimension_semantics<parallel>], iteration_bounds = array<i64: 2>, scalar_prefetch = 0 : i64, scratch_operands = 0 : i64, tpu.core_type = #tpu.core_type<tc>, window_params = [{transform_indices = @transform_0, window_bounds = array<i64: 1, 16, 32>}, {transform_indices = @transform_1, window_bounds = array<i64: 1, 8, 32>}, {pipeline_mode = #tpu.pipeline_mode<synchronous>, transform_indices = @transform_2, window_bounds = array<i64: 32, 128>}, {pipeline_mode = #tpu.pipeline_mode<synchronous>, transform_indices = @transform_3, window_bounds = array<i64: 1, 128>}, {pipeline_mode = #tpu.pipeline_mode<synchronous>, transform_indices = @transform_4, window_bounds = array<i64: 32, 64>}, {pipeline_mode = #tpu.pipeline_mode<synchronous>, transform_indices = @transform_5, window_bounds = array<i64: 1, 64>}, {pipeline_mode = #tpu.pipeline_mode<synchronous>, transform_indices = @transform_6, window_bounds = array<i64: 64, 64>}, {pipeline_mode = #tpu.pipeline_mode<synchronous>, transform_indices = @transform_7, window_bounds = array<i64: 1, 64>}, {pipeline_mode = #tpu.pipeline_mode<synchronous>, transform_indices = @transform_8, window_bounds = array<i64: 64, 128>}, {pipeline_mode = #tpu.pipeline_mode<synchronous>, transform_indices = @transform_9, window_bounds = array<i64: 1, 128>}, {pipeline_mode = #tpu.pipeline_mode<synchronous>, transform_indices = @transform_10, window_bounds = array<i64: 64, 64>}, {pipeline_mode = #tpu.pipeline_mode<synchronous>, transform_indices = @transform_11, window_bounds = array<i64: 1, 64>}, {pipeline_mode = #tpu.pipeline_mode<synchronous>, transform_indices = @transform_12, window_bounds = array<i64: 64, 128>}, {pipeline_mode = #tpu.pipeline_mode<synchronous>, transform_indices = @transform_13, window_bounds = array<i64: 1, 128>}, {pipeline_mode = #tpu.pipeline_mode<synchronous>, transform_indices = @transform_14, window_bounds = array<i64: 64, 32>}, {pipeline_mode = #tpu.pipeline_mode<synchronous>, transform_indices = @transform_15, window_bounds = array<i64: 1, 32>}, {pipeline_mode = #tpu.pipeline_mode<synchronous>, transform_indices = @transform_16, window_bounds = array<i64: 64, 32>}, {pipeline_mode = #tpu.pipeline_mode<synchronous>, transform_indices = @transform_17, window_bounds = array<i64: 1, 32>}, {pipeline_mode = #tpu.pipeline_mode<synchronous>, transform_indices = @transform_18, window_bounds = array<i64: 1, 32>}, {pipeline_mode = #tpu.pipeline_mode<synchronous>, transform_indices = @transform_19, window_bounds = array<i64: 1, 32>}, {pipeline_mode = #tpu.pipeline_mode<synchronous>, transform_indices = @transform_20, window_bounds = array<i64: 1, 32>}, {pipeline_mode = #tpu.pipeline_mode<synchronous>, transform_indices = @transform_21, window_bounds = array<i64: 1, 32>}, {pipeline_mode = #tpu.pipeline_mode<synchronous>, transform_indices = @transform_22, window_bounds = array<i64: 32, 64>}, {pipeline_mode = #tpu.pipeline_mode<synchronous>, transform_indices = @transform_23, window_bounds = array<i64: 1, 64>}, {pipeline_mode = #tpu.pipeline_mode<synchronous>, transform_indices = @transform_24, window_bounds = array<i64: 64, 32>}, {pipeline_mode = #tpu.pipeline_mode<synchronous>, transform_indices = @transform_25, window_bounds = array<i64: 1, 32>}, {pipeline_mode = #tpu.pipeline_mode<synchronous>, transform_indices = @transform_26, window_bounds = array<i64: 1, 32>}, {pipeline_mode = #tpu.pipeline_mode<synchronous>, transform_indices = @transform_27, window_bounds = array<i64: 1, 32>}, {transform_indices = @transform_28, window_bounds = array<i64: 1, 16, 32>}, {transform_indices = @transform_29, window_bounds = array<i64: 1, 8, 32>}]} {
    %c0 = arith.constant 0 : index
    %c0_0 = arith.constant 0 : index
    %c0_1 = arith.constant 0 : index
    %0 = vector.load %arg1[%c0, %c0_0, %c0_1] : memref<1x16x32xf32, #tpu.memory_space<vmem>>, vector<1x16x32xf32>
    %1 = vector.shape_cast %0 : vector<1x16x32xf32> to vector<16x32xf32>
    %c0_2 = arith.constant 0 : index
    %c0_3 = arith.constant 0 : index
    %c0_4 = arith.constant 0 : index
    %2 = vector.load %arg2[%c0_2, %c0_3, %c0_4] : memref<1x8x32xf32, #tpu.memory_space<vmem>>, vector<1x8x32xf32>
    %3 = vector.shape_cast %2 : vector<1x8x32xf32> to vector<8x32xf32>
    %c0_5 = arith.constant 0 : index
    %c0_6 = arith.constant 0 : index
    %4 = vector.load %arg3[%c0_5, %c0_6] : memref<32x128xbf16, #tpu.memory_space<vmem>>, vector<32x128xbf16>
    %5 = arith.truncf %1 : vector<16x32xf32> to vector<16x32xbf16>
    %cst = arith.constant dense<0.000000e+00> : vector<16x128xf32>
    %6 = tpu.matmul %5, %4, %cst {dimension_numbers = #tpu.dot_dimension_numbers<[1], [0], [0], [1], [0, 0, 1, 1], [], []>} : vector<16x32xbf16>, vector<32x128xbf16>, vector<16x128xf32> -> vector<16x128xf32>
    %c0_7 = arith.constant 0 : index
    %c0_8 = arith.constant 0 : index
    %7 = vector.load %arg4[%c0_7, %c0_8] : memref<1x128xf32, #tpu.memory_space<vmem>>, vector<1x128xf32>
    %8 = vector.broadcast %7 : vector<1x128xf32> to vector<16x128xf32>
    %9 = arith.addf %6, %8 : vector<16x128xf32>
    %10 = vector.extract_strided_slice %9 {offsets = [0, 0], sizes = [16, 64], strides = [1, 1]} : vector<16x128xf32> to vector<16x64xf32>
    %11 = vector.extract_strided_slice %9 {offsets = [0, 64], sizes = [16, 64], strides = [1, 1]} : vector<16x128xf32> to vector<16x64xf32>
    %c0_9 = arith.constant 0 : index
    %c0_10 = arith.constant 0 : index
    %12 = vector.load %arg5[%c0_9, %c0_10] : memref<32x64xbf16, #tpu.memory_space<vmem>>, vector<32x64xbf16>
    %13 = arith.truncf %3 : vector<8x32xf32> to vector<8x32xbf16>
    %cst_11 = arith.constant dense<0.000000e+00> : vector<8x64xf32>
    %14 = tpu.matmul %13, %12, %cst_11 {dimension_numbers = #tpu.dot_dimension_numbers<[1], [0], [0], [1], [0, 0, 1, 1], [], []>} : vector<8x32xbf16>, vector<32x64xbf16>, vector<8x64xf32> -> vector<8x64xf32>
    %c0_12 = arith.constant 0 : index
    %c0_13 = arith.constant 0 : index
    %15 = vector.load %arg6[%c0_12, %c0_13] : memref<1x64xf32, #tpu.memory_space<vmem>>, vector<1x64xf32>
    %16 = vector.broadcast %15 : vector<1x64xf32> to vector<8x64xf32>
    %17 = arith.addf %14, %16 : vector<8x64xf32>
    %c0_14 = arith.constant 0 : index
    %c0_15 = arith.constant 0 : index
    %18 = vector.load %arg9[%c0_14, %c0_15] : memref<64x128xbf16, #tpu.memory_space<vmem>>, vector<64x128xbf16>
    %19 = arith.truncf %11 : vector<16x64xf32> to vector<16x64xbf16>
    %cst_16 = arith.constant dense<0.000000e+00> : vector<16x128xf32>
    %20 = tpu.matmul %19, %18, %cst_16 {dimension_numbers = #tpu.dot_dimension_numbers<[1], [0], [0], [1], [0, 0, 1, 1], [], []>} : vector<16x64xbf16>, vector<64x128xbf16>, vector<16x128xf32> -> vector<16x128xf32>
    %c0_17 = arith.constant 0 : index
    %c0_18 = arith.constant 0 : index
    %21 = vector.load %arg10[%c0_17, %c0_18] : memref<1x128xf32, #tpu.memory_space<vmem>>, vector<1x128xf32>
    %22 = vector.broadcast %21 : vector<1x128xf32> to vector<16x128xf32>
    %23 = arith.addf %20, %22 : vector<16x128xf32>
    %24 = vector.extract_strided_slice %23 {offsets = [0, 0], sizes = [16, 64], strides = [1, 1]} : vector<16x128xf32> to vector<16x64xf32>
    %25 = vector.extract_strided_slice %23 {offsets = [0, 64], sizes = [16, 64], strides = [1, 1]} : vector<16x128xf32> to vector<16x64xf32>
    %c0_19 = arith.constant 0 : index
    %c0_20 = arith.constant 0 : index
    %26 = vector.load %arg7[%c0_19, %c0_20] : memref<64x64xbf16, #tpu.memory_space<vmem>>, vector<64x64xbf16>
    %27 = arith.truncf %17 : vector<8x64xf32> to vector<8x64xbf16>
    %cst_21 = arith.constant dense<0.000000e+00> : vector<8x64xf32>
    %28 = tpu.matmul %27, %26, %cst_21 {dimension_numbers = #tpu.dot_dimension_numbers<[1], [0], [0], [1], [0, 0, 1, 1], [], []>} : vector<8x64xbf16>, vector<64x64xbf16>, vector<8x64xf32> -> vector<8x64xf32>
    %c0_22 = arith.constant 0 : index
    %c0_23 = arith.constant 0 : index
    %29 = vector.load %arg8[%c0_22, %c0_23] : memref<1x64xf32, #tpu.memory_space<vmem>>, vector<1x64xf32>
    %30 = vector.broadcast %29 : vector<1x64xf32> to vector<8x64xf32>
    %31 = arith.addf %28, %30 : vector<8x64xf32>
    %32 = vector.extract_strided_slice %31 {offsets = [0, 0], sizes = [8, 16], strides = [1, 1]} : vector<8x64xf32> to vector<8x16xf32>
    %33 = vector.extract_strided_slice %24 {offsets = [0, 0], sizes = [16, 16], strides = [1, 1]} : vector<16x64xf32> to vector<16x16xf32>
    %34 = arith.truncf %32 : vector<8x16xf32> to vector<8x16xbf16>
    %35 = arith.truncf %33 : vector<16x16xf32> to vector<16x16xbf16>
    %cst_24 = arith.constant dense<0.000000e+00> : vector<8x16xf32>
    %36 = tpu.matmul %34, %35, %cst_24 {dimension_numbers = #tpu.dot_dimension_numbers<[1], [1], [0], [0], [0, 0, 1, 0], [], []>} : vector<8x16xbf16>, vector<16x16xbf16>, vector<8x16xf32> -> vector<8x16xf32>
    %cst_25 = arith.constant dense<0xFF800000> : vector<8xf32>
    %37 = vector.multi_reduction <maximumf>, %36, %cst_25 [1] : vector<8x16xf32> to vector<8xf32>
    %38 = vector.shape_cast %37 : vector<8xf32> to vector<8x1xf32>
    %39 = vector.broadcast %38 : vector<8x1xf32> to vector<8x16xf32>
    %40 = arith.subf %36, %39 : vector<8x16xf32>
    %41 = math.exp %40 : vector<8x16xf32>
    %cst_26 = arith.constant dense<0.000000e+00> : vector<8xf32>
    %42 = vector.multi_reduction <add>, %41, %cst_26 [1] : vector<8x16xf32> to vector<8xf32>
    %43 = vector.shape_cast %42 : vector<8xf32> to vector<8x1xf32>
    %44 = tpu.reciprocal %43 {approx = true} : vector<8x1xf32> -> vector<8x1xf32>
    %45 = vector.broadcast %44 : vector<8x1xf32> to vector<8x16xf32>
    %46 = arith.mulf %41, %45 : vector<8x16xf32>
    %47 = vector.extract_strided_slice %25 {offsets = [0, 0], sizes = [16, 16], strides = [1, 1]} : vector<16x64xf32> to vector<16x16xf32>
    %48 = arith.truncf %46 : vector<8x16xf32> to vector<8x16xbf16>
    %49 = arith.truncf %47 : vector<16x16xf32> to vector<16x16xbf16>
    %cst_27 = arith.constant dense<0.000000e+00> : vector<8x16xf32>
    %50 = tpu.matmul %48, %49, %cst_27 {dimension_numbers = #tpu.dot_dimension_numbers<[1], [0], [0], [1], [0, 0, 1, 1], [], []>} : vector<8x16xbf16>, vector<16x16xbf16>, vector<8x16xf32> -> vector<8x16xf32>
    %51 = vector.extract_strided_slice %31 {offsets = [0, 16], sizes = [8, 16], strides = [1, 1]} : vector<8x64xf32> to vector<8x16xf32>
    %52 = vector.extract_strided_slice %24 {offsets = [0, 16], sizes = [16, 16], strides = [1, 1]} : vector<16x64xf32> to vector<16x16xf32>
    %53 = arith.truncf %51 : vector<8x16xf32> to vector<8x16xbf16>
    %54 = arith.truncf %52 : vector<16x16xf32> to vector<16x16xbf16>
    %cst_28 = arith.constant dense<0.000000e+00> : vector<8x16xf32>
    %55 = tpu.matmul %53, %54, %cst_28 {dimension_numbers = #tpu.dot_dimension_numbers<[1], [1], [0], [0], [0, 0, 1, 0], [], []>} : vector<8x16xbf16>, vector<16x16xbf16>, vector<8x16xf32> -> vector<8x16xf32>
    %cst_29 = arith.constant dense<0xFF800000> : vector<8xf32>
    %56 = vector.multi_reduction <maximumf>, %55, %cst_29 [1] : vector<8x16xf32> to vector<8xf32>
    %57 = vector.shape_cast %56 : vector<8xf32> to vector<8x1xf32>
    %58 = vector.broadcast %57 : vector<8x1xf32> to vector<8x16xf32>
    %59 = arith.subf %55, %58 : vector<8x16xf32>
    %60 = math.exp %59 : vector<8x16xf32>
    %cst_30 = arith.constant dense<0.000000e+00> : vector<8xf32>
    %61 = vector.multi_reduction <add>, %60, %cst_30 [1] : vector<8x16xf32> to vector<8xf32>
    %62 = vector.shape_cast %61 : vector<8xf32> to vector<8x1xf32>
    %63 = tpu.reciprocal %62 {approx = true} : vector<8x1xf32> -> vector<8x1xf32>
    %64 = vector.broadcast %63 : vector<8x1xf32> to vector<8x16xf32>
    %65 = arith.mulf %60, %64 : vector<8x16xf32>
    %66 = vector.extract_strided_slice %25 {offsets = [0, 16], sizes = [16, 16], strides = [1, 1]} : vector<16x64xf32> to vector<16x16xf32>
    %67 = arith.truncf %65 : vector<8x16xf32> to vector<8x16xbf16>
    %68 = arith.truncf %66 : vector<16x16xf32> to vector<16x16xbf16>
    %cst_31 = arith.constant dense<0.000000e+00> : vector<8x16xf32>
    %69 = tpu.matmul %67, %68, %cst_31 {dimension_numbers = #tpu.dot_dimension_numbers<[1], [0], [0], [1], [0, 0, 1, 1], [], []>} : vector<8x16xbf16>, vector<16x16xbf16>, vector<8x16xf32> -> vector<8x16xf32>
    %70 = vector.extract_strided_slice %31 {offsets = [0, 32], sizes = [8, 16], strides = [1, 1]} : vector<8x64xf32> to vector<8x16xf32>
    %71 = vector.extract_strided_slice %24 {offsets = [0, 32], sizes = [16, 16], strides = [1, 1]} : vector<16x64xf32> to vector<16x16xf32>
    %72 = arith.truncf %70 : vector<8x16xf32> to vector<8x16xbf16>
    %73 = arith.truncf %71 : vector<16x16xf32> to vector<16x16xbf16>
    %cst_32 = arith.constant dense<0.000000e+00> : vector<8x16xf32>
    %74 = tpu.matmul %72, %73, %cst_32 {dimension_numbers = #tpu.dot_dimension_numbers<[1], [1], [0], [0], [0, 0, 1, 0], [], []>} : vector<8x16xbf16>, vector<16x16xbf16>, vector<8x16xf32> -> vector<8x16xf32>
    %cst_33 = arith.constant dense<0xFF800000> : vector<8xf32>
    %75 = vector.multi_reduction <maximumf>, %74, %cst_33 [1] : vector<8x16xf32> to vector<8xf32>
    %76 = vector.shape_cast %75 : vector<8xf32> to vector<8x1xf32>
    %77 = vector.broadcast %76 : vector<8x1xf32> to vector<8x16xf32>
    %78 = arith.subf %74, %77 : vector<8x16xf32>
    %79 = math.exp %78 : vector<8x16xf32>
    %cst_34 = arith.constant dense<0.000000e+00> : vector<8xf32>
    %80 = vector.multi_reduction <add>, %79, %cst_34 [1] : vector<8x16xf32> to vector<8xf32>
    %81 = vector.shape_cast %80 : vector<8xf32> to vector<8x1xf32>
    %82 = tpu.reciprocal %81 {approx = true} : vector<8x1xf32> -> vector<8x1xf32>
    %83 = vector.broadcast %82 : vector<8x1xf32> to vector<8x16xf32>
    %84 = arith.mulf %79, %83 : vector<8x16xf32>
    %85 = vector.extract_strided_slice %25 {offsets = [0, 32], sizes = [16, 16], strides = [1, 1]} : vector<16x64xf32> to vector<16x16xf32>
    %86 = arith.truncf %84 : vector<8x16xf32> to vector<8x16xbf16>
    %87 = arith.truncf %85 : vector<16x16xf32> to vector<16x16xbf16>
    %cst_35 = arith.constant dense<0.000000e+00> : vector<8x16xf32>
    %88 = tpu.matmul %86, %87, %cst_35 {dimension_numbers = #tpu.dot_dimension_numbers<[1], [0], [0], [1], [0, 0, 1, 1], [], []>} : vector<8x16xbf16>, vector<16x16xbf16>, vector<8x16xf32> -> vector<8x16xf32>
    %89 = vector.extract_strided_slice %31 {offsets = [0, 48], sizes = [8, 16], strides = [1, 1]} : vector<8x64xf32> to vector<8x16xf32>
    %90 = vector.extract_strided_slice %24 {offsets = [0, 48], sizes = [16, 16], strides = [1, 1]} : vector<16x64xf32> to vector<16x16xf32>
    %91 = arith.truncf %89 : vector<8x16xf32> to vector<8x16xbf16>
    %92 = arith.truncf %90 : vector<16x16xf32> to vector<16x16xbf16>
    %cst_36 = arith.constant dense<0.000000e+00> : vector<8x16xf32>
    %93 = tpu.matmul %91, %92, %cst_36 {dimension_numbers = #tpu.dot_dimension_numbers<[1], [1], [0], [0], [0, 0, 1, 0], [], []>} : vector<8x16xbf16>, vector<16x16xbf16>, vector<8x16xf32> -> vector<8x16xf32>
    %cst_37 = arith.constant dense<0xFF800000> : vector<8xf32>
    %94 = vector.multi_reduction <maximumf>, %93, %cst_37 [1] : vector<8x16xf32> to vector<8xf32>
    %95 = vector.shape_cast %94 : vector<8xf32> to vector<8x1xf32>
    %96 = vector.broadcast %95 : vector<8x1xf32> to vector<8x16xf32>
    %97 = arith.subf %93, %96 : vector<8x16xf32>
    %98 = math.exp %97 : vector<8x16xf32>
    %cst_38 = arith.constant dense<0.000000e+00> : vector<8xf32>
    %99 = vector.multi_reduction <add>, %98, %cst_38 [1] : vector<8x16xf32> to vector<8xf32>
    %100 = vector.shape_cast %99 : vector<8xf32> to vector<8x1xf32>
    %101 = tpu.reciprocal %100 {approx = true} : vector<8x1xf32> -> vector<8x1xf32>
    %102 = vector.broadcast %101 : vector<8x1xf32> to vector<8x16xf32>
    %103 = arith.mulf %98, %102 : vector<8x16xf32>
    %104 = vector.extract_strided_slice %25 {offsets = [0, 48], sizes = [16, 16], strides = [1, 1]} : vector<16x64xf32> to vector<16x16xf32>
    %105 = arith.truncf %103 : vector<8x16xf32> to vector<8x16xbf16>
    %106 = arith.truncf %104 : vector<16x16xf32> to vector<16x16xbf16>
    %cst_39 = arith.constant dense<0.000000e+00> : vector<8x16xf32>
    %107 = tpu.matmul %105, %106, %cst_39 {dimension_numbers = #tpu.dot_dimension_numbers<[1], [0], [0], [1], [0, 0, 1, 1], [], []>} : vector<8x16xbf16>, vector<16x16xbf16>, vector<8x16xf32> -> vector<8x16xf32>
    %c0_40 = arith.constant 0 : index
    %c0_41 = arith.constant 0 : index
    %108 = vector.load %arg11[%c0_40, %c0_41] : memref<64x64xbf16, #tpu.memory_space<vmem>>, vector<64x64xbf16>
    %109 = arith.truncf %10 : vector<16x64xf32> to vector<16x64xbf16>
    %cst_42 = arith.constant dense<0.000000e+00> : vector<16x64xf32>
    %110 = tpu.matmul %109, %108, %cst_42 {dimension_numbers = #tpu.dot_dimension_numbers<[1], [0], [0], [1], [0, 0, 1, 1], [], []>} : vector<16x64xbf16>, vector<64x64xbf16>, vector<16x64xf32> -> vector<16x64xf32>
    %c0_43 = arith.constant 0 : index
    %c0_44 = arith.constant 0 : index
    %111 = vector.load %arg12[%c0_43, %c0_44] : memref<1x64xf32, #tpu.memory_space<vmem>>, vector<1x64xf32>
    %112 = vector.broadcast %111 : vector<1x64xf32> to vector<16x64xf32>
    %113 = arith.addf %110, %112 : vector<16x64xf32>
    %c0_45 = arith.constant 0 : index
    %c0_46 = arith.constant 0 : index
    %114 = vector.load %arg13[%c0_45, %c0_46] : memref<64x128xbf16, #tpu.memory_space<vmem>>, vector<16x128xbf16>
    %115 = arith.truncf %50 : vector<8x16xf32> to vector<8x16xbf16>
    %cst_47 = arith.constant dense<0.000000e+00> : vector<8x128xf32>
    %116 = tpu.matmul %115, %114, %cst_47 {dimension_numbers = #tpu.dot_dimension_numbers<[1], [0], [0], [1], [0, 0, 1, 1], [], []>} : vector<8x16xbf16>, vector<16x128xbf16>, vector<8x128xf32> -> vector<8x128xf32>
    %c16 = arith.constant 16 : index
    %c0_48 = arith.constant 0 : index
    %117 = vector.load %arg13[%c16, %c0_48] : memref<64x128xbf16, #tpu.memory_space<vmem>>, vector<16x128xbf16>
    %118 = arith.truncf %69 : vector<8x16xf32> to vector<8x16xbf16>
    %cst_49 = arith.constant dense<0.000000e+00> : vector<8x128xf32>
    %119 = tpu.matmul %118, %117, %cst_49 {dimension_numbers = #tpu.dot_dimension_numbers<[1], [0], [0], [1], [0, 0, 1, 1], [], []>} : vector<8x16xbf16>, vector<16x128xbf16>, vector<8x128xf32> -> vector<8x128xf32>
    %120 = arith.addf %116, %119 : vector<8x128xf32>
    %c32 = arith.constant 32 : index
    %c0_50 = arith.constant 0 : index
    %121 = vector.load %arg13[%c32, %c0_50] : memref<64x128xbf16, #tpu.memory_space<vmem>>, vector<16x128xbf16>
    %122 = arith.truncf %88 : vector<8x16xf32> to vector<8x16xbf16>
    %cst_51 = arith.constant dense<0.000000e+00> : vector<8x128xf32>
    %123 = tpu.matmul %122, %121, %cst_51 {dimension_numbers = #tpu.dot_dimension_numbers<[1], [0], [0], [1], [0, 0, 1, 1], [], []>} : vector<8x16xbf16>, vector<16x128xbf16>, vector<8x128xf32> -> vector<8x128xf32>
    %124 = arith.addf %120, %123 : vector<8x128xf32>
    %c48 = arith.constant 48 : index
    %c0_52 = arith.constant 0 : index
    %125 = vector.load %arg13[%c48, %c0_52] : memref<64x128xbf16, #tpu.memory_space<vmem>>, vector<16x128xbf16>
    %126 = arith.truncf %107 : vector<8x16xf32> to vector<8x16xbf16>
    %cst_53 = arith.constant dense<0.000000e+00> : vector<8x128xf32>
    %127 = tpu.matmul %126, %125, %cst_53 {dimension_numbers = #tpu.dot_dimension_numbers<[1], [0], [0], [1], [0, 0, 1, 1], [], []>} : vector<8x16xbf16>, vector<16x128xbf16>, vector<8x128xf32> -> vector<8x128xf32>
    %128 = arith.addf %124, %127 : vector<8x128xf32>
    %c0_54 = arith.constant 0 : index
    %c0_55 = arith.constant 0 : index
    %129 = vector.load %arg14[%c0_54, %c0_55] : memref<1x128xf32, #tpu.memory_space<vmem>>, vector<1x128xf32>
    %130 = vector.broadcast %129 : vector<1x128xf32> to vector<8x128xf32>
    %131 = arith.addf %128, %130 : vector<8x128xf32>
    %132 = vector.extract_strided_slice %131 {offsets = [0, 0], sizes = [8, 64], strides = [1, 1]} : vector<8x128xf32> to vector<8x64xf32>
    %133 = vector.extract_strided_slice %131 {offsets = [0, 64], sizes = [8, 64], strides = [1, 1]} : vector<8x128xf32> to vector<8x64xf32>
    %134 = vector.extract_strided_slice %113 {offsets = [0, 0], sizes = [16, 16], strides = [1, 1]} : vector<16x64xf32> to vector<16x16xf32>
    %135 = vector.extract_strided_slice %132 {offsets = [0, 0], sizes = [8, 16], strides = [1, 1]} : vector<8x64xf32> to vector<8x16xf32>
    %136 = arith.truncf %134 : vector<16x16xf32> to vector<16x16xbf16>
    %137 = arith.truncf %135 : vector<8x16xf32> to vector<8x16xbf16>
    %cst_56 = arith.constant dense<0.000000e+00> : vector<16x8xf32>
    %138 = tpu.matmul %136, %137, %cst_56 {dimension_numbers = #tpu.dot_dimension_numbers<[1], [1], [0], [0], [0, 0, 1, 0], [], []>} : vector<16x16xbf16>, vector<8x16xbf16>, vector<16x8xf32> -> vector<16x8xf32>
    %cst_57 = arith.constant dense<0xFF800000> : vector<16xf32>
    %139 = vector.multi_reduction <maximumf>, %138, %cst_57 [1] : vector<16x8xf32> to vector<16xf32>
    %140 = vector.shape_cast %139 : vector<16xf32> to vector<16x1xf32>
    %141 = vector.broadcast %140 : vector<16x1xf32> to vector<16x8xf32>
    %142 = arith.subf %138, %141 : vector<16x8xf32>
    %143 = math.exp %142 : vector<16x8xf32>
    %cst_58 = arith.constant dense<0.000000e+00> : vector<16xf32>
    %144 = vector.multi_reduction <add>, %143, %cst_58 [1] : vector<16x8xf32> to vector<16xf32>
    %145 = vector.shape_cast %144 : vector<16xf32> to vector<16x1xf32>
    %146 = tpu.reciprocal %145 {approx = true} : vector<16x1xf32> -> vector<16x1xf32>
    %147 = vector.broadcast %146 : vector<16x1xf32> to vector<16x8xf32>
    %148 = arith.mulf %143, %147 : vector<16x8xf32>
    %149 = vector.extract_strided_slice %133 {offsets = [0, 0], sizes = [8, 16], strides = [1, 1]} : vector<8x64xf32> to vector<8x16xf32>
    %150 = arith.truncf %148 : vector<16x8xf32> to vector<16x8xbf16>
    %151 = arith.truncf %149 : vector<8x16xf32> to vector<8x16xbf16>
    %cst_59 = arith.constant dense<0.000000e+00> : vector<16x16xf32>
    %152 = tpu.matmul %150, %151, %cst_59 {dimension_numbers = #tpu.dot_dimension_numbers<[1], [0], [0], [1], [0, 0, 1, 1], [], []>} : vector<16x8xbf16>, vector<8x16xbf16>, vector<16x16xf32> -> vector<16x16xf32>
    %153 = vector.extract_strided_slice %113 {offsets = [0, 16], sizes = [16, 16], strides = [1, 1]} : vector<16x64xf32> to vector<16x16xf32>
    %154 = vector.extract_strided_slice %132 {offsets = [0, 16], sizes = [8, 16], strides = [1, 1]} : vector<8x64xf32> to vector<8x16xf32>
    %155 = arith.truncf %153 : vector<16x16xf32> to vector<16x16xbf16>
    %156 = arith.truncf %154 : vector<8x16xf32> to vector<8x16xbf16>
    %cst_60 = arith.constant dense<0.000000e+00> : vector<16x8xf32>
    %157 = tpu.matmul %155, %156, %cst_60 {dimension_numbers = #tpu.dot_dimension_numbers<[1], [1], [0], [0], [0, 0, 1, 0], [], []>} : vector<16x16xbf16>, vector<8x16xbf16>, vector<16x8xf32> -> vector<16x8xf32>
    %cst_61 = arith.constant dense<0xFF800000> : vector<16xf32>
    %158 = vector.multi_reduction <maximumf>, %157, %cst_61 [1] : vector<16x8xf32> to vector<16xf32>
    %159 = vector.shape_cast %158 : vector<16xf32> to vector<16x1xf32>
    %160 = vector.broadcast %159 : vector<16x1xf32> to vector<16x8xf32>
    %161 = arith.subf %157, %160 : vector<16x8xf32>
    %162 = math.exp %161 : vector<16x8xf32>
    %cst_62 = arith.constant dense<0.000000e+00> : vector<16xf32>
    %163 = vector.multi_reduction <add>, %162, %cst_62 [1] : vector<16x8xf32> to vector<16xf32>
    %164 = vector.shape_cast %163 : vector<16xf32> to vector<16x1xf32>
    %165 = tpu.reciprocal %164 {approx = true} : vector<16x1xf32> -> vector<16x1xf32>
    %166 = vector.broadcast %165 : vector<16x1xf32> to vector<16x8xf32>
    %167 = arith.mulf %162, %166 : vector<16x8xf32>
    %168 = vector.extract_strided_slice %133 {offsets = [0, 16], sizes = [8, 16], strides = [1, 1]} : vector<8x64xf32> to vector<8x16xf32>
    %169 = arith.truncf %167 : vector<16x8xf32> to vector<16x8xbf16>
    %170 = arith.truncf %168 : vector<8x16xf32> to vector<8x16xbf16>
    %cst_63 = arith.constant dense<0.000000e+00> : vector<16x16xf32>
    %171 = tpu.matmul %169, %170, %cst_63 {dimension_numbers = #tpu.dot_dimension_numbers<[1], [0], [0], [1], [0, 0, 1, 1], [], []>} : vector<16x8xbf16>, vector<8x16xbf16>, vector<16x16xf32> -> vector<16x16xf32>
    %172 = vector.extract_strided_slice %113 {offsets = [0, 32], sizes = [16, 16], strides = [1, 1]} : vector<16x64xf32> to vector<16x16xf32>
    %173 = vector.extract_strided_slice %132 {offsets = [0, 32], sizes = [8, 16], strides = [1, 1]} : vector<8x64xf32> to vector<8x16xf32>
    %174 = arith.truncf %172 : vector<16x16xf32> to vector<16x16xbf16>
    %175 = arith.truncf %173 : vector<8x16xf32> to vector<8x16xbf16>
    %cst_64 = arith.constant dense<0.000000e+00> : vector<16x8xf32>
    %176 = tpu.matmul %174, %175, %cst_64 {dimension_numbers = #tpu.dot_dimension_numbers<[1], [1], [0], [0], [0, 0, 1, 0], [], []>} : vector<16x16xbf16>, vector<8x16xbf16>, vector<16x8xf32> -> vector<16x8xf32>
    %cst_65 = arith.constant dense<0xFF800000> : vector<16xf32>
    %177 = vector.multi_reduction <maximumf>, %176, %cst_65 [1] : vector<16x8xf32> to vector<16xf32>
    %178 = vector.shape_cast %177 : vector<16xf32> to vector<16x1xf32>
    %179 = vector.broadcast %178 : vector<16x1xf32> to vector<16x8xf32>
    %180 = arith.subf %176, %179 : vector<16x8xf32>
    %181 = math.exp %180 : vector<16x8xf32>
    %cst_66 = arith.constant dense<0.000000e+00> : vector<16xf32>
    %182 = vector.multi_reduction <add>, %181, %cst_66 [1] : vector<16x8xf32> to vector<16xf32>
    %183 = vector.shape_cast %182 : vector<16xf32> to vector<16x1xf32>
    %184 = tpu.reciprocal %183 {approx = true} : vector<16x1xf32> -> vector<16x1xf32>
    %185 = vector.broadcast %184 : vector<16x1xf32> to vector<16x8xf32>
    %186 = arith.mulf %181, %185 : vector<16x8xf32>
    %187 = vector.extract_strided_slice %133 {offsets = [0, 32], sizes = [8, 16], strides = [1, 1]} : vector<8x64xf32> to vector<8x16xf32>
    %188 = arith.truncf %186 : vector<16x8xf32> to vector<16x8xbf16>
    %189 = arith.truncf %187 : vector<8x16xf32> to vector<8x16xbf16>
    %cst_67 = arith.constant dense<0.000000e+00> : vector<16x16xf32>
    %190 = tpu.matmul %188, %189, %cst_67 {dimension_numbers = #tpu.dot_dimension_numbers<[1], [0], [0], [1], [0, 0, 1, 1], [], []>} : vector<16x8xbf16>, vector<8x16xbf16>, vector<16x16xf32> -> vector<16x16xf32>
    %191 = vector.extract_strided_slice %113 {offsets = [0, 48], sizes = [16, 16], strides = [1, 1]} : vector<16x64xf32> to vector<16x16xf32>
    %192 = vector.extract_strided_slice %132 {offsets = [0, 48], sizes = [8, 16], strides = [1, 1]} : vector<8x64xf32> to vector<8x16xf32>
    %193 = arith.truncf %191 : vector<16x16xf32> to vector<16x16xbf16>
    %194 = arith.truncf %192 : vector<8x16xf32> to vector<8x16xbf16>
    %cst_68 = arith.constant dense<0.000000e+00> : vector<16x8xf32>
    %195 = tpu.matmul %193, %194, %cst_68 {dimension_numbers = #tpu.dot_dimension_numbers<[1], [1], [0], [0], [0, 0, 1, 0], [], []>} : vector<16x16xbf16>, vector<8x16xbf16>, vector<16x8xf32> -> vector<16x8xf32>
    %cst_69 = arith.constant dense<0xFF800000> : vector<16xf32>
    %196 = vector.multi_reduction <maximumf>, %195, %cst_69 [1] : vector<16x8xf32> to vector<16xf32>
    %197 = vector.shape_cast %196 : vector<16xf32> to vector<16x1xf32>
    %198 = vector.broadcast %197 : vector<16x1xf32> to vector<16x8xf32>
    %199 = arith.subf %195, %198 : vector<16x8xf32>
    %200 = math.exp %199 : vector<16x8xf32>
    %cst_70 = arith.constant dense<0.000000e+00> : vector<16xf32>
    %201 = vector.multi_reduction <add>, %200, %cst_70 [1] : vector<16x8xf32> to vector<16xf32>
    %202 = vector.shape_cast %201 : vector<16xf32> to vector<16x1xf32>
    %203 = tpu.reciprocal %202 {approx = true} : vector<16x1xf32> -> vector<16x1xf32>
    %204 = vector.broadcast %203 : vector<16x1xf32> to vector<16x8xf32>
    %205 = arith.mulf %200, %204 : vector<16x8xf32>
    %206 = vector.extract_strided_slice %133 {offsets = [0, 48], sizes = [8, 16], strides = [1, 1]} : vector<8x64xf32> to vector<8x16xf32>
    %207 = arith.truncf %205 : vector<16x8xf32> to vector<16x8xbf16>
    %208 = arith.truncf %206 : vector<8x16xf32> to vector<8x16xbf16>
    %cst_71 = arith.constant dense<0.000000e+00> : vector<16x16xf32>
    %209 = tpu.matmul %207, %208, %cst_71 {dimension_numbers = #tpu.dot_dimension_numbers<[1], [0], [0], [1], [0, 0, 1, 1], [], []>} : vector<16x8xbf16>, vector<8x16xbf16>, vector<16x16xf32> -> vector<16x16xf32>
    %c0_72 = arith.constant 0 : index
    %c0_73 = arith.constant 0 : index
    %210 = vector.load %arg15[%c0_72, %c0_73] : memref<64x32xbf16, #tpu.memory_space<vmem>>, vector<16x32xbf16>
    %211 = arith.truncf %152 : vector<16x16xf32> to vector<16x16xbf16>
    %cst_74 = arith.constant dense<0.000000e+00> : vector<16x32xf32>
    %212 = tpu.matmul %211, %210, %cst_74 {dimension_numbers = #tpu.dot_dimension_numbers<[1], [0], [0], [1], [0, 0, 1, 1], [], []>} : vector<16x16xbf16>, vector<16x32xbf16>, vector<16x32xf32> -> vector<16x32xf32>
    %c16_75 = arith.constant 16 : index
    %c0_76 = arith.constant 0 : index
    %213 = vector.load %arg15[%c16_75, %c0_76] : memref<64x32xbf16, #tpu.memory_space<vmem>>, vector<16x32xbf16>
    %214 = arith.truncf %171 : vector<16x16xf32> to vector<16x16xbf16>
    %cst_77 = arith.constant dense<0.000000e+00> : vector<16x32xf32>
    %215 = tpu.matmul %214, %213, %cst_77 {dimension_numbers = #tpu.dot_dimension_numbers<[1], [0], [0], [1], [0, 0, 1, 1], [], []>} : vector<16x16xbf16>, vector<16x32xbf16>, vector<16x32xf32> -> vector<16x32xf32>
    %216 = arith.addf %212, %215 : vector<16x32xf32>
    %c32_78 = arith.constant 32 : index
    %c0_79 = arith.constant 0 : index
    %217 = vector.load %arg15[%c32_78, %c0_79] : memref<64x32xbf16, #tpu.memory_space<vmem>>, vector<16x32xbf16>
    %218 = arith.truncf %190 : vector<16x16xf32> to vector<16x16xbf16>
    %cst_80 = arith.constant dense<0.000000e+00> : vector<16x32xf32>
    %219 = tpu.matmul %218, %217, %cst_80 {dimension_numbers = #tpu.dot_dimension_numbers<[1], [0], [0], [1], [0, 0, 1, 1], [], []>} : vector<16x16xbf16>, vector<16x32xbf16>, vector<16x32xf32> -> vector<16x32xf32>
    %220 = arith.addf %216, %219 : vector<16x32xf32>
    %c48_81 = arith.constant 48 : index
    %c0_82 = arith.constant 0 : index
    %221 = vector.load %arg15[%c48_81, %c0_82] : memref<64x32xbf16, #tpu.memory_space<vmem>>, vector<16x32xbf16>
    %222 = arith.truncf %209 : vector<16x16xf32> to vector<16x16xbf16>
    %cst_83 = arith.constant dense<0.000000e+00> : vector<16x32xf32>
    %223 = tpu.matmul %222, %221, %cst_83 {dimension_numbers = #tpu.dot_dimension_numbers<[1], [0], [0], [1], [0, 0, 1, 1], [], []>} : vector<16x16xbf16>, vector<16x32xbf16>, vector<16x32xf32> -> vector<16x32xf32>
    %224 = arith.addf %220, %223 : vector<16x32xf32>
    %c0_84 = arith.constant 0 : index
    %c0_85 = arith.constant 0 : index
    %225 = vector.load %arg16[%c0_84, %c0_85] : memref<1x32xf32, #tpu.memory_space<vmem>>, vector<1x32xf32>
    %226 = vector.broadcast %225 : vector<1x32xf32> to vector<16x32xf32>
    %227 = arith.addf %224, %226 : vector<16x32xf32>
    %c0_86 = arith.constant 0 : index
    %c0_87 = arith.constant 0 : index
    %228 = vector.load %arg17[%c0_86, %c0_87] : memref<64x32xbf16, #tpu.memory_space<vmem>>, vector<16x32xbf16>
    %229 = arith.truncf %50 : vector<8x16xf32> to vector<8x16xbf16>
    %cst_88 = arith.constant dense<0.000000e+00> : vector<8x32xf32>
    %230 = tpu.matmul %229, %228, %cst_88 {dimension_numbers = #tpu.dot_dimension_numbers<[1], [0], [0], [1], [0, 0, 1, 1], [], []>} : vector<8x16xbf16>, vector<16x32xbf16>, vector<8x32xf32> -> vector<8x32xf32>
    %c16_89 = arith.constant 16 : index
    %c0_90 = arith.constant 0 : index
    %231 = vector.load %arg17[%c16_89, %c0_90] : memref<64x32xbf16, #tpu.memory_space<vmem>>, vector<16x32xbf16>
    %232 = arith.truncf %69 : vector<8x16xf32> to vector<8x16xbf16>
    %cst_91 = arith.constant dense<0.000000e+00> : vector<8x32xf32>
    %233 = tpu.matmul %232, %231, %cst_91 {dimension_numbers = #tpu.dot_dimension_numbers<[1], [0], [0], [1], [0, 0, 1, 1], [], []>} : vector<8x16xbf16>, vector<16x32xbf16>, vector<8x32xf32> -> vector<8x32xf32>
    %234 = arith.addf %230, %233 : vector<8x32xf32>
    %c32_92 = arith.constant 32 : index
    %c0_93 = arith.constant 0 : index
    %235 = vector.load %arg17[%c32_92, %c0_93] : memref<64x32xbf16, #tpu.memory_space<vmem>>, vector<16x32xbf16>
    %236 = arith.truncf %88 : vector<8x16xf32> to vector<8x16xbf16>
    %cst_94 = arith.constant dense<0.000000e+00> : vector<8x32xf32>
    %237 = tpu.matmul %236, %235, %cst_94 {dimension_numbers = #tpu.dot_dimension_numbers<[1], [0], [0], [1], [0, 0, 1, 1], [], []>} : vector<8x16xbf16>, vector<16x32xbf16>, vector<8x32xf32> -> vector<8x32xf32>
    %238 = arith.addf %234, %237 : vector<8x32xf32>
    %c48_95 = arith.constant 48 : index
    %c0_96 = arith.constant 0 : index
    %239 = vector.load %arg17[%c48_95, %c0_96] : memref<64x32xbf16, #tpu.memory_space<vmem>>, vector<16x32xbf16>
    %240 = arith.truncf %107 : vector<8x16xf32> to vector<8x16xbf16>
    %cst_97 = arith.constant dense<0.000000e+00> : vector<8x32xf32>
    %241 = tpu.matmul %240, %239, %cst_97 {dimension_numbers = #tpu.dot_dimension_numbers<[1], [0], [0], [1], [0, 0, 1, 1], [], []>} : vector<8x16xbf16>, vector<16x32xbf16>, vector<8x32xf32> -> vector<8x32xf32>
    %242 = arith.addf %238, %241 : vector<8x32xf32>
    %c0_98 = arith.constant 0 : index
    %c0_99 = arith.constant 0 : index
    %243 = vector.load %arg18[%c0_98, %c0_99] : memref<1x32xf32, #tpu.memory_space<vmem>>, vector<1x32xf32>
    %244 = vector.broadcast %243 : vector<1x32xf32> to vector<8x32xf32>
    %245 = arith.addf %242, %244 : vector<8x32xf32>
    %246 = arith.addf %1, %227 : vector<16x32xf32>
    %c0_100 = arith.constant 0 : index
    %c0_101 = arith.constant 0 : index
    %247 = vector.load %arg19[%c0_100, %c0_101] : memref<1x32xf32, #tpu.memory_space<vmem>>, vector<1x32xf32>
    %c0_102 = arith.constant 0 : index
    %c0_103 = arith.constant 0 : index
    %248 = vector.load %arg20[%c0_102, %c0_103] : memref<1x32xf32, #tpu.memory_space<vmem>>, vector<1x32xf32>
    %cst_104 = arith.constant dense<0.000000e+00> : vector<16xf32>
    %249 = vector.multi_reduction <add>, %246, %cst_104 [1] : vector<16x32xf32> to vector<16xf32>
    %250 = vector.shape_cast %249 : vector<16xf32> to vector<16x1xf32>
    %cst_105 = arith.constant 3.200000e+01 : f32
    %251 = vector.broadcast %cst_105 : f32 to vector<16x1xf32>
    %252 = arith.divf %250, %251 : vector<16x1xf32>
    %253 = vector.broadcast %252 : vector<16x1xf32> to vector<16x32xf32>
    %254 = arith.subf %246, %253 : vector<16x32xf32>
    %255 = arith.mulf %254, %254 : vector<16x32xf32>
    %cst_106 = arith.constant dense<0.000000e+00> : vector<16xf32>
    %256 = vector.multi_reduction <add>, %255, %cst_106 [1] : vector<16x32xf32> to vector<16xf32>
    %257 = vector.shape_cast %256 : vector<16xf32> to vector<16x1xf32>
    %cst_107 = arith.constant 3.200000e+01 : f32
    %258 = vector.broadcast %cst_107 : f32 to vector<16x1xf32>
    %259 = arith.divf %257, %258 : vector<16x1xf32>
    %cst_108 = arith.constant 9.99999974E-6 : f32
    %260 = vector.broadcast %cst_108 : f32 to vector<16x1xf32>
    %261 = arith.addf %259, %260 : vector<16x1xf32>
    %262 = math.rsqrt %261 : vector<16x1xf32>
    %263 = vector.broadcast %262 : vector<16x1xf32> to vector<16x32xf32>
    %264 = arith.mulf %254, %263 : vector<16x32xf32>
    %265 = vector.broadcast %247 : vector<1x32xf32> to vector<16x32xf32>
    %266 = arith.mulf %264, %265 : vector<16x32xf32>
    %267 = vector.broadcast %248 : vector<1x32xf32> to vector<16x32xf32>
    %268 = arith.addf %266, %267 : vector<16x32xf32>
    %269 = arith.addf %3, %245 : vector<8x32xf32>
    %c0_109 = arith.constant 0 : index
    %c0_110 = arith.constant 0 : index
    %270 = vector.load %arg21[%c0_109, %c0_110] : memref<1x32xf32, #tpu.memory_space<vmem>>, vector<1x32xf32>
    %c0_111 = arith.constant 0 : index
    %c0_112 = arith.constant 0 : index
    %271 = vector.load %arg22[%c0_111, %c0_112] : memref<1x32xf32, #tpu.memory_space<vmem>>, vector<1x32xf32>
    %cst_113 = arith.constant dense<0.000000e+00> : vector<8xf32>
    %272 = vector.multi_reduction <add>, %269, %cst_113 [1] : vector<8x32xf32> to vector<8xf32>
    %273 = vector.shape_cast %272 : vector<8xf32> to vector<8x1xf32>
    %cst_114 = arith.constant 3.200000e+01 : f32
    %274 = vector.broadcast %cst_114 : f32 to vector<8x1xf32>
    %275 = arith.divf %273, %274 : vector<8x1xf32>
    %276 = vector.broadcast %275 : vector<8x1xf32> to vector<8x32xf32>
    %277 = arith.subf %269, %276 : vector<8x32xf32>
    %278 = arith.mulf %277, %277 : vector<8x32xf32>
    %cst_115 = arith.constant dense<0.000000e+00> : vector<8xf32>
    %279 = vector.multi_reduction <add>, %278, %cst_115 [1] : vector<8x32xf32> to vector<8xf32>
    %280 = vector.shape_cast %279 : vector<8xf32> to vector<8x1xf32>
    %cst_116 = arith.constant 3.200000e+01 : f32
    %281 = vector.broadcast %cst_116 : f32 to vector<8x1xf32>
    %282 = arith.divf %280, %281 : vector<8x1xf32>
    %cst_117 = arith.constant 9.99999974E-6 : f32
    %283 = vector.broadcast %cst_117 : f32 to vector<8x1xf32>
    %284 = arith.addf %282, %283 : vector<8x1xf32>
    %285 = math.rsqrt %284 : vector<8x1xf32>
    %286 = vector.broadcast %285 : vector<8x1xf32> to vector<8x32xf32>
    %287 = arith.mulf %277, %286 : vector<8x32xf32>
    %288 = vector.broadcast %270 : vector<1x32xf32> to vector<8x32xf32>
    %289 = arith.mulf %287, %288 : vector<8x32xf32>
    %290 = vector.broadcast %271 : vector<1x32xf32> to vector<8x32xf32>
    %291 = arith.addf %289, %290 : vector<8x32xf32>
    %c0_118 = arith.constant 0 : index
    %c0_119 = arith.constant 0 : index
    %292 = vector.load %arg23[%c0_118, %c0_119] : memref<32x64xbf16, #tpu.memory_space<vmem>>, vector<32x64xbf16>
    %293 = arith.truncf %268 : vector<16x32xf32> to vector<16x32xbf16>
    %cst_120 = arith.constant dense<0.000000e+00> : vector<16x64xf32>
    %294 = tpu.matmul %293, %292, %cst_120 {dimension_numbers = #tpu.dot_dimension_numbers<[1], [0], [0], [1], [0, 0, 1, 1], [], []>} : vector<16x32xbf16>, vector<32x64xbf16>, vector<16x64xf32> -> vector<16x64xf32>
    %c0_121 = arith.constant 0 : index
    %c0_122 = arith.constant 0 : index
    %295 = vector.load %arg24[%c0_121, %c0_122] : memref<1x64xf32, #tpu.memory_space<vmem>>, vector<1x64xf32>
    %296 = vector.broadcast %295 : vector<1x64xf32> to vector<16x64xf32>
    %297 = arith.addf %294, %296 : vector<16x64xf32>
    %298 = arith.mulf %297, %297 : vector<16x64xf32>
    %299 = arith.mulf %297, %298 : vector<16x64xf32>
    %cst_123 = arith.constant 4.471500e-02 : f32
    %300 = vector.broadcast %cst_123 : f32 to vector<16x64xf32>
    %301 = arith.mulf %300, %299 : vector<16x64xf32>
    %302 = arith.addf %297, %301 : vector<16x64xf32>
    %cst_124 = arith.constant 0.797884583 : f32
    %303 = vector.broadcast %cst_124 : f32 to vector<16x64xf32>
    %304 = arith.mulf %303, %302 : vector<16x64xf32>
    %305 = math.tanh %304 : vector<16x64xf32>
    %cst_125 = arith.constant 1.000000e+00 : f32
    %306 = vector.broadcast %cst_125 : f32 to vector<16x64xf32>
    %307 = arith.addf %306, %305 : vector<16x64xf32>
    %cst_126 = arith.constant 5.000000e-01 : f32
    %308 = vector.broadcast %cst_126 : f32 to vector<16x64xf32>
    %309 = arith.mulf %308, %307 : vector<16x64xf32>
    %310 = arith.mulf %297, %309 : vector<16x64xf32>
    %c0_127 = arith.constant 0 : index
    %c0_128 = arith.constant 0 : index
    %311 = vector.load %arg25[%c0_127, %c0_128] : memref<64x32xbf16, #tpu.memory_space<vmem>>, vector<64x32xbf16>
    %312 = arith.truncf %310 : vector<16x64xf32> to vector<16x64xbf16>
    %cst_129 = arith.constant dense<0.000000e+00> : vector<16x32xf32>
    %313 = tpu.matmul %312, %311, %cst_129 {dimension_numbers = #tpu.dot_dimension_numbers<[1], [0], [0], [1], [0, 0, 1, 1], [], []>} : vector<16x64xbf16>, vector<64x32xbf16>, vector<16x32xf32> -> vector<16x32xf32>
    %c0_130 = arith.constant 0 : index
    %c0_131 = arith.constant 0 : index
    %314 = vector.load %arg26[%c0_130, %c0_131] : memref<1x32xf32, #tpu.memory_space<vmem>>, vector<1x32xf32>
    %315 = vector.broadcast %314 : vector<1x32xf32> to vector<16x32xf32>
    %316 = arith.addf %313, %315 : vector<16x32xf32>
    %317 = arith.addf %268, %316 : vector<16x32xf32>
    %c0_132 = arith.constant 0 : index
    %c0_133 = arith.constant 0 : index
    %318 = vector.load %arg27[%c0_132, %c0_133] : memref<1x32xf32, #tpu.memory_space<vmem>>, vector<1x32xf32>
    %c0_134 = arith.constant 0 : index
    %c0_135 = arith.constant 0 : index
    %319 = vector.load %arg28[%c0_134, %c0_135] : memref<1x32xf32, #tpu.memory_space<vmem>>, vector<1x32xf32>
    %cst_136 = arith.constant dense<0.000000e+00> : vector<16xf32>
    %320 = vector.multi_reduction <add>, %317, %cst_136 [1] : vector<16x32xf32> to vector<16xf32>
    %321 = vector.shape_cast %320 : vector<16xf32> to vector<16x1xf32>
    %cst_137 = arith.constant 3.200000e+01 : f32
    %322 = vector.broadcast %cst_137 : f32 to vector<16x1xf32>
    %323 = arith.divf %321, %322 : vector<16x1xf32>
    %324 = vector.broadcast %323 : vector<16x1xf32> to vector<16x32xf32>
    %325 = arith.subf %317, %324 : vector<16x32xf32>
    %326 = arith.mulf %325, %325 : vector<16x32xf32>
    %cst_138 = arith.constant dense<0.000000e+00> : vector<16xf32>
    %327 = vector.multi_reduction <add>, %326, %cst_138 [1] : vector<16x32xf32> to vector<16xf32>
    %328 = vector.shape_cast %327 : vector<16xf32> to vector<16x1xf32>
    %cst_139 = arith.constant 3.200000e+01 : f32
    %329 = vector.broadcast %cst_139 : f32 to vector<16x1xf32>
    %330 = arith.divf %328, %329 : vector<16x1xf32>
    %cst_140 = arith.constant 9.99999974E-6 : f32
    %331 = vector.broadcast %cst_140 : f32 to vector<16x1xf32>
    %332 = arith.addf %330, %331 : vector<16x1xf32>
    %333 = math.rsqrt %332 : vector<16x1xf32>
    %334 = vector.broadcast %333 : vector<16x1xf32> to vector<16x32xf32>
    %335 = arith.mulf %325, %334 : vector<16x32xf32>
    %336 = vector.broadcast %318 : vector<1x32xf32> to vector<16x32xf32>
    %337 = arith.mulf %335, %336 : vector<16x32xf32>
    %338 = vector.broadcast %319 : vector<1x32xf32> to vector<16x32xf32>
    %339 = arith.addf %337, %338 : vector<16x32xf32>
    %c0_141 = arith.constant 0 : index
    %c0_142 = arith.constant 0 : index
    %c0_143 = arith.constant 0 : index
    %340 = vector.load %arg29[%c0_141, %c0_142, %c0_143] : memref<1x16x32xf32, #tpu.memory_space<vmem>>, vector<1x16x32xf32>
    %341 = vector.shape_cast %340 : vector<1x16x32xf32> to vector<16x32xf32>
    %342 = vector.shape_cast %339 : vector<16x32xf32> to vector<1x16x32xf32>
    tpu.vector_store %arg29[%c0_141, %c0_142, %c0_143], %342 {strides = array<i32>} : memref<1x16x32xf32, #tpu.memory_space<vmem>>, vector<1x16x32xf32>,
    %c0_144 = arith.constant 0 : index
    %c0_145 = arith.constant 0 : index
    %c0_146 = arith.constant 0 : index
    %343 = vector.load %arg30[%c0_144, %c0_145, %c0_146] : memref<1x8x32xf32, #tpu.memory_space<vmem>>, vector<1x8x32xf32>
    %344 = vector.shape_cast %343 : vector<1x8x32xf32> to vector<8x32xf32>
    %345 = vector.shape_cast %291 : vector<8x32xf32> to vector<1x8x32xf32>
    tpu.vector_store %arg30[%c0_144, %c0_145, %c0_146], %345 {strides = array<i32>} : memref<1x8x32xf32, #tpu.memory_space<vmem>>, vector<1x8x32xf32>,
    return
  }
  func.func @transform_0(%arg0: i32) -> (i32, i32, i32) {
    %c0_i32 = arith.constant 0 : i32
    %c0_i32_0 = arith.constant 0 : i32
    %c0_i32_1 = arith.constant 0 : i32
    return %arg0, %c0_i32, %c0_i32_0 : i32, i32, i32
  }
  func.func @transform_1(%arg0: i32) -> (i32, i32, i32) {
    %c0_i32 = arith.constant 0 : i32
    %c0_i32_0 = arith.constant 0 : i32
    %c0_i32_1 = arith.constant 0 : i32
    return %arg0, %c0_i32, %c0_i32_0 : i32, i32, i32
  }
  func.func @transform_2(%arg0: i32) -> (i32, i32) {
    %c0_i32 = arith.constant 0 : i32
    %c0_i32_0 = arith.constant 0 : i32
    %c0_i32_1 = arith.constant 0 : i32
    return %c0_i32, %c0_i32_0 : i32, i32
  }
  func.func @transform_3(%arg0: i32) -> (i32, i32) {
    %c0_i32 = arith.constant 0 : i32
    %c0_i32_0 = arith.constant 0 : i32
    %c0_i32_1 = arith.constant 0 : i32
    return %c0_i32, %c0_i32_0 : i32, i32
  }
  func.func @transform_4(%arg0: i32) -> (i32, i32) {
    %c0_i32 = arith.constant 0 : i32
    %c0_i32_0 = arith.constant 0 : i32
    %c0_i32_1 = arith.constant 0 : i32
    return %c0_i32, %c0_i32_0 : i32, i32
  }
  func.func @transform_5(%arg0: i32) -> (i32, i32) {
    %c0_i32 = arith.constant 0 : i32
    %c0_i32_0 = arith.constant 0 : i32
    %c0_i32_1 = arith.constant 0 : i32
    return %c0_i32, %c0_i32_0 : i32, i32
  }
  func.func @transform_6(%arg0: i32) -> (i32, i32) {
    %c0_i32 = arith.constant 0 : i32
    %c0_i32_0 = arith.constant 0 : i32
    %c0_i32_1 = arith.constant 0 : i32
    return %c0_i32, %c0_i32_0 : i32, i32
  }
  func.func @transform_7(%arg0: i32) -> (i32, i32) {
    %c0_i32 = arith.constant 0 : i32
    %c0_i32_0 = arith.constant 0 : i32
    %c0_i32_1 = arith.constant 0 : i32
    return %c0_i32, %c0_i32_0 : i32, i32
  }
  func.func @transform_8(%arg0: i32) -> (i32, i32) {
    %c0_i32 = arith.constant 0 : i32
    %c0_i32_0 = arith.constant 0 : i32
    %c0_i32_1 = arith.constant 0 : i32
    return %c0_i32, %c0_i32_0 : i32, i32
  }
  func.func @transform_9(%arg0: i32) -> (i32, i32) {
    %c0_i32 = arith.constant 0 : i32
    %c0_i32_0 = arith.constant 0 : i32
    %c0_i32_1 = arith.constant 0 : i32
    return %c0_i32, %c0_i32_0 : i32, i32
  }
  func.func @transform_10(%arg0: i32) -> (i32, i32) {
    %c0_i32 = arith.constant 0 : i32
    %c0_i32_0 = arith.constant 0 : i32
    %c0_i32_1 = arith.constant 0 : i32
    return %c0_i32, %c0_i32_0 : i32, i32
  }
  func.func @transform_11(%arg0: i32) -> (i32, i32) {
    %c0_i32 = arith.constant 0 : i32
    %c0_i32_0 = arith.constant 0 : i32
    %c0_i32_1 = arith.constant 0 : i32
    return %c0_i32, %c0_i32_0 : i32, i32
  }
  func.func @transform_12(%arg0: i32) -> (i32, i32) {
    %c0_i32 = arith.constant 0 : i32
    %c0_i32_0 = arith.constant 0 : i32
    %c0_i32_1 = arith.constant 0 : i32
    return %c0_i32, %c0_i32_0 : i32, i32
  }
  func.func @transform_13(%arg0: i32) -> (i32, i32) {
    %c0_i32 = arith.constant 0 : i32
    %c0_i32_0 = arith.constant 0 : i32
    %c0_i32_1 = arith.constant 0 : i32
    return %c0_i32, %c0_i32_0 : i32, i32
  }
  func.func @transform_14(%arg0: i32) -> (i32, i32) {
    %c0_i32 = arith.constant 0 : i32
    %c0_i32_0 = arith.constant 0 : i32
    %c0_i32_1 = arith.constant 0 : i32
    return %c0_i32, %c0_i32_0 : i32, i32
  }
  func.func @transform_15(%arg0: i32) -> (i32, i32) {
    %c0_i32 = arith.constant 0 : i32
    %c0_i32_0 = arith.constant 0 : i32
    %c0_i32_1 = arith.constant 0 : i32
    return %c0_i32, %c0_i32_0 : i32, i32
  }
  func.func @transform_16(%arg0: i32) -> (i32, i32) {
    %c0_i32 = arith.constant 0 : i32
    %c0_i32_0 = arith.constant 0 : i32
    %c0_i32_1 = arith.constant 0 : i32
    return %c0_i32, %c0_i32_0 : i32, i32
  }
  func.func @transform_17(%arg0: i32) -> (i32, i32) {
    %c0_i32 = arith.constant 0 : i32
    %c0_i32_0 = arith.constant 0 : i32
    %c0_i32_1 = arith.constant 0 : i32
    return %c0_i32, %c0_i32_0 : i32, i32
  }
  func.func @transform_18(%arg0: i32) -> (i32, i32) {
    %c0_i32 = arith.constant 0 : i32
    %c0_i32_0 = arith.constant 0 : i32
    %c0_i32_1 = arith.constant 0 : i32
    return %c0_i32, %c0_i32_0 : i32, i32
  }
  func.func @transform_19(%arg0: i32) -> (i32, i32) {
    %c0_i32 = arith.constant 0 : i32
    %c0_i32_0 = arith.constant 0 : i32
    %c0_i32_1 = arith.constant 0 : i32
    return %c0_i32, %c0_i32_0 : i32, i32
  }
  func.func @transform_20(%arg0: i32) -> (i32, i32) {
    %c0_i32 = arith.constant 0 : i32
    %c0_i32_0 = arith.constant 0 : i32
    %c0_i32_1 = arith.constant 0 : i32
    return %c0_i32, %c0_i32_0 : i32, i32
  }
  func.func @transform_21(%arg0: i32) -> (i32, i32) {
    %c0_i32 = arith.constant 0 : i32
    %c0_i32_0 = arith.constant 0 : i32
    %c0_i32_1 = arith.constant 0 : i32
    return %c0_i32, %c0_i32_0 : i32, i32
  }
  func.func @transform_22(%arg0: i32) -> (i32, i32) {
    %c0_i32 = arith.constant 0 : i32
    %c0_i32_0 = arith.constant 0 : i32
    %c0_i32_1 = arith.constant 0 : i32
    return %c0_i32, %c0_i32_0 : i32, i32
  }
  func.func @transform_23(%arg0: i32) -> (i32, i32) {
    %c0_i32 = arith.constant 0 : i32
    %c0_i32_0 = arith.constant 0 : i32
    %c0_i32_1 = arith.constant 0 : i32
    return %c0_i32, %c0_i32_0 : i32, i32
  }
  func.func @transform_24(%arg0: i32) -> (i32, i32) {
    %c0_i32 = arith.constant 0 : i32
    %c0_i32_0 = arith.constant 0 : i32
    %c0_i32_1 = arith.constant 0 : i32
    return %c0_i32, %c0_i32_0 : i32, i32
  }
  func.func @transform_25(%arg0: i32) -> (i32, i32) {
    %c0_i32 = arith.constant 0 : i32
    %c0_i32_0 = arith.constant 0 : i32
    %c0_i32_1 = arith.constant 0 : i32
    return %c0_i32, %c0_i32_0 : i32, i32
  }
  func.func @transform_26(%arg0: i32) -> (i32, i32) {
    %c0_i32 = arith.constant 0 : i32
    %c0_i32_0 = arith.constant 0 : i32
    %c0_i32_1 = arith.constant 0 : i32
    return %c0_i32, %c0_i32_0 : i32, i32
  }
  func.func @transform_27(%arg0: i32) -> (i32, i32) {
    %c0_i32 = arith.constant 0 : i32
    %c0_i32_0 = arith.constant 0 : i32
    %c0_i32_1 = arith.constant 0 : i32
    return %c0_i32, %c0_i32_0 : i32, i32
  }
  func.func @transform_28(%arg0: i32) -> (i32, i32, i32) {
    %c0_i32 = arith.constant 0 : i32
    %c0_i32_0 = arith.constant 0 : i32
    %c0_i32_1 = arith.constant 0 : i32
    return %arg0, %c0_i32, %c0_i32_0 : i32, i32, i32
  }
  func.func @transform_29(%arg0: i32) -> (i32, i32, i32) {
    %c0_i32 = arith.constant 0 : i32
    %c0_i32_0 = arith.constant 0 : i32
    %c0_i32_1 = arith.constant 0 : i32
    return %arg0, %c0_i32, %c0_i32_0 : i32, i32, i32
  }
}

module attributes {stable_mosaic.version = 11 : i64} {
  func.func @_head_kernel(%arg0: memref<2x16x32xf32, #tpu.memory_space<vmem>>, %arg1: memref<1x32xf32, #tpu.memory_space<vmem>>, %arg2: memref<1x32xf32, #tpu.memory_space<vmem>>, %arg3: memref<32x8xbf16, #tpu.memory_space<vmem>>, %arg4: memref<1x8xf32, #tpu.memory_space<vmem>>, %arg5: memref<2x8xf32, #tpu.memory_space<vmem>>) attributes {dimension_semantics = [], scalar_prefetch = 0 : i64, scratch_operands = 0 : i64, tpu.core_type = #tpu.core_type<tc>} {
    %c0 = arith.constant 0 : index
    %c0_0 = arith.constant 0 : index
    %c0_1 = arith.constant 0 : index
    %0 = vector.load %arg0[%c0, %c0_0, %c0_1] : memref<2x16x32xf32, #tpu.memory_space<vmem>>, vector<1x16x32xf32>
    %1 = vector.shape_cast %0 : vector<1x16x32xf32> to vector<16x32xf32>
    %c0_2 = arith.constant 0 : index
    %c0_3 = arith.constant 0 : index
    %2 = vector.load %arg1[%c0_2, %c0_3] : memref<1x32xf32, #tpu.memory_space<vmem>>, vector<1x32xf32>
    %c0_4 = arith.constant 0 : index
    %c0_5 = arith.constant 0 : index
    %3 = vector.load %arg2[%c0_4, %c0_5] : memref<1x32xf32, #tpu.memory_space<vmem>>, vector<1x32xf32>
    %cst = arith.constant dense<0.000000e+00> : vector<16xf32>
    %4 = vector.multi_reduction <add>, %1, %cst [1] : vector<16x32xf32> to vector<16xf32>
    %5 = vector.shape_cast %4 : vector<16xf32> to vector<16x1xf32>
    %cst_6 = arith.constant 3.200000e+01 : f32
    %6 = vector.broadcast %cst_6 : f32 to vector<16x1xf32>
    %7 = arith.divf %5, %6 : vector<16x1xf32>
    %8 = vector.broadcast %7 : vector<16x1xf32> to vector<16x32xf32>
    %9 = arith.subf %1, %8 : vector<16x32xf32>
    %10 = arith.mulf %9, %9 : vector<16x32xf32>
    %cst_7 = arith.constant dense<0.000000e+00> : vector<16xf32>
    %11 = vector.multi_reduction <add>, %10, %cst_7 [1] : vector<16x32xf32> to vector<16xf32>
    %12 = vector.shape_cast %11 : vector<16xf32> to vector<16x1xf32>
    %cst_8 = arith.constant 3.200000e+01 : f32
    %13 = vector.broadcast %cst_8 : f32 to vector<16x1xf32>
    %14 = arith.divf %12, %13 : vector<16x1xf32>
    %cst_9 = arith.constant 9.99999974E-6 : f32
    %15 = vector.broadcast %cst_9 : f32 to vector<16x1xf32>
    %16 = arith.addf %14, %15 : vector<16x1xf32>
    %17 = math.rsqrt %16 : vector<16x1xf32>
    %18 = vector.broadcast %17 : vector<16x1xf32> to vector<16x32xf32>
    %19 = arith.mulf %9, %18 : vector<16x32xf32>
    %20 = vector.broadcast %2 : vector<1x32xf32> to vector<16x32xf32>
    %21 = arith.mulf %19, %20 : vector<16x32xf32>
    %22 = vector.broadcast %3 : vector<1x32xf32> to vector<16x32xf32>
    %23 = arith.addf %21, %22 : vector<16x32xf32>
    %cst_10 = arith.constant dense<0.000000e+00> : vector<32xf32>
    %24 = vector.multi_reduction <add>, %23, %cst_10 [0] : vector<16x32xf32> to vector<32xf32>
    %25 = vector.shape_cast %24 : vector<32xf32> to vector<1x32xf32>
    %cst_11 = arith.constant 1.600000e+01 : f32
    %26 = vector.broadcast %cst_11 : f32 to vector<1x32xf32>
    %27 = arith.divf %25, %26 : vector<1x32xf32>
    %c0_12 = arith.constant 0 : index
    %c0_13 = arith.constant 0 : index
    %28 = vector.load %arg3[%c0_12, %c0_13] : memref<32x8xbf16, #tpu.memory_space<vmem>>, vector<32x8xbf16>
    %29 = arith.truncf %27 : vector<1x32xf32> to vector<1x32xbf16>
    %cst_14 = arith.constant dense<0.000000e+00> : vector<1x8xf32>
    %30 = tpu.matmul %29, %28, %cst_14 {dimension_numbers = #tpu.dot_dimension_numbers<[1], [0], [0], [1], [0, 0, 1, 1], [], []>} : vector<1x32xbf16>, vector<32x8xbf16>, vector<1x8xf32> -> vector<1x8xf32>
    %c0_15 = arith.constant 0 : index
    %c0_16 = arith.constant 0 : index
    %31 = vector.load %arg4[%c0_15, %c0_16] : memref<1x8xf32, #tpu.memory_space<vmem>>, vector<1x8xf32>
    %32 = arith.addf %30, %31 : vector<1x8xf32>
    %c0_17 = arith.constant 0 : index
    %c0_18 = arith.constant 0 : index
    %33 = vector.load %arg5[%c0_17, %c0_18] : memref<2x8xf32, #tpu.memory_space<vmem>>, vector<1x8xf32>
    tpu.vector_store %arg5[%c0_17, %c0_18], %32 {strides = array<i32>} : memref<2x8xf32, #tpu.memory_space<vmem>>, vector<1x8xf32>,
    %c1 = arith.constant 1 : index
    %c0_19 = arith.constant 0 : index
    %c0_20 = arith.constant 0 : index
    %34 = vector.load %arg0[%c1, %c0_19, %c0_20] : memref<2x16x32xf32, #tpu.memory_space<vmem>>, vector<1x16x32xf32>
    %35 = vector.shape_cast %34 : vector<1x16x32xf32> to vector<16x32xf32>
    %c0_21 = arith.constant 0 : index
    %c0_22 = arith.constant 0 : index
    %36 = vector.load %arg1[%c0_21, %c0_22] : memref<1x32xf32, #tpu.memory_space<vmem>>, vector<1x32xf32>
    %c0_23 = arith.constant 0 : index
    %c0_24 = arith.constant 0 : index
    %37 = vector.load %arg2[%c0_23, %c0_24] : memref<1x32xf32, #tpu.memory_space<vmem>>, vector<1x32xf32>
    %cst_25 = arith.constant dense<0.000000e+00> : vector<16xf32>
    %38 = vector.multi_reduction <add>, %35, %cst_25 [1] : vector<16x32xf32> to vector<16xf32>
    %39 = vector.shape_cast %38 : vector<16xf32> to vector<16x1xf32>
    %cst_26 = arith.constant 3.200000e+01 : f32
    %40 = vector.broadcast %cst_26 : f32 to vector<16x1xf32>
    %41 = arith.divf %39, %40 : vector<16x1xf32>
    %42 = vector.broadcast %41 : vector<16x1xf32> to vector<16x32xf32>
    %43 = arith.subf %35, %42 : vector<16x32xf32>
    %44 = arith.mulf %43, %43 : vector<16x32xf32>
    %cst_27 = arith.constant dense<0.000000e+00> : vector<16xf32>
    %45 = vector.multi_reduction <add>, %44, %cst_27 [1] : vector<16x32xf32> to vector<16xf32>
    %46 = vector.shape_cast %45 : vector<16xf32> to vector<16x1xf32>
    %cst_28 = arith.constant 3.200000e+01 : f32
    %47 = vector.broadcast %cst_28 : f32 to vector<16x1xf32>
    %48 = arith.divf %46, %47 : vector<16x1xf32>
    %cst_29 = arith.constant 9.99999974E-6 : f32
    %49 = vector.broadcast %cst_29 : f32 to vector<16x1xf32>
    %50 = arith.addf %48, %49 : vector<16x1xf32>
    %51 = math.rsqrt %50 : vector<16x1xf32>
    %52 = vector.broadcast %51 : vector<16x1xf32> to vector<16x32xf32>
    %53 = arith.mulf %43, %52 : vector<16x32xf32>
    %54 = vector.broadcast %36 : vector<1x32xf32> to vector<16x32xf32>
    %55 = arith.mulf %53, %54 : vector<16x32xf32>
    %56 = vector.broadcast %37 : vector<1x32xf32> to vector<16x32xf32>
    %57 = arith.addf %55, %56 : vector<16x32xf32>
    %cst_30 = arith.constant dense<0.000000e+00> : vector<32xf32>
    %58 = vector.multi_reduction <add>, %57, %cst_30 [0] : vector<16x32xf32> to vector<32xf32>
    %59 = vector.shape_cast %58 : vector<32xf32> to vector<1x32xf32>
    %cst_31 = arith.constant 1.600000e+01 : f32
    %60 = vector.broadcast %cst_31 : f32 to vector<1x32xf32>
    %61 = arith.divf %59, %60 : vector<1x32xf32>
    %c0_32 = arith.constant 0 : index
    %c0_33 = arith.constant 0 : index
    %62 = vector.load %arg3[%c0_32, %c0_33] : memref<32x8xbf16, #tpu.memory_space<vmem>>, vector<32x8xbf16>
    %63 = arith.truncf %61 : vector<1x32xf32> to vector<1x32xbf16>
    %cst_34 = arith.constant dense<0.000000e+00> : vector<1x8xf32>
    %64 = tpu.matmul %63, %62, %cst_34 {dimension_numbers = #tpu.dot_dimension_numbers<[1], [0], [0], [1], [0, 0, 1, 1], [], []>} : vector<1x32xbf16>, vector<32x8xbf16>, vector<1x8xf32> -> vector<1x8xf32>
    %c0_35 = arith.constant 0 : index
    %c0_36 = arith.constant 0 : index
    %65 = vector.load %arg4[%c0_35, %c0_36] : memref<1x8xf32, #tpu.memory_space<vmem>>, vector<1x8xf32>
    %66 = arith.addf %64, %65 : vector<1x8xf32>
    %c1_37 = arith.constant 1 : index
    %c0_38 = arith.constant 0 : index
    %67 = vector.load %arg5[%c1_37, %c0_38] : memref<2x8xf32, #tpu.memory_space<vmem>>, vector<1x8xf32>
    tpu.vector_store %arg5[%c1_37, %c0_38], %66 {strides = array<i32>} : memref<2x8xf32, #tpu.memory_space<vmem>>, vector<1x8xf32>,
    return
  }
}

module attributes {stable_mosaic.version = 11 : i64} {
  func.func @_luna_block_kernel(%arg0: i32, %arg1: memref<1x16x32xf32, #tpu.memory_space<vmem>>, %arg2: memref<1x8x32xf32, #tpu.memory_space<vmem>>, %arg3: memref<32x128xbf16, #tpu.memory_space<vmem>>, %arg4: memref<1x128xf32, #tpu.memory_space<vmem>>, %arg5: memref<32x64xbf16, #tpu.memory_space<vmem>>, %arg6: memref<1x64xf32, #tpu.memory_space<vmem>>, %arg7: memref<64x64xbf16, #tpu.memory_space<vmem>>, %arg8: memref<1x64xf32, #tpu.memory_space<vmem>>, %arg9: memref<64x128xbf16, #tpu.memory_space<vmem>>, %arg10: memref<1x128xf32, #tpu.memory_space<vmem>>, %arg11: memref<64x64xbf16, #tpu.memory_space<vmem>>, %arg12: memref<1x64xf32, #tpu.memory_space<vmem>>, %arg13: memref<64x128xbf16, #tpu.memory_space<vmem>>, %arg14: memref<1x128xf32, #tpu.memory_space<vmem>>, %arg15: memref<64x32xbf16, #tpu.memory_space<vmem>>, %arg16: memref<1x32xf32, #tpu.memory_space<vmem>>, %arg17: memref<64x32xbf16, #tpu.memory_space<vmem>>, %arg18: memref<1x32xf32, #tpu.memory_space<vmem>>, %arg19: memref<1x32xf32, #tpu.memory_space<vmem>>, %arg20: memref<1x32xf32, #tpu.memory_space<vmem>>, %arg21: memref<1x32xf32, #tpu.memory_space<vmem>>, %arg22: memref<1x32xf32, #tpu.memory_space<vmem>>, %arg23: memref<32x64xbf16, #tpu.memory_space<vmem>>, %arg24: memref<1x64xf32, #tpu.memory_space<vmem>>, %arg25: memref<64x32xbf16, #tpu.memory_space<vmem>>, %arg26: memref<1x32xf32, #tpu.memory_space<vmem>>, %arg27: memref<1x32xf32, #tpu.memory_space<vmem>>, %arg28: memref<1x32xf32, #tpu.memory_space<vmem>>, %arg29: memref<1x16x32xf32, #tpu.memory_space<vmem>>, %arg30: memref<1x8x32xf32, #tpu.memory_space<vmem>>) attributes {dimension_semantics = [#tpu.dimension_semantics<parallel>], iteration_bounds = array<i64: 2>, scalar_prefetch = 0 : i64, scratch_operands = 0 : i64, tpu.core_type = #tpu.core_type<tc>, window_params = [{transform_indices = @transform_0, window_bounds = array<i64: 1, 16, 32>}, {transform_indices = @transform_1, window_bounds = array<i64: 1, 8, 32>}, {pipeline_mode = #tpu.pipeline_mode<synchronous>, transform_indices = @transform_2, window_bounds = array<i64: 32, 128>}, {pipeline_mode = #tpu.pipeline_mode<synchronous>, transform_indices = @transform_3, window_bounds = array<i64: 1, 128>}, {pipeline_mode = #tpu.pipeline_mode<synchronous>, transform_indices = @transform_4, window_bounds = array<i64: 32, 64>}, {pipeline_mode = #tpu.pipeline_mode<synchronous>, transform_indices = @transform_5, window_bounds = array<i64: 1, 64>}, {pipeline_mode = #tpu.pipeline_mode<synchronous>, transform_indices = @transform_6, window_bounds = array<i64: 64, 64>}, {pipeline_mode = #tpu.pipeline_mode<synchronous>, transform_indices = @transform_7, window_bounds = array<i64: 1, 64>}, {pipeline_mode = #tpu.pipeline_mode<synchronous>, transform_indices = @transform_8, window_bounds = array<i64: 64, 128>}, {pipeline_mode = #tpu.pipeline_mode<synchronous>, transform_indices = @transform_9, window_bounds = array<i64: 1, 128>}, {pipeline_mode = #tpu.pipeline_mode<synchronous>, transform_indices = @transform_10, window_bounds = array<i64: 64, 64>}, {pipeline_mode = #tpu.pipeline_mode<synchronous>, transform_indices = @transform_11, window_bounds = array<i64: 1, 64>}, {pipeline_mode = #tpu.pipeline_mode<synchronous>, transform_indices = @transform_12, window_bounds = array<i64: 64, 128>}, {pipeline_mode = #tpu.pipeline_mode<synchronous>, transform_indices = @transform_13, window_bounds = array<i64: 1, 128>}, {pipeline_mode = #tpu.pipeline_mode<synchronous>, transform_indices = @transform_14, window_bounds = array<i64: 64, 32>}, {pipeline_mode = #tpu.pipeline_mode<synchronous>, transform_indices = @transform_15, window_bounds = array<i64: 1, 32>}, {pipeline_mode = #tpu.pipeline_mode<synchronous>, transform_indices = @transform_16, window_bounds = array<i64: 64, 32>}, {pipeline_mode = #tpu.pipeline_mode<synchronous>, transform_indices = @transform_17, window_bounds = array<i64: 1, 32>}, {pipeline_mode = #tpu.pipeline_mode<synchronous>, transform_indices = @transform_18, window_bounds = array<i64: 1, 32>}, {pipeline_mode = #tpu.pipeline_mode<synchronous>, transform_indices = @transform_19, window_bounds = array<i64: 1, 32>}, {pipeline_mode = #tpu.pipeline_mode<synchronous>, transform_indices = @transform_20, window_bounds = array<i64: 1, 32>}, {pipeline_mode = #tpu.pipeline_mode<synchronous>, transform_indices = @transform_21, window_bounds = array<i64: 1, 32>}, {pipeline_mode = #tpu.pipeline_mode<synchronous>, transform_indices = @transform_22, window_bounds = array<i64: 32, 64>}, {pipeline_mode = #tpu.pipeline_mode<synchronous>, transform_indices = @transform_23, window_bounds = array<i64: 1, 64>}, {pipeline_mode = #tpu.pipeline_mode<synchronous>, transform_indices = @transform_24, window_bounds = array<i64: 64, 32>}, {pipeline_mode = #tpu.pipeline_mode<synchronous>, transform_indices = @transform_25, window_bounds = array<i64: 1, 32>}, {pipeline_mode = #tpu.pipeline_mode<synchronous>, transform_indices = @transform_26, window_bounds = array<i64: 1, 32>}, {pipeline_mode = #tpu.pipeline_mode<synchronous>, transform_indices = @transform_27, window_bounds = array<i64: 1, 32>}, {transform_indices = @transform_28, window_bounds = array<i64: 1, 16, 32>}, {transform_indices = @transform_29, window_bounds = array<i64: 1, 8, 32>}]} {
    %c0 = arith.constant 0 : index
    %c0_0 = arith.constant 0 : index
    %c0_1 = arith.constant 0 : index
    %0 = vector.load %arg1[%c0, %c0_0, %c0_1] : memref<1x16x32xf32, #tpu.memory_space<vmem>>, vector<1x16x32xf32>
    %1 = vector.shape_cast %0 : vector<1x16x32xf32> to vector<16x32xf32>
    %c0_2 = arith.constant 0 : index
    %c0_3 = arith.constant 0 : index
    %c0_4 = arith.constant 0 : index
    %2 = vector.load %arg2[%c0_2, %c0_3, %c0_4] : memref<1x8x32xf32, #tpu.memory_space<vmem>>, vector<1x8x32xf32>
    %3 = vector.shape_cast %2 : vector<1x8x32xf32> to vector<8x32xf32>
    %c0_5 = arith.constant 0 : index
    %c0_6 = arith.constant 0 : index
    %4 = vector.load %arg3[%c0_5, %c0_6] : memref<32x128xbf16, #tpu.memory_space<vmem>>, vector<32x128xbf16>
    %5 = arith.truncf %1 : vector<16x32xf32> to vector<16x32xbf16>
    %cst = arith.constant dense<0.000000e+00> : vector<16x128xf32>
    %6 = tpu.matmul %5, %4, %cst {dimension_numbers = #tpu.dot_dimension_numbers<[1], [0], [0], [1], [0, 0, 1, 1], [], []>} : vector<16x32xbf16>, vector<32x128xbf16>, vector<16x128xf32> -> vector<16x128xf32>
    %c0_7 = arith.constant 0 : index
    %c0_8 = arith.constant 0 : index
    %7 = vector.load %arg4[%c0_7, %c0_8] : memref<1x128xf32, #tpu.memory_space<vmem>>, vector<1x128xf32>
    %8 = vector.broadcast %7 : vector<1x128xf32> to vector<16x128xf32>
    %9 = arith.addf %6, %8 : vector<16x128xf32>
    %10 = vector.extract_strided_slice %9 {offsets = [0, 0], sizes = [16, 64], strides = [1, 1]} : vector<16x128xf32> to vector<16x64xf32>
    %11 = vector.extract_strided_slice %9 {offsets = [0, 64], sizes = [16, 64], strides = [1, 1]} : vector<16x128xf32> to vector<16x64xf32>
    %c0_9 = arith.constant 0 : index
    %c0_10 = arith.constant 0 : index
    %12 = vector.load %arg5[%c0_9, %c0_10] : memref<32x64xbf16, #tpu.memory_space<vmem>>, vector<32x64xbf16>
    %13 = arith.truncf %3 : vector<8x32xf32> to vector<8x32xbf16>
    %cst_11 = arith.constant dense<0.000000e+00> : vector<8x64xf32>
    %14 = tpu.matmul %13, %12, %cst_11 {dimension_numbers = #tpu.dot_dimension_numbers<[1], [0], [0], [1], [0, 0, 1, 1], [], []>} : vector<8x32xbf16>, vector<32x64xbf16>, vector<8x64xf32> -> vector<8x64xf32>
    %c0_12 = arith.constant 0 : index
    %c0_13 = arith.constant 0 : index
    %15 = vector.load %arg6[%c0_12, %c0_13] : memref<1x64xf32, #tpu.memory_space<vmem>>, vector<1x64xf32>
    %16 = vector.broadcast %15 : vector<1x64xf32> to vector<8x64xf32>
    %17 = arith.addf %14, %16 : vector<8x64xf32>
    %c0_14 = arith.constant 0 : index
    %c0_15 = arith.constant 0 : index
    %18 = vector.load %arg9[%c0_14, %c0_15] : memref<64x128xbf16, #tpu.memory_space<vmem>>, vector<64x128xbf16>
    %19 = arith.truncf %11 : vector<16x64xf32> to vector<16x64xbf16>
    %cst_16 = arith.constant dense<0.000000e+00> : vector<16x128xf32>
    %20 = tpu.matmul %19, %18, %cst_16 {dimension_numbers = #tpu.dot_dimension_numbers<[1], [0], [0], [1], [0, 0, 1, 1], [], []>} : vector<16x64xbf16>, vector<64x128xbf16>, vector<16x128xf32> -> vector<16x128xf32>
    %c0_17 = arith.constant 0 : index
    %c0_18 = arith.constant 0 : index
    %21 = vector.load %arg10[%c0_17, %c0_18] : memref<1x128xf32, #tpu.memory_space<vmem>>, vector<1x128xf32>
    %22 = vector.broadcast %21 : vector<1x128xf32> to vector<16x128xf32>
    %23 = arith.addf %20, %22 : vector<16x128xf32>
    %24 = vector.extract_strided_slice %23 {offsets = [0, 0], sizes = [16, 64], strides = [1, 1]} : vector<16x128xf32> to vector<16x64xf32>
    %25 = vector.extract_strided_slice %23 {offsets = [0, 64], sizes = [16, 64], strides = [1, 1]} : vector<16x128xf32> to vector<16x64xf32>
    %c0_19 = arith.constant 0 : index
    %c0_20 = arith.constant 0 : index
    %26 = vector.load %arg7[%c0_19, %c0_20] : memref<64x64xbf16, #tpu.memory_space<vmem>>, vector<64x64xbf16>
    %27 = arith.truncf %17 : vector<8x64xf32> to vector<8x64xbf16>
    %cst_21 = arith.constant dense<0.000000e+00> : vector<8x64xf32>
    %28 = tpu.matmul %27, %26, %cst_21 {dimension_numbers = #tpu.dot_dimension_numbers<[1], [0], [0], [1], [0, 0, 1, 1], [], []>} : vector<8x64xbf16>, vector<64x64xbf16>, vector<8x64xf32> -> vector<8x64xf32>
    %c0_22 = arith.constant 0 : index
    %c0_23 = arith.constant 0 : index
    %29 = vector.load %arg8[%c0_22, %c0_23] : memref<1x64xf32, #tpu.memory_space<vmem>>, vector<1x64xf32>
    %30 = vector.broadcast %29 : vector<1x64xf32> to vector<8x64xf32>
    %31 = arith.addf %28, %30 : vector<8x64xf32>
    %32 = vector.extract_strided_slice %31 {offsets = [0, 0], sizes = [8, 16], strides = [1, 1]} : vector<8x64xf32> to vector<8x16xf32>
    %33 = vector.extract_strided_slice %24 {offsets = [0, 0], sizes = [16, 16], strides = [1, 1]} : vector<16x64xf32> to vector<16x16xf32>
    %34 = arith.truncf %32 : vector<8x16xf32> to vector<8x16xbf16>
    %35 = arith.truncf %33 : vector<16x16xf32> to vector<16x16xbf16>
    %cst_24 = arith.constant dense<0.000000e+00> : vector<8x16xf32>
    %36 = tpu.matmul %34, %35, %cst_24 {dimension_numbers = #tpu.dot_dimension_numbers<[1], [1], [0], [0], [0, 0, 1, 0], [], []>} : vector<8x16xbf16>, vector<16x16xbf16>, vector<8x16xf32> -> vector<8x16xf32>
    %cst_25 = arith.constant dense<0xFF800000> : vector<8xf32>
    %37 = vector.multi_reduction <maximumf>, %36, %cst_25 [1] : vector<8x16xf32> to vector<8xf32>
    %38 = vector.shape_cast %37 : vector<8xf32> to vector<8x1xf32>
    %39 = vector.broadcast %38 : vector<8x1xf32> to vector<8x16xf32>
    %40 = arith.subf %36, %39 : vector<8x16xf32>
    %41 = math.exp %40 : vector<8x16xf32>
    %cst_26 = arith.constant dense<0.000000e+00> : vector<8xf32>
    %42 = vector.multi_reduction <add>, %41, %cst_26 [1] : vector<8x16xf32> to vector<8xf32>
    %43 = vector.shape_cast %42 : vector<8xf32> to vector<8x1xf32>
    %44 = tpu.reciprocal %43 {approx = true} : vector<8x1xf32> -> vector<8x1xf32>
    %45 = vector.broadcast %44 : vector<8x1xf32> to vector<8x16xf32>
    %46 = arith.mulf %41, %45 : vector<8x16xf32>
    %47 = vector.extract_strided_slice %25 {offsets = [0, 0], sizes = [16, 16], strides = [1, 1]} : vector<16x64xf32> to vector<16x16xf32>
    %48 = arith.truncf %46 : vector<8x16xf32> to vector<8x16xbf16>
    %49 = arith.truncf %47 : vector<16x16xf32> to vector<16x16xbf16>
    %cst_27 = arith.constant dense<0.000000e+00> : vector<8x16xf32>
    %50 = tpu.matmul %48, %49, %cst_27 {dimension_numbers = #tpu.dot_dimension_numbers<[1], [0], [0], [1], [0, 0, 1, 1], [], []>} : vector<8x16xbf16>, vector<16x16xbf16>, vector<8x16xf32> -> vector<8x16xf32>
    %51 = vector.extract_strided_slice %31 {offsets = [0, 16], sizes = [8, 16], strides = [1, 1]} : vector<8x64xf32> to vector<8x16xf32>
    %52 = vector.extract_strided_slice %24 {offsets = [0, 16], sizes = [16, 16], strides = [1, 1]} : vector<16x64xf32> to vector<16x16xf32>
    %53 = arith.truncf %51 : vector<8x16xf32> to vector<8x16xbf16>
    %54 = arith.truncf %52 : vector<16x16xf32> to vector<16x16xbf16>
    %cst_28 = arith.constant dense<0.000000e+00> : vector<8x16xf32>
    %55 = tpu.matmul %53, %54, %cst_28 {dimension_numbers = #tpu.dot_dimension_numbers<[1], [1], [0], [0], [0, 0, 1, 0], [], []>} : vector<8x16xbf16>, vector<16x16xbf16>, vector<8x16xf32> -> vector<8x16xf32>
    %cst_29 = arith.constant dense<0xFF800000> : vector<8xf32>
    %56 = vector.multi_reduction <maximumf>, %55, %cst_29 [1] : vector<8x16xf32> to vector<8xf32>
    %57 = vector.shape_cast %56 : vector<8xf32> to vector<8x1xf32>
    %58 = vector.broadcast %57 : vector<8x1xf32> to vector<8x16xf32>
    %59 = arith.subf %55, %58 : vector<8x16xf32>
    %60 = math.exp %59 : vector<8x16xf32>
    %cst_30 = arith.constant dense<0.000000e+00> : vector<8xf32>
    %61 = vector.multi_reduction <add>, %60, %cst_30 [1] : vector<8x16xf32> to vector<8xf32>
    %62 = vector.shape_cast %61 : vector<8xf32> to vector<8x1xf32>
    %63 = tpu.reciprocal %62 {approx = true} : vector<8x1xf32> -> vector<8x1xf32>
    %64 = vector.broadcast %63 : vector<8x1xf32> to vector<8x16xf32>
    %65 = arith.mulf %60, %64 : vector<8x16xf32>
    %66 = vector.extract_strided_slice %25 {offsets = [0, 16], sizes = [16, 16], strides = [1, 1]} : vector<16x64xf32> to vector<16x16xf32>
    %67 = arith.truncf %65 : vector<8x16xf32> to vector<8x16xbf16>
    %68 = arith.truncf %66 : vector<16x16xf32> to vector<16x16xbf16>
    %cst_31 = arith.constant dense<0.000000e+00> : vector<8x16xf32>
    %69 = tpu.matmul %67, %68, %cst_31 {dimension_numbers = #tpu.dot_dimension_numbers<[1], [0], [0], [1], [0, 0, 1, 1], [], []>} : vector<8x16xbf16>, vector<16x16xbf16>, vector<8x16xf32> -> vector<8x16xf32>
    %70 = vector.extract_strided_slice %31 {offsets = [0, 32], sizes = [8, 16], strides = [1, 1]} : vector<8x64xf32> to vector<8x16xf32>
    %71 = vector.extract_strided_slice %24 {offsets = [0, 32], sizes = [16, 16], strides = [1, 1]} : vector<16x64xf32> to vector<16x16xf32>
    %72 = arith.truncf %70 : vector<8x16xf32> to vector<8x16xbf16>
    %73 = arith.truncf %71 : vector<16x16xf32> to vector<16x16xbf16>
    %cst_32 = arith.constant dense<0.000000e+00> : vector<8x16xf32>
    %74 = tpu.matmul %72, %73, %cst_32 {dimension_numbers = #tpu.dot_dimension_numbers<[1], [1], [0], [0], [0, 0, 1, 0], [], []>} : vector<8x16xbf16>, vector<16x16xbf16>, vector<8x16xf32> -> vector<8x16xf32>
    %cst_33 = arith.constant dense<0xFF800000> : vector<8xf32>
    %75 = vector.multi_reduction <maximumf>, %74, %cst_33 [1] : vector<8x16xf32> to vector<8xf32>
    %76 = vector.shape_cast %75 : vector<8xf32> to vector<8x1xf32>
    %77 = vector.broadcast %76 : vector<8x1xf32> to vector<8x16xf32>
    %78 = arith.subf %74, %77 : vector<8x16xf32>
    %79 = math.exp %78 : vector<8x16xf32>
    %cst_34 = arith.constant dense<0.000000e+00> : vector<8xf32>
    %80 = vector.multi_reduction <add>, %79, %cst_34 [1] : vector<8x16xf32> to vector<8xf32>
    %81 = vector.shape_cast %80 : vector<8xf32> to vector<8x1xf32>
    %82 = tpu.reciprocal %81 {approx = true} : vector<8x1xf32> -> vector<8x1xf32>
    %83 = vector.broadcast %82 : vector<8x1xf32> to vector<8x16xf32>
    %84 = arith.mulf %79, %83 : vector<8x16xf32>
    %85 = vector.extract_strided_slice %25 {offsets = [0, 32], sizes = [16, 16], strides = [1, 1]} : vector<16x64xf32> to vector<16x16xf32>
    %86 = arith.truncf %84 : vector<8x16xf32> to vector<8x16xbf16>
    %87 = arith.truncf %85 : vector<16x16xf32> to vector<16x16xbf16>
    %cst_35 = arith.constant dense<0.000000e+00> : vector<8x16xf32>
    %88 = tpu.matmul %86, %87, %cst_35 {dimension_numbers = #tpu.dot_dimension_numbers<[1], [0], [0], [1], [0, 0, 1, 1], [], []>} : vector<8x16xbf16>, vector<16x16xbf16>, vector<8x16xf32> -> vector<8x16xf32>
    %89 = vector.extract_strided_slice %31 {offsets = [0, 48], sizes = [8, 16], strides = [1, 1]} : vector<8x64xf32> to vector<8x16xf32>
    %90 = vector.extract_strided_slice %24 {offsets = [0, 48], sizes = [16, 16], strides = [1, 1]} : vector<16x64xf32> to vector<16x16xf32>
    %91 = arith.truncf %89 : vector<8x16xf32> to vector<8x16xbf16>
    %92 = arith.truncf %90 : vector<16x16xf32> to vector<16x16xbf16>
    %cst_36 = arith.constant dense<0.000000e+00> : vector<8x16xf32>
    %93 = tpu.matmul %91, %92, %cst_36 {dimension_numbers = #tpu.dot_dimension_numbers<[1], [1], [0], [0], [0, 0, 1, 0], [], []>} : vector<8x16xbf16>, vector<16x16xbf16>, vector<8x16xf32> -> vector<8x16xf32>
    %cst_37 = arith.constant dense<0xFF800000> : vector<8xf32>
    %94 = vector.multi_reduction <maximumf>, %93, %cst_37 [1] : vector<8x16xf32> to vector<8xf32>
    %95 = vector.shape_cast %94 : vector<8xf32> to vector<8x1xf32>
    %96 = vector.broadcast %95 : vector<8x1xf32> to vector<8x16xf32>
    %97 = arith.subf %93, %96 : vector<8x16xf32>
    %98 = math.exp %97 : vector<8x16xf32>
    %cst_38 = arith.constant dense<0.000000e+00> : vector<8xf32>
    %99 = vector.multi_reduction <add>, %98, %cst_38 [1] : vector<8x16xf32> to vector<8xf32>
    %100 = vector.shape_cast %99 : vector<8xf32> to vector<8x1xf32>
    %101 = tpu.reciprocal %100 {approx = true} : vector<8x1xf32> -> vector<8x1xf32>
    %102 = vector.broadcast %101 : vector<8x1xf32> to vector<8x16xf32>
    %103 = arith.mulf %98, %102 : vector<8x16xf32>
    %104 = vector.extract_strided_slice %25 {offsets = [0, 48], sizes = [16, 16], strides = [1, 1]} : vector<16x64xf32> to vector<16x16xf32>
    %105 = arith.truncf %103 : vector<8x16xf32> to vector<8x16xbf16>
    %106 = arith.truncf %104 : vector<16x16xf32> to vector<16x16xbf16>
    %cst_39 = arith.constant dense<0.000000e+00> : vector<8x16xf32>
    %107 = tpu.matmul %105, %106, %cst_39 {dimension_numbers = #tpu.dot_dimension_numbers<[1], [0], [0], [1], [0, 0, 1, 1], [], []>} : vector<8x16xbf16>, vector<16x16xbf16>, vector<8x16xf32> -> vector<8x16xf32>
    %c0_40 = arith.constant 0 : index
    %c0_41 = arith.constant 0 : index
    %108 = vector.load %arg11[%c0_40, %c0_41] : memref<64x64xbf16, #tpu.memory_space<vmem>>, vector<64x64xbf16>
    %109 = arith.truncf %10 : vector<16x64xf32> to vector<16x64xbf16>
    %cst_42 = arith.constant dense<0.000000e+00> : vector<16x64xf32>
    %110 = tpu.matmul %109, %108, %cst_42 {dimension_numbers = #tpu.dot_dimension_numbers<[1], [0], [0], [1], [0, 0, 1, 1], [], []>} : vector<16x64xbf16>, vector<64x64xbf16>, vector<16x64xf32> -> vector<16x64xf32>
    %c0_43 = arith.constant 0 : index
    %c0_44 = arith.constant 0 : index
    %111 = vector.load %arg12[%c0_43, %c0_44] : memref<1x64xf32, #tpu.memory_space<vmem>>, vector<1x64xf32>
    %112 = vector.broadcast %111 : vector<1x64xf32> to vector<16x64xf32>
    %113 = arith.addf %110, %112 : vector<16x64xf32>
    %c0_45 = arith.constant 0 : index
    %c0_46 = arith.constant 0 : index
    %114 = vector.load %arg13[%c0_45, %c0_46] : memref<64x128xbf16, #tpu.memory_space<vmem>>, vector<16x128xbf16>
    %115 = arith.truncf %50 : vector<8x16xf32> to vector<8x16xbf16>
    %cst_47 = arith.constant dense<0.000000e+00> : vector<8x128xf32>
    %116 = tpu.matmul %115, %114, %cst_47 {dimension_numbers = #tpu.dot_dimension_numbers<[1], [0], [0], [1], [0, 0, 1, 1], [], []>} : vector<8x16xbf16>, vector<16x128xbf16>, vector<8x128xf32> -> vector<8x128xf32>
    %c16 = arith.constant 16 : index
    %c0_48 = arith.constant 0 : index
    %117 = vector.load %arg13[%c16, %c0_48] : memref<64x128xbf16, #tpu.memory_space<vmem>>, vector<16x128xbf16>
    %118 = arith.truncf %69 : vector<8x16xf32> to vector<8x16xbf16>
    %cst_49 = arith.constant dense<0.000000e+00> : vector<8x128xf32>
    %119 = tpu.matmul %118, %117, %cst_49 {dimension_numbers = #tpu.dot_dimension_numbers<[1], [0], [0], [1], [0, 0, 1, 1], [], []>} : vector<8x16xbf16>, vector<16x128xbf16>, vector<8x128xf32> -> vector<8x128xf32>
    %120 = arith.addf %116, %119 : vector<8x128xf32>
    %c32 = arith.constant 32 : index
    %c0_50 = arith.constant 0 : index
    %121 = vector.load %arg13[%c32, %c0_50] : memref<64x128xbf16, #tpu.memory_space<vmem>>, vector<16x128xbf16>
    %122 = arith.truncf %88 : vector<8x16xf32> to vector<8x16xbf16>
    %cst_51 = arith.constant dense<0.000000e+00> : vector<8x128xf32>
    %123 = tpu.matmul %122, %121, %cst_51 {dimension_numbers = #tpu.dot_dimension_numbers<[1], [0], [0], [1], [0, 0, 1, 1], [], []>} : vector<8x16xbf16>, vector<16x128xbf16>, vector<8x128xf32> -> vector<8x128xf32>
    %124 = arith.addf %120, %123 : vector<8x128xf32>
    %c48 = arith.constant 48 : index
    %c0_52 = arith.constant 0 : index
    %125 = vector.load %arg13[%c48, %c0_52] : memref<64x128xbf16, #tpu.memory_space<vmem>>, vector<16x128xbf16>
    %126 = arith.truncf %107 : vector<8x16xf32> to vector<8x16xbf16>
    %cst_53 = arith.constant dense<0.000000e+00> : vector<8x128xf32>
    %127 = tpu.matmul %126, %125, %cst_53 {dimension_numbers = #tpu.dot_dimension_numbers<[1], [0], [0], [1], [0, 0, 1, 1], [], []>} : vector<8x16xbf16>, vector<16x128xbf16>, vector<8x128xf32> -> vector<8x128xf32>
    %128 = arith.addf %124, %127 : vector<8x128xf32>
    %c0_54 = arith.constant 0 : index
    %c0_55 = arith.constant 0 : index
    %129 = vector.load %arg14[%c0_54, %c0_55] : memref<1x128xf32, #tpu.memory_space<vmem>>, vector<1x128xf32>
    %130 = vector.broadcast %129 : vector<1x128xf32> to vector<8x128xf32>
    %131 = arith.addf %128, %130 : vector<8x128xf32>
    %132 = vector.extract_strided_slice %131 {offsets = [0, 0], sizes = [8, 64], strides = [1, 1]} : vector<8x128xf32> to vector<8x64xf32>
    %133 = vector.extract_strided_slice %131 {offsets = [0, 64], sizes = [8, 64], strides = [1, 1]} : vector<8x128xf32> to vector<8x64xf32>
    %134 = vector.extract_strided_slice %113 {offsets = [0, 0], sizes = [16, 16], strides = [1, 1]} : vector<16x64xf32> to vector<16x16xf32>
    %135 = vector.extract_strided_slice %132 {offsets = [0, 0], sizes = [8, 16], strides = [1, 1]} : vector<8x64xf32> to vector<8x16xf32>
    %136 = arith.truncf %134 : vector<16x16xf32> to vector<16x16xbf16>
    %137 = arith.truncf %135 : vector<8x16xf32> to vector<8x16xbf16>
    %cst_56 = arith.constant dense<0.000000e+00> : vector<16x8xf32>
    %138 = tpu.matmul %136, %137, %cst_56 {dimension_numbers = #tpu.dot_dimension_numbers<[1], [1], [0], [0], [0, 0, 1, 0], [], []>} : vector<16x16xbf16>, vector<8x16xbf16>, vector<16x8xf32> -> vector<16x8xf32>
    %cst_57 = arith.constant dense<0xFF800000> : vector<16xf32>
    %139 = vector.multi_reduction <maximumf>, %138, %cst_57 [1] : vector<16x8xf32> to vector<16xf32>
    %140 = vector.shape_cast %139 : vector<16xf32> to vector<16x1xf32>
    %141 = vector.broadcast %140 : vector<16x1xf32> to vector<16x8xf32>
    %142 = arith.subf %138, %141 : vector<16x8xf32>
    %143 = math.exp %142 : vector<16x8xf32>
    %cst_58 = arith.constant dense<0.000000e+00> : vector<16xf32>
    %144 = vector.multi_reduction <add>, %143, %cst_58 [1] : vector<16x8xf32> to vector<16xf32>
    %145 = vector.shape_cast %144 : vector<16xf32> to vector<16x1xf32>
    %146 = tpu.reciprocal %145 {approx = true} : vector<16x1xf32> -> vector<16x1xf32>
    %147 = vector.broadcast %146 : vector<16x1xf32> to vector<16x8xf32>
    %148 = arith.mulf %143, %147 : vector<16x8xf32>
    %149 = vector.extract_strided_slice %133 {offsets = [0, 0], sizes = [8, 16], strides = [1, 1]} : vector<8x64xf32> to vector<8x16xf32>
    %150 = arith.truncf %148 : vector<16x8xf32> to vector<16x8xbf16>
    %151 = arith.truncf %149 : vector<8x16xf32> to vector<8x16xbf16>
    %cst_59 = arith.constant dense<0.000000e+00> : vector<16x16xf32>
    %152 = tpu.matmul %150, %151, %cst_59 {dimension_numbers = #tpu.dot_dimension_numbers<[1], [0], [0], [1], [0, 0, 1, 1], [], []>} : vector<16x8xbf16>, vector<8x16xbf16>, vector<16x16xf32> -> vector<16x16xf32>
    %153 = vector.extract_strided_slice %113 {offsets = [0, 16], sizes = [16, 16], strides = [1, 1]} : vector<16x64xf32> to vector<16x16xf32>
    %154 = vector.extract_strided_slice %132 {offsets = [0, 16], sizes = [8, 16], strides = [1, 1]} : vector<8x64xf32> to vector<8x16xf32>
    %155 = arith.truncf %153 : vector<16x16xf32> to vector<16x16xbf16>
    %156 = arith.truncf %154 : vector<8x16xf32> to vector<8x16xbf16>
    %cst_60 = arith.constant dense<0.000000e+00> : vector<16x8xf32>
    %157 = tpu.matmul %155, %156, %cst_60 {dimension_numbers = #tpu.dot_dimension_numbers<[1], [1], [0], [0], [0, 0, 1, 0], [], []>} : vector<16x16xbf16>, vector<8x16xbf16>, vector<16x8xf32> -> vector<16x8xf32>
    %cst_61 = arith.constant dense<0xFF800000> : vector<16xf32>
    %158 = vector.multi_reduction <maximumf>, %157, %cst_61 [1] : vector<16x8xf32> to vector<16xf32>
    %159 = vector.shape_cast %158 : vector<16xf32> to vector<16x1xf32>
    %160 = vector.broadcast %159 : vector<16x1xf32> to vector<16x8xf32>
    %161 = arith.subf %157, %160 : vector<16x8xf32>
    %162 = math.exp %161 : vector<16x8xf32>
    %cst_62 = arith.constant dense<0.000000e+00> : vector<16xf32>
    %163 = vector.multi_reduction <add>, %162, %cst_62 [1] : vector<16x8xf32> to vector<16xf32>
    %164 = vector.shape_cast %163 : vector<16xf32> to vector<16x1xf32>
    %165 = tpu.reciprocal %164 {approx = true} : vector<16x1xf32> -> vector<16x1xf32>
    %166 = vector.broadcast %165 : vector<16x1xf32> to vector<16x8xf32>
    %167 = arith.mulf %162, %166 : vector<16x8xf32>
    %168 = vector.extract_strided_slice %133 {offsets = [0, 16], sizes = [8, 16], strides = [1, 1]} : vector<8x64xf32> to vector<8x16xf32>
    %169 = arith.truncf %167 : vector<16x8xf32> to vector<16x8xbf16>
    %170 = arith.truncf %168 : vector<8x16xf32> to vector<8x16xbf16>
    %cst_63 = arith.constant dense<0.000000e+00> : vector<16x16xf32>
    %171 = tpu.matmul %169, %170, %cst_63 {dimension_numbers = #tpu.dot_dimension_numbers<[1], [0], [0], [1], [0, 0, 1, 1], [], []>} : vector<16x8xbf16>, vector<8x16xbf16>, vector<16x16xf32> -> vector<16x16xf32>
    %172 = vector.extract_strided_slice %113 {offsets = [0, 32], sizes = [16, 16], strides = [1, 1]} : vector<16x64xf32> to vector<16x16xf32>
    %173 = vector.extract_strided_slice %132 {offsets = [0, 32], sizes = [8, 16], strides = [1, 1]} : vector<8x64xf32> to vector<8x16xf32>
    %174 = arith.truncf %172 : vector<16x16xf32> to vector<16x16xbf16>
    %175 = arith.truncf %173 : vector<8x16xf32> to vector<8x16xbf16>
    %cst_64 = arith.constant dense<0.000000e+00> : vector<16x8xf32>
    %176 = tpu.matmul %174, %175, %cst_64 {dimension_numbers = #tpu.dot_dimension_numbers<[1], [1], [0], [0], [0, 0, 1, 0], [], []>} : vector<16x16xbf16>, vector<8x16xbf16>, vector<16x8xf32> -> vector<16x8xf32>
    %cst_65 = arith.constant dense<0xFF800000> : vector<16xf32>
    %177 = vector.multi_reduction <maximumf>, %176, %cst_65 [1] : vector<16x8xf32> to vector<16xf32>
    %178 = vector.shape_cast %177 : vector<16xf32> to vector<16x1xf32>
    %179 = vector.broadcast %178 : vector<16x1xf32> to vector<16x8xf32>
    %180 = arith.subf %176, %179 : vector<16x8xf32>
    %181 = math.exp %180 : vector<16x8xf32>
    %cst_66 = arith.constant dense<0.000000e+00> : vector<16xf32>
    %182 = vector.multi_reduction <add>, %181, %cst_66 [1] : vector<16x8xf32> to vector<16xf32>
    %183 = vector.shape_cast %182 : vector<16xf32> to vector<16x1xf32>
    %184 = tpu.reciprocal %183 {approx = true} : vector<16x1xf32> -> vector<16x1xf32>
    %185 = vector.broadcast %184 : vector<16x1xf32> to vector<16x8xf32>
    %186 = arith.mulf %181, %185 : vector<16x8xf32>
    %187 = vector.extract_strided_slice %133 {offsets = [0, 32], sizes = [8, 16], strides = [1, 1]} : vector<8x64xf32> to vector<8x16xf32>
    %188 = arith.truncf %186 : vector<16x8xf32> to vector<16x8xbf16>
    %189 = arith.truncf %187 : vector<8x16xf32> to vector<8x16xbf16>
    %cst_67 = arith.constant dense<0.000000e+00> : vector<16x16xf32>
    %190 = tpu.matmul %188, %189, %cst_67 {dimension_numbers = #tpu.dot_dimension_numbers<[1], [0], [0], [1], [0, 0, 1, 1], [], []>} : vector<16x8xbf16>, vector<8x16xbf16>, vector<16x16xf32> -> vector<16x16xf32>
    %191 = vector.extract_strided_slice %113 {offsets = [0, 48], sizes = [16, 16], strides = [1, 1]} : vector<16x64xf32> to vector<16x16xf32>
    %192 = vector.extract_strided_slice %132 {offsets = [0, 48], sizes = [8, 16], strides = [1, 1]} : vector<8x64xf32> to vector<8x16xf32>
    %193 = arith.truncf %191 : vector<16x16xf32> to vector<16x16xbf16>
    %194 = arith.truncf %192 : vector<8x16xf32> to vector<8x16xbf16>
    %cst_68 = arith.constant dense<0.000000e+00> : vector<16x8xf32>
    %195 = tpu.matmul %193, %194, %cst_68 {dimension_numbers = #tpu.dot_dimension_numbers<[1], [1], [0], [0], [0, 0, 1, 0], [], []>} : vector<16x16xbf16>, vector<8x16xbf16>, vector<16x8xf32> -> vector<16x8xf32>
    %cst_69 = arith.constant dense<0xFF800000> : vector<16xf32>
    %196 = vector.multi_reduction <maximumf>, %195, %cst_69 [1] : vector<16x8xf32> to vector<16xf32>
    %197 = vector.shape_cast %196 : vector<16xf32> to vector<16x1xf32>
    %198 = vector.broadcast %197 : vector<16x1xf32> to vector<16x8xf32>
    %199 = arith.subf %195, %198 : vector<16x8xf32>
    %200 = math.exp %199 : vector<16x8xf32>
    %cst_70 = arith.constant dense<0.000000e+00> : vector<16xf32>
    %201 = vector.multi_reduction <add>, %200, %cst_70 [1] : vector<16x8xf32> to vector<16xf32>
    %202 = vector.shape_cast %201 : vector<16xf32> to vector<16x1xf32>
    %203 = tpu.reciprocal %202 {approx = true} : vector<16x1xf32> -> vector<16x1xf32>
    %204 = vector.broadcast %203 : vector<16x1xf32> to vector<16x8xf32>
    %205 = arith.mulf %200, %204 : vector<16x8xf32>
    %206 = vector.extract_strided_slice %133 {offsets = [0, 48], sizes = [8, 16], strides = [1, 1]} : vector<8x64xf32> to vector<8x16xf32>
    %207 = arith.truncf %205 : vector<16x8xf32> to vector<16x8xbf16>
    %208 = arith.truncf %206 : vector<8x16xf32> to vector<8x16xbf16>
    %cst_71 = arith.constant dense<0.000000e+00> : vector<16x16xf32>
    %209 = tpu.matmul %207, %208, %cst_71 {dimension_numbers = #tpu.dot_dimension_numbers<[1], [0], [0], [1], [0, 0, 1, 1], [], []>} : vector<16x8xbf16>, vector<8x16xbf16>, vector<16x16xf32> -> vector<16x16xf32>
    %c0_72 = arith.constant 0 : index
    %c0_73 = arith.constant 0 : index
    %210 = vector.load %arg15[%c0_72, %c0_73] : memref<64x32xbf16, #tpu.memory_space<vmem>>, vector<16x32xbf16>
    %211 = arith.truncf %152 : vector<16x16xf32> to vector<16x16xbf16>
    %cst_74 = arith.constant dense<0.000000e+00> : vector<16x32xf32>
    %212 = tpu.matmul %211, %210, %cst_74 {dimension_numbers = #tpu.dot_dimension_numbers<[1], [0], [0], [1], [0, 0, 1, 1], [], []>} : vector<16x16xbf16>, vector<16x32xbf16>, vector<16x32xf32> -> vector<16x32xf32>
    %c16_75 = arith.constant 16 : index
    %c0_76 = arith.constant 0 : index
    %213 = vector.load %arg15[%c16_75, %c0_76] : memref<64x32xbf16, #tpu.memory_space<vmem>>, vector<16x32xbf16>
    %214 = arith.truncf %171 : vector<16x16xf32> to vector<16x16xbf16>
    %cst_77 = arith.constant dense<0.000000e+00> : vector<16x32xf32>
    %215 = tpu.matmul %214, %213, %cst_77 {dimension_numbers = #tpu.dot_dimension_numbers<[1], [0], [0], [1], [0, 0, 1, 1], [], []>} : vector<16x16xbf16>, vector<16x32xbf16>, vector<16x32xf32> -> vector<16x32xf32>
    %216 = arith.addf %212, %215 : vector<16x32xf32>
    %c32_78 = arith.constant 32 : index
    %c0_79 = arith.constant 0 : index
    %217 = vector.load %arg15[%c32_78, %c0_79] : memref<64x32xbf16, #tpu.memory_space<vmem>>, vector<16x32xbf16>
    %218 = arith.truncf %190 : vector<16x16xf32> to vector<16x16xbf16>
    %cst_80 = arith.constant dense<0.000000e+00> : vector<16x32xf32>
    %219 = tpu.matmul %218, %217, %cst_80 {dimension_numbers = #tpu.dot_dimension_numbers<[1], [0], [0], [1], [0, 0, 1, 1], [], []>} : vector<16x16xbf16>, vector<16x32xbf16>, vector<16x32xf32> -> vector<16x32xf32>
    %220 = arith.addf %216, %219 : vector<16x32xf32>
    %c48_81 = arith.constant 48 : index
    %c0_82 = arith.constant 0 : index
    %221 = vector.load %arg15[%c48_81, %c0_82] : memref<64x32xbf16, #tpu.memory_space<vmem>>, vector<16x32xbf16>
    %222 = arith.truncf %209 : vector<16x16xf32> to vector<16x16xbf16>
    %cst_83 = arith.constant dense<0.000000e+00> : vector<16x32xf32>
    %223 = tpu.matmul %222, %221, %cst_83 {dimension_numbers = #tpu.dot_dimension_numbers<[1], [0], [0], [1], [0, 0, 1, 1], [], []>} : vector<16x16xbf16>, vector<16x32xbf16>, vector<16x32xf32> -> vector<16x32xf32>
    %224 = arith.addf %220, %223 : vector<16x32xf32>
    %c0_84 = arith.constant 0 : index
    %c0_85 = arith.constant 0 : index
    %225 = vector.load %arg16[%c0_84, %c0_85] : memref<1x32xf32, #tpu.memory_space<vmem>>, vector<1x32xf32>
    %226 = vector.broadcast %225 : vector<1x32xf32> to vector<16x32xf32>
    %227 = arith.addf %224, %226 : vector<16x32xf32>
    %c0_86 = arith.constant 0 : index
    %c0_87 = arith.constant 0 : index
    %228 = vector.load %arg17[%c0_86, %c0_87] : memref<64x32xbf16, #tpu.memory_space<vmem>>, vector<16x32xbf16>
    %229 = arith.truncf %50 : vector<8x16xf32> to vector<8x16xbf16>
    %cst_88 = arith.constant dense<0.000000e+00> : vector<8x32xf32>
    %230 = tpu.matmul %229, %228, %cst_88 {dimension_numbers = #tpu.dot_dimension_numbers<[1], [0], [0], [1], [0, 0, 1, 1], [], []>} : vector<8x16xbf16>, vector<16x32xbf16>, vector<8x32xf32> -> vector<8x32xf32>
    %c16_89 = arith.constant 16 : index
    %c0_90 = arith.constant 0 : index
    %231 = vector.load %arg17[%c16_89, %c0_90] : memref<64x32xbf16, #tpu.memory_space<vmem>>, vector<16x32xbf16>
    %232 = arith.truncf %69 : vector<8x16xf32> to vector<8x16xbf16>
    %cst_91 = arith.constant dense<0.000000e+00> : vector<8x32xf32>
    %233 = tpu.matmul %232, %231, %cst_91 {dimension_numbers = #tpu.dot_dimension_numbers<[1], [0], [0], [1], [0, 0, 1, 1], [], []>} : vector<8x16xbf16>, vector<16x32xbf16>, vector<8x32xf32> -> vector<8x32xf32>
    %234 = arith.addf %230, %233 : vector<8x32xf32>
    %c32_92 = arith.constant 32 : index
    %c0_93 = arith.constant 0 : index
    %235 = vector.load %arg17[%c32_92, %c0_93] : memref<64x32xbf16, #tpu.memory_space<vmem>>, vector<16x32xbf16>
    %236 = arith.truncf %88 : vector<8x16xf32> to vector<8x16xbf16>
    %cst_94 = arith.constant dense<0.000000e+00> : vector<8x32xf32>
    %237 = tpu.matmul %236, %235, %cst_94 {dimension_numbers = #tpu.dot_dimension_numbers<[1], [0], [0], [1], [0, 0, 1, 1], [], []>} : vector<8x16xbf16>, vector<16x32xbf16>, vector<8x32xf32> -> vector<8x32xf32>
    %238 = arith.addf %234, %237 : vector<8x32xf32>
    %c48_95 = arith.constant 48 : index
    %c0_96 = arith.constant 0 : index
    %239 = vector.load %arg17[%c48_95, %c0_96] : memref<64x32xbf16, #tpu.memory_space<vmem>>, vector<16x32xbf16>
    %240 = arith.truncf %107 : vector<8x16xf32> to vector<8x16xbf16>
    %cst_97 = arith.constant dense<0.000000e+00> : vector<8x32xf32>
    %241 = tpu.matmul %240, %239, %cst_97 {dimension_numbers = #tpu.dot_dimension_numbers<[1], [0], [0], [1], [0, 0, 1, 1], [], []>} : vector<8x16xbf16>, vector<16x32xbf16>, vector<8x32xf32> -> vector<8x32xf32>
    %242 = arith.addf %238, %241 : vector<8x32xf32>
    %c0_98 = arith.constant 0 : index
    %c0_99 = arith.constant 0 : index
    %243 = vector.load %arg18[%c0_98, %c0_99] : memref<1x32xf32, #tpu.memory_space<vmem>>, vector<1x32xf32>
    %244 = vector.broadcast %243 : vector<1x32xf32> to vector<8x32xf32>
    %245 = arith.addf %242, %244 : vector<8x32xf32>
    %246 = arith.addf %1, %227 : vector<16x32xf32>
    %c0_100 = arith.constant 0 : index
    %c0_101 = arith.constant 0 : index
    %247 = vector.load %arg19[%c0_100, %c0_101] : memref<1x32xf32, #tpu.memory_space<vmem>>, vector<1x32xf32>
    %c0_102 = arith.constant 0 : index
    %c0_103 = arith.constant 0 : index
    %248 = vector.load %arg20[%c0_102, %c0_103] : memref<1x32xf32, #tpu.memory_space<vmem>>, vector<1x32xf32>
    %cst_104 = arith.constant dense<0.000000e+00> : vector<16xf32>
    %249 = vector.multi_reduction <add>, %246, %cst_104 [1] : vector<16x32xf32> to vector<16xf32>
    %250 = vector.shape_cast %249 : vector<16xf32> to vector<16x1xf32>
    %cst_105 = arith.constant 3.200000e+01 : f32
    %251 = vector.broadcast %cst_105 : f32 to vector<16x1xf32>
    %252 = arith.divf %250, %251 : vector<16x1xf32>
    %253 = vector.broadcast %252 : vector<16x1xf32> to vector<16x32xf32>
    %254 = arith.subf %246, %253 : vector<16x32xf32>
    %255 = arith.mulf %254, %254 : vector<16x32xf32>
    %cst_106 = arith.constant dense<0.000000e+00> : vector<16xf32>
    %256 = vector.multi_reduction <add>, %255, %cst_106 [1] : vector<16x32xf32> to vector<16xf32>
    %257 = vector.shape_cast %256 : vector<16xf32> to vector<16x1xf32>
    %cst_107 = arith.constant 3.200000e+01 : f32
    %258 = vector.broadcast %cst_107 : f32 to vector<16x1xf32>
    %259 = arith.divf %257, %258 : vector<16x1xf32>
    %cst_108 = arith.constant 9.99999974E-6 : f32
    %260 = vector.broadcast %cst_108 : f32 to vector<16x1xf32>
    %261 = arith.addf %259, %260 : vector<16x1xf32>
    %262 = math.rsqrt %261 : vector<16x1xf32>
    %263 = vector.broadcast %262 : vector<16x1xf32> to vector<16x32xf32>
    %264 = arith.mulf %254, %263 : vector<16x32xf32>
    %265 = vector.broadcast %247 : vector<1x32xf32> to vector<16x32xf32>
    %266 = arith.mulf %264, %265 : vector<16x32xf32>
    %267 = vector.broadcast %248 : vector<1x32xf32> to vector<16x32xf32>
    %268 = arith.addf %266, %267 : vector<16x32xf32>
    %269 = arith.addf %3, %245 : vector<8x32xf32>
    %c0_109 = arith.constant 0 : index
    %c0_110 = arith.constant 0 : index
    %270 = vector.load %arg21[%c0_109, %c0_110] : memref<1x32xf32, #tpu.memory_space<vmem>>, vector<1x32xf32>
    %c0_111 = arith.constant 0 : index
    %c0_112 = arith.constant 0 : index
    %271 = vector.load %arg22[%c0_111, %c0_112] : memref<1x32xf32, #tpu.memory_space<vmem>>, vector<1x32xf32>
    %cst_113 = arith.constant dense<0.000000e+00> : vector<8xf32>
    %272 = vector.multi_reduction <add>, %269, %cst_113 [1] : vector<8x32xf32> to vector<8xf32>
    %273 = vector.shape_cast %272 : vector<8xf32> to vector<8x1xf32>
    %cst_114 = arith.constant 3.200000e+01 : f32
    %274 = vector.broadcast %cst_114 : f32 to vector<8x1xf32>
    %275 = arith.divf %273, %274 : vector<8x1xf32>
    %276 = vector.broadcast %275 : vector<8x1xf32> to vector<8x32xf32>
    %277 = arith.subf %269, %276 : vector<8x32xf32>
    %278 = arith.mulf %277, %277 : vector<8x32xf32>
    %cst_115 = arith.constant dense<0.000000e+00> : vector<8xf32>
    %279 = vector.multi_reduction <add>, %278, %cst_115 [1] : vector<8x32xf32> to vector<8xf32>
    %280 = vector.shape_cast %279 : vector<8xf32> to vector<8x1xf32>
    %cst_116 = arith.constant 3.200000e+01 : f32
    %281 = vector.broadcast %cst_116 : f32 to vector<8x1xf32>
    %282 = arith.divf %280, %281 : vector<8x1xf32>
    %cst_117 = arith.constant 9.99999974E-6 : f32
    %283 = vector.broadcast %cst_117 : f32 to vector<8x1xf32>
    %284 = arith.addf %282, %283 : vector<8x1xf32>
    %285 = math.rsqrt %284 : vector<8x1xf32>
    %286 = vector.broadcast %285 : vector<8x1xf32> to vector<8x32xf32>
    %287 = arith.mulf %277, %286 : vector<8x32xf32>
    %288 = vector.broadcast %270 : vector<1x32xf32> to vector<8x32xf32>
    %289 = arith.mulf %287, %288 : vector<8x32xf32>
    %290 = vector.broadcast %271 : vector<1x32xf32> to vector<8x32xf32>
    %291 = arith.addf %289, %290 : vector<8x32xf32>
    %c0_118 = arith.constant 0 : index
    %c0_119 = arith.constant 0 : index
    %292 = vector.load %arg23[%c0_118, %c0_119] : memref<32x64xbf16, #tpu.memory_space<vmem>>, vector<32x64xbf16>
    %293 = arith.truncf %268 : vector<16x32xf32> to vector<16x32xbf16>
    %cst_120 = arith.constant dense<0.000000e+00> : vector<16x64xf32>
    %294 = tpu.matmul %293, %292, %cst_120 {dimension_numbers = #tpu.dot_dimension_numbers<[1], [0], [0], [1], [0, 0, 1, 1], [], []>} : vector<16x32xbf16>, vector<32x64xbf16>, vector<16x64xf32> -> vector<16x64xf32>
    %c0_121 = arith.constant 0 : index
    %c0_122 = arith.constant 0 : index
    %295 = vector.load %arg24[%c0_121, %c0_122] : memref<1x64xf32, #tpu.memory_space<vmem>>, vector<1x64xf32>
    %296 = vector.broadcast %295 : vector<1x64xf32> to vector<16x64xf32>
    %297 = arith.addf %294, %296 : vector<16x64xf32>
    %298 = arith.mulf %297, %297 : vector<16x64xf32>
    %299 = arith.mulf %297, %298 : vector<16x64xf32>
    %cst_123 = arith.constant 4.471500e-02 : f32
    %300 = vector.broadcast %cst_123 : f32 to vector<16x64xf32>
    %301 = arith.mulf %300, %299 : vector<16x64xf32>
    %302 = arith.addf %297, %301 : vector<16x64xf32>
    %cst_124 = arith.constant 0.797884583 : f32
    %303 = vector.broadcast %cst_124 : f32 to vector<16x64xf32>
    %304 = arith.mulf %303, %302 : vector<16x64xf32>
    %305 = math.tanh %304 : vector<16x64xf32>
    %cst_125 = arith.constant 1.000000e+00 : f32
    %306 = vector.broadcast %cst_125 : f32 to vector<16x64xf32>
    %307 = arith.addf %306, %305 : vector<16x64xf32>
    %cst_126 = arith.constant 5.000000e-01 : f32
    %308 = vector.broadcast %cst_126 : f32 to vector<16x64xf32>
    %309 = arith.mulf %308, %307 : vector<16x64xf32>
    %310 = arith.mulf %297, %309 : vector<16x64xf32>
    %c0_127 = arith.constant 0 : index
    %c0_128 = arith.constant 0 : index
    %311 = vector.load %arg25[%c0_127, %c0_128] : memref<64x32xbf16, #tpu.memory_space<vmem>>, vector<64x32xbf16>
    %312 = arith.truncf %310 : vector<16x64xf32> to vector<16x64xbf16>
    %cst_129 = arith.constant dense<0.000000e+00> : vector<16x32xf32>
    %313 = tpu.matmul %312, %311, %cst_129 {dimension_numbers = #tpu.dot_dimension_numbers<[1], [0], [0], [1], [0, 0, 1, 1], [], []>} : vector<16x64xbf16>, vector<64x32xbf16>, vector<16x32xf32> -> vector<16x32xf32>
    %c0_130 = arith.constant 0 : index
    %c0_131 = arith.constant 0 : index
    %314 = vector.load %arg26[%c0_130, %c0_131] : memref<1x32xf32, #tpu.memory_space<vmem>>, vector<1x32xf32>
    %315 = vector.broadcast %314 : vector<1x32xf32> to vector<16x32xf32>
    %316 = arith.addf %313, %315 : vector<16x32xf32>
    %317 = arith.addf %268, %316 : vector<16x32xf32>
    %c0_132 = arith.constant 0 : index
    %c0_133 = arith.constant 0 : index
    %318 = vector.load %arg27[%c0_132, %c0_133] : memref<1x32xf32, #tpu.memory_space<vmem>>, vector<1x32xf32>
    %c0_134 = arith.constant 0 : index
    %c0_135 = arith.constant 0 : index
    %319 = vector.load %arg28[%c0_134, %c0_135] : memref<1x32xf32, #tpu.memory_space<vmem>>, vector<1x32xf32>
    %cst_136 = arith.constant dense<0.000000e+00> : vector<16xf32>
    %320 = vector.multi_reduction <add>, %317, %cst_136 [1] : vector<16x32xf32> to vector<16xf32>
    %321 = vector.shape_cast %320 : vector<16xf32> to vector<16x1xf32>
    %cst_137 = arith.constant 3.200000e+01 : f32
    %322 = vector.broadcast %cst_137 : f32 to vector<16x1xf32>
    %323 = arith.divf %321, %322 : vector<16x1xf32>
    %324 = vector.broadcast %323 : vector<16x1xf32> to vector<16x32xf32>
    %325 = arith.subf %317, %324 : vector<16x32xf32>
    %326 = arith.mulf %325, %325 : vector<16x32xf32>
    %cst_138 = arith.constant dense<0.000000e+00> : vector<16xf32>
    %327 = vector.multi_reduction <add>, %326, %cst_138 [1] : vector<16x32xf32> to vector<16xf32>
    %328 = vector.shape_cast %327 : vector<16xf32> to vector<16x1xf32>
    %cst_139 = arith.constant 3.200000e+01 : f32
    %329 = vector.broadcast %cst_139 : f32 to vector<16x1xf32>
    %330 = arith.divf %328, %329 : vector<16x1xf32>
    %cst_140 = arith.constant 9.99999974E-6 : f32
    %331 = vector.broadcast %cst_140 : f32 to vector<16x1xf32>
    %332 = arith.addf %330, %331 : vector<16x1xf32>
    %333 = math.rsqrt %332 : vector<16x1xf32>
    %334 = vector.broadcast %333 : vector<16x1xf32> to vector<16x32xf32>
    %335 = arith.mulf %325, %334 : vector<16x32xf32>
    %336 = vector.broadcast %318 : vector<1x32xf32> to vector<16x32xf32>
    %337 = arith.mulf %335, %336 : vector<16x32xf32>
    %338 = vector.broadcast %319 : vector<1x32xf32> to vector<16x32xf32>
    %339 = arith.addf %337, %338 : vector<16x32xf32>
    %c0_141 = arith.constant 0 : index
    %c0_142 = arith.constant 0 : index
    %c0_143 = arith.constant 0 : index
    %340 = vector.load %arg29[%c0_141, %c0_142, %c0_143] : memref<1x16x32xf32, #tpu.memory_space<vmem>>, vector<1x16x32xf32>
    %341 = vector.shape_cast %340 : vector<1x16x32xf32> to vector<16x32xf32>
    %342 = vector.shape_cast %339 : vector<16x32xf32> to vector<1x16x32xf32>
    tpu.vector_store %arg29[%c0_141, %c0_142, %c0_143], %342 {strides = array<i32>} : memref<1x16x32xf32, #tpu.memory_space<vmem>>, vector<1x16x32xf32>,
    %c0_144 = arith.constant 0 : index
    %c0_145 = arith.constant 0 : index
    %c0_146 = arith.constant 0 : index
    %343 = vector.load %arg30[%c0_144, %c0_145, %c0_146] : memref<1x8x32xf32, #tpu.memory_space<vmem>>, vector<1x8x32xf32>
    %344 = vector.shape_cast %343 : vector<1x8x32xf32> to vector<8x32xf32>
    %345 = vector.shape_cast %291 : vector<8x32xf32> to vector<1x8x32xf32>
    tpu.vector_store %arg30[%c0_144, %c0_145, %c0_146], %345 {strides = array<i32>} : memref<1x8x32xf32, #tpu.memory_space<vmem>>, vector<1x8x32xf32>,
    return
  }
  func.func @transform_0(%arg0: i32) -> (i32, i32, i32) {
    %c0_i32 = arith.constant 0 : i32
    %c0_i32_0 = arith.constant 0 : i32
    %c0_i32_1 = arith.constant 0 : i32
    return %arg0, %c0_i32, %c0_i32_0 : i32, i32, i32
  }
  func.func @transform_1(%arg0: i32) -> (i32, i32, i32) {
    %c0_i32 = arith.constant 0 : i32
    %c0_i32_0 = arith.constant 0 : i32
    %c0_i32_1 = arith.constant 0 : i32
    return %arg0, %c0_i32, %c0_i32_0 : i32, i32, i32
  }
  func.func @transform_2(%arg0: i32) -> (i32, i32) {
    %c0_i32 = arith.constant 0 : i32
    %c0_i32_0 = arith.constant 0 : i32
    %c0_i32_1 = arith.constant 0 : i32
    return %c0_i32, %c0_i32_0 : i32, i32
  }
  func.func @transform_3(%arg0: i32) -> (i32, i32) {
    %c0_i32 = arith.constant 0 : i32
    %c0_i32_0 = arith.constant 0 : i32
    %c0_i32_1 = arith.constant 0 : i32
    return %c0_i32, %c0_i32_0 : i32, i32
  }
  func.func @transform_4(%arg0: i32) -> (i32, i32) {
    %c0_i32 = arith.constant 0 : i32
    %c0_i32_0 = arith.constant 0 : i32
    %c0_i32_1 = arith.constant 0 : i32
    return %c0_i32, %c0_i32_0 : i32, i32
  }
  func.func @transform_5(%arg0: i32) -> (i32, i32) {
    %c0_i32 = arith.constant 0 : i32
    %c0_i32_0 = arith.constant 0 : i32
    %c0_i32_1 = arith.constant 0 : i32
    return %c0_i32, %c0_i32_0 : i32, i32
  }
  func.func @transform_6(%arg0: i32) -> (i32, i32) {
    %c0_i32 = arith.constant 0 : i32
    %c0_i32_0 = arith.constant 0 : i32
    %c0_i32_1 = arith.constant 0 : i32
    return %c0_i32, %c0_i32_0 : i32, i32
  }
  func.func @transform_7(%arg0: i32) -> (i32, i32) {
    %c0_i32 = arith.constant 0 : i32
    %c0_i32_0 = arith.constant 0 : i32
    %c0_i32_1 = arith.constant 0 : i32
    return %c0_i32, %c0_i32_0 : i32, i32
  }
  func.func @transform_8(%arg0: i32) -> (i32, i32) {
    %c0_i32 = arith.constant 0 : i32
    %c0_i32_0 = arith.constant 0 : i32
    %c0_i32_1 = arith.constant 0 : i32
    return %c0_i32, %c0_i32_0 : i32, i32
  }
  func.func @transform_9(%arg0: i32) -> (i32, i32) {
    %c0_i32 = arith.constant 0 : i32
    %c0_i32_0 = arith.constant 0 : i32
    %c0_i32_1 = arith.constant 0 : i32
    return %c0_i32, %c0_i32_0 : i32, i32
  }
  func.func @transform_10(%arg0: i32) -> (i32, i32) {
    %c0_i32 = arith.constant 0 : i32
    %c0_i32_0 = arith.constant 0 : i32
    %c0_i32_1 = arith.constant 0 : i32
    return %c0_i32, %c0_i32_0 : i32, i32
  }
  func.func @transform_11(%arg0: i32) -> (i32, i32) {
    %c0_i32 = arith.constant 0 : i32
    %c0_i32_0 = arith.constant 0 : i32
    %c0_i32_1 = arith.constant 0 : i32
    return %c0_i32, %c0_i32_0 : i32, i32
  }
  func.func @transform_12(%arg0: i32) -> (i32, i32) {
    %c0_i32 = arith.constant 0 : i32
    %c0_i32_0 = arith.constant 0 : i32
    %c0_i32_1 = arith.constant 0 : i32
    return %c0_i32, %c0_i32_0 : i32, i32
  }
  func.func @transform_13(%arg0: i32) -> (i32, i32) {
    %c0_i32 = arith.constant 0 : i32
    %c0_i32_0 = arith.constant 0 : i32
    %c0_i32_1 = arith.constant 0 : i32
    return %c0_i32, %c0_i32_0 : i32, i32
  }
  func.func @transform_14(%arg0: i32) -> (i32, i32) {
    %c0_i32 = arith.constant 0 : i32
    %c0_i32_0 = arith.constant 0 : i32
    %c0_i32_1 = arith.constant 0 : i32
    return %c0_i32, %c0_i32_0 : i32, i32
  }
  func.func @transform_15(%arg0: i32) -> (i32, i32) {
    %c0_i32 = arith.constant 0 : i32
    %c0_i32_0 = arith.constant 0 : i32
    %c0_i32_1 = arith.constant 0 : i32
    return %c0_i32, %c0_i32_0 : i32, i32
  }
  func.func @transform_16(%arg0: i32) -> (i32, i32) {
    %c0_i32 = arith.constant 0 : i32
    %c0_i32_0 = arith.constant 0 : i32
    %c0_i32_1 = arith.constant 0 : i32
    return %c0_i32, %c0_i32_0 : i32, i32
  }
  func.func @transform_17(%arg0: i32) -> (i32, i32) {
    %c0_i32 = arith.constant 0 : i32
    %c0_i32_0 = arith.constant 0 : i32
    %c0_i32_1 = arith.constant 0 : i32
    return %c0_i32, %c0_i32_0 : i32, i32
  }
  func.func @transform_18(%arg0: i32) -> (i32, i32) {
    %c0_i32 = arith.constant 0 : i32
    %c0_i32_0 = arith.constant 0 : i32
    %c0_i32_1 = arith.constant 0 : i32
    return %c0_i32, %c0_i32_0 : i32, i32
  }
  func.func @transform_19(%arg0: i32) -> (i32, i32) {
    %c0_i32 = arith.constant 0 : i32
    %c0_i32_0 = arith.constant 0 : i32
    %c0_i32_1 = arith.constant 0 : i32
    return %c0_i32, %c0_i32_0 : i32, i32
  }
  func.func @transform_20(%arg0: i32) -> (i32, i32) {
    %c0_i32 = arith.constant 0 : i32
    %c0_i32_0 = arith.constant 0 : i32
    %c0_i32_1 = arith.constant 0 : i32
    return %c0_i32, %c0_i32_0 : i32, i32
  }
  func.func @transform_21(%arg0: i32) -> (i32, i32) {
    %c0_i32 = arith.constant 0 : i32
    %c0_i32_0 = arith.constant 0 : i32
    %c0_i32_1 = arith.constant 0 : i32
    return %c0_i32, %c0_i32_0 : i32, i32
  }
  func.func @transform_22(%arg0: i32) -> (i32, i32) {
    %c0_i32 = arith.constant 0 : i32
    %c0_i32_0 = arith.constant 0 : i32
    %c0_i32_1 = arith.constant 0 : i32
    return %c0_i32, %c0_i32_0 : i32, i32
  }
  func.func @transform_23(%arg0: i32) -> (i32, i32) {
    %c0_i32 = arith.constant 0 : i32
    %c0_i32_0 = arith.constant 0 : i32
    %c0_i32_1 = arith.constant 0 : i32
    return %c0_i32, %c0_i32_0 : i32, i32
  }
  func.func @transform_24(%arg0: i32) -> (i32, i32) {
    %c0_i32 = arith.constant 0 : i32
    %c0_i32_0 = arith.constant 0 : i32
    %c0_i32_1 = arith.constant 0 : i32
    return %c0_i32, %c0_i32_0 : i32, i32
  }
  func.func @transform_25(%arg0: i32) -> (i32, i32) {
    %c0_i32 = arith.constant 0 : i32
    %c0_i32_0 = arith.constant 0 : i32
    %c0_i32_1 = arith.constant 0 : i32
    return %c0_i32, %c0_i32_0 : i32, i32
  }
  func.func @transform_26(%arg0: i32) -> (i32, i32) {
    %c0_i32 = arith.constant 0 : i32
    %c0_i32_0 = arith.constant 0 : i32
    %c0_i32_1 = arith.constant 0 : i32
    return %c0_i32, %c0_i32_0 : i32, i32
  }
  func.func @transform_27(%arg0: i32) -> (i32, i32) {
    %c0_i32 = arith.constant 0 : i32
    %c0_i32_0 = arith.constant 0 : i32
    %c0_i32_1 = arith.constant 0 : i32
    return %c0_i32, %c0_i32_0 : i32, i32
  }
  func.func @transform_28(%arg0: i32) -> (i32, i32, i32) {
    %c0_i32 = arith.constant 0 : i32
    %c0_i32_0 = arith.constant 0 : i32
    %c0_i32_1 = arith.constant 0 : i32
    return %arg0, %c0_i32, %c0_i32_0 : i32, i32, i32
  }
  func.func @transform_29(%arg0: i32) -> (i32, i32, i32) {
    %c0_i32 = arith.constant 0 : i32
    %c0_i32_0 = arith.constant 0 : i32
    %c0_i32_1 = arith.constant 0 : i32
    return %arg0, %c0_i32, %c0_i32_0 : i32, i32, i32
  }
}

</mosaic_0001>

<llo_original>
// kernel: luna_transformer_forward.5
$region0: #{luna_transformer_forward.5}
  #allocation0 [shape = 'u32[]', space=smem, size = 0x4, offset = 0x4, fixed_abs, tag = 'smem constant byte address 0x4 - core index']
  #allocation1 [shape = 'u32[144,128]{1,0:T(1,128)}', space=vmem, size = 0x12000, scoped, tag = 'internal scratch']
  %s0 = inlined_call_operand.vmem [shape: f32[2,16,32], index: 0, kind: input, shape index: {}]
  %s1 = inlined_call_operand.vmem [shape: f32[1,32], index: 1, kind: input, shape index: {}]
  %s2 = inlined_call_operand.vmem [shape: f32[1,32], index: 2, kind: input, shape index: {}]
  %s3 = inlined_call_operand.vmem [shape: bf16[32,8], index: 3, kind: input, shape index: {}]
  %s4 = inlined_call_operand.vmem [shape: f32[1,8], index: 4, kind: input, shape index: {}]
  %s5 = inlined_call_operand.hbm [shape: f32[2,8], index: 5, kind: output, shape index: {}]
  %s6 = sld [smem:[#allocation0]]
  $region30: #{luna_transformer_forward.5} parent=0
    _
  %s8 = ssub.s32 1, %s6
  %s9 = scalar_select 0, %s8, %s6
  $region1: #{luna_transformer_forward.5} parent=0
    #allocation2 [shape = 'u8[1024]{0}', space=vmem, size = 0x400, scoped, tag = 'output window, operand 0, single buffered']
    #allocation3 [shape = 's32[1]{0}', space=sflag, size = 0x4, scoped, tag = 'scoped memory for luna_transformer_forward.5']
    %10 = vsyncpa [#allocation3], 0
    // Predicated region
    $region2: #{luna_transformer_forward.5} parent=1 // pred_check
      _
    $region3: #{luna_transformer_forward.5} parent=1 // pred_check_branch
      %12 = sbr.rel (0) target = $region5
    $region4: #{luna_transformer_forward.5} parent=1 // pred_region
      _
    $region5: #{luna_transformer_forward.5} parent=1 // pred_fallthru
      _
    // Predicated region
    $region6: #{luna_transformer_forward.5} parent=1 // pred_check
      _
    $region7: #{luna_transformer_forward.5} parent=1 // pred_check_branch
      %14 = sbr.rel (0) target = $region9
    $region8: #{luna_transformer_forward.5} parent=1 // pred_region
      _
    $region9: #{luna_transformer_forward.5} parent=1 // pred_fallthru
      _
    // Predicated region
    $region10: #{luna_transformer_forward.5} parent=1 // pred_check
      _
    $region11: #{luna_transformer_forward.5} parent=1 // pred_check_branch
      %16 = sbr.rel (0) target = $region13
    $region12: #{luna_transformer_forward.5} parent=1 // pred_region
      _
    $region13: #{luna_transformer_forward.5} parent=1 // pred_fallthru
      _
    // Predicated region
    $region14: #{luna_transformer_forward.5} parent=1 // pred_check
      _
    $region15: #{luna_transformer_forward.5} parent=1 // pred_check_branch
      %18 = sbr.rel (0) target = $region17
    $region16: #{luna_transformer_forward.5} parent=1 // pred_region
      _
    $region17: #{luna_transformer_forward.5} parent=1 // pred_fallthru
      _
    // Predicated region
    $region18: #{luna_transformer_forward.5} parent=1 // pred_check
      _
    $region19: #{luna_transformer_forward.5} parent=1 // pred_check_branch
      %20 = sbr.rel (0) target = $region21
    $region20: #{luna_transformer_forward.5} parent=1 // pred_region
      _
    $region21: #{luna_transformer_forward.5} parent=1 // pred_fallthru
      _
    %v22 = vld [vmem:[%s0] sm:$0xff]
    %v23 = vld [vmem:[%s0 + $0x8] sm:$0xff]
    %v24 = vld [vmem:[%s1] sm:$0x1]
    %v25 = vld [vmem:[%s2] sm:$0x1]
    %vm26 = vcmask 261120
    %v27 = vsel %vm26, %v22, 0.0
    %28 = vadd.xlane.f32.xlu0 %v27
    %v29 = vpop.xlane.xlu0 %28
    %v30 = vsel %vm26, %v23, 0.0
    %31 = vadd.xlane.f32.xlu0 %v30
    %v32 = vpop.xlane.xlu0 %31
    %v33 = vrcp.pop 32.0
    %v34 = vmul.f32 %v29, %v33
    %v35 = vmul.f32 %v32, %v33
    %v36 = vsub.f32 %v22, %v34
    %v37 = vsub.f32 %v23, %v35
    %v38 = vmul.f32 %v36, %v36
    %v39 = vmul.f32 %v37, %v37
    %v40 = vsel %vm26, %v38, 0.0
    %41 = vadd.xlane.f32.xlu0 %v40
    %v42 = vpop.xlane.xlu0 %41
    %v43 = vsel %vm26, %v39, 0.0
    %44 = vadd.xlane.f32.xlu0 %v43
    %v45 = vpop.xlane.xlu0 %44
    %v46 = vmul.f32 %v42, %v33
    %v47 = vmul.f32 %v45, %v33
    %v48 = vadd.f32 %v46, 1e-05
    %v49 = vadd.f32 %v47, 1e-05
    %v50 = vrsqrt.pop %v48
    %v51 = vrsqrt.pop %v49
    %v52 = vmul.f32 %v36, %v50
    %v53 = vmul.f32 %v37, %v51
    %v55 = vlaneseq
    %v56 = vshrl.u32 %v55, 7
    %v57 = vsub.s32 0, %v56
    %v58 = vrot.slane %v24, %v57
    %v60 = vmul.f32 %v52, %v58
    %v61 = vmul.f32 %v53, %v58
    %v63 = vlaneseq
    %v64 = vshrl.u32 %v63, 7
    %v65 = vsub.s32 0, %v64
    %v66 = vrot.slane %v25, %v65
    %v68 = vadd.f32 %v60, %v66
    %v69 = vadd.f32 %v61, %v66
    %v70 = vsel %vm26, %v68, 0.0
    %v71 = vsel %vm26, %v69, 0.0
    %v72 = vadd.f32 %v70, %v71
    %v73 = vrot.slane %v72, 4
    %v74 = vadd.f32 %v72, %v73
    %v75 = vrot.slane %v74, 2
    %v76 = vadd.f32 %v74, %v75
    %v77 = vrot.slane %v76, 1
    %v78 = vadd.f32 %v76, %v77
    %v79 = vrcp.pop 16.0
    %v80 = vmul.f32 %v78, %v79
    %v81 = vld [vmem:[%s3] sm:$0xf]
    %v82 = vld [vmem:[%s3 + $0x4] sm:$0xf]
    %v83 = vld [vmem:[%s3 + $0x8] sm:$0xf]
    %v84 = vld [vmem:[%s3 + $0xc] sm:$0xf]
    %v85 = vpack.c.bf16 %v80, %v80
    %v86 = vld [vmem:[%s4] sm:$0x1]
    %v91 = vunpack.c.l.b16 %v81
    %v92 = vunpack.c.l.b16 %v82
    %v93 = vunpack.c.l.b16 %v83
    %v94 = vunpack.c.l.b16 %v84
    %v95 = vpack.c.b16 %v92, %v91
    %v96 = vpack.c.b16 %v94, %v93
    %v100 = vsel %vm26, %v85, 0
    %102 = vmatprep.subr.bf16.mxu0 0
    %103 = vmatpush1.bf16.msra.mxu0 %v95
    %104 = vmatprep.subr.bf16.mxu0 0
    %105 = vmatpush1.bf16.msra.mxu0 %v96
    %106 = vmatprep.subr.bf16.mxu0 0
    %107 = vmatpush1.bf16.msra.mxu0 0
    %108 = vmatprep.subr.bf16.mxu0 0
    %109 = vmatpush1.bf16.msra.mxu0 0
    %110 = vmatprep.subr.bf16.mxu0 0
    %111 = vmatpush1.bf16.msra.mxu0 0
    %112 = vmatprep.subr.bf16.mxu0 0
    %113 = vmatpush1.bf16.msra.mxu0 0
    %114 = vmatprep.subr.bf16.mxu0 0
    %115 = vmatpush1.bf16.msra.mxu0 0
    %116 = vmatprep.subr.bf16.mxu0 0
    %117 = vmatpush1.bf16.msra.mxu0 0
    %118 = vmatprep.subr.bf16.mxu0 0
    %119 = vmatpush1.bf16.msra.mxu0 0
    %120 = vmatprep.subr.bf16.mxu0 0
    %121 = vmatpush1.bf16.msra.mxu0 0
    %122 = vmatprep.subr.bf16.mxu0 0
    %123 = vmatpush1.bf16.msra.mxu0 0
    %124 = vmatprep.subr.bf16.mxu0 0
    %125 = vmatpush1.bf16.msra.mxu0 0
    %126 = vmatprep.subr.bf16.mxu0 0
    %127 = vmatpush1.bf16.msra.mxu0 0
    %128 = vmatprep.subr.bf16.mxu0 0
    %129 = vmatpush1.bf16.msra.mxu0 0
    %130 = vmatprep.subr.bf16.mxu0 0
    %131 = vmatpush1.bf16.msra.mxu0 0
    %132 = vmatprep.subr.bf16.mxu0 0
    %133 = vmatpush1.bf16.msra.mxu0 0
    %134 = vmatprep.mubr.bf16.mxu0 0
    %135 = vmatmul.mubr.bf16.gmra.mrb[0].mxu0 %v100
    %v136 = vpop.f32.mrb[0].mxu0
    %v137 = vadd.f32 %v86, %v136
    %v138 = vpop.f32.mrb[0].mxu0
    %v139 = vpop.f32.mrb[0].mxu0
    %v140 = vpop.f32.mrb[0].mxu0
    %141 = vdwg.mxu0
    %vm142 = vcmask 57344
    %143 = vst.msk [vmem:[#allocation2] sm:$0x1] %vm142, %v137
    %s144 = scalar_lea.vmem %s0, 16
    %v145 = vld [vmem:[%s144] sm:$0xff]
    %v146 = vld [vmem:[%s144 + $0x8] sm:$0xff]
    %v147 = vld [vmem:[%s1] sm:$0x1]
    %v148 = vld [vmem:[%s2] sm:$0x1]
    %v149 = vsel %vm26, %v145, 0.0
    %150 = vadd.xlane.f32.xlu0 %v149
    %v151 = vpop.xlane.xlu0 %150
    %v152 = vsel %vm26, %v146, 0.0
    %153 = vadd.xlane.f32.xlu0 %v152
    %v154 = vpop.xlane.xlu0 %153
    %v155 = vmul.f32 %v151, %v33
    %v156 = vmul.f32 %v154, %v33
    %v157 = vsub.f32 %v145, %v155
    %v158 = vsub.f32 %v146, %v156
    %v159 = vmul.f32 %v157, %v157
    %v160 = vmul.f32 %v158, %v158
    %v161 = vsel %vm26, %v159, 0.0
    %162 = vadd.xlane.f32.xlu0 %v161
    %v163 = vpop.xlane.xlu0 %162
    %v164 = vsel %vm26, %v160, 0.0
    %165 = vadd.xlane.f32.xlu0 %v164
    %v166 = vpop.xlane.xlu0 %165
    %v167 = vmul.f32 %v163, %v33
    %v168 = vmul.f32 %v166, %v33
    %v169 = vadd.f32 %v167, 1e-05
    %v170 = vadd.f32 %v168, 1e-05
    %v171 = vrsqrt.pop %v169
    %v172 = vrsqrt.pop %v170
    %v173 = vmul.f32 %v157, %v171
    %v174 = vmul.f32 %v158, %v172
    %v176 = vlaneseq
    %v177 = vshrl.u32 %v176, 7
    %v178 = vsub.s32 0, %v177
    %v179 = vrot.slane %v147, %v178
    %v181 = vmul.f32 %v173, %v179
    %v182 = vmul.f32 %v174, %v179
    %v184 = vlaneseq
    %v185 = vshrl.u32 %v184, 7
    %v186 = vsub.s32 0, %v185
    %v187 = vrot.slane %v148, %v186
    %v189 = vadd.f32 %v181, %v187
    %v190 = vadd.f32 %v182, %v187
    %v191 = vsel %vm26, %v189, 0.0
    %v192 = vsel %vm26, %v190, 0.0
    %v193 = vadd.f32 %v191, %v192
    %v194 = vrot.slane %v193, 4
    %v195 = vadd.f32 %v193, %v194
    %v196 = vrot.slane %v195, 2
    %v197 = vadd.f32 %v195, %v196
    %v198 = vrot.slane %v197, 1
    %v199 = vadd.f32 %v197, %v198
    %v200 = vmul.f32 %v199, %v79
    %v201 = vld [vmem:[%s3] sm:$0xf]
    %v202 = vld [vmem:[%s3 + $0x4] sm:$0xf]
    %v203 = vld [vmem:[%s3 + $0x8] sm:$0xf]
    %v204 = vld [vmem:[%s3 + $0xc] sm:$0xf]
    %v205 = vpack.c.bf16 %v200, %v200
    %v206 = vld [vmem:[%s4] sm:$0x1]
    %v211 = vunpack.c.l.b16 %v201
    %v212 = vunpack.c.l.b16 %v202
    %v213 = vunpack.c.l.b16 %v203
    %v214 = vunpack.c.l.b16 %v204
    %v215 = vpack.c.b16 %v212, %v211
    %v216 = vpack.c.b16 %v214, %v213
    %v220 = vsel %vm26, %v205, 0
    %222 = vmatprep.subr.bf16.mxu0 0
    %223 = vmatpush1.bf16.msra.mxu0 %v215
    %224 = vmatprep.subr.bf16.mxu0 0
    %225 = vmatpush1.bf16.msra.mxu0 %v216
    %226 = vmatprep.subr.bf16.mxu0 0
    %227 = vmatpush1.bf16.msra.mxu0 0
    %228 = vmatprep.subr.bf16.mxu0 0
    %229 = vmatpush1.bf16.msra.mxu0 0
    %230 = vmatprep.subr.bf16.mxu0 0
    %231 = vmatpush1.bf16.msra.mxu0 0
    %232 = vmatprep.subr.bf16.mxu0 0
    %233 = vmatpush1.bf16.msra.mxu0 0
    %234 = vmatprep.subr.bf16.mxu0 0
    %235 = vmatpush1.bf16.msra.mxu0 0
    %236 = vmatprep.subr.bf16.mxu0 0
    %237 = vmatpush1.bf16.msra.mxu0 0
    %238 = vmatprep.subr.bf16.mxu0 0
    %239 = vmatpush1.bf16.msra.mxu0 0
    %240 = vmatprep.subr.bf16.mxu0 0
    %241 = vmatpush1.bf16.msra.mxu0 0
    %242 = vmatprep.subr.bf16.mxu0 0
    %243 = vmatpush1.bf16.msra.mxu0 0
    %244 = vmatprep.subr.bf16.mxu0 0
    %245 = vmatpush1.bf16.msra.mxu0 0
    %246 = vmatprep.subr.bf16.mxu0 0
    %247 = vmatpush1.bf16.msra.mxu0 0
    %248 = vmatprep.subr.bf16.mxu0 0
    %249 = vmatpush1.bf16.msra.mxu0 0
    %250 = vmatprep.subr.bf16.mxu0 0
    %251 = vmatpush1.bf16.msra.mxu0 0
    %252 = vmatprep.subr.bf16.mxu0 0
    %253 = vmatpush1.bf16.msra.mxu0 0
    %254 = vmatprep.mubr.bf16.mxu0 0
    %255 = vmatmul.mubr.bf16.gmra.mrb[0].mxu0 %v220
    %v256 = vpop.f32.mrb[0].mxu0
    %v257 = vadd.f32 %v206, %v256
    %v258 = vpop.f32.mrb[0].mxu0
    %v259 = vpop.f32.mrb[0].mxu0
    %v260 = vpop.f32.mrb[0].mxu0
    %261 = vdwg.mxu0
    %262 = vst.msk [vmem:[#allocation2 + $0x1] sm:$0x1] %vm142, %v257
    // Predicated region
    $region22: #{luna_transformer_forward.5} parent=1 // pred_check
      _
    $region23: #{luna_transformer_forward.5} parent=1 // pred_check_branch
      %264 = sbr.rel (0) target = $region25
    $region24: #{luna_transformer_forward.5} parent=1 // pred_region
      %s266 = ssub.s32 32, 32
      %267 = vsyncadd [#allocation3], %s266
      %s269 = sshll.u32 [#allocation2], 4
      %s270 = int_to_ptr.vmem [resolvable:$true] %s269
      %272 = dma.vmem_to_hbm [thread:$0]  %s270, 32, %s5, [#allocation3]
    $region25: #{luna_transformer_forward.5} parent=1 // pred_fallthru
      _
    // Predicated region
    $region26: #{luna_transformer_forward.5} parent=1 // pred_check
      _
    $region27: #{luna_transformer_forward.5} parent=1 // pred_check_branch
      %274 = sbr.rel (0) target = $region29
    $region28: #{luna_transformer_forward.5} parent=1 // pred_region
      %275 = dma.done [#allocation3], 32
    $region29: #{luna_transformer_forward.5} parent=1 // pred_fallthru
      _
    %276 = vsyncpa [#allocation3], 1

// kernel: luna_transformer_forward.3
$region0: #{luna_transformer_forward.3}
  #allocation0 [shape = 'u32[]', space=smem, size = 0x4, offset = 0x4, fixed_abs, tag = 'smem constant byte address 0x4 - core index']
  #allocation1 [shape = 'u32[144,128]{1,0:T(1,128)}', space=vmem, size = 0x12000, scoped, tag = 'internal scratch']
  %s0 = inlined_call_operand.smem [shape: u32[30], index: -1, kind: input, shape index: {}]
  %s1 = sld [smem:[%s0]]
  %s2 = scalar_lea.smem %s0, 1
  %s3 = sld [smem:[%s2]]
  %s4 = scalar_lea.smem %s0, 2
  %s5 = sld [smem:[%s4]]
  %s6 = scalar_lea.smem %s0, 3
  %s7 = sld [smem:[%s6]]
  %s8 = scalar_lea.smem %s0, 4
  %s9 = sld [smem:[%s8]]
  %s10 = scalar_lea.smem %s0, 5
  %s11 = sld [smem:[%s10]]
  %s12 = scalar_lea.smem %s0, 6
  %s13 = sld [smem:[%s12]]
  %s14 = scalar_lea.smem %s0, 7
  %s15 = sld [smem:[%s14]]
  %s16 = scalar_lea.smem %s0, 8
  %s17 = sld [smem:[%s16]]
  %s18 = scalar_lea.smem %s0, 9
  %s19 = sld [smem:[%s18]]
  %s20 = scalar_lea.smem %s0, 10
  %s21 = sld [smem:[%s20]]
  %s22 = scalar_lea.smem %s0, 11
  %s23 = sld [smem:[%s22]]
  %s24 = scalar_lea.smem %s0, 12
  %s25 = sld [smem:[%s24]]
  %s26 = scalar_lea.smem %s0, 13
  %s27 = sld [smem:[%s26]]
  %s28 = scalar_lea.smem %s0, 14
  %s29 = sld [smem:[%s28]]
  %s30 = scalar_lea.smem %s0, 15
  %s31 = sld [smem:[%s30]]
  %s32 = scalar_lea.smem %s0, 16
  %s33 = sld [smem:[%s32]]
  %s34 = scalar_lea.smem %s0, 17
  %s35 = sld [smem:[%s34]]
  %s36 = scalar_lea.smem %s0, 18
  %s37 = sld [smem:[%s36]]
  %s38 = scalar_lea.smem %s0, 19
  %s39 = sld [smem:[%s38]]
  %s40 = scalar_lea.smem %s0, 20
  %s41 = sld [smem:[%s40]]
  %s42 = scalar_lea.smem %s0, 21
  %s43 = sld [smem:[%s42]]
  %s44 = scalar_lea.smem %s0, 22
  %s45 = sld [smem:[%s44]]
  %s46 = scalar_lea.smem %s0, 23
  %s47 = sld [smem:[%s46]]
  %s48 = scalar_lea.smem %s0, 24
  %s49 = sld [smem:[%s48]]
  %s50 = scalar_lea.smem %s0, 25
  %s51 = sld [smem:[%s50]]
  %s52 = scalar_lea.smem %s0, 26
  %s53 = sld [smem:[%s52]]
  %s54 = scalar_lea.smem %s0, 27
  %s55 = sld [smem:[%s54]]
  %s56 = scalar_lea.smem %s0, 28
  %s57 = sld [smem:[%s56]]
  %s58 = scalar_lea.smem %s0, 29
  %s59 = sld [smem:[%s58]]
  %60 = xla_tuple %s57, %s59
  %s61 = sld [smem:[#allocation0]]
  $region153: #{luna_transformer_forward.3} parent=0
    _
  %s63 = ssub.s32 1, %s61
  %s64 = scalar_select 0, %s63, %s61
  loop: start=0, step=1, limit=4
  $region2: #{luna_transformer_forward.3} parent=0 // loop_pre_header
    _
  $region3: #{luna_transformer_forward.3} parent=0 // loop_header
    %s66 = sphi 0, %s70
    %p67 = scmp.ge.s32.totalorder %s66, 4
    %s76 = sphi 0, %s78
    %s79 = sphi 0, %s76
    %s80 = sphi 0, %s79
    %s96 = sphi 0, %s80
    %s102 = sphi 0, %s104
    %s105 = sphi 0, %s102
    %s106 = sphi 0, %s105
    %s122 = sphi 0, %s106
    %s126 = sphi 0, %s126
    %s128 = sphi 0, %s126
    %s129 = sphi 0, %s128
    %s143 = sphi 0, %s129
    %s147 = sphi 0, %s147
    %s149 = sphi 0, %s147
    %s150 = sphi 0, %s149
    %s164 = sphi 0, %s150
    %s168 = sphi 0, %s168
    %s170 = sphi 0, %s168
    %s171 = sphi 0, %s170
    %s185 = sphi 0, %s171
    %s189 = sphi 0, %s189
    %s191 = sphi 0, %s189
    %s192 = sphi 0, %s191
    %s206 = sphi 0, %s192
    %s210 = sphi 0, %s210
    %s212 = sphi 0, %s210
    %s213 = sphi 0, %s212
    %s227 = sphi 0, %s213
    %s231 = sphi 0, %s231
    %s233 = sphi 0, %s231
    %s234 = sphi 0, %s233
    %s248 = sphi 0, %s234
    %s252 = sphi 0, %s252
    %s254 = sphi 0, %s252
    %s255 = sphi 0, %s254
    %s269 = sphi 0, %s255
    %s273 = sphi 0, %s273
    %s275 = sphi 0, %s273
    %s276 = sphi 0, %s275
    %s290 = sphi 0, %s276
    %s294 = sphi 0, %s294
    %s296 = sphi 0, %s294
    %s297 = sphi 0, %s296
    %s311 = sphi 0, %s297
    %s315 = sphi 0, %s315
    %s317 = sphi 0, %s315
    %s318 = sphi 0, %s317
    %s332 = sphi 0, %s318
    %s336 = sphi 0, %s336
    %s338 = sphi 0, %s336
    %s339 = sphi 0, %s338
    %s353 = sphi 0, %s339
    %s357 = sphi 0, %s357
    %s359 = sphi 0, %s357
    %s360 = sphi 0, %s359
    %s374 = sphi 0, %s360
    %s378 = sphi 0, %s378
    %s380 = sphi 0, %s378
    %s381 = sphi 0, %s380
    %s395 = sphi 0, %s381
    %s399 = sphi 0, %s399
    %s401 = sphi 0, %s399
    %s402 = sphi 0, %s401
    %s416 = sphi 0, %s402
    %s420 = sphi 0, %s420
    %s422 = sphi 0, %s420
    %s423 = sphi 0, %s422
    %s437 = sphi 0, %s423
    %s441 = sphi 0, %s441
    %s443 = sphi 0, %s441
    %s444 = sphi 0, %s443
    %s458 = sphi 0, %s444
    %s462 = sphi 0, %s462
    %s464 = sphi 0, %s462
    %s465 = sphi 0, %s464
    %s479 = sphi 0, %s465
    %s483 = sphi 0, %s483
    %s485 = sphi 0, %s483
    %s486 = sphi 0, %s485
    %s500 = sphi 0, %s486
    %s504 = sphi 0, %s504
    %s506 = sphi 0, %s504
    %s507 = sphi 0, %s506
    %s521 = sphi 0, %s507
    %s525 = sphi 0, %s525
    %s527 = sphi 0, %s525
    %s528 = sphi 0, %s527
    %s542 = sphi 0, %s528
    %s546 = sphi 0, %s546
    %s548 = sphi 0, %s546
    %s549 = sphi 0, %s548
    %s563 = sphi 0, %s549
    %s567 = sphi 0, %s567
    %s569 = sphi 0, %s567
    %s570 = sphi 0, %s569
    %s584 = sphi 0, %s570
    %s588 = sphi 0, %s588
    %s590 = sphi 0, %s588
    %s591 = sphi 0, %s590
    %s605 = sphi 0, %s591
    %s609 = sphi 0, %s609
    %s611 = sphi 0, %s609
    %s612 = sphi 0, %s611
    %s626 = sphi 0, %s612
    %s630 = sphi 0, %s630
    %s632 = sphi 0, %s630
    %s633 = sphi 0, %s632
    %s647 = sphi 0, %s633
    %s651 = sphi 0, %s651
    %s653 = sphi 0, %s651
    %s654 = sphi 0, %s653
    %s668 = sphi 0, %s654
    %s674 = sphi 0, %s676
    %s677 = sphi 0, %s674
    %s678 = sphi 0, %s677
    %s694 = sphi 0, %s678
    %s700 = sphi 0, %s702
    %s703 = sphi 0, %s700
    %s704 = sphi 0, %s703
    %s720 = sphi 0, %s704
  $region4: #{luna_transformer_forward.3} parent=0 // loop_header_branch
    %69 = sbr.rel (%p67) target = $region8
  $region5: #{luna_transformer_forward.3} parent=0 // loop_body
    %s71 = ssub.s32 %s66, 1
    %s72 = ssub.s32 %s66, 2
    %s73 = sadd.s32 %s66, 1
    %s74 = ssub.s32 %s66, %s73
    %p75 = scmp.eq.s32.totalorder %s74, 0
    %s77 = sadd.s32 %s76, 1
    %s78 = scalar_select %p75, %s76, %s77
    %p81 = pneg %p75
    %p82 = scmp.eq.s32.totalorder %s66, 1
    %p83 = por %p81, %p82
    %p84 = scmp.ne.s32.totalorder %s76, %s79
    %p85 = scmp.eq.s32.totalorder %s66, 0
    %p86 = por %p84, %p85
    %p87 = scmp.ne.s32.totalorder %s76, %s79
    %p88 = scmp.eq.s32.totalorder %s71, 1
    %p89 = por %p87, %p88
    %p90 = scmp.ne.s32.totalorder %s79, %s80
    %p91 = scmp.eq.s32.totalorder %s71, 0
    %p92 = por %p90, %p91
    %p93 = scmp.ne.s32.totalorder %s79, %s80
    %p94 = scmp.eq.s32.totalorder %s72, 1
    %p95 = por %p93, %p94
    %p97 = scmp.ne.s32.totalorder %s80, %s96
    %p98 = scmp.eq.s32.totalorder %s72, 0
    %p99 = por %p97, %p98
    %s100 = ssub.s32 %s66, %s73
    %p101 = scmp.eq.s32.totalorder %s100, 0
    %s103 = sadd.s32 %s102, 1
    %s104 = scalar_select %p101, %s102, %s103
    %p107 = pneg %p101
    %p108 = scmp.eq.s32.totalorder %s66, 1
    %p109 = por %p107, %p108
    %p110 = scmp.ne.s32.totalorder %s102, %s105
    %p111 = scmp.eq.s32.totalorder %s66, 0
    %p112 = por %p110, %p111
    %p113 = scmp.ne.s32.totalorder %s102, %s105
    %p114 = scmp.eq.s32.totalorder %s71, 1
    %p115 = por %p113, %p114
    %p116 = scmp.ne.s32.totalorder %s105, %s106
    %p117 = scmp.eq.s32.totalorder %s71, 0
    %p118 = por %p116, %p117
    %p119 = scmp.ne.s32.totalorder %s105, %s106
    %p120 = scmp.eq.s32.totalorder %s72, 1
    %p121 = por %p119, %p120
    %p123 = scmp.ne.s32.totalorder %s106, %s122
    %p124 = scmp.eq.s32.totalorder %s72, 0
    %p125 = por %p123, %p124
    %s127 = sadd.s32 %s126, 1
    %p130 = scmp.eq.s32.totalorder %s66, 1
    %p131 = scmp.ne.s32.totalorder %s126, %s128
    %p132 = scmp.eq.s32.totalorder %s66, 0
    %p133 = por %p131, %p132
    %p134 = scmp.ne.s32.totalorder %s126, %s128
    %p135 = scmp.eq.s32.totalorder %s71, 1
    %p136 = por %p134, %p135
    %p137 = scmp.ne.s32.totalorder %s128, %s129
    %p138 = scmp.eq.s32.totalorder %s71, 0
    %p139 = por %p137, %p138
    %p140 = scmp.ne.s32.totalorder %s128, %s129
    %p141 = scmp.eq.s32.totalorder %s72, 1
    %p142 = por %p140, %p141
    %p144 = scmp.ne.s32.totalorder %s129, %s143
    %p145 = scmp.eq.s32.totalorder %s72, 0
    %p146 = por %p144, %p145
    %s148 = sadd.s32 %s147, 1
    %p151 = scmp.eq.s32.totalorder %s66, 1
    %p152 = scmp.ne.s32.totalorder %s147, %s149
    %p153 = scmp.eq.s32.totalorder %s66, 0
    %p154 = por %p152, %p153
    %p155 = scmp.ne.s32.totalorder %s147, %s149
    %p156 = scmp.eq.s32.totalorder %s71, 1
    %p157 = por %p155, %p156
    %p158 = scmp.ne.s32.totalorder %s149, %s150
    %p159 = scmp.eq.s32.totalorder %s71, 0
    %p160 = por %p158, %p159
    %p161 = scmp.ne.s32.totalorder %s149, %s150
    %p162 = scmp.eq.s32.totalorder %s72, 1
    %p163 = por %p161, %p162
    %p165 = scmp.ne.s32.totalorder %s150, %s164
    %p166 = scmp.eq.s32.totalorder %s72, 0
    %p167 = por %p165, %p166
    %s169 = sadd.s32 %s168, 1
    %p172 = scmp.eq.s32.totalorder %s66, 1
    %p173 = scmp.ne.s32.totalorder %s168, %s170
    %p174 = scmp.eq.s32.totalorder %s66, 0
    %p175 = por %p173, %p174
    %p176 = scmp.ne.s32.totalorder %s168, %s170
    %p177 = scmp.eq.s32.totalorder %s71, 1
    %p178 = por %p176, %p177
    %p179 = scmp.ne.s32.totalorder %s170, %s171
    %p180 = scmp.eq.s32.totalorder %s71, 0
    %p181 = por %p179, %p180
    %p182 = scmp.ne.s32.totalorder %s170, %s171
    %p183 = scmp.eq.s32.totalorder %s72, 1
    %p184 = por %p182, %p183
    %p186 = scmp.ne.s32.totalorder %s171, %s185
    %p187 = scmp.eq.s32.totalorder %s72, 0
    %p188 = por %p186, %p187
    %s190 = sadd.s32 %s189, 1
    %p193 = scmp.eq.s32.totalorder %s66, 1
    %p194 = scmp.ne.s32.totalorder %s189, %s191
    %p195 = scmp.eq.s32.totalorder %s66, 0
    %p196 = por %p194, %p195
    %p197 = scmp.ne.s32.totalorder %s189, %s191
    %p198 = scmp.eq.s32.totalorder %s71, 1
    %p199 = por %p197, %p198
    %p200 = scmp.ne.s32.totalorder %s191, %s192
    %p201 = scmp.eq.s32.totalorder %s71, 0
    %p202 = por %p200, %p201
    %p203 = scmp.ne.s32.totalorder %s191, %s192
    %p204 = scmp.eq.s32.totalorder %s72, 1
    %p205 = por %p203, %p204
    %p207 = scmp.ne.s32.totalorder %s192, %s206
    %p208 = scmp.eq.s32.totalorder %s72, 0
    %p209 = por %p207, %p208
    %s211 = sadd.s32 %s210, 1
    %p214 = scmp.eq.s32.totalorder %s66, 1
    %p215 = scmp.ne.s32.totalorder %s210, %s212
    %p216 = scmp.eq.s32.totalorder %s66, 0
    %p217 = por %p215, %p216
    %p218 = scmp.ne.s32.totalorder %s210, %s212
    %p219 = scmp.eq.s32.totalorder %s71, 1
    %p220 = por %p218, %p219
    %p221 = scmp.ne.s32.totalorder %s212, %s213
    %p222 = scmp.eq.s32.totalorder %s71, 0
    %p223 = por %p221, %p222
    %p224 = scmp.ne.s32.totalorder %s212, %s213
    %p225 = scmp.eq.s32.totalorder %s72, 1
    %p226 = por %p224, %p225
    %p228 = scmp.ne.s32.totalorder %s213, %s227
    %p229 = scmp.eq.s32.totalorder %s72, 0
    %p230 = por %p228, %p229
    %s232 = sadd.s32 %s231, 1
    %p235 = scmp.eq.s32.totalorder %s66, 1
    %p236 = scmp.ne.s32.totalorder %s231, %s233
    %p237 = scmp.eq.s32.totalorder %s66, 0
    %p238 = por %p236, %p237
    %p239 = scmp.ne.s32.totalorder %s231, %s233
    %p240 = scmp.eq.s32.totalorder %s71, 1
    %p241 = por %p239, %p240
    %p242 = scmp.ne.s32.totalorder %s233, %s234
    %p243 = scmp.eq.s32.totalorder %s71, 0
    %p244 = por %p242, %p243
    %p245 = scmp.ne.s32.totalorder %s233, %s234
    %p246 = scmp.eq.s32.totalorder %s72, 1
    %p247 = por %p245, %p246
    %p249 = scmp.ne.s32.totalorder %s234, %s248
    %p250 = scmp.eq.s32.totalorder %s72, 0
    %p251 = por %p249, %p250
    %s253 = sadd.s32 %s252, 1
    %p256 = scmp.eq.s32.totalorder %s66, 1
    %p257 = scmp.ne.s32.totalorder %s252, %s254
    %p258 = scmp.eq.s32.totalorder %s66, 0
    %p259 = por %p257, %p258
    %p260 = scmp.ne.s32.totalorder %s252, %s254
    %p261 = scmp.eq.s32.totalorder %s71, 1
    %p262 = por %p260, %p261
    %p263 = scmp.ne.s32.totalorder %s254, %s255
    %p264 = scmp.eq.s32.totalorder %s71, 0
    %p265 = por %p263, %p264
    %p266 = scmp.ne.s32.totalorder %s254, %s255
    %p267 = scmp.eq.s32.totalorder %s72, 1
    %p268 = por %p266, %p267
    %p270 = scmp.ne.s32.totalorder %s255, %s269
    %p271 = scmp.eq.s32.totalorder %s72, 0
    %p272 = por %p270, %p271
    %s274 = sadd.s32 %s273, 1
    %p277 = scmp.eq.s32.totalorder %s66, 1
    %p278 = scmp.ne.s32.totalorder %s273, %s275
    %p279 = scmp.eq.s32.totalorder %s66, 0
    %p280 = por %p278, %p279
    %p281 = scmp.ne.s32.totalorder %s273, %s275
    %p282 = scmp.eq.s32.totalorder %s71, 1
    %p283 = por %p281, %p282
    %p284 = scmp.ne.s32.totalorder %s275, %s276
    %p285 = scmp.eq.s32.totalorder %s71, 0
    %p286 = por %p284, %p285
    %p287 = scmp.ne.s32.totalorder %s275, %s276
    %p288 = scmp.eq.s32.totalorder %s72, 1
    %p289 = por %p287, %p288
    %p291 = scmp.ne.s32.totalorder %s276, %s290
    %p292 = scmp.eq.s32.totalorder %s72, 0
    %p293 = por %p291, %p292
    %s295 = sadd.s32 %s294, 1
    %p298 = scmp.eq.s32.totalorder %s66, 1
    %p299 = scmp.ne.s32.totalorder %s294, %s296
    %p300 = scmp.eq.s32.totalorder %s66, 0
    %p301 = por %p299, %p300
    %p302 = scmp.ne.s32.totalorder %s294, %s296
    %p303 = scmp.eq.s32.totalorder %s71, 1
    %p304 = por %p302, %p303
    %p305 = scmp.ne.s32.totalorder %s296, %s297
    %p306 = scmp.eq.s32.totalorder %s71, 0
    %p307 = por %p305, %p306
    %p308 = scmp.ne.s32.totalorder %s296, %s297
    %p309 = scmp.eq.s32.totalorder %s72, 1
    %p310 = por %p308, %p309
    %p312 = scmp.ne.s32.totalorder %s297, %s311
    %p313 = scmp.eq.s32.totalorder %s72, 0
    %p314 = por %p312, %p313
    %s316 = sadd.s32 %s315, 1
    %p319 = scmp.eq.s32.totalorder %s66, 1
    %p320 = scmp.ne.s32.totalorder %s315, %s317
    %p321 = scmp.eq.s32.totalorder %s66, 0
    %p322 = por %p320, %p321
    %p323 = scmp.ne.s32.totalorder %s315, %s317
    %p324 = scmp.eq.s32.totalorder %s71, 1
    %p325 = por %p323, %p324
    %p326 = scmp.ne.s32.totalorder %s317, %s318
    %p327 = scmp.eq.s32.totalorder %s71, 0
    %p328 = por %p326, %p327
    %p329 = scmp.ne.s32.totalorder %s317, %s318
    %p330 = scmp.eq.s32.totalorder %s72, 1
    %p331 = por %p329, %p330
    %p333 = scmp.ne.s32.totalorder %s318, %s332
    %p334 = scmp.eq.s32.totalorder %s72, 0
    %p335 = por %p333, %p334
    %s337 = sadd.s32 %s336, 1
    %p340 = scmp.eq.s32.totalorder %s66, 1
    %p341 = scmp.ne.s32.totalorder %s336, %s338
    %p342 = scmp.eq.s32.totalorder %s66, 0
    %p343 = por %p341, %p342
    %p344 = scmp.ne.s32.totalorder %s336, %s338
    %p345 = scmp.eq.s32.totalorder %s71, 1
    %p346 = por %p344, %p345
    %p347 = scmp.ne.s32.totalorder %s338, %s339
    %p348 = scmp.eq.s32.totalorder %s71, 0
    %p349 = por %p347, %p348
    %p350 = scmp.ne.s32.totalorder %s338, %s339
    %p351 = scmp.eq.s32.totalorder %s72, 1
    %p352 = por %p350, %p351
    %p354 = scmp.ne.s32.totalorder %s339, %s353
    %p355 = scmp.eq.s32.totalorder %s72, 0
    %p356 = por %p354, %p355
    %s358 = sadd.s32 %s357, 1
    %p361 = scmp.eq.s32.totalorder %s66, 1
    %p362 = scmp.ne.s32.totalorder %s357, %s359
    %p363 = scmp.eq.s32.totalorder %s66, 0
    %p364 = por %p362, %p363
    %p365 = scmp.ne.s32.totalorder %s357, %s359
    %p366 = scmp.eq.s32.totalorder %s71, 1
    %p367 = por %p365, %p366
    %p368 = scmp.ne.s32.totalorder %s359, %s360
    %p369 = scmp.eq.s32.totalorder %s71, 0
    %p370 = por %p368, %p369
    %p371 = scmp.ne.s32.totalorder %s359, %s360
    %p372 = scmp.eq.s32.totalorder %s72, 1
    %p373 = por %p371, %p372
    %p375 = scmp.ne.s32.totalorder %s360, %s374
    %p376 = scmp.eq.s32.totalorder %s72, 0
    %p377 = por %p375, %p376
    %s379 = sadd.s32 %s378, 1
    %p382 = scmp.eq.s32.totalorder %s66, 1
    %p383 = scmp.ne.s32.totalorder %s378, %s380
    %p384 = scmp.eq.s32.totalorder %s66, 0
    %p385 = por %p383, %p384
    %p386 = scmp.ne.s32.totalorder %s378, %s380
    %p387 = scmp.eq.s32.totalorder %s71, 1
    %p388 = por %p386, %p387
    %p389 = scmp.ne.s32.totalorder %s380, %s381
    %p390 = scmp.eq.s32.totalorder %s71, 0
    %p391 = por %p389, %p390
    %p392 = scmp.ne.s32.totalorder %s380, %s381
    %p393 = scmp.eq.s32.totalorder %s72, 1
    %p394 = por %p392, %p393
    %p396 = scmp.ne.s32.totalorder %s381, %s395
    %p397 = scmp.eq.s32.totalorder %s72, 0
    %p398 = por %p396, %p397
    %s400 = sadd.s32 %s399, 1
    %p403 = scmp.eq.s32.totalorder %s66, 1
    %p404 = scmp.ne.s32.totalorder %s399, %s401
    %p405 = scmp.eq.s32.totalorder %s66, 0
    %p406 = por %p404, %p405
    %p407 = scmp.ne.s32.totalorder %s399, %s401
    %p408 = scmp.eq.s32.totalorder %s71, 1
    %p409 = por %p407, %p408
    %p410 = scmp.ne.s32.totalorder %s401, %s402
    %p411 = scmp.eq.s32.totalorder %s71, 0
    %p412 = por %p410, %p411
    %p413 = scmp.ne.s32.totalorder %s401, %s402
    %p414 = scmp.eq.s32.totalorder %s72, 1
    %p415 = por %p413, %p414
    %p417 = scmp.ne.s32.totalorder %s402, %s416
    %p418 = scmp.eq.s32.totalorder %s72, 0
    %p419 = por %p417, %p418
    %s421 = sadd.s32 %s420, 1
    %p424 = scmp.eq.s32.totalorder %s66, 1
    %p425 = scmp.ne.s32.totalorder %s420, %s422
    %p426 = scmp.eq.s32.totalorder %s66, 0
    %p427 = por %p425, %p426
    %p428 = scmp.ne.s32.totalorder %s420, %s422
    %p429 = scmp.eq.s32.totalorder %s71, 1
    %p430 = por %p428, %p429
    %p431 = scmp.ne.s32.totalorder %s422, %s423
    %p432 = scmp.eq.s32.totalorder %s71, 0
    %p433 = por %p431, %p432
    %p434 = scmp.ne.s32.totalorder %s422, %s423
    %p435 = scmp.eq.s32.totalorder %s72, 1
    %p436 = por %p434, %p435
    %p438 = scmp.ne.s32.totalorder %s423, %s437
    %p439 = scmp.eq.s32.totalorder %s72, 0
    %p440 = por %p438, %p439
    %s442 = sadd.s32 %s441, 1
    %p445 = scmp.eq.s32.totalorder %s66, 1
    %p446 = scmp.ne.s32.totalorder %s441, %s443
    %p447 = scmp.eq.s32.totalorder %s66, 0
    %p448 = por %p446, %p447
    %p449 = scmp.ne.s32.totalorder %s441, %s443
    %p450 = scmp.eq.s32.totalorder %s71, 1
    %p451 = por %p449, %p450
    %p452 = scmp.ne.s32.totalorder %s443, %s444
    %p453 = scmp.eq.s32.totalorder %s71, 0
    %p454 = por %p452, %p453
    %p455 = scmp.ne.s32.totalorder %s443, %s444
    %p456 = scmp.eq.s32.totalorder %s72, 1
    %p457 = por %p455, %p456
    %p459 = scmp.ne.s32.totalorder %s444, %s458
    %p460 = scmp.eq.s32.totalorder %s72, 0
    %p461 = por %p459, %p460
    %s463 = sadd.s32 %s462, 1
    %p466 = scmp.eq.s32.totalorder %s66, 1
    %p467 = scmp.ne.s32.totalorder %s462, %s464
    %p468 = scmp.eq.s32.totalorder %s66, 0
    %p469 = por %p467, %p468
    %p470 = scmp.ne.s32.totalorder %s462, %s464
    %p471 = scmp.eq.s32.totalorder %s71, 1
    %p472 = por %p470, %p471
    %p473 = scmp.ne.s32.totalorder %s464, %s465
    %p474 = scmp.eq.s32.totalorder %s71, 0
    %p475 = por %p473, %p474
    %p476 = scmp.ne.s32.totalorder %s464, %s465
    %p477 = scmp.eq.s32.totalorder %s72, 1
    %p478 = por %p476, %p477
    %p480 = scmp.ne.s32.totalorder %s465, %s479
    %p481 = scmp.eq.s32.totalorder %s72, 0
    %p482 = por %p480, %p481
    %s484 = sadd.s32 %s483, 1
    %p487 = scmp.eq.s32.totalorder %s66, 1
    %p488 = scmp.ne.s32.totalorder %s483, %s485
    %p489 = scmp.eq.s32.totalorder %s66, 0
    %p490 = por %p488, %p489
    %p491 = scmp.ne.s32.totalorder %s483, %s485
    %p492 = scmp.eq.s32.totalorder %s71, 1
    %p493 = por %p491, %p492
    %p494 = scmp.ne.s32.totalorder %s485, %s486
    %p495 = scmp.eq.s32.totalorder %s71, 0
    %p496 = por %p494, %p495
    %p497 = scmp.ne.s32.totalorder %s485, %s486
    %p498 = scmp.eq.s32.totalorder %s72, 1
    %p499 = por %p497, %p498
    %p501 = scmp.ne.s32.totalorder %s486, %s500
    %p502 = scmp.eq.s32.totalorder %s72, 0
    %p503 = por %p501, %p502
    %s505 = sadd.s32 %s504, 1
    %p508 = scmp.eq.s32.totalorder %s66, 1
    %p509 = scmp.ne.s32.totalorder %s504, %s506
    %p510 = scmp.eq.s32.totalorder %s66, 0
    %p511 = por %p509, %p510
    %p512 = scmp.ne.s32.totalorder %s504, %s506
    %p513 = scmp.eq.s32.totalorder %s71, 1
    %p514 = por %p512, %p513
    %p515 = scmp.ne.s32.totalorder %s506, %s507
    %p516 = scmp.eq.s32.totalorder %s71, 0
    %p517 = por %p515, %p516
    %p518 = scmp.ne.s32.totalorder %s506, %s507
    %p519 = scmp.eq.s32.totalorder %s72, 1
    %p520 = por %p518, %p519
    %p522 = scmp.ne.s32.totalorder %s507, %s521
    %p523 = scmp.eq.s32.totalorder %s72, 0
    %p524 = por %p522, %p523
    %s526 = sadd.s32 %s525, 1
    %p529 = scmp.eq.s32.totalorder %s66, 1
    %p530 = scmp.ne.s32.totalorder %s525, %s527
    %p531 = scmp.eq.s32.totalorder %s66, 0
    %p532 = por %p530, %p531
    %p533 = scmp.ne.s32.totalorder %s525, %s527
    %p534 = scmp.eq.s32.totalorder %s71, 1
    %p535 = por %p533, %p534
    %p536 = scmp.ne.s32.totalorder %s527, %s528
    %p537 = scmp.eq.s32.totalorder %s71, 0
    %p538 = por %p536, %p537
    %p539 = scmp.ne.s32.totalorder %s527, %s528
    %p540 = scmp.eq.s32.totalorder %s72, 1
    %p541 = por %p539, %p540
    %p543 = scmp.ne.s32.totalorder %s528, %s542
    %p544 = scmp.eq.s32.totalorder %s72, 0
    %p545 = por %p543, %p544
    %s547 = sadd.s32 %s546, 1
    %p550 = scmp.eq.s32.totalorder %s66, 1
    %p551 = scmp.ne.s32.totalorder %s546, %s548
    %p552 = scmp.eq.s32.totalorder %s66, 0
    %p553 = por %p551, %p552
    %p554 = scmp.ne.s32.totalorder %s546, %s548
    %p555 = scmp.eq.s32.totalorder %s71, 1
    %p556 = por %p554, %p555
    %p557 = scmp.ne.s32.totalorder %s548, %s549
    %p558 = scmp.eq.s32.totalorder %s71, 0
    %p559 = por %p557, %p558
    %p560 = scmp.ne.s32.totalorder %s548, %s549
    %p561 = scmp.eq.s32.totalorder %s72, 1
    %p562 = por %p560, %p561
    %p564 = scmp.ne.s32.totalorder %s549, %s563
    %p565 = scmp.eq.s32.totalorder %s72, 0
    %p566 = por %p564, %p565
    %s568 = sadd.s32 %s567, 1
    %p571 = scmp.eq.s32.totalorder %s66, 1
    %p572 = scmp.ne.s32.totalorder %s567, %s569
    %p573 = scmp.eq.s32.totalorder %s66, 0
    %p574 = por %p572, %p573
    %p575 = scmp.ne.s32.totalorder %s567, %s569
    %p576 = scmp.eq.s32.totalorder %s71, 1
    %p577 = por %p575, %p576
    %p578 = scmp.ne.s32.totalorder %s569, %s570
    %p579 = scmp.eq.s32.totalorder %s71, 0
    %p580 = por %p578, %p579
    %p581 = scmp.ne.s32.totalorder %s569, %s570
    %p582 = scmp.eq.s32.totalorder %s72, 1
    %p583 = por %p581, %p582
    %p585 = scmp.ne.s32.totalorder %s570, %s584
    %p586 = scmp.eq.s32.totalorder %s72, 0
    %p587 = por %p585, %p586
    %s589 = sadd.s32 %s588, 1
    %p592 = scmp.eq.s32.totalorder %s66, 1
    %p593 = scmp.ne.s32.totalorder %s588, %s590
    %p594 = scmp.eq.s32.totalorder %s66, 0
    %p595 = por %p593, %p594
    %p596 = scmp.ne.s32.totalorder %s588, %s590
    %p597 = scmp.eq.s32.totalorder %s71, 1
    %p598 = por %p596, %p597
    %p599 = scmp.ne.s32.totalorder %s590, %s591
    %p600 = scmp.eq.s32.totalorder %s71, 0
    %p601 = por %p599, %p600
    %p602 = scmp.ne.s32.totalorder %s590, %s591
    %p603 = scmp.eq.s32.totalorder %s72, 1
    %p604 = por %p602, %p603
    %p606 = scmp.ne.s32.totalorder %s591, %s605
    %p607 = scmp.eq.s32.totalorder %s72, 0
    %p608 = por %p606, %p607
    %s610 = sadd.s32 %s609, 1
    %p613 = scmp.eq.s32.totalorder %s66, 1
    %p614 = scmp.ne.s32.totalorder %s609, %s611
    %p615 = scmp.eq.s32.totalorder %s66, 0
    %p616 = por %p614, %p615
    %p617 = scmp.ne.s32.totalorder %s609, %s611
    %p618 = scmp.eq.s32.totalorder %s71, 1
    %p619 = por %p617, %p618
    %p620 = scmp.ne.s32.totalorder %s611, %s612
    %p621 = scmp.eq.s32.totalorder %s71, 0
    %p622 = por %p620, %p621
    %p623 = scmp.ne.s32.totalorder %s611, %s612
    %p624 = scmp.eq.s32.totalorder %s72, 1
    %p625 = por %p623, %p624
    %p627 = scmp.ne.s32.totalorder %s612, %s626
    %p628 = scmp.eq.s32.totalorder %s72, 0
    %p629 = por %p627, %p628
    %s631 = sadd.s32 %s630, 1
    %p634 = scmp.eq.s32.totalorder %s66, 1
    %p635 = scmp.ne.s32.totalorder %s630, %s632
    %p636 = scmp.eq.s32.totalorder %s66, 0
    %p637 = por %p635, %p636
    %p638 = scmp.ne.s32.totalorder %s630, %s632
    %p639 = scmp.eq.s32.totalorder %s71, 1
    %p640 = por %p638, %p639
    %p641 = scmp.ne.s32.totalorder %s632, %s633
    %p642 = scmp.eq.s32.totalorder %s71, 0
    %p643 = por %p641, %p642
    %p644 = scmp.ne.s32.totalorder %s632, %s633
    %p645 = scmp.eq.s32.totalorder %s72, 1
    %p646 = por %p644, %p645
    %p648 = scmp.ne.s32.totalorder %s633, %s647
    %p649 = scmp.eq.s32.totalorder %s72, 0
    %p650 = por %p648, %p649
    %s652 = sadd.s32 %s651, 1
    %p655 = scmp.eq.s32.totalorder %s66, 1
    %p656 = scmp.ne.s32.totalorder %s651, %s653
    %p657 = scmp.eq.s32.totalorder %s66, 0
    %p658 = por %p656, %p657
    %p659 = scmp.ne.s32.totalorder %s651, %s653
    %p660 = scmp.eq.s32.totalorder %s71, 1
    %p661 = por %p659, %p660
    %p662 = scmp.ne.s32.totalorder %s653, %s654
    %p663 = scmp.eq.s32.totalorder %s71, 0
    %p664 = por %p662, %p663
    %p665 = scmp.ne.s32.totalorder %s653, %s654
    %p666 = scmp.eq.s32.totalorder %s72, 1
    %p667 = por %p665, %p666
    %p669 = scmp.ne.s32.totalorder %s654, %s668
    %p670 = scmp.eq.s32.totalorder %s72, 0
    %p671 = por %p669, %p670
    %s672 = ssub.s32 %s66, %s73
    %p673 = scmp.eq.s32.totalorder %s672, 0
    %s675 = sadd.s32 %s674, 1
    %s676 = scalar_select %p673, %s674, %s675
    %p679 = pneg %p673
    %p680 = scmp.eq.s32.totalorder %s66, 1
    %p681 = por %p679, %p680
    %p682 = scmp.ne.s32.totalorder %s674, %s677
    %p683 = scmp.eq.s32.totalorder %s66, 0
    %p684 = por %p682, %p683
    %p685 = scmp.ne.s32.totalorder %s674, %s677
    %p686 = scmp.eq.s32.totalorder %s71, 1
    %p687 = por %p685, %p686
    %p688 = scmp.ne.s32.totalorder %s677, %s678
    %p689 = scmp.eq.s32.totalorder %s71, 0
    %p690 = por %p688, %p689
    %p691 = scmp.ne.s32.totalorder %s677, %s678
    %p692 = scmp.eq.s32.totalorder %s72, 1
    %p693 = por %p691, %p692
    %p695 = scmp.ne.s32.totalorder %s678, %s694
    %p696 = scmp.eq.s32.totalorder %s72, 0
    %p697 = por %p695, %p696
    %s698 = ssub.s32 %s66, %s73
    %p699 = scmp.eq.s32.totalorder %s698, 0
    %s701 = sadd.s32 %s700, 1
    %s702 = scalar_select %p699, %s700, %s701
    %p705 = pneg %p699
    %p706 = scmp.eq.s32.totalorder %s66, 1
    %p707 = por %p705, %p706
    %p708 = scmp.ne.s32.totalorder %s700, %s703
    %p709 = scmp.eq.s32.totalorder %s66, 0
    %p710 = por %p708, %p709
    %p711 = scmp.ne.s32.totalorder %s700, %s703
    %p712 = scmp.eq.s32.totalorder %s71, 1
    %p713 = por %p711, %p712
    %p714 = scmp.ne.s32.totalorder %s703, %s704
    %p715 = scmp.eq.s32.totalorder %s71, 0
    %p716 = por %p714, %p715
    %p717 = scmp.ne.s32.totalorder %s703, %s704
    %p718 = scmp.eq.s32.totalorder %s72, 1
    %p719 = por %p717, %p718
    %p721 = scmp.ne.s32.totalorder %s704, %s720
    %p722 = scmp.eq.s32.totalorder %s72, 0
    %p723 = por %p721, %p722
    %p724 = scmp.le.s32.totalorder 1, %s66
    %p725 = scmp.lt.s32.totalorder %s66, 3
    %p726 = pnand %p724, %p725
    %p727 = pneg %p726
    // Predicated region
    $region9: #{luna_transformer_forward.3} parent=5 // pred_check
      _
    $region10: #{luna_transformer_forward.3} parent=5 // pred_check_branch
      %729 = sbr.rel (%p726) target = $region12
    $region11: #{luna_transformer_forward.3} parent=5 // pred_region
      %s730 = ssub.s32 %s66, 1
      // Predicated region
      $region13: #{luna_transformer_forward.3} parent=11 // pred_check
        %p731 = pneg %p139
      $region14: #{luna_transformer_forward.3} parent=11 // pred_check_branch
        %733 = sbr.rel (%p731) target = $region16
      $region15: #{luna_transformer_forward.3} parent=11 // pred_region
        _
      $region16: #{luna_transformer_forward.3} parent=11 // pred_fallthru
        _
      // Predicated region
      $region17: #{luna_transformer_forward.3} parent=11 // pred_check
        %p734 = pneg %p160
      $region18: #{luna_transformer_forward.3} parent=11 // pred_check_branch
        %736 = sbr.rel (%p734) target = $region20
      $region19: #{luna_transformer_forward.3} parent=11 // pred_region
        _
      $region20: #{luna_transformer_forward.3} parent=11 // pred_fallthru
        _
      // Predicated region
      $region21: #{luna_transformer_forward.3} parent=11 // pred_check
        %p737 = pneg %p181
      $region22: #{luna_transformer_forward.3} parent=11 // pred_check_branch
        %739 = sbr.rel (%p737) target = $region24
      $region23: #{luna_transformer_forward.3} parent=11 // pred_region
        _
      $region24: #{luna_transformer_forward.3} parent=11 // pred_fallthru
        _
      // Predicated region
      $region25: #{luna_transformer_forward.3} parent=11 // pred_check
        %p740 = pneg %p202
      $region26: #{luna_transformer_forward.3} parent=11 // pred_check_branch
        %742 = sbr.rel (%p740) target = $region28
      $region27: #{luna_transformer_forward.3} parent=11 // pred_region
        _
      $region28: #{luna_transformer_forward.3} parent=11 // pred_fallthru
        _
      // Predicated region
      $region29: #{luna_transformer_forward.3} parent=11 // pred_check
        %p743 = pneg %p223
      $region30: #{luna_transformer_forward.3} parent=11 // pred_check_branch
        %745 = sbr.rel (%p743) target = $region32
      $region31: #{luna_transformer_forward.3} parent=11 // pred_region
        _
      $region32: #{luna_transformer_forward.3} parent=11 // pred_fallthru
        _
      // Predicated region
      $region33: #{luna_transformer_forward.3} parent=11 // pred_check
        %p746 = pneg %p244
      $region34: #{luna_transformer_forward.3} parent=11 // pred_check_branch
        %748 = sbr.rel (%p746) target = $region36
      $region35: #{luna_transformer_forward.3} parent=11 // pred_region
        _
      $region36: #{luna_transformer_forward.3} parent=11 // pred_fallthru
        _
      // Predicated region
      $region37: #{luna_transformer_forward.3} parent=11 // pred_check
        %p749 = pneg %p265
      $region38: #{luna_transformer_forward.3} parent=11 // pred_check_branch
        %751 = sbr.rel (%p749) target = $region40
      $region39: #{luna_transformer_forward.3} parent=11 // pred_region
        _
      $region40: #{luna_transformer_forward.3} parent=11 // pred_fallthru
        _
      // Predicated region
      $region41: #{luna_transformer_forward.3} parent=11 // pred_check
        %p752 = pneg %p286
      $region42: #{luna_transformer_forward.3} parent=11 // pred_check_branch
        %754 = sbr.rel (%p752) target = $region44
      $region43: #{luna_transformer_forward.3} parent=11 // pred_region
        _
      $region44: #{luna_transformer_forward.3} parent=11 // pred_fallthru
        _
      // Predicated region
      $region45: #{luna_transformer_forward.3} parent=11 // pred_check
        %p755 = pneg %p307
      $region46: #{luna_transformer_forward.3} parent=11 // pred_check_branch
        %757 = sbr.rel (%p755) target = $region48
      $region47: #{luna_transformer_forward.3} parent=11 // pred_region
        _
      $region48: #{luna_transformer_forward.3} parent=11 // pred_fallthru
        _
      // Predicated region
      $region49: #{luna_transformer_forward.3} parent=11 // pred_check
        %p758 = pneg %p328
      $region50: #{luna_transformer_forward.3} parent=11 // pred_check_branch
        %760 = sbr.rel (%p758) target = $region52
      $region51: #{luna_transformer_forward.3} parent=11 // pred_region
        _
      $region52: #{luna_transformer_forward.3} parent=11 // pred_fallthru
        _
      // Predicated region
      $region53: #{luna_transformer_forward.3} parent=11 // pred_check
        %p761 = pneg %p349
      $region54: #{luna_transformer_forward.3} parent=11 // pred_check_branch
        %763 = sbr.rel (%p761) target = $region56
      $region55: #{luna_transformer_forward.3} parent=11 // pred_region
        _
      $region56: #{luna_transformer_forward.3} parent=11 // pred_fallthru
        _
      // Predicated region
      $region57: #{luna_transformer_forward.3} parent=11 // pred_check
        %p764 = pneg %p370
      $region58: #{luna_transformer_forward.3} parent=11 // pred_check_branch
        %766 = sbr.rel (%p764) target = $region60
      $region59: #{luna_transformer_forward.3} parent=11 // pred_region
        _
      $region60: #{luna_transformer_forward.3} parent=11 // pred_fallthru
        _
      // Predicated region
      $region61: #{luna_transformer_forward.3} parent=11 // pred_check
        %p767 = pneg %p391
      $region62: #{luna_transformer_forward.3} parent=11 // pred_check_branch
        %769 = sbr.rel (%p767) target = $region64
      $region63: #{luna_transformer_forward.3} parent=11 // pred_region
        _
      $region64: #{luna_transformer_forward.3} parent=11 // pred_fallthru
        _
      // Predicated region
      $region65: #{luna_transformer_forward.3} parent=11 // pred_check
        %p770 = pneg %p412
      $region66: #{luna_transformer_forward.3} parent=11 // pred_check_branch
        %772 = sbr.rel (%p770) target = $region68
      $region67: #{luna_transformer_forward.3} parent=11 // pred_region
        _
      $region68: #{luna_transformer_forward.3} parent=11 // pred_fallthru
        _
      // Predicated region
      $region69: #{luna_transformer_forward.3} parent=11 // pred_check
        %p773 = pneg %p433
      $region70: #{luna_transformer_forward.3} parent=11 // pred_check_branch
        %775 = sbr.rel (%p773) target = $region72
      $region71: #{luna_transformer_forward.3} parent=11 // pred_region
        _
      $region72: #{luna_transformer_forward.3} parent=11 // pred_fallthru
        _
      // Predicated region
      $region73: #{luna_transformer_forward.3} parent=11 // pred_check
        %p776 = pneg %p454
      $region74: #{luna_transformer_forward.3} parent=11 // pred_check_branch
        %778 = sbr.rel (%p776) target = $region76
      $region75: #{luna_transformer_forward.3} parent=11 // pred_region
        _
      $region76: #{luna_transformer_forward.3} parent=11 // pred_fallthru
        _
      // Predicated region
      $region77: #{luna_transformer_forward.3} parent=11 // pred_check
        %p779 = pneg %p475
      $region78: #{luna_transformer_forward.3} parent=11 // pred_check_branch
        %781 = sbr.rel (%p779) target = $region80
      $region79: #{luna_transformer_forward.3} parent=11 // pred_region
        _
      $region80: #{luna_transformer_forward.3} parent=11 // pred_fallthru
        _
      // Predicated region
      $region81: #{luna_transformer_forward.3} parent=11 // pred_check
        %p782 = pneg %p496
      $region82: #{luna_transformer_forward.3} parent=11 // pred_check_branch
        %784 = sbr.rel (%p782) target = $region84
      $region83: #{luna_transformer_forward.3} parent=11 // pred_region
        _
      $region84: #{luna_transformer_forward.3} parent=11 // pred_fallthru
        _
      // Predicated region
      $region85: #{luna_transformer_forward.3} parent=11 // pred_check
        %p785 = pneg %p517
      $region86: #{luna_transformer_forward.3} parent=11 // pred_check_branch
        %787 = sbr.rel (%p785) target = $region88
      $region87: #{luna_transformer_forward.3} parent=11 // pred_region
        _
      $region88: #{luna_transformer_forward.3} parent=11 // pred_fallthru
        _
      // Predicated region
      $region89: #{luna_transformer_forward.3} parent=11 // pred_check
        %p788 = pneg %p538
      $region90: #{luna_transformer_forward.3} parent=11 // pred_check_branch
        %790 = sbr.rel (%p788) target = $region92
      $region91: #{luna_transformer_forward.3} parent=11 // pred_region
        _
      $region92: #{luna_transformer_forward.3} parent=11 // pred_fallthru
        _
      // Predicated region
      $region93: #{luna_transformer_forward.3} parent=11 // pred_check
        %p791 = pneg %p559
      $region94: #{luna_transformer_forward.3} parent=11 // pred_check_branch
        %793 = sbr.rel (%p791) target = $region96
      $region95: #{luna_transformer_forward.3} parent=11 // pred_region
        _
      $region96: #{luna_transformer_forward.3} parent=11 // pred_fallthru
        _
      // Predicated region
      $region97: #{luna_transformer_forward.3} parent=11 // pred_check
        %p794 = pneg %p580
      $region98: #{luna_transformer_forward.3} parent=11 // pred_check_branch
        %796 = sbr.rel (%p794) target = $region100
      $region99: #{luna_transformer_forward.3} parent=11 // pred_region
        _
      $region100: #{luna_transformer_forward.3} parent=11 // pred_fallthru
        _
      // Predicated region
      $region101: #{luna_transformer_forward.3} parent=11 // pred_check
        %p797 = pneg %p601
      $region102: #{luna_transformer_forward.3} parent=11 // pred_check_branch
        %799 = sbr.rel (%p797) target = $region104
      $region103: #{luna_transformer_forward.3} parent=11 // pred_region
        _
      $region104: #{luna_transformer_forward.3} parent=11 // pred_fallthru
        _
      // Predicated region
      $region105: #{luna_transformer_forward.3} parent=11 // pred_check
        %p800 = pneg %p622
      $region106: #{luna_transformer_forward.3} parent=11 // pred_check_branch
        %802 = sbr.rel (%p800) target = $region108
      $region107: #{luna_transformer_forward.3} parent=11 // pred_region
        _
      $region108: #{luna_transformer_forward.3} parent=11 // pred_fallthru
        _
      // Predicated region
      $region109: #{luna_transformer_forward.3} parent=11 // pred_check
        %p803 = pneg %p643
      $region110: #{luna_transformer_forward.3} parent=11 // pred_check_branch
        %805 = sbr.rel (%p803) target = $region112
      $region111: #{luna_transformer_forward.3} parent=11 // pred_region
        _
      $region112: #{luna_transformer_forward.3} parent=11 // pred_fallthru
        _
      // Predicated region
      $region113: #{luna_transformer_forward.3} parent=11 // pred_check
        %p806 = pneg %p664
      $region114: #{luna_transformer_forward.3} parent=11 // pred_check_branch
        %808 = sbr.rel (%p806) target = $region116
      $region115: #{luna_transformer_forward.3} parent=11 // pred_region
        _
      $region116: #{luna_transformer_forward.3} parent=11 // pred_fallthru
        _
    $region12: #{luna_transformer_forward.3} parent=5 // pred_fallthru
      _
    %p809 = scmp.lt.s32.totalorder %s66, 2
    // Predicated region
    $region117: #{luna_transformer_forward.3} parent=5 // pred_check
      %p810 = pneg %p809
    $region118: #{luna_transformer_forward.3} parent=5 // pred_check_branch
      %812 = sbr.rel (%p810) target = $region120
    $region119: #{luna_transformer_forward.3} parent=5 // pred_region
      // Predicated region
      $region121: #{luna_transformer_forward.3} parent=119 // pred_check
        %p813 = pneg %p86
      $region122: #{luna_transformer_forward.3} parent=119 // pred_check_branch
        %815 = sbr.rel (%p813) target = $region124
      $region123: #{luna_transformer_forward.3} parent=119 // pred_region
        %p816 = scmp.lt.s32.totalorder %s66, 1
        %s817 = scalar_select %p816, %s66, 1
        %s818 = smul.addr %s817, 2
        %s819 = smul.addr %s818, 8
        %s820 = scalar_lea.vmem %s1, %s819
      $region124: #{luna_transformer_forward.3} parent=119 // pred_fallthru
        _
      // Predicated region
      $region125: #{luna_transformer_forward.3} parent=119 // pred_check
        %p821 = pneg %p112
      $region126: #{luna_transformer_forward.3} parent=119 // pred_check_branch
        %823 = sbr.rel (%p821) target = $region128
      $region127: #{luna_transformer_forward.3} parent=119 // pred_region
        %p824 = scmp.lt.s32.totalorder %s66, 1
        %s825 = scalar_select %p824, %s66, 1
        %s826 = smul.addr %s825, 8
        %s827 = scalar_lea.vmem %s3, %s826
      $region128: #{luna_transformer_forward.3} parent=119 // pred_fallthru
        _
    $region120: #{luna_transformer_forward.3} parent=5 // pred_fallthru
      _
    %p828 = scmp.le.s32.totalorder 1, %s66
    %p829 = scmp.lt.s32.totalorder %s66, 3
    %p830 = pnand %p828, %p829
    %p831 = pneg %p830
    // Predicated region
    $region129: #{luna_transformer_forward.3} parent=5 // pred_check
      _
    $region130: #{luna_transformer_forward.3} parent=5 // pred_check_branch
      %833 = sbr.rel (%p830) target = $region132
    $region131: #{luna_transformer_forward.3} parent=5 // pred_region
      %s834 = ssub.s32 %s66, 1
      %p835 = scmp.lt.s32.totalorder %s71, 1
      %s836 = scalar_select %p835, %s71, 1
      %s837 = smul.addr %s836, 2
      %s838 = smul.addr %s837, 8
      %s839 = scalar_lea.vmem %s1, %s838
      %p840 = pneg %p92
      %p841 = pneg %p89
      %p842 = scmp.lt.s32.totalorder %s71, 1
      %s843 = scalar_select %p842, %s71, 1
      %s844 = smul.addr %s843, 8
      %s845 = scalar_lea.vmem %s3, %s844
      %p846 = pneg %p118
      %p847 = pneg %p115
      %p848 = pneg %p139
      %p849 = pneg %p136
      %p850 = pneg %p160
      %p851 = pneg %p157
      %p852 = pneg %p181
      %p853 = pneg %p178
      %p854 = pneg %p202
      %p855 = pneg %p199
      %p856 = pneg %p223
      %p857 = pneg %p220
      %p858 = pneg %p244
      %p859 = pneg %p241
      %p860 = pneg %p265
      %p861 = pneg %p262
      %p862 = pneg %p286
      %p863 = pneg %p283
      %p864 = pneg %p307
      %p865 = pneg %p304
      %p866 = pneg %p328
      %p867 = pneg %p325
      %p868 = pneg %p349
      %p869 = pneg %p346
      %p870 = pneg %p370
      %p871 = pneg %p367
      %p872 = pneg %p391
      %p873 = pneg %p388
      %p874 = pneg %p412
      %p875 = pneg %p409
      %p876 = pneg %p433
      %p877 = pneg %p430
      %p878 = pneg %p454
      %p879 = pneg %p451
      %p880 = pneg %p475
      %p881 = pneg %p472
      %p882 = pneg %p496
      %p883 = pneg %p493
      %p884 = pneg %p517
      %p885 = pneg %p514
      %p886 = pneg %p538
      %p887 = pneg %p535
      %p888 = pneg %p559
      %p889 = pneg %p556
      %p890 = pneg %p580
      %p891 = pneg %p577
      %p892 = pneg %p601
      %p893 = pneg %p598
      %p894 = pneg %p622
      %p895 = pneg %p619
      %p896 = pneg %p643
      %p897 = pneg %p640
      %p898 = pneg %p664
      %p899 = pneg %p661
      %p900 = pneg %p690
      %p901 = pneg %p687
      %p902 = scmp.lt.s32.totalorder %s71, 1
      %s903 = scalar_select %p902, %s71, 1
      %s904 = smul.addr %s903, 2
      %s905 = smul.addr %s904, 8
      %s906 = scalar_lea.vmem %s57, %s905
      %p907 = pneg %p716
      %p908 = pneg %p713
      %p909 = scmp.lt.s32.totalorder %s71, 1
      %s910 = scalar_select %p909, %s71, 1
      %s911 = smul.addr %s910, 8
      %s912 = scalar_lea.vmem %s59, %s911
      %p913 = scmp.lt.s32.totalorder %s71, 1
      %s914 = scalar_select %p913, %s71, 1
      %s915 = smul.addr %s914, 2
      %s916 = smul.addr %s915, 8
      %s917 = scalar_lea.vmem %s1, %s916
      %p918 = scmp.lt.s32.totalorder %s71, 1
      %s919 = scalar_select %p918, %s71, 1
      %s920 = smul.addr %s919, 8
      %s921 = scalar_lea.vmem %s3, %s920
      %p922 = scmp.lt.s32.totalorder %s71, 1
      %s923 = scalar_select %p922, %s71, 1
      %s924 = smul.addr %s923, 2
      %s925 = smul.addr %s924, 8
      %s926 = scalar_lea.vmem %s57, %s925
      %p927 = scmp.lt.s32.totalorder %s71, 1
      %s928 = scalar_select %p927, %s71, 1
      %s929 = smul.addr %s928, 8
      %s930 = scalar_lea.vmem %s59, %s929
      %v932 = vld [vmem:[%s917] sm:$0xff]
      %v933 = vld [vmem:[%s917 + $0x8] sm:$0xff]
      %v934 = vld [vmem:[%s921] sm:$0xff]
      %v935 = vld [vmem:[%s5] sm:$0xf]
      %v936 = vld [vmem:[%s5 + $0x4] sm:$0xf]
      %v937 = vld [vmem:[%s5 + $0x8] sm:$0xf]
      %v938 = vld [vmem:[%s5 + $0xc] sm:$0xf]
      %v939 = vpack.c.bf16 %v933, %v932
      %v940 = vld [vmem:[%s7] sm:$0x1]
      %v942 = vlaneseq
      %v943 = vshrl.u32 %v942, 7
      %v944 = vsub.s32 0, %v943
      %v945 = vrot.slane %v940, %v944
      %v951 = vunpack.c.l.b16 %v935
      %v952 = vunpack.c.l.b16 %v936
      %v953 = vunpack.c.l.b16 %v937
      %v954 = vunpack.c.l.b16 %v938
      %v955 = vpack.c.b16 %v952, %v951
      %v956 = vpack.c.b16 %v954, %v953
      %vm959 = vcmask 261120
      %v961 = vsel %vm959, %v939, 0
      %963 = vmatprep.subr.bf16.mxu0 0
      %964 = vmatpush1.bf16.msra.mxu0 %v955
      %965 = vmatprep.subr.bf16.mxu0 0
      %966 = vmatpush1.bf16.msra.mxu0 %v956
      %967 = vmatprep.subr.bf16.mxu0 0
      %968 = vmatpush1.bf16.msra.mxu0 0
      %969 = vmatprep.subr.bf16.mxu0 0
      %970 = vmatpush1.bf16.msra.mxu0 0
      %971 = vmatprep.subr.bf16.mxu0 0
      %972 = vmatpush1.bf16.msra.mxu0 0
      %973 = vmatprep.subr.bf16.mxu0 0
      %974 = vmatpush1.bf16.msra.mxu0 0
      %975 = vmatprep.subr.bf16.mxu0 0
      %976 = vmatpush1.bf16.msra.mxu0 0
      %977 = vmatprep.subr.bf16.mxu0 0
      %978 = vmatpush1.bf16.msra.mxu0 0
      %979 = vmatprep.subr.bf16.mxu0 0
      %980 = vmatpush1.bf16.msra.mxu0 0
      %981 = vmatprep.subr.bf16.mxu0 0
      %982 = vmatpush1.bf16.msra.mxu0 0
      %983 = vmatprep.subr.bf16.mxu0 0
      %984 = vmatpush1.bf16.msra.mxu0 0
      %985 = vmatprep.subr.bf16.mxu0 0
      %986 = vmatpush1.bf16.msra.mxu0 0
      %987 = vmatprep.subr.bf16.mxu0 0
      %988 = vmatpush1.bf16.msra.mxu0 0
      %989 = vmatprep.subr.bf16.mxu0 0
      %990 = vmatpush1.bf16.msra.mxu0 0
      %991 = vmatprep.subr.bf16.mxu0 0
      %992 = vmatpush1.bf16.msra.mxu0 0
      %993 = vmatprep.subr.bf16.mxu0 0
      %994 = vmatpush1.bf16.msra.mxu0 0
      %995 = vmatprep.mubr.bf16.mxu0 0
      %996 = vmatmul.mubr.bf16.gmra.mrb[0].mxu0 %v961
      %v997 = vpop.f32.mrb[0].mxu0
      %v998 = vadd.f32 %v945, %v997
      %v999 = vpop.f32.mrb[0].mxu0
      %v1000 = vpop.f32.mrb[0].mxu0
      %v1001 = vadd.f32 %v945, %v1000
      %v1002 = vpop.f32.mrb[0].mxu0
      %1003 = vdwg.mxu0
      %v1004 = vld [vmem:[%s9] sm:$0xf]
      %v1005 = vld [vmem:[%s9 + $0x4] sm:$0xf]
      %v1006 = vld [vmem:[%s9 + $0x8] sm:$0xf]
      %v1007 = vld [vmem:[%s9 + $0xc] sm:$0xf]
      %v1008 = vpack.c.bf16 %v934, %v934
      %v1009 = vld [vmem:[%s11] sm:$0x1]
      %v1011 = vlaneseq
      %v1012 = vshrl.u32 %v1011, 7
      %v1013 = vsub.s32 0, %v1012
      %v1014 = vrot.slane %v1009, %v1013
      %v1020 = vunpack.c.l.b16 %v1004
      %v1021 = vunpack.c.l.b16 %v1005
      %v1022 = vunpack.c.l.b16 %v1006
      %v1023 = vunpack.c.l.b16 %v1007
      %v1024 = vpack.c.b16 %v1021, %v1020
      %v1025 = vpack.c.b16 %v1023, %v1022
      %v1029 = vsel %vm959, %v1008, 0
      %1031 = vmatprep.subr.bf16.mxu0 0
      %1032 = vmatpush1.bf16.msra.mxu0 %v1024
      %1033 = vmatprep.subr.bf16.mxu0 0
      %1034 = vmatpush1.bf16.msra.mxu0 %v1025
      %1035 = vmatprep.subr.bf16.mxu0 0
      %1036 = vmatpush1.bf16.msra.mxu0 0
      %1037 = vmatprep.subr.bf16.mxu0 0
      %1038 = vmatpush1.bf16.msra.mxu0 0
      %1039 = vmatprep.subr.bf16.mxu0 0
      %1040 = vmatpush1.bf16.msra.mxu0 0
      %1041 = vmatprep.subr.bf16.mxu0 0
      %1042 = vmatpush1.bf16.msra.mxu0 0
      %1043 = vmatprep.subr.bf16.mxu0 0
      %1044 = vmatpush1.bf16.msra.mxu0 0
      %1045 = vmatprep.subr.bf16.mxu0 0
      %1046 = vmatpush1.bf16.msra.mxu0 0
      %1047 = vmatprep.subr.bf16.mxu0 0
      %1048 = vmatpush1.bf16.msra.mxu0 0
      %1049 = vmatprep.subr.bf16.mxu0 0
      %1050 = vmatpush1.bf16.msra.mxu0 0
      %1051 = vmatprep.subr.bf16.mxu0 0
      %1052 = vmatpush1.bf16.msra.mxu0 0
      %1053 = vmatprep.subr.bf16.mxu0 0
      %1054 = vmatpush1.bf16.msra.mxu0 0
      %1055 = vmatprep.subr.bf16.mxu0 0
      %1056 = vmatpush1.bf16.msra.mxu0 0
      %1057 = vmatprep.subr.bf16.mxu0 0
      %1058 = vmatpush1.bf16.msra.mxu0 0
      %1059 = vmatprep.subr.bf16.mxu0 0
      %1060 = vmatpush1.bf16.msra.mxu0 0
      %1061 = vmatprep.subr.bf16.mxu0 0
      %1062 = vmatpush1.bf16.msra.mxu0 0
      %1063 = vmatprep.mubr.bf16.mxu0 0
      %1064 = vmatmul.mubr.bf16.gmra.mrb[0].mxu0 %v1029
      %v1065 = vpop.f32.mrb[0].mxu0
      %v1066 = vadd.f32 %v1014, %v1065
      %v1067 = vpop.f32.mrb[0].mxu0
      %v1068 = vpop.f32.mrb[0].mxu0
      %v1069 = vpop.f32.mrb[0].mxu0
      %1070 = vdwg.mxu0
      %v1071 = vld [vmem:[%s17] sm:$0xf]
      %v1072 = vld [vmem:[%s17 + $0x4] sm:$0xf]
      %v1073 = vld [vmem:[%s17 + $0x8] sm:$0xf]
      %v1074 = vld [vmem:[%s17 + $0xc] sm:$0xf]
      %v1075 = vld [vmem:[%s17 + $0x10] sm:$0xf]
      %v1076 = vld [vmem:[%s17 + $0x14] sm:$0xf]
      %v1077 = vld [vmem:[%s17 + $0x18] sm:$0xf]
      %v1078 = vld [vmem:[%s17 + $0x1c] sm:$0xf]
      %v1079 = vpack.c.bf16 %v1001, %v998
      %v1080 = vld [vmem:[%s19] sm:$0x1]
      %v1082 = vlaneseq
      %v1083 = vshrl.u32 %v1082, 7
      %v1084 = vsub.s32 0, %v1083
      %v1085 = vrot.slane %v1080, %v1084
      %1088 = vrot.lane.b32.xlu0 %v1079, 64
      %v1089 = vpop.permute.xlu0 %1088
      %v1098 = vunpack.c.l.b16 %v1071
      %v1099 = vunpack.c.l.b16 %v1072
      %v1100 = vunpack.c.l.b16 %v1073
      %v1101 = vunpack.c.l.b16 %v1074
      %v1102 = vunpack.c.l.b16 %v1075
      %v1103 = vunpack.c.l.b16 %v1076
      %v1104 = vunpack.c.l.b16 %v1077
      %v1105 = vunpack.c.l.b16 %v1078
      %v1106 = vpack.c.b16 %v1099, %v1098
      %v1107 = vpack.c.b16 %v1101, %v1100
      %v1108 = vpack.c.b16 %v1103, %v1102
      %v1109 = vpack.c.b16 %v1105, %v1104
      %vm1114 = vcmask 523264
      %v1116 = vsel %vm1114, %v1089, 0
      %1118 = vmatprep.subr.bf16.mxu0 0
      %1119 = vmatpush1.bf16.msra.mxu0 %v1106
      %1120 = vmatprep.subr.bf16.mxu0 0
      %1121 = vmatpush1.bf16.msra.mxu0 %v1107
      %1122 = vmatprep.subr.bf16.mxu0 0
      %1123 = vmatpush1.bf16.msra.mxu0 %v1108
      %1124 = vmatprep.subr.bf16.mxu0 0
      %1125 = vmatpush1.bf16.msra.mxu0 %v1109
      %1126 = vmatprep.subr.bf16.mxu0 0
      %1127 = vmatpush1.bf16.msra.mxu0 0
      %1128 = vmatprep.subr.bf16.mxu0 0
      %1129 = vmatpush1.bf16.msra.mxu0 0
      %1130 = vmatprep.subr.bf16.mxu0 0
      %1131 = vmatpush1.bf16.msra.mxu0 0
      %1132 = vmatprep.subr.bf16.mxu0 0
      %1133 = vmatpush1.bf16.msra.mxu0 0
      %1134 = vmatprep.subr.bf16.mxu0 0
      %1135 = vmatpush1.bf16.msra.mxu0 0
      %1136 = vmatprep.subr.bf16.mxu0 0
      %1137 = vmatpush1.bf16.msra.mxu0 0
      %1138 = vmatprep.subr.bf16.mxu0 0
      %1139 = vmatpush1.bf16.msra.mxu0 0
      %1140 = vmatprep.subr.bf16.mxu0 0
      %1141 = vmatpush1.bf16.msra.mxu0 0
      %1142 = vmatprep.subr.bf16.mxu0 0
      %1143 = vmatpush1.bf16.msra.mxu0 0
      %1144 = vmatprep.subr.bf16.mxu0 0
      %1145 = vmatpush1.bf16.msra.mxu0 0
      %1146 = vmatprep.subr.bf16.mxu0 0
      %1147 = vmatpush1.bf16.msra.mxu0 0
      %1148 = vmatprep.subr.bf16.mxu0 0
      %1149 = vmatpush1.bf16.msra.mxu0 0
      %1150 = vmatprep.mubr.bf16.mxu0 0
      %1151 = vmatmul.mubr.bf16.gmra.mrb[0].mxu0 %v1116
      %v1152 = vpop.f32.mrb[0].mxu0
      %v1153 = vadd.f32 %v1085, %v1152
      %v1154 = vpop.f32.mrb[0].mxu0
      %v1155 = vpop.f32.mrb[0].mxu0
      %v1156 = vadd.f32 %v1085, %v1155
      %v1157 = vpop.f32.mrb[0].mxu0
      %1158 = vdwg.mxu0
      %v1159 = vld [vmem:[%s13] sm:$0xf]
      %v1160 = vld [vmem:[%s13 + $0x4] sm:$0xf]
      %v1161 = vld [vmem:[%s13 + $0x8] sm:$0xf]
      %v1162 = vld [vmem:[%s13 + $0xc] sm:$0xf]
      %v1163 = vld [vmem:[%s13 + $0x10] sm:$0xf]
      %v1164 = vld [vmem:[%s13 + $0x14] sm:$0xf]
      %v1165 = vld [vmem:[%s13 + $0x18] sm:$0xf]
      %v1166 = vld [vmem:[%s13 + $0x1c] sm:$0xf]
      %v1167 = vpack.c.bf16 %v1066, %v1066
      %v1168 = vld [vmem:[%s15] sm:$0x1]
      %v1170 = vlaneseq
      %v1171 = vshrl.u32 %v1170, 7
      %v1172 = vsub.s32 0, %v1171
      %v1173 = vrot.slane %v1168, %v1172
      %v1183 = vunpack.c.l.b16 %v1159
      %v1184 = vunpack.c.l.b16 %v1160
      %v1185 = vunpack.c.l.b16 %v1161
      %v1186 = vunpack.c.l.b16 %v1162
      %v1187 = vunpack.c.l.b16 %v1163
      %v1188 = vunpack.c.l.b16 %v1164
      %v1189 = vunpack.c.l.b16 %v1165
      %v1190 = vunpack.c.l.b16 %v1166
      %v1191 = vpack.c.b16 %v1184, %v1183
      %v1192 = vpack.c.b16 %v1186, %v1185
      %v1193 = vpack.c.b16 %v1188, %v1187
      %v1194 = vpack.c.b16 %v1190, %v1189
      %v1200 = vsel %vm1114, %v1167, 0
      %1202 = vmatprep.subr.bf16.mxu0 0
      %1203 = vmatpush1.bf16.msra.mxu0 %v1191
      %1204 = vmatprep.subr.bf16.mxu0 0
      %1205 = vmatpush1.bf16.msra.mxu0 %v1192
      %1206 = vmatprep.subr.bf16.mxu0 0
      %1207 = vmatpush1.bf16.msra.mxu0 %v1193
      %1208 = vmatprep.subr.bf16.mxu0 0
      %1209 = vmatpush1.bf16.msra.mxu0 %v1194
      %1210 = vmatprep.subr.bf16.mxu0 0
      %1211 = vmatpush1.bf16.msra.mxu0 0
      %1212 = vmatprep.subr.bf16.mxu0 0
      %1213 = vmatpush1.bf16.msra.mxu0 0
      %1214 = vmatprep.subr.bf16.mxu0 0
      %1215 = vmatpush1.bf16.msra.mxu0 0
      %1216 = vmatprep.subr.bf16.mxu0 0
      %1217 = vmatpush1.bf16.msra.mxu0 0
      %1218 = vmatprep.subr.bf16.mxu0 0
      %1219 = vmatpush1.bf16.msra.mxu0 0
      %1220 = vmatprep.subr.bf16.mxu0 0
      %1221 = vmatpush1.bf16.msra.mxu0 0
      %1222 = vmatprep.subr.bf16.mxu0 0
      %1223 = vmatpush1.bf16.msra.mxu0 0
      %1224 = vmatprep.subr.bf16.mxu0 0
      %1225 = vmatpush1.bf16.msra.mxu0 0
      %1226 = vmatprep.subr.bf16.mxu0 0
      %1227 = vmatpush1.bf16.msra.mxu0 0
      %1228 = vmatprep.subr.bf16.mxu0 0
      %1229 = vmatpush1.bf16.msra.mxu0 0
      %1230 = vmatprep.subr.bf16.mxu0 0
      %1231 = vmatpush1.bf16.msra.mxu0 0
      %1232 = vmatprep.subr.bf16.mxu0 0
      %1233 = vmatpush1.bf16.msra.mxu0 0
      %1234 = vmatprep.mubr.bf16.mxu0 0
      %1235 = vmatmul.mubr.bf16.gmra.mrb[0].mxu0 %v1200
      %v1236 = vpop.f32.mrb[0].mxu0
      %v1237 = vadd.f32 %v1173, %v1236
      %v1238 = vpop.f32.mrb[0].mxu0
      %v1239 = vpop.f32.mrb[0].mxu0
      %v1240 = vpop.f32.mrb[0].mxu0
      %1241 = vdwg.mxu0
      %v1242 = vpack.c.bf16 %v1237, %v1237
      %v1243 = vpack.c.bf16 %v1156, %v1153
      %vm1244 = vcmask 130048
      %v1246 = vsel %vm1244, %v1242, 0
      %v1249 = vsel %vm1244, %v1243, 0
      %1251 = vmatprep.subr.bf16.mxu0 0
      %1252 = vmatpush1.bf16.xpose.msra.mxu0 %v1249
      %1253 = vmatprep.subr.bf16.mxu0 0
      %1254 = vmatpush1.bf16.xpose.msra.mxu0 0
      %1255 = vmatprep.subr.bf16.mxu0 0
      %1256 = vmatpush1.bf16.xpose.msra.mxu0 0
      %1257 = vmatprep.subr.bf16.mxu0 0
      %1258 = vmatpush1.bf16.xpose.msra.mxu0 0
      %1259 = vmatprep.subr.bf16.mxu0 0
      %1260 = vmatpush1.bf16.xpose.msra.mxu0 0
      %1261 = vmatprep.subr.bf16.mxu0 0
      %1262 = vmatpush1.bf16.xpose.msra.mxu0 0
      %1263 = vmatprep.subr.bf16.mxu0 0
      %1264 = vmatpush1.bf16.xpose.msra.mxu0 0
      %1265 = vmatprep.subr.bf16.mxu0 0
      %1266 = vmatpush1.bf16.xpose.msra.mxu0 0
      %1267 = vmatprep.subr.bf16.mxu0 0
      %1268 = vmatpush1.bf16.xpose.msra.mxu0 0
      %1269 = vmatprep.subr.bf16.mxu0 0
      %1270 = vmatpush1.bf16.xpose.msra.mxu0 0
      %1271 = vmatprep.subr.bf16.mxu0 0
      %1272 = vmatpush1.bf16.xpose.msra.mxu0 0
      %1273 = vmatprep.subr.bf16.mxu0 0
      %1274 = vmatpush1.bf16.xpose.msra.mxu0 0
      %1275 = vmatprep.subr.bf16.mxu0 0
      %1276 = vmatpush1.bf16.xpose.msra.mxu0 0
      %1277 = vmatprep.subr.bf16.mxu0 0
      %1278 = vmatpush1.bf16.xpose.msra.mxu0 0
      %1279 = vmatprep.subr.bf16.mxu0 0
      %1280 = vmatpush1.bf16.xpose.msra.mxu0 0
      %1281 = vmatprep.subr.bf16.mxu0 0
      %1282 = vmatpush1.bf16.xpose.msra.mxu0 0
      %1283 = vmatprep.mubr.bf16.mxu0 0
      %1284 = vmatmul.mubr.bf16.gmra.mrb[0].mxu0 %v1246
      %v1285 = vpop.f32.mrb[0].mxu0
      %v1286 = vadd.f32 0.0, %v1285
      %v1287 = vpop.f32.mrb[0].mxu0
      %v1288 = vpop.f32.mrb[0].mxu0
      %v1289 = vpop.f32.mrb[0].mxu0
      %1290 = vdwg.mxu0
      %v1291 = vsel %vm1244, %v1286, -inf
      %1292 = vmax.xlane.f32.xlu0 %v1291
      %v1293 = vpop.xlane.xlu0 %1292
      %v1294 = vsub.f32 %v1286, %v1293
      %v1295 = vmul.f32 %v1294, 1.442695
      %v1296 = vpow.pop %v1295
      %v1297 = vsel %vm1244, %v1296, 0.0
      %1298 = vadd.xlane.f32.xlu0 %v1297
      %v1299 = vpop.xlane.xlu0 %1298
      %v1300 = vrcp.pop %v1299
      %v1301 = vmul.f32 %v1296, %v1300
      %v1302 = vpack.c.bf16 %v1301, %v1301
      %1304 = vrot.lane.b32.xlu0 %v1243, 64
      %v1305 = vpop.permute.xlu0 %1304
      %v1308 = vsel %vm1244, %v1302, 0
      %1310 = vmatprep.subr.bf16.mxu0 0
      %1311 = vmatpush1.bf16.msra.mxu0 %v1305
      %1312 = vmatprep.subr.bf16.mxu0 0
      %1313 = vmatpush1.bf16.msra.mxu0 0
      %1314 = vmatprep.subr.bf16.mxu0 0
      %1315 = vmatpush1.bf16.msra.mxu0 0
      %1316 = vmatprep.subr.bf16.mxu0 0
      %1317 = vmatpush1.bf16.msra.mxu0 0
      %1318 = vmatprep.subr.bf16.mxu0 0
      %1319 = vmatpush1.bf16.msra.mxu0 0
      %1320 = vmatprep.subr.bf16.mxu0 0
      %1321 = vmatpush1.bf16.msra.mxu0 0
      %1322 = vmatprep.subr.bf16.mxu0 0
      %1323 = vmatpush1.bf16.msra.mxu0 0
      %1324 = vmatprep.subr.bf16.mxu0 0
      %1325 = vmatpush1.bf16.msra.mxu0 0
      %1326 = vmatprep.subr.bf16.mxu0 0
      %1327 = vmatpush1.bf16.msra.mxu0 0
      %1328 = vmatprep.subr.bf16.mxu0 0
      %1329 = vmatpush1.bf16.msra.mxu0 0
      %1330 = vmatprep.subr.bf16.mxu0 0
      %1331 = vmatpush1.bf16.msra.mxu0 0
      %1332 = vmatprep.subr.bf16.mxu0 0
      %1333 = vmatpush1.bf16.msra.mxu0 0
      %1334 = vmatprep.subr.bf16.mxu0 0
      %1335 = vmatpush1.bf16.msra.mxu0 0
      %1336 = vmatprep.subr.bf16.mxu0 0
      %1337 = vmatpush1.bf16.msra.mxu0 0
      %1338 = vmatprep.subr.bf16.mxu0 0
      %1339 = vmatpush1.bf16.msra.mxu0 0
      %1340 = vmatprep.subr.bf16.mxu0 0
      %1341 = vmatpush1.bf16.msra.mxu0 0
      %1342 = vmatprep.mubr.bf16.mxu0 0
      %1343 = vmatmul.mubr.bf16.gmra.mrb[0].mxu0 %v1308
      %v1344 = vpop.f32.mrb[0].mxu0
      %v1345 = vadd.f32 0.0, %v1344
      %v1346 = vpop.f32.mrb[0].mxu0
      %v1347 = vpop.f32.mrb[0].mxu0
      %v1348 = vpop.f32.mrb[0].mxu0
      %1349 = vdwg.mxu0
      %1351 = vrot.lane.b32.xlu0 %v1242, 112
      %v1352 = vpop.permute.xlu0 %1351
      %1353 = vrot.lane.b32.xlu0 %v1243, 112
      %v1354 = vpop.permute.xlu0 %1353
      %v1356 = vsel %vm1244, %v1352, 0
      %v1359 = vsel %vm1244, %v1354, 0
      %1361 = vmatprep.subr.bf16.mxu0 0
      %1362 = vmatpush1.bf16.xpose.msra.mxu0 %v1359
      %1363 = vmatprep.subr.bf16.mxu0 0
      %1364 = vmatpush1.bf16.xpose.msra.mxu0 0
      %1365 = vmatprep.subr.bf16.mxu0 0
      %1366 = vmatpush1.bf16.xpose.msra.mxu0 0
      %1367 = vmatprep.subr.bf16.mxu0 0
      %1368 = vmatpush1.bf16.xpose.msra.mxu0 0
      %1369 = vmatprep.subr.bf16.mxu0 0
      %1370 = vmatpush1.bf16.xpose.msra.mxu0 0
      %1371 = vmatprep.subr.bf16.mxu0 0
      %1372 = vmatpush1.bf16.xpose.msra.mxu0 0
      %1373 = vmatprep.subr.bf16.mxu0 0
      %1374 = vmatpush1.bf16.xpose.msra.mxu0 0
      %1375 = vmatprep.subr.bf16.mxu0 0
      %1376 = vmatpush1.bf16.xpose.msra.mxu0 0
      %1377 = vmatprep.subr.bf16.mxu0 0
      %1378 = vmatpush1.bf16.xpose.msra.mxu0 0
      %1379 = vmatprep.subr.bf16.mxu0 0
      %1380 = vmatpush1.bf16.xpose.msra.mxu0 0
      %1381 = vmatprep.subr.bf16.mxu0 0
      %1382 = vmatpush1.bf16.xpose.msra.mxu0 0
      %1383 = vmatprep.subr.bf16.mxu0 0
      %1384 = vmatpush1.bf16.xpose.msra.mxu0 0
      %1385 = vmatprep.subr.bf16.mxu0 0
      %1386 = vmatpush1.bf16.xpose.msra.mxu0 0
      %1387 = vmatprep.subr.bf16.mxu0 0
      %1388 = vmatpush1.bf16.xpose.msra.mxu0 0
      %1389 = vmatprep.subr.bf16.mxu0 0
      %1390 = vmatpush1.bf16.xpose.msra.mxu0 0
      %1391 = vmatprep.subr.bf16.mxu0 0
      %1392 = vmatpush1.bf16.xpose.msra.mxu0 0
      %1393 = vmatprep.mubr.bf16.mxu0 0
      %1394 = vmatmul.mubr.bf16.gmra.mrb[0].mxu0 %v1356
      %v1395 = vpop.f32.mrb[0].mxu0
      %v1396 = vadd.f32 0.0, %v1395
      %v1397 = vpop.f32.mrb[0].mxu0
      %v1398 = vpop.f32.mrb[0].mxu0
      %v1399 = vpop.f32.mrb[0].mxu0
      %1400 = vdwg.mxu0
      %v1401 = vsel %vm1244, %v1396, -inf
      %1402 = vmax.xlane.f32.xlu0 %v1401
      %v1403 = vpop.xlane.xlu0 %1402
      %v1404 = vsub.f32 %v1396, %v1403
      %v1405 = vmul.f32 %v1404, 1.442695
      %v1406 = vpow.pop %v1405
      %v1407 = vsel %vm1244, %v1406, 0.0
      %1408 = vadd.xlane.f32.xlu0 %v1407
      %v1409 = vpop.xlane.xlu0 %1408
      %v1410 = vrcp.pop %v1409
      %v1411 = vmul.f32 %v1406, %v1410
      %v1412 = vpack.c.bf16 %v1411, %v1411
      %1413 = vrot.lane.b32.xlu0 %v1243, 48
      %v1414 = vpop.permute.xlu0 %1413
      %v1417 = vsel %vm1244, %v1412, 0
      %1419 = vmatprep.subr.bf16.mxu0 0
      %1420 = vmatpush1.bf16.msra.mxu0 %v1414
      %1421 = vmatprep.subr.bf16.mxu0 0
      %1422 = vmatpush1.bf16.msra.mxu0 0
      %1423 = vmatprep.subr.bf16.mxu0 0
      %1424 = vmatpush1.bf16.msra.mxu0 0
      %1425 = vmatprep.subr.bf16.mxu0 0
      %1426 = vmatpush1.bf16.msra.mxu0 0
      %1427 = vmatprep.subr.bf16.mxu0 0
      %1428 = vmatpush1.bf16.msra.mxu0 0
      %1429 = vmatprep.subr.bf16.mxu0 0
      %1430 = vmatpush1.bf16.msra.mxu0 0
      %1431 = vmatprep.subr.bf16.mxu0 0
      %1432 = vmatpush1.bf16.msra.mxu0 0
      %1433 = vmatprep.subr.bf16.mxu0 0
      %1434 = vmatpush1.bf16.msra.mxu0 0
      %1435 = vmatprep.subr.bf16.mxu0 0
      %1436 = vmatpush1.bf16.msra.mxu0 0
      %1437 = vmatprep.subr.bf16.mxu0 0
      %1438 = vmatpush1.bf16.msra.mxu0 0
      %1439 = vmatprep.subr.bf16.mxu0 0
      %1440 = vmatpush1.bf16.msra.mxu0 0
      %1441 = vmatprep.subr.bf16.mxu0 0
      %1442 = vmatpush1.bf16.msra.mxu0 0
      %1443 = vmatprep.subr.bf16.mxu0 0
      %1444 = vmatpush1.bf16.msra.mxu0 0
      %1445 = vmatprep.subr.bf16.mxu0 0
      %1446 = vmatpush1.bf16.msra.mxu0 0
      %1447 = vmatprep.subr.bf16.mxu0 0
      %1448 = vmatpush1.bf16.msra.mxu0 0
      %1449 = vmatprep.subr.bf16.mxu0 0
      %1450 = vmatpush1.bf16.msra.mxu0 0
      %1451 = vmatprep.mubr.bf16.mxu0 0
      %1452 = vmatmul.mubr.bf16.gmra.mrb[0].mxu0 %v1417
      %v1453 = vpop.f32.mrb[0].mxu0
      %v1454 = vadd.f32 0.0, %v1453
      %v1455 = vpop.f32.mrb[0].mxu0
      %v1456 = vpop.f32.mrb[0].mxu0
      %v1457 = vpop.f32.mrb[0].mxu0
      %1458 = vdwg.mxu0
      %1459 = vrot.lane.b32.xlu0 %v1242, 96
      %v1460 = vpop.permute.xlu0 %1459
      %1461 = vrot.lane.b32.xlu0 %v1243, 96
      %v1462 = vpop.permute.xlu0 %1461
      %v1464 = vsel %vm1244, %v1460, 0
      %v1467 = vsel %vm1244, %v1462, 0
      %1469 = vmatprep.subr.bf16.mxu0 0
      %1470 = vmatpush1.bf16.xpose.msra.mxu0 %v1467
      %1471 = vmatprep.subr.bf16.mxu0 0
      %1472 = vmatpush1.bf16.xpose.msra.mxu0 0
      %1473 = vmatprep.subr.bf16.mxu0 0
      %1474 = vmatpush1.bf16.xpose.msra.mxu0 0
      %1475 = vmatprep.subr.bf16.mxu0 0
      %1476 = vmatpush1.bf16.xpose.msra.mxu0 0
      %1477 = vmatprep.subr.bf16.mxu0 0
      %1478 = vmatpush1.bf16.xpose.msra.mxu0 0
      %1479 = vmatprep.subr.bf16.mxu0 0
      %1480 = vmatpush1.bf16.xpose.msra.mxu0 0
      %1481 = vmatprep.subr.bf16.mxu0 0
      %1482 = vmatpush1.bf16.xpose.msra.mxu0 0
      %1483 = vmatprep.subr.bf16.mxu0 0
      %1484 = vmatpush1.bf16.xpose.msra.mxu0 0
      %1485 = vmatprep.subr.bf16.mxu0 0
      %1486 = vmatpush1.bf16.xpose.msra.mxu0 0
      %1487 = vmatprep.subr.bf16.mxu0 0
      %1488 = vmatpush1.bf16.xpose.msra.mxu0 0
      %1489 = vmatprep.subr.bf16.mxu0 0
      %1490 = vmatpush1.bf16.xpose.msra.mxu0 0
      %1491 = vmatprep.subr.bf16.mxu0 0
      %1492 = vmatpush1.bf16.xpose.msra.mxu0 0
      %1493 = vmatprep.subr.bf16.mxu0 0
      %1494 = vmatpush1.bf16.xpose.msra.mxu0 0
      %1495 = vmatprep.subr.bf16.mxu0 0
      %1496 = vmatpush1.bf16.xpose.msra.mxu0 0
      %1497 = vmatprep.subr.bf16.mxu0 0
      %1498 = vmatpush1.bf16.xpose.msra.mxu0 0
      %1499 = vmatprep.subr.bf16.mxu0 0
      %1500 = vmatpush1.bf16.xpose.msra.mxu0 0
      %1501 = vmatprep.mubr.bf16.mxu0 0
      %1502 = vmatmul.mubr.bf16.gmra.mrb[0].mxu0 %v1464
      %v1503 = vpop.f32.mrb[0].mxu0
      %v1504 = vadd.f32 0.0, %v1503
      %v1505 = vpop.f32.mrb[0].mxu0
      %v1506 = vpop.f32.mrb[0].mxu0
      %v1507 = vpop.f32.mrb[0].mxu0
      %1508 = vdwg.mxu0
      %v1509 = vsel %vm1244, %v1504, -inf
      %1510 = vmax.xlane.f32.xlu0 %v1509
      %v1511 = vpop.xlane.xlu0 %1510
      %v1512 = vsub.f32 %v1504, %v1511
      %v1513 = vmul.f32 %v1512, 1.442695
      %v1514 = vpow.pop %v1513
      %v1515 = vsel %vm1244, %v1514, 0.0
      %1516 = vadd.xlane.f32.xlu0 %v1515
      %v1517 = vpop.xlane.xlu0 %1516
      %v1518 = vrcp.pop %v1517
      %v1519 = vmul.f32 %v1514, %v1518
      %v1520 = vpack.c.bf16 %v1519, %v1519
      %1521 = vrot.lane.b32.xlu0 %v1243, 32
      %v1522 = vpop.permute.xlu0 %1521
      %v1525 = vsel %vm1244, %v1520, 0
      %1527 = vmatprep.subr.bf16.mxu0 0
      %1528 = vmatpush1.bf16.msra.mxu0 %v1522
      %1529 = vmatprep.subr.bf16.mxu0 0
      %1530 = vmatpush1.bf16.msra.mxu0 0
      %1531 = vmatprep.subr.bf16.mxu0 0
      %1532 = vmatpush1.bf16.msra.mxu0 0
      %1533 = vmatprep.subr.bf16.mxu0 0
      %1534 = vmatpush1.bf16.msra.mxu0 0
      %1535 = vmatprep.subr.bf16.mxu0 0
      %1536 = vmatpush1.bf16.msra.mxu0 0
      %1537 = vmatprep.subr.bf16.mxu0 0
      %1538 = vmatpush1.bf16.msra.mxu0 0
      %1539 = vmatprep.subr.bf16.mxu0 0
      %1540 = vmatpush1.bf16.msra.mxu0 0
      %1541 = vmatprep.subr.bf16.mxu0 0
      %1542 = vmatpush1.bf16.msra.mxu0 0
      %1543 = vmatprep.subr.bf16.mxu0 0
      %1544 = vmatpush1.bf16.msra.mxu0 0
      %1545 = vmatprep.subr.bf16.mxu0 0
      %1546 = vmatpush1.bf16.msra.mxu0 0
      %1547 = vmatprep.subr.bf16.mxu0 0
      %1548 = vmatpush1.bf16.msra.mxu0 0
      %1549 = vmatprep.subr.bf16.mxu0 0
      %1550 = vmatpush1.bf16.msra.mxu0 0
      %1551 = vmatprep.subr.bf16.mxu0 0
      %1552 = vmatpush1.bf16.msra.mxu0 0
      %1553 = vmatprep.subr.bf16.mxu0 0
      %1554 = vmatpush1.bf16.msra.mxu0 0
      %1555 = vmatprep.subr.bf16.mxu0 0
      %1556 = vmatpush1.bf16.msra.mxu0 0
      %1557 = vmatprep.subr.bf16.mxu0 0
      %1558 = vmatpush1.bf16.msra.mxu0 0
      %1559 = vmatprep.mubr.bf16.mxu0 0
      %1560 = vmatmul.mubr.bf16.gmra.mrb[0].mxu0 %v1525
      %v1561 = vpop.f32.mrb[0].mxu0
      %v1562 = vadd.f32 0.0, %v1561
      %v1563 = vpop.f32.mrb[0].mxu0
      %v1564 = vpop.f32.mrb[0].mxu0
      %v1565 = vpop.f32.mrb[0].mxu0
      %1566 = vdwg.mxu0
      %1567 = vrot.lane.b32.xlu0 %v1242, 80
      %v1568 = vpop.permute.xlu0 %1567
      %1569 = vrot.lane.b32.xlu0 %v1243, 80
      %v1570 = vpop.permute.xlu0 %1569
      %v1572 = vsel %vm1244, %v1568, 0
      %v1575 = vsel %vm1244, %v1570, 0
      %1577 = vmatprep.subr.bf16.mxu0 0
      %1578 = vmatpush1.bf16.xpose.msra.mxu0 %v1575
      %1579 = vmatprep.subr.bf16.mxu0 0
      %1580 = vmatpush1.bf16.xpose.msra.mxu0 0
      %1581 = vmatprep.subr.bf16.mxu0 0
      %1582 = vmatpush1.bf16.xpose.msra.mxu0 0
      %1583 = vmatprep.subr.bf16.mxu0 0
      %1584 = vmatpush1.bf16.xpose.msra.mxu0 0
      %1585 = vmatprep.subr.bf16.mxu0 0
      %1586 = vmatpush1.bf16.xpose.msra.mxu0 0
      %1587 = vmatprep.subr.bf16.mxu0 0
      %1588 = vmatpush1.bf16.xpose.msra.mxu0 0
      %1589 = vmatprep.subr.bf16.mxu0 0
      %1590 = vmatpush1.bf16.xpose.msra.mxu0 0
      %1591 = vmatprep.subr.bf16.mxu0 0
      %1592 = vmatpush1.bf16.xpose.msra.mxu0 0
      %1593 = vmatprep.subr.bf16.mxu0 0
      %1594 = vmatpush1.bf16.xpose.msra.mxu0 0
      %1595 = vmatprep.subr.bf16.mxu0 0
      %1596 = vmatpush1.bf16.xpose.msra.mxu0 0
      %1597 = vmatprep.subr.bf16.mxu0 0
      %1598 = vmatpush1.bf16.xpose.msra.mxu0 0
      %1599 = vmatprep.subr.bf16.mxu0 0
      %1600 = vmatpush1.bf16.xpose.msra.mxu0 0
      %1601 = vmatprep.subr.bf16.mxu0 0
      %1602 = vmatpush1.bf16.xpose.msra.mxu0 0
      %1603 = vmatprep.subr.bf16.mxu0 0
      %1604 = vmatpush1.bf16.xpose.msra.mxu0 0
      %1605 = vmatprep.subr.bf16.mxu0 0
      %1606 = vmatpush1.bf16.xpose.msra.mxu0 0
      %1607 = vmatprep.subr.bf16.mxu0 0
      %1608 = vmatpush1.bf16.xpose.msra.mxu0 0
      %1609 = vmatprep.mubr.bf16.mxu0 0
      %1610 = vmatmul.mubr.bf16.gmra.mrb[0].mxu0 %v1572
      %v1611 = vpop.f32.mrb[0].mxu0
      %v1612 = vadd.f32 0.0, %v1611
      %v1613 = vpop.f32.mrb[0].mxu0
      %v1614 = vpop.f32.mrb[0].mxu0
      %v1615 = vpop.f32.mrb[0].mxu0
      %1616 = vdwg.mxu0
      %v1617 = vsel %vm1244, %v1612, -inf
      %1618 = vmax.xlane.f32.xlu0 %v1617
      %v1619 = vpop.xlane.xlu0 %1618
      %v1620 = vsub.f32 %v1612, %v1619
      %v1621 = vmul.f32 %v1620, 1.442695
      %v1622 = vpow.pop %v1621
      %v1623 = vsel %vm1244, %v1622, 0.0
      %1624 = vadd.xlane.f32.xlu0 %v1623
      %v1625 = vpop.xlane.xlu0 %1624
      %v1626 = vrcp.pop %v1625
      %v1627 = vmul.f32 %v1622, %v1626
      %v1628 = vpack.c.bf16 %v1627, %v1627
      %1629 = vrot.lane.b32.xlu0 %v1243, 16
      %v1630 = vpop.permute.xlu0 %1629
      %v1633 = vsel %vm1244, %v1628, 0
      %1635 = vmatprep.subr.bf16.mxu0 0
      %1636 = vmatpush1.bf16.msra.mxu0 %v1630
      %1637 = vmatprep.subr.bf16.mxu0 0
      %1638 = vmatpush1.bf16.msra.mxu0 0
      %1639 = vmatprep.subr.bf16.mxu0 0
      %1640 = vmatpush1.bf16.msra.mxu0 0
      %1641 = vmatprep.subr.bf16.mxu0 0
      %1642 = vmatpush1.bf16.msra.mxu0 0
      %1643 = vmatprep.subr.bf16.mxu0 0
      %1644 = vmatpush1.bf16.msra.mxu0 0
      %1645 = vmatprep.subr.bf16.mxu0 0
      %1646 = vmatpush1.bf16.msra.mxu0 0
      %1647 = vmatprep.subr.bf16.mxu0 0
      %1648 = vmatpush1.bf16.msra.mxu0 0
      %1649 = vmatprep.subr.bf16.mxu0 0
      %1650 = vmatpush1.bf16.msra.mxu0 0
      %1651 = vmatprep.subr.bf16.mxu0 0
      %1652 = vmatpush1.bf16.msra.mxu0 0
      %1653 = vmatprep.subr.bf16.mxu0 0
      %1654 = vmatpush1.bf16.msra.mxu0 0
      %1655 = vmatprep.subr.bf16.mxu0 0
      %1656 = vmatpush1.bf16.msra.mxu0 0
      %1657 = vmatprep.subr.bf16.mxu0 0
      %1658 = vmatpush1.bf16.msra.mxu0 0
      %1659 = vmatprep.subr.bf16.mxu0 0
      %1660 = vmatpush1.bf16.msra.mxu0 0
      %1661 = vmatprep.subr.bf16.mxu0 0
      %1662 = vmatpush1.bf16.msra.mxu0 0
      %1663 = vmatprep.subr.bf16.mxu0 0
      %1664 = vmatpush1.bf16.msra.mxu0 0
      %1665 = vmatprep.subr.bf16.mxu0 0
      %1666 = vmatpush1.bf16.msra.mxu0 0
      %1667 = vmatprep.mubr.bf16.mxu0 0
      %1668 = vmatmul.mubr.bf16.gmra.mrb[0].mxu0 %v1633
      %v1669 = vpop.f32.mrb[0].mxu0
      %v1670 = vadd.f32 0.0, %v1669
      %v1671 = vpop.f32.mrb[0].mxu0
      %v1672 = vpop.f32.mrb[0].mxu0
      %v1673 = vpop.f32.mrb[0].mxu0
      %1674 = vdwg.mxu0
      %v1675 = vld [vmem:[%s21] sm:$0xf]
      %v1676 = vld [vmem:[%s21 + $0x4] sm:$0xf]
      %v1677 = vld [vmem:[%s21 + $0x8] sm:$0xf]
      %v1678 = vld [vmem:[%s21 + $0xc] sm:$0xf]
      %v1679 = vld [vmem:[%s21 + $0x10] sm:$0xf]
      %v1680 = vld [vmem:[%s21 + $0x14] sm:$0xf]
      %v1681 = vld [vmem:[%s21 + $0x18] sm:$0xf]
      %v1682 = vld [vmem:[%s21 + $0x1c] sm:$0xf]
      %v1683 = vld [vmem:[%s23] sm:$0x1]
      %v1685 = vlaneseq
      %v1686 = vshrl.u32 %v1685, 7
      %v1687 = vsub.s32 0, %v1686
      %v1688 = vrot.slane %v1683, %v1687
      %v1698 = vunpack.c.l.b16 %v1675
      %v1699 = vunpack.c.l.b16 %v1676
      %v1700 = vunpack.c.l.b16 %v1677
      %v1701 = vunpack.c.l.b16 %v1678
      %v1702 = vunpack.c.l.b16 %v1679
      %v1703 = vunpack.c.l.b16 %v1680
      %v1704 = vunpack.c.l.b16 %v1681
      %v1705 = vunpack.c.l.b16 %v1682
      %v1706 = vpack.c.b16 %v1699, %v1698
      %v1707 = vpack.c.b16 %v1701, %v1700
      %v1708 = vpack.c.b16 %v1703, %v1702
      %v1709 = vpack.c.b16 %v1705, %v1704
      %v1715 = vsel %vm1114, %v1079, 0
      %1717 = vmatprep.subr.bf16.mxu0 0
      %1718 = vmatpush1.bf16.msra.mxu0 %v1706
      %1719 = vmatprep.subr.bf16.mxu0 0
      %1720 = vmatpush1.bf16.msra.mxu0 %v1707
      %1721 = vmatprep.subr.bf16.mxu0 0
      %1722 = vmatpush1.bf16.msra.mxu0 %v1708
      %1723 = vmatprep.subr.bf16.mxu0 0
      %1724 = vmatpush1.bf16.msra.mxu0 %v1709
      %1725 = vmatprep.subr.bf16.mxu0 0
      %1726 = vmatpush1.bf16.msra.mxu0 0
      %1727 = vmatprep.subr.bf16.mxu0 0
      %1728 = vmatpush1.bf16.msra.mxu0 0
      %1729 = vmatprep.subr.bf16.mxu0 0
      %1730 = vmatpush1.bf16.msra.mxu0 0
      %1731 = vmatprep.subr.bf16.mxu0 0
      %1732 = vmatpush1.bf16.msra.mxu0 0
      %1733 = vmatprep.subr.bf16.mxu0 0
      %1734 = vmatpush1.bf16.msra.mxu0 0
      %1735 = vmatprep.subr.bf16.mxu0 0
      %1736 = vmatpush1.bf16.msra.mxu0 0
      %1737 = vmatprep.subr.bf16.mxu0 0
      %1738 = vmatpush1.bf16.msra.mxu0 0
      %1739 = vmatprep.subr.bf16.mxu0 0
      %1740 = vmatpush1.bf16.msra.mxu0 0
      %1741 = vmatprep.subr.bf16.mxu0 0
      %1742 = vmatpush1.bf16.msra.mxu0 0
      %1743 = vmatprep.subr.bf16.mxu0 0
      %1744 = vmatpush1.bf16.msra.mxu0 0
      %1745 = vmatprep.subr.bf16.mxu0 0
      %1746 = vmatpush1.bf16.msra.mxu0 0
      %1747 = vmatprep.subr.bf16.mxu0 0
      %1748 = vmatpush1.bf16.msra.mxu0 0
      %1749 = vmatprep.mubr.bf16.mxu0 0
      %1750 = vmatmul.mubr.bf16.gmra.mrb[0].mxu0 %v1715
      %v1751 = vpop.f32.mrb[0].mxu0
      %v1752 = vadd.f32 %v1688, %v1751
      %v1753 = vpop.f32.mrb[0].mxu0
      %v1754 = vpop.f32.mrb[0].mxu0
      %v1755 = vadd.f32 %v1688, %v1754
      %v1756 = vpop.f32.mrb[0].mxu0
      %1757 = vdwg.mxu0
      %v1758 = vld [vmem:[%s25] sm:$0xf]
      %v1759 = vld [vmem:[%s25 + $0x4] sm:$0xf]
      %v1760 = vpack.c.bf16 %v1345, %v1345
      %v1761 = vld [vmem:[%s25 + $0x8] sm:$0xf]
      %v1762 = vld [vmem:[%s25 + $0xc] sm:$0xf]
      %v1763 = vpack.c.bf16 %v1454, %v1454
      %v1766 = vunpack.c.l.b16 %v1761
      %v1767 = vunpack.c.l.b16 %v1762
      %v1768 = vpack.c.b16 %v1767, %v1766
      %v1771 = vsel %vm1244, %v1763, 0
      %1773 = vmatprep.subr.bf16.mxu0 0
      %1774 = vmatpush1.bf16.msra.mxu0 %v1768
      %1775 = vmatprep.subr.bf16.mxu0 0
      %1776 = vmatpush1.bf16.msra.mxu0 0
      %1777 = vmatprep.subr.bf16.mxu0 0
      %1778 = vmatpush1.bf16.msra.mxu0 0
      %1779 = vmatprep.subr.bf16.mxu0 0
      %1780 = vmatpush1.bf16.msra.mxu0 0
      %1781 = vmatprep.subr.bf16.mxu0 0
      %1782 = vmatpush1.bf16.msra.mxu0 0
      %1783 = vmatprep.subr.bf16.mxu0 0
      %1784 = vmatpush1.bf16.msra.mxu0 0
      %1785 = vmatprep.subr.bf16.mxu0 0
      %1786 = vmatpush1.bf16.msra.mxu0 0
      %1787 = vmatprep.subr.bf16.mxu0 0
      %1788 = vmatpush1.bf16.msra.mxu0 0
      %1789 = vmatprep.subr.bf16.mxu0 0
      %1790 = vmatpush1.bf16.msra.mxu0 0
      %1791 = vmatprep.subr.bf16.mxu0 0
      %1792 = vmatpush1.bf16.msra.mxu0 0
      %1793 = vmatprep.subr.bf16.mxu0 0
      %1794 = vmatpush1.bf16.msra.mxu0 0
      %1795 = vmatprep.subr.bf16.mxu0 0
      %1796 = vmatpush1.bf16.msra.mxu0 0
      %1797 = vmatprep.subr.bf16.mxu0 0
      %1798 = vmatpush1.bf16.msra.mxu0 0
      %1799 = vmatprep.subr.bf16.mxu0 0
      %1800 = vmatpush1.bf16.msra.mxu0 0
      %1801 = vmatprep.subr.bf16.mxu0 0
      %1802 = vmatpush1.bf16.msra.mxu0 0
      %1803 = vmatprep.subr.bf16.mxu0 0
      %1804 = vmatpush1.bf16.msra.mxu0 0
      %1805 = vmatprep.mubr.bf16.mxu0 0
      %1806 = vmatmul.mubr.bf16.gmra.mrb[0].mxu0 %v1771
      %v1807 = vpop.f32.mrb[0].mxu0
      %v1808 = vadd.f32 0.0, %v1807
      %v1809 = vpop.f32.mrb[0].mxu0
      %v1810 = vpop.f32.mrb[0].mxu0
      %v1811 = vpop.f32.mrb[0].mxu0
      %1812 = vdwg.mxu0
      %v1815 = vunpack.c.l.b16 %v1758
      %v1816 = vunpack.c.l.b16 %v1759
      %v1817 = vpack.c.b16 %v1816, %v1815
      %v1820 = vsel %vm1244, %v1760, 0
      %1822 = vmatprep.subr.bf16.mxu0 0
      %1823 = vmatpush1.bf16.msra.mxu0 %v1817
      %1824 = vmatprep.subr.bf16.mxu0 0
      %1825 = vmatpush1.bf16.msra.mxu0 0
      %1826 = vmatprep.subr.bf16.mxu0 0
      %1827 = vmatpush1.bf16.msra.mxu0 0
      %1828 = vmatprep.subr.bf16.mxu0 0
      %1829 = vmatpush1.bf16.msra.mxu0 0
      %1830 = vmatprep.subr.bf16.mxu0 0
      %1831 = vmatpush1.bf16.msra.mxu0 0
      %1832 = vmatprep.subr.bf16.mxu0 0
      %1833 = vmatpush1.bf16.msra.mxu0 0
      %1834 = vmatprep.subr.bf16.mxu0 0
      %1835 = vmatpush1.bf16.msra.mxu0 0
      %1836 = vmatprep.subr.bf16.mxu0 0
      %1837 = vmatpush1.bf16.msra.mxu0 0
      %1838 = vmatprep.subr.bf16.mxu0 0
      %1839 = vmatpush1.bf16.msra.mxu0 0
      %1840 = vmatprep.subr.bf16.mxu0 0
      %1841 = vmatpush1.bf16.msra.mxu0 0
      %1842 = vmatprep.subr.bf16.mxu0 0
      %1843 = vmatpush1.bf16.msra.mxu0 0
      %1844 = vmatprep.subr.bf16.mxu0 0
      %1845 = vmatpush1.bf16.msra.mxu0 0
      %1846 = vmatprep.subr.bf16.mxu0 0
      %1847 = vmatpush1.bf16.msra.mxu0 0
      %1848 = vmatprep.subr.bf16.mxu0 0
      %1849 = vmatpush1.bf16.msra.mxu0 0
      %1850 = vmatprep.subr.bf16.mxu0 0
      %1851 = vmatpush1.bf16.msra.mxu0 0
      %1852 = vmatprep.subr.bf16.mxu0 0
      %1853 = vmatpush1.bf16.msra.mxu0 0
      %1854 = vmatprep.mubr.bf16.mxu0 0
      %1855 = vmatmul.mubr.bf16.gmra.mrb[0].mxu0 %v1820
      %v1856 = vpop.f32.mrb[0].mxu0
      %v1857 = vadd.f32 %v1808, %v1856
      %v1858 = vpop.f32.mrb[0].mxu0
      %v1859 = vpop.f32.mrb[0].mxu0
      %v1860 = vpop.f32.mrb[0].mxu0
      %1861 = vdwg.mxu0
      %v1862 = vld [vmem:[%s25 + $0x10] sm:$0xf]
      %v1863 = vld [vmem:[%s25 + $0x14] sm:$0xf]
      %v1864 = vpack.c.bf16 %v1562, %v1562
      %v1867 = vunpack.c.l.b16 %v1862
      %v1868 = vunpack.c.l.b16 %v1863
      %v1869 = vpack.c.b16 %v1868, %v1867
      %v1872 = vsel %vm1244, %v1864, 0
      %1874 = vmatprep.subr.bf16.mxu0 0
      %1875 = vmatpush1.bf16.msra.mxu0 %v1869
      %1876 = vmatprep.subr.bf16.mxu0 0
      %1877 = vmatpush1.bf16.msra.mxu0 0
      %1878 = vmatprep.subr.bf16.mxu0 0
      %1879 = vmatpush1.bf16.msra.mxu0 0
      %1880 = vmatprep.subr.bf16.mxu0 0
      %1881 = vmatpush1.bf16.msra.mxu0 0
      %1882 = vmatprep.subr.bf16.mxu0 0
      %1883 = vmatpush1.bf16.msra.mxu0 0
      %1884 = vmatprep.subr.bf16.mxu0 0
      %1885 = vmatpush1.bf16.msra.mxu0 0
      %1886 = vmatprep.subr.bf16.mxu0 0
      %1887 = vmatpush1.bf16.msra.mxu0 0
      %1888 = vmatprep.subr.bf16.mxu0 0
      %1889 = vmatpush1.bf16.msra.mxu0 0
      %1890 = vmatprep.subr.bf16.mxu0 0
      %1891 = vmatpush1.bf16.msra.mxu0 0
      %1892 = vmatprep.subr.bf16.mxu0 0
      %1893 = vmatpush1.bf16.msra.mxu0 0
      %1894 = vmatprep.subr.bf16.mxu0 0
      %1895 = vmatpush1.bf16.msra.mxu0 0
      %1896 = vmatprep.subr.bf16.mxu0 0
      %1897 = vmatpush1.bf16.msra.mxu0 0
      %1898 = vmatprep.subr.bf16.mxu0 0
      %1899 = vmatpush1.bf16.msra.mxu0 0
      %1900 = vmatprep.subr.bf16.mxu0 0
      %1901 = vmatpush1.bf16.msra.mxu0 0
      %1902 = vmatprep.subr.bf16.mxu0 0
      %1903 = vmatpush1.bf16.msra.mxu0 0
      %1904 = vmatprep.subr.bf16.mxu0 0
      %1905 = vmatpush1.bf16.msra.mxu0 0
      %1906 = vmatprep.mubr.bf16.mxu0 0
      %1907 = vmatmul.mubr.bf16.gmra.mrb[0].mxu0 %v1872
      %v1908 = vpop.f32.mrb[0].mxu0
      %v1909 = vadd.f32 0.0, %v1908
      %v1910 = vpop.f32.mrb[0].mxu0
      %v1911 = vpop.f32.mrb[0].mxu0
      %v1912 = vpop.f32.mrb[0].mxu0
      %1913 = vdwg.mxu0
      %v1914 = vadd.f32 %v1857, %v1909
      %v1915 = vld [vmem:[%s25 + $0x18] sm:$0xf]
      %v1916 = vld [vmem:[%s25 + $0x1c] sm:$0xf]
      %v1917 = vpack.c.bf16 %v1670, %v1670
      %v1920 = vunpack.c.l.b16 %v1915
      %v1921 = vunpack.c.l.b16 %v1916
      %v1922 = vpack.c.b16 %v1921, %v1920
      %v1925 = vsel %vm1244, %v1917, 0
      %1927 = vmatprep.subr.bf16.mxu0 0
      %1928 = vmatpush1.bf16.msra.mxu0 %v1922
      %1929 = vmatprep.subr.bf16.mxu0 0
      %1930 = vmatpush1.bf16.msra.mxu0 0
      %1931 = vmatprep.subr.bf16.mxu0 0
      %1932 = vmatpush1.bf16.msra.mxu0 0
      %1933 = vmatprep.subr.bf16.mxu0 0
      %1934 = vmatpush1.bf16.msra.mxu0 0
      %1935 = vmatprep.subr.bf16.mxu0 0
      %1936 = vmatpush1.bf16.msra.mxu0 0
      %1937 = vmatprep.subr.bf16.mxu0 0
      %1938 = vmatpush1.bf16.msra.mxu0 0
      %1939 = vmatprep.subr.bf16.mxu0 0
      %1940 = vmatpush1.bf16.msra.mxu0 0
      %1941 = vmatprep.subr.bf16.mxu0 0
      %1942 = vmatpush1.bf16.msra.mxu0 0
      %1943 = vmatprep.subr.bf16.mxu0 0
      %1944 = vmatpush1.bf16.msra.mxu0 0
      %1945 = vmatprep.subr.bf16.mxu0 0
      %1946 = vmatpush1.bf16.msra.mxu0 0
      %1947 = vmatprep.subr.bf16.mxu0 0
      %1948 = vmatpush1.bf16.msra.mxu0 0
      %1949 = vmatprep.subr.bf16.mxu0 0
      %1950 = vmatpush1.bf16.msra.mxu0 0
      %1951 = vmatprep.subr.bf16.mxu0 0
      %1952 = vmatpush1.bf16.msra.mxu0 0
      %1953 = vmatprep.subr.bf16.mxu0 0
      %1954 = vmatpush1.bf16.msra.mxu0 0
      %1955 = vmatprep.subr.bf16.mxu0 0
      %1956 = vmatpush1.bf16.msra.mxu0 0
      %1957 = vmatprep.subr.bf16.mxu0 0
      %1958 = vmatpush1.bf16.msra.mxu0 0
      %1959 = vmatprep.mubr.bf16.mxu0 0
      %1960 = vmatmul.mubr.bf16.gmra.mrb[0].mxu0 %v1925
      %v1961 = vpop.f32.mrb[0].mxu0
      %v1962 = vadd.f32 0.0, %v1961
      %v1963 = vpop.f32.mrb[0].mxu0
      %v1964 = vpop.f32.mrb[0].mxu0
      %v1965 = vpop.f32.mrb[0].mxu0
      %1966 = vdwg.mxu0
      %v1967 = vadd.f32 %v1914, %v1962
      %v1968 = vld [vmem:[%s27] sm:$0x1]
      %v1970 = vlaneseq
      %v1971 = vshrl.u32 %v1970, 7
      %v1972 = vsub.s32 0, %v1971
      %v1973 = vrot.slane %v1968, %v1972
      %v1975 = vadd.f32 %v1967, %v1973
      %v1976 = vpack.c.bf16 %v1755, %v1752
      %v1977 = vpack.c.bf16 %v1975, %v1975
      %v1979 = vsel %vm1244, %v1976, 0
      %v1982 = vsel %vm1244, %v1977, 0
      %1984 = vmatprep.subr.bf16.mxu0 0
      %1985 = vmatpush1.bf16.xpose.msra.mxu0 %v1982
      %1986 = vmatprep.subr.bf16.mxu0 0
      %1987 = vmatpush1.bf16.xpose.msra.mxu0 0
      %1988 = vmatprep.subr.bf16.mxu0 0
      %1989 = vmatpush1.bf16.xpose.msra.mxu0 0
      %1990 = vmatprep.subr.bf16.mxu0 0
      %1991 = vmatpush1.bf16.xpose.msra.mxu0 0
      %1992 = vmatprep.subr.bf16.mxu0 0
      %1993 = vmatpush1.bf16.xpose.msra.mxu0 0
      %1994 = vmatprep.subr.bf16.mxu0 0
      %1995 = vmatpush1.bf16.xpose.msra.mxu0 0
      %1996 = vmatprep.subr.bf16.mxu0 0
      %1997 = vmatpush1.bf16.xpose.msra.mxu0 0
      %1998 = vmatprep.subr.bf16.mxu0 0
      %1999 = vmatpush1.bf16.xpose.msra.mxu0 0
      %2000 = vmatprep.subr.bf16.mxu0 0
      %2001 = vmatpush1.bf16.xpose.msra.mxu0 0
      %2002 = vmatprep.subr.bf16.mxu0 0
      %2003 = vmatpush1.bf16.xpose.msra.mxu0 0
      %2004 = vmatprep.subr.bf16.mxu0 0
      %2005 = vmatpush1.bf16.xpose.msra.mxu0 0
      %2006 = vmatprep.subr.bf16.mxu0 0
      %2007 = vmatpush1.bf16.xpose.msra.mxu0 0
      %2008 = vmatprep.subr.bf16.mxu0 0
      %2009 = vmatpush1.bf16.xpose.msra.mxu0 0
      %2010 = vmatprep.subr.bf16.mxu0 0
      %2011 = vmatpush1.bf16.xpose.msra.mxu0 0
      %2012 = vmatprep.subr.bf16.mxu0 0
      %2013 = vmatpush1.bf16.xpose.msra.mxu0 0
      %2014 = vmatprep.subr.bf16.mxu0 0
      %2015 = vmatpush1.bf16.xpose.msra.mxu0 0
      %2016 = vmatprep.mubr.bf16.mxu0 0
      %2017 = vmatmul.mubr.bf16.gmra.mrb[0].mxu0 %v1979
      %v2018 = vpop.f32.mrb[0].mxu0
      %v2019 = vadd.f32 0.0, %v2018
      %v2020 = vpop.f32.mrb[0].mxu0
      %v2021 = vpop.f32.mrb[0].mxu0
      %v2022 = vadd.f32 0.0, %v2021
      %v2023 = vpop.f32.mrb[0].mxu0
      %2024 = vdwg.mxu0
      %vm2025 = vcmask 64512
      %v2026 = vsel %vm2025, %v2019, -inf
      %2027 = vmax.xlane.f32.xlu0 %v2026
      %v2028 = vpop.xlane.xlu0 %2027
      %v2029 = vsel %vm2025, %v2022, -inf
      %2030 = vmax.xlane.f32.xlu0 %v2029
      %v2031 = vpop.xlane.xlu0 %2030
      %v2032 = vsub.f32 %v2019, %v2028
      %v2033 = vsub.f32 %v2022, %v2031
      %v2034 = vmul.f32 %v2032, 1.442695
      %v2035 = vpow.pop %v2034
      %v2036 = vmul.f32 %v2033, 1.442695
      %v2037 = vpow.pop %v2036
      %v2038 = vsel %vm2025, %v2035, 0.0
      %2039 = vadd.xlane.f32.xlu0 %v2038
      %v2040 = vpop.xlane.xlu0 %2039
      %v2041 = vsel %vm2025, %v2037, 0.0
      %2042 = vadd.xlane.f32.xlu0 %v2041
      %v2043 = vpop.xlane.xlu0 %2042
      %v2044 = vrcp.pop %v2040
      %v2045 = vrcp.pop %v2043
      %v2046 = vmul.f32 %v2035, %v2044
      %v2047 = vmul.f32 %v2037, %v2045
      %v2048 = vpack.c.bf16 %v2047, %v2046
      %2050 = vrot.lane.b32.xlu0 %v1977, 64
      %v2051 = vpop.permute.xlu0 %2050
      %v2053 = vsel %vm2025, %v2048, 0
      %vm2055 = vcmask 1043456
      %v2057 = vsel %vm2055, %v2051, 0
      %2059 = vmatprep.subr.bf16.mxu0 0
      %2060 = vmatpush1.bf16.msra.mxu0 %v2057
      %2061 = vmatprep.subr.bf16.mxu0 0
      %2062 = vmatpush1.bf16.msra.mxu0 0
      %2063 = vmatprep.subr.bf16.mxu0 0
      %2064 = vmatpush1.bf16.msra.mxu0 0
      %2065 = vmatprep.subr.bf16.mxu0 0
      %2066 = vmatpush1.bf16.msra.mxu0 0
      %2067 = vmatprep.subr.bf16.mxu0 0
      %2068 = vmatpush1.bf16.msra.mxu0 0
      %2069 = vmatprep.subr.bf16.mxu0 0
      %2070 = vmatpush1.bf16.msra.mxu0 0
      %2071 = vmatprep.subr.bf16.mxu0 0
      %2072 = vmatpush1.bf16.msra.mxu0 0
      %2073 = vmatprep.subr.bf16.mxu0 0
      %2074 = vmatpush1.bf16.msra.mxu0 0
      %2075 = vmatprep.subr.bf16.mxu0 0
      %2076 = vmatpush1.bf16.msra.mxu0 0
      %2077 = vmatprep.subr.bf16.mxu0 0
      %2078 = vmatpush1.bf16.msra.mxu0 0
      %2079 = vmatprep.subr.bf16.mxu0 0
      %2080 = vmatpush1.bf16.msra.mxu0 0
      %2081 = vmatprep.subr.bf16.mxu0 0
      %2082 = vmatpush1.bf16.msra.mxu0 0
      %2083 = vmatprep.subr.bf16.mxu0 0
      %2084 = vmatpush1.bf16.msra.mxu0 0
      %2085 = vmatprep.subr.bf16.mxu0 0
      %2086 = vmatpush1.bf16.msra.mxu0 0
      %2087 = vmatprep.subr.bf16.mxu0 0
      %2088 = vmatpush1.bf16.msra.mxu0 0
      %2089 = vmatprep.subr.bf16.mxu0 0
      %2090 = vmatpush1.bf16.msra.mxu0 0
      %2091 = vmatprep.mubr.bf16.mxu0 0
      %2092 = vmatmul.mubr.bf16.gmra.mrb[0].mxu0 %v2053
      %v2093 = vpop.f32.mrb[0].mxu0
      %v2094 = vadd.f32 0.0, %v2093
      %v2095 = vpop.f32.mrb[0].mxu0
      %v2096 = vpop.f32.mrb[0].mxu0
      %v2097 = vadd.f32 0.0, %v2096
      %v2098 = vpop.f32.mrb[0].mxu0
      %2099 = vdwg.mxu0
      %2101 = vrot.lane.b32.xlu0 %v1976, 112
      %v2102 = vpop.permute.xlu0 %2101
      %2103 = vrot.lane.b32.xlu0 %v1977, 112
      %v2104 = vpop.permute.xlu0 %2103
      %v2106 = vsel %vm1244, %v2102, 0
      %v2109 = vsel %vm1244, %v2104, 0
      %2111 = vmatprep.subr.bf16.mxu0 0
      %2112 = vmatpush1.bf16.xpose.msra.mxu0 %v2109
      %2113 = vmatprep.subr.bf16.mxu0 0
      %2114 = vmatpush1.bf16.xpose.msra.mxu0 0
      %2115 = vmatprep.subr.bf16.mxu0 0
      %2116 = vmatpush1.bf16.xpose.msra.mxu0 0
      %2117 = vmatprep.subr.bf16.mxu0 0
      %2118 = vmatpush1.bf16.xpose.msra.mxu0 0
      %2119 = vmatprep.subr.bf16.mxu0 0
      %2120 = vmatpush1.bf16.xpose.msra.mxu0 0
      %2121 = vmatprep.subr.bf16.mxu0 0
      %2122 = vmatpush1.bf16.xpose.msra.mxu0 0
      %2123 = vmatprep.subr.bf16.mxu0 0
      %2124 = vmatpush1.bf16.xpose.msra.mxu0 0
      %2125 = vmatprep.subr.bf16.mxu0 0
      %2126 = vmatpush1.bf16.xpose.msra.mxu0 0
      %2127 = vmatprep.subr.bf16.mxu0 0
      %2128 = vmatpush1.bf16.xpose.msra.mxu0 0
      %2129 = vmatprep.subr.bf16.mxu0 0
      %2130 = vmatpush1.bf16.xpose.msra.mxu0 0
      %2131 = vmatprep.subr.bf16.mxu0 0
      %2132 = vmatpush1.bf16.xpose.msra.mxu0 0
      %2133 = vmatprep.subr.bf16.mxu0 0
      %2134 = vmatpush1.bf16.xpose.msra.mxu0 0
      %2135 = vmatprep.subr.bf16.mxu0 0
      %2136 = vmatpush1.bf16.xpose.msra.mxu0 0
      %2137 = vmatprep.subr.bf16.mxu0 0
      %2138 = vmatpush1.bf16.xpose.msra.mxu0 0
      %2139 = vmatprep.subr.bf16.mxu0 0
      %2140 = vmatpush1.bf16.xpose.msra.mxu0 0
      %2141 = vmatprep.subr.bf16.mxu0 0
      %2142 = vmatpush1.bf16.xpose.msra.mxu0 0
      %2143 = vmatprep.mubr.bf16.mxu0 0
      %2144 = vmatmul.mubr.bf16.gmra.mrb[0].mxu0 %v2106
      %v2145 = vpop.f32.mrb[0].mxu0
      %v2146 = vadd.f32 0.0, %v2145
      %v2147 = vpop.f32.mrb[0].mxu0
      %v2148 = vpop.f32.mrb[0].mxu0
      %v2149 = vadd.f32 0.0, %v2148
      %v2150 = vpop.f32.mrb[0].mxu0
      %2151 = vdwg.mxu0
      %v2152 = vsel %vm2025, %v2146, -inf
      %2153 = vmax.xlane.f32.xlu0 %v2152
      %v2154 = vpop.xlane.xlu0 %2153
      %v2155 = vsel %vm2025, %v2149, -inf
      %2156 = vmax.xlane.f32.xlu0 %v2155
      %v2157 = vpop.xlane.xlu0 %2156
      %v2158 = vsub.f32 %v2146, %v2154
      %v2159 = vsub.f32 %v2149, %v2157
      %v2160 = vmul.f32 %v2158, 1.442695
      %v2161 = vpow.pop %v2160
      %v2162 = vmul.f32 %v2159, 1.442695
      %v2163 = vpow.pop %v2162
      %v2164 = vsel %vm2025, %v2161, 0.0
      %2165 = vadd.xlane.f32.xlu0 %v2164
      %v2166 = vpop.xlane.xlu0 %2165
      %v2167 = vsel %vm2025, %v2163, 0.0
      %2168 = vadd.xlane.f32.xlu0 %v2167
      %v2169 = vpop.xlane.xlu0 %2168
      %v2170 = vrcp.pop %v2166
      %v2171 = vrcp.pop %v2169
      %v2172 = vmul.f32 %v2161, %v2170
      %v2173 = vmul.f32 %v2163, %v2171
      %v2174 = vpack.c.bf16 %v2173, %v2172
      %2175 = vrot.lane.b32.xlu0 %v1977, 48
      %v2176 = vpop.permute.xlu0 %2175
      %v2178 = vsel %vm2025, %v2174, 0
      %v2181 = vsel %vm2055, %v2176, 0
      %2183 = vmatprep.subr.bf16.mxu0 0
      %2184 = vmatpush1.bf16.msra.mxu0 %v2181
      %2185 = vmatprep.subr.bf16.mxu0 0
      %2186 = vmatpush1.bf16.msra.mxu0 0
      %2187 = vmatprep.subr.bf16.mxu0 0
      %2188 = vmatpush1.bf16.msra.mxu0 0
      %2189 = vmatprep.subr.bf16.mxu0 0
      %2190 = vmatpush1.bf16.msra.mxu0 0
      %2191 = vmatprep.subr.bf16.mxu0 0
      %2192 = vmatpush1.bf16.msra.mxu0 0
      %2193 = vmatprep.subr.bf16.mxu0 0
      %2194 = vmatpush1.bf16.msra.mxu0 0
      %2195 = vmatprep.subr.bf16.mxu0 0
      %2196 = vmatpush1.bf16.msra.mxu0 0
      %2197 = vmatprep.subr.bf16.mxu0 0
      %2198 = vmatpush1.bf16.msra.mxu0 0
      %2199 = vmatprep.subr.bf16.mxu0 0
      %2200 = vmatpush1.bf16.msra.mxu0 0
      %2201 = vmatprep.subr.bf16.mxu0 0
      %2202 = vmatpush1.bf16.msra.mxu0 0
      %2203 = vmatprep.subr.bf16.mxu0 0
      %2204 = vmatpush1.bf16.msra.mxu0 0
      %2205 = vmatprep.subr.bf16.mxu0 0
      %2206 = vmatpush1.bf16.msra.mxu0 0
      %2207 = vmatprep.subr.bf16.mxu0 0
      %2208 = vmatpush1.bf16.msra.mxu0 0
      %2209 = vmatprep.subr.bf16.mxu0 0
      %2210 = vmatpush1.bf16.msra.mxu0 0
      %2211 = vmatprep.subr.bf16.mxu0 0
      %2212 = vmatpush1.bf16.msra.mxu0 0
      %2213 = vmatprep.subr.bf16.mxu0 0
      %2214 = vmatpush1.bf16.msra.mxu0 0
      %2215 = vmatprep.mubr.bf16.mxu0 0
      %2216 = vmatmul.mubr.bf16.gmra.mrb[0].mxu0 %v2178
      %v2217 = vpop.f32.mrb[0].mxu0
      %v2218 = vadd.f32 0.0, %v2217
      %v2219 = vpop.f32.mrb[0].mxu0
      %v2220 = vpop.f32.mrb[0].mxu0
      %v2221 = vadd.f32 0.0, %v2220
      %v2222 = vpop.f32.mrb[0].mxu0
      %2223 = vdwg.mxu0
      %2224 = vrot.lane.b32.xlu0 %v1976, 96
      %v2225 = vpop.permute.xlu0 %2224
      %2226 = vrot.lane.b32.xlu0 %v1977, 96
      %v2227 = vpop.permute.xlu0 %2226
      %v2229 = vsel %vm1244, %v2225, 0
      %v2232 = vsel %vm1244, %v2227, 0
      %2234 = vmatprep.subr.bf16.mxu0 0
      %2235 = vmatpush1.bf16.xpose.msra.mxu0 %v2232
      %2236 = vmatprep.subr.bf16.mxu0 0
      %2237 = vmatpush1.bf16.xpose.msra.mxu0 0
      %2238 = vmatprep.subr.bf16.mxu0 0
      %2239 = vmatpush1.bf16.xpose.msra.mxu0 0
      %2240 = vmatprep.subr.bf16.mxu0 0
      %2241 = vmatpush1.bf16.xpose.msra.mxu0 0
      %2242 = vmatprep.subr.bf16.mxu0 0
      %2243 = vmatpush1.bf16.xpose.msra.mxu0 0
      %2244 = vmatprep.subr.bf16.mxu0 0
      %2245 = vmatpush1.bf16.xpose.msra.mxu0 0
      %2246 = vmatprep.subr.bf16.mxu0 0
      %2247 = vmatpush1.bf16.xpose.msra.mxu0 0
      %2248 = vmatprep.subr.bf16.mxu0 0
      %2249 = vmatpush1.bf16.xpose.msra.mxu0 0
      %2250 = vmatprep.subr.bf16.mxu0 0
      %2251 = vmatpush1.bf16.xpose.msra.mxu0 0
      %2252 = vmatprep.subr.bf16.mxu0 0
      %2253 = vmatpush1.bf16.xpose.msra.mxu0 0
      %2254 = vmatprep.subr.bf16.mxu0 0
      %2255 = vmatpush1.bf16.xpose.msra.mxu0 0
      %2256 = vmatprep.subr.bf16.mxu0 0
      %2257 = vmatpush1.bf16.xpose.msra.mxu0 0
      %2258 = vmatprep.subr.bf16.mxu0 0
      %2259 = vmatpush1.bf16.xpose.msra.mxu0 0
      %2260 = vmatprep.subr.bf16.mxu0 0
      %2261 = vmatpush1.bf16.xpose.msra.mxu0 0
      %2262 = vmatprep.subr.bf16.mxu0 0
      %2263 = vmatpush1.bf16.xpose.msra.mxu0 0
      %2264 = vmatprep.subr.bf16.mxu0 0
      %2265 = vmatpush1.bf16.xpose.msra.mxu0 0
      %2266 = vmatprep.mubr.bf16.mxu0 0
      %2267 = vmatmul.mubr.bf16.gmra.mrb[0].mxu0 %v2229
      %v2268 = vpop.f32.mrb[0].mxu0
      %v2269 = vadd.f32 0.0, %v2268
      %v2270 = vpop.f32.mrb[0].mxu0
      %v2271 = vpop.f32.mrb[0].mxu0
      %v2272 = vadd.f32 0.0, %v2271
      %v2273 = vpop.f32.mrb[0].mxu0
      %2274 = vdwg.mxu0
      %v2275 = vsel %vm2025, %v2269, -inf
      %2276 = vmax.xlane.f32.xlu0 %v2275
      %v2277 = vpop.xlane.xlu0 %2276
      %v2278 = vsel %vm2025, %v2272, -inf
      %2279 = vmax.xlane.f32.xlu0 %v2278
      %v2280 = vpop.xlane.xlu0 %2279
      %v2281 = vsub.f32 %v2269, %v2277
      %v2282 = vsub.f32 %v2272, %v2280
      %v2283 = vmul.f32 %v2281, 1.442695
      %v2284 = vpow.pop %v2283
      %v2285 = vmul.f32 %v2282, 1.442695
      %v2286 = vpow.pop %v2285
      %v2287 = vsel %vm2025, %v2284, 0.0
      %2288 = vadd.xlane.f32.xlu0 %v2287
      %v2289 = vpop.xlane.xlu0 %2288
      %v2290 = vsel %vm2025, %v2286, 0.0
      %2291 = vadd.xlane.f32.xlu0 %v2290
      %v2292 = vpop.xlane.xlu0 %2291
      %v2293 = vrcp.pop %v2289
      %v2294 = vrcp.pop %v2292
      %v2295 = vmul.f32 %v2284, %v2293
      %v2296 = vmul.f32 %v2286, %v2294
      %v2297 = vpack.c.bf16 %v2296, %v2295
      %2298 = vrot.lane.b32.xlu0 %v1977, 32
      %v2299 = vpop.permute.xlu0 %2298
      %v2301 = vsel %vm2025, %v2297, 0
      %v2304 = vsel %vm2055, %v2299, 0
      %2306 = vmatprep.subr.bf16.mxu0 0
      %2307 = vmatpush1.bf16.msra.mxu0 %v2304
      %2308 = vmatprep.subr.bf16.mxu0 0
      %2309 = vmatpush1.bf16.msra.mxu0 0
      %2310 = vmatprep.subr.bf16.mxu0 0
      %2311 = vmatpush1.bf16.msra.mxu0 0
      %2312 = vmatprep.subr.bf16.mxu0 0
      %2313 = vmatpush1.bf16.msra.mxu0 0
      %2314 = vmatprep.subr.bf16.mxu0 0
      %2315 = vmatpush1.bf16.msra.mxu0 0
      %2316 = vmatprep.subr.bf16.mxu0 0
      %2317 = vmatpush1.bf16.msra.mxu0 0
      %2318 = vmatprep.subr.bf16.mxu0 0
      %2319 = vmatpush1.bf16.msra.mxu0 0
      %2320 = vmatprep.subr.bf16.mxu0 0
      %2321 = vmatpush1.bf16.msra.mxu0 0
      %2322 = vmatprep.subr.bf16.mxu0 0
      %2323 = vmatpush1.bf16.msra.mxu0 0
      %2324 = vmatprep.subr.bf16.mxu0 0
      %2325 = vmatpush1.bf16.msra.mxu0 0
      %2326 = vmatprep.subr.bf16.mxu0 0
      %2327 = vmatpush1.bf16.msra.mxu0 0
      %2328 = vmatprep.subr.bf16.mxu0 0
      %2329 = vmatpush1.bf16.msra.mxu0 0
      %2330 = vmatprep.subr.bf16.mxu0 0
      %2331 = vmatpush1.bf16.msra.mxu0 0
      %2332 = vmatprep.subr.bf16.mxu0 0
      %2333 = vmatpush1.bf16.msra.mxu0 0
      %2334 = vmatprep.subr.bf16.mxu0 0
      %2335 = vmatpush1.bf16.msra.mxu0 0
      %2336 = vmatprep.subr.bf16.mxu0 0
      %2337 = vmatpush1.bf16.msra.mxu0 0
      %2338 = vmatprep.mubr.bf16.mxu0 0
      %2339 = vmatmul.mubr.bf16.gmra.mrb[0].mxu0 %v2301
      %v2340 = vpop.f32.mrb[0].mxu0
      %v2341 = vadd.f32 0.0, %v2340
      %v2342 = vpop.f32.mrb[0].mxu0
      %v2343 = vpop.f32.mrb[0].mxu0
      %v2344 = vadd.f32 0.0, %v2343
      %v2345 = vpop.f32.mrb[0].mxu0
      %2346 = vdwg.mxu0
      %2347 = vrot.lane.b32.xlu0 %v1976, 80
      %v2348 = vpop.permute.xlu0 %2347
      %2349 = vrot.lane.b32.xlu0 %v1977, 80
      %v2350 = vpop.permute.xlu0 %2349
      %v2352 = vsel %vm1244, %v2348, 0
      %v2355 = vsel %vm1244, %v2350, 0
      %2357 = vmatprep.subr.bf16.mxu0 0
      %2358 = vmatpush1.bf16.xpose.msra.mxu0 %v2355
      %2359 = vmatprep.subr.bf16.mxu0 0
      %2360 = vmatpush1.bf16.xpose.msra.mxu0 0
      %2361 = vmatprep.subr.bf16.mxu0 0
      %2362 = vmatpush1.bf16.xpose.msra.mxu0 0
      %2363 = vmatprep.subr.bf16.mxu0 0
      %2364 = vmatpush1.bf16.xpose.msra.mxu0 0
      %2365 = vmatprep.subr.bf16.mxu0 0
      %2366 = vmatpush1.bf16.xpose.msra.mxu0 0
      %2367 = vmatprep.subr.bf16.mxu0 0
      %2368 = vmatpush1.bf16.xpose.msra.mxu0 0
      %2369 = vmatprep.subr.bf16.mxu0 0
      %2370 = vmatpush1.bf16.xpose.msra.mxu0 0
      %2371 = vmatprep.subr.bf16.mxu0 0
      %2372 = vmatpush1.bf16.xpose.msra.mxu0 0
      %2373 = vmatprep.subr.bf16.mxu0 0
      %2374 = vmatpush1.bf16.xpose.msra.mxu0 0
      %2375 = vmatprep.subr.bf16.mxu0 0
      %2376 = vmatpush1.bf16.xpose.msra.mxu0 0
      %2377 = vmatprep.subr.bf16.mxu0 0
      %2378 = vmatpush1.bf16.xpose.msra.mxu0 0
      %2379 = vmatprep.subr.bf16.mxu0 0
      %2380 = vmatpush1.bf16.xpose.msra.mxu0 0
      %2381 = vmatprep.subr.bf16.mxu0 0
      %2382 = vmatpush1.bf16.xpose.msra.mxu0 0
      %2383 = vmatprep.subr.bf16.mxu0 0
      %2384 = vmatpush1.bf16.xpose.msra.mxu0 0
      %2385 = vmatprep.subr.bf16.mxu0 0
      %2386 = vmatpush1.bf16.xpose.msra.mxu0 0
      %2387 = vmatprep.subr.bf16.mxu0 0
      %2388 = vmatpush1.bf16.xpose.msra.mxu0 0
      %2389 = vmatprep.mubr.bf16.mxu0 0
      %2390 = vmatmul.mubr.bf16.gmra.mrb[0].mxu0 %v2352
      %v2391 = vpop.f32.mrb[0].mxu0
      %v2392 = vadd.f32 0.0, %v2391
      %v2393 = vpop.f32.mrb[0].mxu0
      %v2394 = vpop.f32.mrb[0].mxu0
      %v2395 = vadd.f32 0.0, %v2394
      %v2396 = vpop.f32.mrb[0].mxu0
      %2397 = vdwg.mxu0
      %v2398 = vsel %vm2025, %v2392, -inf
      %2399 = vmax.xlane.f32.xlu0 %v2398
      %v2400 = vpop.xlane.xlu0 %2399
      %v2401 = vsel %vm2025, %v2395, -inf
      %2402 = vmax.xlane.f32.xlu0 %v2401
      %v2403 = vpop.xlane.xlu0 %2402
      %v2404 = vsub.f32 %v2392, %v2400
      %v2405 = vsub.f32 %v2395, %v2403
      %v2406 = vmul.f32 %v2404, 1.442695
      %v2407 = vpow.pop %v2406
      %v2408 = vmul.f32 %v2405, 1.442695
      %v2409 = vpow.pop %v2408
      %v2410 = vsel %vm2025, %v2407, 0.0
      %2411 = vadd.xlane.f32.xlu0 %v2410
      %v2412 = vpop.xlane.xlu0 %2411
      %v2413 = vsel %vm2025, %v2409, 0.0
      %2414 = vadd.xlane.f32.xlu0 %v2413
      %v2415 = vpop.xlane.xlu0 %2414
      %v2416 = vrcp.pop %v2412
      %v2417 = vrcp.pop %v2415
      %v2418 = vmul.f32 %v2407, %v2416
      %v2419 = vmul.f32 %v2409, %v2417
      %v2420 = vpack.c.bf16 %v2419, %v2418
      %2421 = vrot.lane.b32.xlu0 %v1977, 16
      %v2422 = vpop.permute.xlu0 %2421
      %v2424 = vsel %vm2025, %v2420, 0
      %v2427 = vsel %vm2055, %v2422, 0
      %2429 = vmatprep.subr.bf16.mxu0 0
      %2430 = vmatpush1.bf16.msra.mxu0 %v2427
      %2431 = vmatprep.subr.bf16.mxu0 0
      %2432 = vmatpush1.bf16.msra.mxu0 0
      %2433 = vmatprep.subr.bf16.mxu0 0
      %2434 = vmatpush1.bf16.msra.mxu0 0
      %2435 = vmatprep.subr.bf16.mxu0 0
      %2436 = vmatpush1.bf16.msra.mxu0 0
      %2437 = vmatprep.subr.bf16.mxu0 0
      %2438 = vmatpush1.bf16.msra.mxu0 0
      %2439 = vmatprep.subr.bf16.mxu0 0
      %2440 = vmatpush1.bf16.msra.mxu0 0
      %2441 = vmatprep.subr.bf16.mxu0 0
      %2442 = vmatpush1.bf16.msra.mxu0 0
      %2443 = vmatprep.subr.bf16.mxu0 0
      %2444 = vmatpush1.bf16.msra.mxu0 0
      %2445 = vmatprep.subr.bf16.mxu0 0
      %2446 = vmatpush1.bf16.msra.mxu0 0
      %2447 = vmatprep.subr.bf16.mxu0 0
      %2448 = vmatpush1.bf16.msra.mxu0 0
      %2449 = vmatprep.subr.bf16.mxu0 0
      %2450 = vmatpush1.bf16.msra.mxu0 0
      %2451 = vmatprep.subr.bf16.mxu0 0
      %2452 = vmatpush1.bf16.msra.mxu0 0
      %2453 = vmatprep.subr.bf16.mxu0 0
      %2454 = vmatpush1.bf16.msra.mxu0 0
      %2455 = vmatprep.subr.bf16.mxu0 0
      %2456 = vmatpush1.bf16.msra.mxu0 0
      %2457 = vmatprep.subr.bf16.mxu0 0
      %2458 = vmatpush1.bf16.msra.mxu0 0
      %2459 = vmatprep.subr.bf16.mxu0 0
      %2460 = vmatpush1.bf16.msra.mxu0 0
      %2461 = vmatprep.mubr.bf16.mxu0 0
      %2462 = vmatmul.mubr.bf16.gmra.mrb[0].mxu0 %v2424
      %v2463 = vpop.f32.mrb[0].mxu0
      %v2464 = vadd.f32 0.0, %v2463
      %v2465 = vpop.f32.mrb[0].mxu0
      %v2466 = vpop.f32.mrb[0].mxu0
      %v2467 = vadd.f32 0.0, %v2466
      %v2468 = vpop.f32.mrb[0].mxu0
      %2469 = vdwg.mxu0
      %v2470 = vld [vmem:[%s29] sm:$0xf]
      %v2471 = vld [vmem:[%s29 + $0x4] sm:$0xf]
      %v2472 = vpack.c.bf16 %v2097, %v2094
      %v2473 = vld [vmem:[%s29 + $0x8] sm:$0xf]
      %v2474 = vld [vmem:[%s29 + $0xc] sm:$0xf]
      %v2475 = vpack.c.bf16 %v2221, %v2218
      %v2478 = vunpack.c.l.b16 %v2473
      %v2479 = vunpack.c.l.b16 %v2474
      %v2480 = vpack.c.b16 %v2479, %v2478
      %v2483 = vsel %vm1244, %v2475, 0
      %2485 = vmatprep.subr.bf16.mxu0 0
      %2486 = vmatpush1.bf16.msra.mxu0 %v2480
      %2487 = vmatprep.subr.bf16.mxu0 0
      %2488 = vmatpush1.bf16.msra.mxu0 0
      %2489 = vmatprep.subr.bf16.mxu0 0
      %2490 = vmatpush1.bf16.msra.mxu0 0
      %2491 = vmatprep.subr.bf16.mxu0 0
      %2492 = vmatpush1.bf16.msra.mxu0 0
      %2493 = vmatprep.subr.bf16.mxu0 0
      %2494 = vmatpush1.bf16.msra.mxu0 0
      %2495 = vmatprep.subr.bf16.mxu0 0
      %2496 = vmatpush1.bf16.msra.mxu0 0
      %2497 = vmatprep.subr.bf16.mxu0 0
      %2498 = vmatpush1.bf16.msra.mxu0 0
      %2499 = vmatprep.subr.bf16.mxu0 0
      %2500 = vmatpush1.bf16.msra.mxu0 0
      %2501 = vmatprep.subr.bf16.mxu0 0
      %2502 = vmatpush1.bf16.msra.mxu0 0
      %2503 = vmatprep.subr.bf16.mxu0 0
      %2504 = vmatpush1.bf16.msra.mxu0 0
      %2505 = vmatprep.subr.bf16.mxu0 0
      %2506 = vmatpush1.bf16.msra.mxu0 0
      %2507 = vmatprep.subr.bf16.mxu0 0
      %2508 = vmatpush1.bf16.msra.mxu0 0
      %2509 = vmatprep.subr.bf16.mxu0 0
      %2510 = vmatpush1.bf16.msra.mxu0 0
      %2511 = vmatprep.subr.bf16.mxu0 0
      %2512 = vmatpush1.bf16.msra.mxu0 0
      %2513 = vmatprep.subr.bf16.mxu0 0
      %2514 = vmatpush1.bf16.msra.mxu0 0
      %2515 = vmatprep.subr.bf16.mxu0 0
      %2516 = vmatpush1.bf16.msra.mxu0 0
      %2517 = vmatprep.mubr.bf16.mxu0 0
      %2518 = vmatmul.mubr.bf16.gmra.mrb[0].mxu0 %v2483
      %v2519 = vpop.f32.mrb[0].mxu0
      %v2520 = vadd.f32 0.0, %v2519
      %v2521 = vpop.f32.mrb[0].mxu0
      %v2522 = vpop.f32.mrb[0].mxu0
      %v2523 = vadd.f32 0.0, %v2522
      %v2524 = vpop.f32.mrb[0].mxu0
      %2525 = vdwg.mxu0
      %v2528 = vunpack.c.l.b16 %v2470
      %v2529 = vunpack.c.l.b16 %v2471
      %v2530 = vpack.c.b16 %v2529, %v2528
      %v2533 = vsel %vm1244, %v2472, 0
      %2535 = vmatprep.subr.bf16.mxu0 0
      %2536 = vmatpush1.bf16.msra.mxu0 %v2530
      %2537 = vmatprep.subr.bf16.mxu0 0
      %2538 = vmatpush1.bf16.msra.mxu0 0
      %2539 = vmatprep.subr.bf16.mxu0 0
      %2540 = vmatpush1.bf16.msra.mxu0 0
      %2541 = vmatprep.subr.bf16.mxu0 0
      %2542 = vmatpush1.bf16.msra.mxu0 0
      %2543 = vmatprep.subr.bf16.mxu0 0
      %2544 = vmatpush1.bf16.msra.mxu0 0
      %2545 = vmatprep.subr.bf16.mxu0 0
      %2546 = vmatpush1.bf16.msra.mxu0 0
      %2547 = vmatprep.subr.bf16.mxu0 0
      %2548 = vmatpush1.bf16.msra.mxu0 0
      %2549 = vmatprep.subr.bf16.mxu0 0
      %2550 = vmatpush1.bf16.msra.mxu0 0
      %2551 = vmatprep.subr.bf16.mxu0 0
      %2552 = vmatpush1.bf16.msra.mxu0 0
      %2553 = vmatprep.subr.bf16.mxu0 0
      %2554 = vmatpush1.bf16.msra.mxu0 0
      %2555 = vmatprep.subr.bf16.mxu0 0
      %2556 = vmatpush1.bf16.msra.mxu0 0
      %2557 = vmatprep.subr.bf16.mxu0 0
      %2558 = vmatpush1.bf16.msra.mxu0 0
      %2559 = vmatprep.subr.bf16.mxu0 0
      %2560 = vmatpush1.bf16.msra.mxu0 0
      %2561 = vmatprep.subr.bf16.mxu0 0
      %2562 = vmatpush1.bf16.msra.mxu0 0
      %2563 = vmatprep.subr.bf16.mxu0 0
      %2564 = vmatpush1.bf16.msra.mxu0 0
      %2565 = vmatprep.subr.bf16.mxu0 0
      %2566 = vmatpush1.bf16.msra.mxu0 0
      %2567 = vmatprep.mubr.bf16.mxu0 0
      %2568 = vmatmul.mubr.bf16.gmra.mrb[0].mxu0 %v2533
      %v2569 = vpop.f32.mrb[0].mxu0
      %v2570 = vadd.f32 %v2520, %v2569
      %v2571 = vpop.f32.mrb[0].mxu0
      %v2572 = vpop.f32.mrb[0].mxu0
      %v2573 = vadd.f32 %v2523, %v2572
      %v2574 = vpop.f32.mrb[0].mxu0
      %2575 = vdwg.mxu0
      %v2576 = vld [vmem:[%s29 + $0x10] sm:$0xf]
      %v2577 = vld [vmem:[%s29 + $0x14] sm:$0xf]
      %v2578 = vpack.c.bf16 %v2344, %v2341
      %v2581 = vunpack.c.l.b16 %v2576
      %v2582 = vunpack.c.l.b16 %v2577
      %v2583 = vpack.c.b16 %v2582, %v2581
      %v2586 = vsel %vm1244, %v2578, 0
      %2588 = vmatprep.subr.bf16.mxu0 0
      %2589 = vmatpush1.bf16.msra.mxu0 %v2583
      %2590 = vmatprep.subr.bf16.mxu0 0
      %2591 = vmatpush1.bf16.msra.mxu0 0
      %2592 = vmatprep.subr.bf16.mxu0 0
      %2593 = vmatpush1.bf16.msra.mxu0 0
      %2594 = vmatprep.subr.bf16.mxu0 0
      %2595 = vmatpush1.bf16.msra.mxu0 0
      %2596 = vmatprep.subr.bf16.mxu0 0
      %2597 = vmatpush1.bf16.msra.mxu0 0
      %2598 = vmatprep.subr.bf16.mxu0 0
      %2599 = vmatpush1.bf16.msra.mxu0 0
      %2600 = vmatprep.subr.bf16.mxu0 0
      %2601 = vmatpush1.bf16.msra.mxu0 0
      %2602 = vmatprep.subr.bf16.mxu0 0
      %2603 = vmatpush1.bf16.msra.mxu0 0
      %2604 = vmatprep.subr.bf16.mxu0 0
      %2605 = vmatpush1.bf16.msra.mxu0 0
      %2606 = vmatprep.subr.bf16.mxu0 0
      %2607 = vmatpush1.bf16.msra.mxu0 0
      %2608 = vmatprep.subr.bf16.mxu0 0
      %2609 = vmatpush1.bf16.msra.mxu0 0
      %2610 = vmatprep.subr.bf16.mxu0 0
      %2611 = vmatpush1.bf16.msra.mxu0 0
      %2612 = vmatprep.subr.bf16.mxu0 0
      %2613 = vmatpush1.bf16.msra.mxu0 0
      %2614 = vmatprep.subr.bf16.mxu0 0
      %2615 = vmatpush1.bf16.msra.mxu0 0
      %2616 = vmatprep.subr.bf16.mxu0 0
      %2617 = vmatpush1.bf16.msra.mxu0 0
      %2618 = vmatprep.subr.bf16.mxu0 0
      %2619 = vmatpush1.bf16.msra.mxu0 0
      %2620 = vmatprep.mubr.bf16.mxu0 0
      %2621 = vmatmul.mubr.bf16.gmra.mrb[0].mxu0 %v2586
      %v2622 = vpop.f32.mrb[0].mxu0
      %v2623 = vadd.f32 0.0, %v2622
      %v2624 = vpop.f32.mrb[0].mxu0
      %v2625 = vpop.f32.mrb[0].mxu0
      %v2626 = vadd.f32 0.0, %v2625
      %v2627 = vpop.f32.mrb[0].mxu0
      %2628 = vdwg.mxu0
      %v2629 = vadd.f32 %v2570, %v2623
      %v2630 = vadd.f32 %v2573, %v2626
      %v2631 = vld [vmem:[%s29 + $0x18] sm:$0xf]
      %v2632 = vld [vmem:[%s29 + $0x1c] sm:$0xf]
      %v2633 = vpack.c.bf16 %v2467, %v2464
      %v2636 = vunpack.c.l.b16 %v2631
      %v2637 = vunpack.c.l.b16 %v2632
      %v2638 = vpack.c.b16 %v2637, %v2636
      %v2641 = vsel %vm1244, %v2633, 0
      %2643 = vmatprep.subr.bf16.mxu0 0
      %2644 = vmatpush1.bf16.msra.mxu0 %v2638
      %2645 = vmatprep.subr.bf16.mxu0 0
      %2646 = vmatpush1.bf16.msra.mxu0 0
      %2647 = vmatprep.subr.bf16.mxu0 0
      %2648 = vmatpush1.bf16.msra.mxu0 0
      %2649 = vmatprep.subr.bf16.mxu0 0
      %2650 = vmatpush1.bf16.msra.mxu0 0
      %2651 = vmatprep.subr.bf16.mxu0 0
      %2652 = vmatpush1.bf16.msra.mxu0 0
      %2653 = vmatprep.subr.bf16.mxu0 0
      %2654 = vmatpush1.bf16.msra.mxu0 0
      %2655 = vmatprep.subr.bf16.mxu0 0
      %2656 = vmatpush1.bf16.msra.mxu0 0
      %2657 = vmatprep.subr.bf16.mxu0 0
      %2658 = vmatpush1.bf16.msra.mxu0 0
      %2659 = vmatprep.subr.bf16.mxu0 0
      %2660 = vmatpush1.bf16.msra.mxu0 0
      %2661 = vmatprep.subr.bf16.mxu0 0
      %2662 = vmatpush1.bf16.msra.mxu0 0
      %2663 = vmatprep.subr.bf16.mxu0 0
      %2664 = vmatpush1.bf16.msra.mxu0 0
      %2665 = vmatprep.subr.bf16.mxu0 0
      %2666 = vmatpush1.bf16.msra.mxu0 0
      %2667 = vmatprep.subr.bf16.mxu0 0
      %2668 = vmatpush1.bf16.msra.mxu0 0
      %2669 = vmatprep.subr.bf16.mxu0 0
      %2670 = vmatpush1.bf16.msra.mxu0 0
      %2671 = vmatprep.subr.bf16.mxu0 0
      %2672 = vmatpush1.bf16.msra.mxu0 0
      %2673 = vmatprep.subr.bf16.mxu0 0
      %2674 = vmatpush1.bf16.msra.mxu0 0
      %2675 = vmatprep.mubr.bf16.mxu0 0
      %2676 = vmatmul.mubr.bf16.gmra.mrb[0].mxu0 %v2641
      %v2677 = vpop.f32.mrb[0].mxu0
      %v2678 = vadd.f32 0.0, %v2677
      %v2679 = vpop.f32.mrb[0].mxu0
      %v2680 = vpop.f32.mrb[0].mxu0
      %v2681 = vadd.f32 0.0, %v2680
      %v2682 = vpop.f32.mrb[0].mxu0
      %2683 = vdwg.mxu0
      %v2684 = vadd.f32 %v2629, %v2678
      %v2685 = vadd.f32 %v2630, %v2681
      %v2686 = vld [vmem:[%s31] sm:$0x1]
      %v2688 = vlaneseq
      %v2689 = vshrl.u32 %v2688, 7
      %v2690 = vsub.s32 0, %v2689
      %v2691 = vrot.slane %v2686, %v2690
      %v2693 = vadd.f32 %v2684, %v2691
      %v2694 = vadd.f32 %v2685, %v2691
      %v2695 = vld [vmem:[%s33] sm:$0xf]
      %v2696 = vld [vmem:[%s33 + $0x4] sm:$0xf]
      %v2697 = vld [vmem:[%s33 + $0x8] sm:$0xf]
      %v2698 = vld [vmem:[%s33 + $0xc] sm:$0xf]
      %v2701 = vunpack.c.l.b16 %v2697
      %v2702 = vunpack.c.l.b16 %v2698
      %v2703 = vpack.c.b16 %v2702, %v2701
      %2705 = vmatprep.subr.bf16.mxu0 0
      %2706 = vmatpush1.bf16.msra.mxu0 %v2703
      %2707 = vmatprep.subr.bf16.mxu0 0
      %2708 = vmatpush1.bf16.msra.mxu0 0
      %2709 = vmatprep.subr.bf16.mxu0 0
      %2710 = vmatpush1.bf16.msra.mxu0 0
      %2711 = vmatprep.subr.bf16.mxu0 0
      %2712 = vmatpush1.bf16.msra.mxu0 0
      %2713 = vmatprep.subr.bf16.mxu0 0
      %2714 = vmatpush1.bf16.msra.mxu0 0
      %2715 = vmatprep.subr.bf16.mxu0 0
      %2716 = vmatpush1.bf16.msra.mxu0 0
      %2717 = vmatprep.subr.bf16.mxu0 0
      %2718 = vmatpush1.bf16.msra.mxu0 0
      %2719 = vmatprep.subr.bf16.mxu0 0
      %2720 = vmatpush1.bf16.msra.mxu0 0
      %2721 = vmatprep.subr.bf16.mxu0 0
      %2722 = vmatpush1.bf16.msra.mxu0 0
      %2723 = vmatprep.subr.bf16.mxu0 0
      %2724 = vmatpush1.bf16.msra.mxu0 0
      %2725 = vmatprep.subr.bf16.mxu0 0
      %2726 = vmatpush1.bf16.msra.mxu0 0
      %2727 = vmatprep.subr.bf16.mxu0 0
      %2728 = vmatpush1.bf16.msra.mxu0 0
      %2729 = vmatprep.subr.bf16.mxu0 0
      %2730 = vmatpush1.bf16.msra.mxu0 0
      %2731 = vmatprep.subr.bf16.mxu0 0
      %2732 = vmatpush1.bf16.msra.mxu0 0
      %2733 = vmatprep.subr.bf16.mxu0 0
      %2734 = vmatpush1.bf16.msra.mxu0 0
      %2735 = vmatprep.subr.bf16.mxu0 0
      %2736 = vmatpush1.bf16.msra.mxu0 0
      %2737 = vmatprep.mubr.bf16.mxu0 0
      %2738 = vmatmul.mubr.bf16.gmra.mrb[0].mxu0 %v1771
      %v2739 = vpop.f32.mrb[0].mxu0
      %v2740 = vadd.f32 0.0, %v2739
      %v2741 = vpop.f32.mrb[0].mxu0
      %v2742 = vpop.f32.mrb[0].mxu0
      %v2743 = vpop.f32.mrb[0].mxu0
      %2744 = vdwg.mxu0
      %v2747 = vunpack.c.l.b16 %v2695
      %v2748 = vunpack.c.l.b16 %v2696
      %v2749 = vpack.c.b16 %v2748, %v2747
      %2751 = vmatprep.subr.bf16.mxu0 0
      %2752 = vmatpush1.bf16.msra.mxu0 %v2749
      %2753 = vmatprep.subr.bf16.mxu0 0
      %2754 = vmatpush1.bf16.msra.mxu0 0
      %2755 = vmatprep.subr.bf16.mxu0 0
      %2756 = vmatpush1.bf16.msra.mxu0 0
      %2757 = vmatprep.subr.bf16.mxu0 0
      %2758 = vmatpush1.bf16.msra.mxu0 0
      %2759 = vmatprep.subr.bf16.mxu0 0
      %2760 = vmatpush1.bf16.msra.mxu0 0
      %2761 = vmatprep.subr.bf16.mxu0 0
      %2762 = vmatpush1.bf16.msra.mxu0 0
      %2763 = vmatprep.subr.bf16.mxu0 0
      %2764 = vmatpush1.bf16.msra.mxu0 0
      %2765 = vmatprep.subr.bf16.mxu0 0
      %2766 = vmatpush1.bf16.msra.mxu0 0
      %2767 = vmatprep.subr.bf16.mxu0 0
      %2768 = vmatpush1.bf16.msra.mxu0 0
      %2769 = vmatprep.subr.bf16.mxu0 0
      %2770 = vmatpush1.bf16.msra.mxu0 0
      %2771 = vmatprep.subr.bf16.mxu0 0
      %2772 = vmatpush1.bf16.msra.mxu0 0
      %2773 = vmatprep.subr.bf16.mxu0 0
      %2774 = vmatpush1.bf16.msra.mxu0 0
      %2775 = vmatprep.subr.bf16.mxu0 0
      %2776 = vmatpush1.bf16.msra.mxu0 0
      %2777 = vmatprep.subr.bf16.mxu0 0
      %2778 = vmatpush1.bf16.msra.mxu0 0
      %2779 = vmatprep.subr.bf16.mxu0 0
      %2780 = vmatpush1.bf16.msra.mxu0 0
      %2781 = vmatprep.subr.bf16.mxu0 0
      %2782 = vmatpush1.bf16.msra.mxu0 0
      %2783 = vmatprep.mubr.bf16.mxu0 0
      %2784 = vmatmul.mubr.bf16.gmra.mrb[0].mxu0 %v1820
      %v2785 = vpop.f32.mrb[0].mxu0
      %v2786 = vadd.f32 %v2740, %v2785
      %v2787 = vpop.f32.mrb[0].mxu0
      %v2788 = vpop.f32.mrb[0].mxu0
      %v2789 = vpop.f32.mrb[0].mxu0
      %2790 = vdwg.mxu0
      %v2791 = vld [vmem:[%s33 + $0x10] sm:$0xf]
      %v2792 = vld [vmem:[%s33 + $0x14] sm:$0xf]
      %v2795 = vunpack.c.l.b16 %v2791
      %v2796 = vunpack.c.l.b16 %v2792
      %v2797 = vpack.c.b16 %v2796, %v2795
      %2799 = vmatprep.subr.bf16.mxu0 0
      %2800 = vmatpush1.bf16.msra.mxu0 %v2797
      %2801 = vmatprep.subr.bf16.mxu0 0
      %2802 = vmatpush1.bf16.msra.mxu0 0
      %2803 = vmatprep.subr.bf16.mxu0 0
      %2804 = vmatpush1.bf16.msra.mxu0 0
      %2805 = vmatprep.subr.bf16.mxu0 0
      %2806 = vmatpush1.bf16.msra.mxu0 0
      %2807 = vmatprep.subr.bf16.mxu0 0
      %2808 = vmatpush1.bf16.msra.mxu0 0
      %2809 = vmatprep.subr.bf16.mxu0 0
      %2810 = vmatpush1.bf16.msra.mxu0 0
      %2811 = vmatprep.subr.bf16.mxu0 0
      %2812 = vmatpush1.bf16.msra.mxu0 0
      %2813 = vmatprep.subr.bf16.mxu0 0
      %2814 = vmatpush1.bf16.msra.mxu0 0
      %2815 = vmatprep.subr.bf16.mxu0 0
      %2816 = vmatpush1.bf16.msra.mxu0 0
      %2817 = vmatprep.subr.bf16.mxu0 0
      %2818 = vmatpush1.bf16.msra.mxu0 0
      %2819 = vmatprep.subr.bf16.mxu0 0
      %2820 = vmatpush1.bf16.msra.mxu0 0
      %2821 = vmatprep.subr.bf16.mxu0 0
      %2822 = vmatpush1.bf16.msra.mxu0 0
      %2823 = vmatprep.subr.bf16.mxu0 0
      %2824 = vmatpush1.bf16.msra.mxu0 0
      %2825 = vmatprep.subr.bf16.mxu0 0
      %2826 = vmatpush1.bf16.msra.mxu0 0
      %2827 = vmatprep.subr.bf16.mxu0 0
      %2828 = vmatpush1.bf16.msra.mxu0 0
      %2829 = vmatprep.subr.bf16.mxu0 0
      %2830 = vmatpush1.bf16.msra.mxu0 0
      %2831 = vmatprep.mubr.bf16.mxu0 0
      %2832 = vmatmul.mubr.bf16.gmra.mrb[0].mxu0 %v1872
      %v2833 = vpop.f32.mrb[0].mxu0
      %v2834 = vadd.f32 0.0, %v2833
      %v2835 = vpop.f32.mrb[0].mxu0
      %v2836 = vpop.f32.mrb[0].mxu0
      %v2837 = vpop.f32.mrb[0].mxu0
      %2838 = vdwg.mxu0
      %v2839 = vadd.f32 %v2786, %v2834
      %v2840 = vld [vmem:[%s33 + $0x18] sm:$0xf]
      %v2841 = vld [vmem:[%s33 + $0x1c] sm:$0xf]
      %v2844 = vunpack.c.l.b16 %v2840
      %v2845 = vunpack.c.l.b16 %v2841
      %v2846 = vpack.c.b16 %v2845, %v2844
      %2848 = vmatprep.subr.bf16.mxu0 0
      %2849 = vmatpush1.bf16.msra.mxu0 %v2846
      %2850 = vmatprep.subr.bf16.mxu0 0
      %2851 = vmatpush1.bf16.msra.mxu0 0
      %2852 = vmatprep.subr.bf16.mxu0 0
      %2853 = vmatpush1.bf16.msra.mxu0 0
      %2854 = vmatprep.subr.bf16.mxu0 0
      %2855 = vmatpush1.bf16.msra.mxu0 0
      %2856 = vmatprep.subr.bf16.mxu0 0
      %2857 = vmatpush1.bf16.msra.mxu0 0
      %2858 = vmatprep.subr.bf16.mxu0 0
      %2859 = vmatpush1.bf16.msra.mxu0 0
      %2860 = vmatprep.subr.bf16.mxu0 0
      %2861 = vmatpush1.bf16.msra.mxu0 0
      %2862 = vmatprep.subr.bf16.mxu0 0
      %2863 = vmatpush1.bf16.msra.mxu0 0
      %2864 = vmatprep.subr.bf16.mxu0 0
      %2865 = vmatpush1.bf16.msra.mxu0 0
      %2866 = vmatprep.subr.bf16.mxu0 0
      %2867 = vmatpush1.bf16.msra.mxu0 0
      %2868 = vmatprep.subr.bf16.mxu0 0
      %2869 = vmatpush1.bf16.msra.mxu0 0
      %2870 = vmatprep.subr.bf16.mxu0 0
      %2871 = vmatpush1.bf16.msra.mxu0 0
      %2872 = vmatprep.subr.bf16.mxu0 0
      %2873 = vmatpush1.bf16.msra.mxu0 0
      %2874 = vmatprep.subr.bf16.mxu0 0
      %2875 = vmatpush1.bf16.msra.mxu0 0
      %2876 = vmatprep.subr.bf16.mxu0 0
      %2877 = vmatpush1.bf16.msra.mxu0 0
      %2878 = vmatprep.subr.bf16.mxu0 0
      %2879 = vmatpush1.bf16.msra.mxu0 0
      %2880 = vmatprep.mubr.bf16.mxu0 0
      %2881 = vmatmul.mubr.bf16.gmra.mrb[0].mxu0 %v1925
      %v2882 = vpop.f32.mrb[0].mxu0
      %v2883 = vadd.f32 0.0, %v2882
      %v2884 = vpop.f32.mrb[0].mxu0
      %v2885 = vpop.f32.mrb[0].mxu0
      %v2886 = vpop.f32.mrb[0].mxu0
      %2887 = vdwg.mxu0
      %v2888 = vadd.f32 %v2839, %v2883
      %v2889 = vld [vmem:[%s35] sm:$0x1]
      %v2891 = vlaneseq
      %v2892 = vshrl.u32 %v2891, 7
      %v2893 = vsub.s32 0, %v2892
      %v2894 = vrot.slane %v2889, %v2893
      %v2896 = vadd.f32 %v2888, %v2894
      %v2897 = vadd.f32 %v932, %v2693
      %v2898 = vadd.f32 %v933, %v2694
      %v2899 = vld [vmem:[%s37] sm:$0x1]
      %v2900 = vld [vmem:[%s39] sm:$0x1]
      %v2901 = vsel %vm959, %v2897, 0.0
      %2902 = vadd.xlane.f32.xlu0 %v2901
      %v2903 = vpop.xlane.xlu0 %2902
      %v2904 = vsel %vm959, %v2898, 0.0
      %2905 = vadd.xlane.f32.xlu0 %v2904
      %v2906 = vpop.xlane.xlu0 %2905
      %v2907 = vrcp.pop 32.0
      %v2908 = vmul.f32 %v2903, %v2907
      %v2909 = vmul.f32 %v2906, %v2907
      %v2910 = vsub.f32 %v2897, %v2908
      %v2911 = vsub.f32 %v2898, %v2909
      %v2912 = vmul.f32 %v2910, %v2910
      %v2913 = vmul.f32 %v2911, %v2911
      %v2914 = vsel %vm959, %v2912, 0.0
      %2915 = vadd.xlane.f32.xlu0 %v2914
      %v2916 = vpop.xlane.xlu0 %2915
      %v2917 = vsel %vm959, %v2913, 0.0
      %2918 = vadd.xlane.f32.xlu0 %v2917
      %v2919 = vpop.xlane.xlu0 %2918
      %v2920 = vmul.f32 %v2916, %v2907
      %v2921 = vmul.f32 %v2919, %v2907
      %v2922 = vadd.f32 %v2920, 1e-05
      %v2923 = vadd.f32 %v2921, 1e-05
      %v2924 = vrsqrt.pop %v2922
      %v2925 = vrsqrt.pop %v2923
      %v2926 = vmul.f32 %v2910, %v2924
      %v2927 = vmul.f32 %v2911, %v2925
      %v2929 = vlaneseq
      %v2930 = vshrl.u32 %v2929, 7
      %v2931 = vsub.s32 0, %v2930
      %v2932 = vrot.slane %v2899, %v2931
      %v2934 = vmul.f32 %v2926, %v2932
      %v2935 = vmul.f32 %v2927, %v2932
      %v2937 = vlaneseq
      %v2938 = vshrl.u32 %v2937, 7
      %v2939 = vsub.s32 0, %v2938
      %v2940 = vrot.slane %v2900, %v2939
      %v2942 = vadd.f32 %v2934, %v2940
      %v2943 = vadd.f32 %v2935, %v2940
      %v2944 = vadd.f32 %v934, %v2896
      %v2945 = vld [vmem:[%s41] sm:$0x1]
      %v2946 = vld [vmem:[%s43] sm:$0x1]
      %v2947 = vsel %vm959, %v2944, 0.0
      %2948 = vadd.xlane.f32.xlu0 %v2947
      %v2949 = vpop.xlane.xlu0 %2948
      %v2950 = vmul.f32 %v2949, %v2907
      %v2951 = vsub.f32 %v2944, %v2950
      %v2952 = vmul.f32 %v2951, %v2951
      %v2953 = vsel %vm959, %v2952, 0.0
      %2954 = vadd.xlane.f32.xlu0 %v2953
      %v2955 = vpop.xlane.xlu0 %2954
      %v2956 = vmul.f32 %v2955, %v2907
      %v2957 = vadd.f32 %v2956, 1e-05
      %v2958 = vrsqrt.pop %v2957
      %v2959 = vmul.f32 %v2951, %v2958
      %v2961 = vlaneseq
      %v2962 = vshrl.u32 %v2961, 7
      %v2963 = vsub.s32 0, %v2962
      %v2964 = vrot.slane %v2945, %v2963
      %v2966 = vmul.f32 %v2959, %v2964
      %v2968 = vlaneseq
      %v2969 = vshrl.u32 %v2968, 7
      %v2970 = vsub.s32 0, %v2969
      %v2971 = vrot.slane %v2946, %v2970
      %v2973 = vadd.f32 %v2966, %v2971
      %v2974 = vld [vmem:[%s45] sm:$0xf]
      %v2975 = vld [vmem:[%s45 + $0x4] sm:$0xf]
      %v2976 = vld [vmem:[%s45 + $0x8] sm:$0xf]
      %v2977 = vld [vmem:[%s45 + $0xc] sm:$0xf]
      %v2978 = vpack.c.bf16 %v2943, %v2942
      %v2979 = vld [vmem:[%s47] sm:$0x1]
      %v2981 = vlaneseq
      %v2982 = vshrl.u32 %v2981, 7
      %v2983 = vsub.s32 0, %v2982
      %v2984 = vrot.slane %v2979, %v2983
      %v2990 = vunpack.c.l.b16 %v2974
      %v2991 = vunpack.c.l.b16 %v2975
      %v2992 = vunpack.c.l.b16 %v2976
      %v2993 = vunpack.c.l.b16 %v2977
      %v2994 = vpack.c.b16 %v2991, %v2990
      %v2995 = vpack.c.b16 %v2993, %v2992
      %v2999 = vsel %vm959, %v2978, 0
      %3001 = vmatprep.subr.bf16.mxu0 0
      %3002 = vmatpush1.bf16.msra.mxu0 %v2994
      %3003 = vmatprep.subr.bf16.mxu0 0
      %3004 = vmatpush1.bf16.msra.mxu0 %v2995
      %3005 = vmatprep.subr.bf16.mxu0 0
      %3006 = vmatpush1.bf16.msra.mxu0 0
      %3007 = vmatprep.subr.bf16.mxu0 0
      %3008 = vmatpush1.bf16.msra.mxu0 0
      %3009 = vmatprep.subr.bf16.mxu0 0
      %3010 = vmatpush1.bf16.msra.mxu0 0
      %3011 = vmatprep.subr.bf16.mxu0 0
      %3012 = vmatpush1.bf16.msra.mxu0 0
      %3013 = vmatprep.subr.bf16.mxu0 0
      %3014 = vmatpush1.bf16.msra.mxu0 0
      %3015 = vmatprep.subr.bf16.mxu0 0
      %3016 = vmatpush1.bf16.msra.mxu0 0
      %3017 = vmatprep.subr.bf16.mxu0 0
      %3018 = vmatpush1.bf16.msra.mxu0 0
      %3019 = vmatprep.subr.bf16.mxu0 0
      %3020 = vmatpush1.bf16.msra.mxu0 0
      %3021 = vmatprep.subr.bf16.mxu0 0
      %3022 = vmatpush1.bf16.msra.mxu0 0
      %3023 = vmatprep.subr.bf16.mxu0 0
      %3024 = vmatpush1.bf16.msra.mxu0 0
      %3025 = vmatprep.subr.bf16.mxu0 0
      %3026 = vmatpush1.bf16.msra.mxu0 0
      %3027 = vmatprep.subr.bf16.mxu0 0
      %3028 = vmatpush1.bf16.msra.mxu0 0
      %3029 = vmatprep.subr.bf16.mxu0 0
      %3030 = vmatpush1.bf16.msra.mxu0 0
      %3031 = vmatprep.subr.bf16.mxu0 0
      %3032 = vmatpush1.bf16.msra.mxu0 0
      %3033 = vmatprep.mubr.bf16.mxu0 0
      %3034 = vmatmul.mubr.bf16.gmra.mrb[0].mxu0 %v2999
      %v3035 = vpop.f32.mrb[0].mxu0
      %v3036 = vadd.f32 %v2984, %v3035
      %v3037 = vpop.f32.mrb[0].mxu0
      %v3038 = vpop.f32.mrb[0].mxu0
      %v3039 = vadd.f32 %v2984, %v3038
      %v3040 = vpop.f32.mrb[0].mxu0
      %3041 = vdwg.mxu0
      %v3042 = vmul.f32 %v3036, %v3036
      %v3043 = vmul.f32 %v3039, %v3039
      %v3044 = vmul.f32 %v3036, %v3042
      %v3045 = vmul.f32 %v3039, %v3043
      %v3046 = vmul.f32 %v3044, 0.044715
      %v3047 = vmul.f32 %v3045, 0.044715
      %v3048 = vadd.f32 %v3036, %v3046
      %v3049 = vadd.f32 %v3039, %v3047
      %v3050 = vmul.f32 %v3048, 0.7978846
      %v3051 = vmul.f32 %v3049, 0.7978846
      %v3052 = vtanh.pop %v3050
      %v3053 = vtanh.pop %v3051
      %v3054 = vadd.f32 %v3052, 1.0
      %v3055 = vadd.f32 %v3053, 1.0
      %v3056 = vmul.f32 %v3054, 0.5
      %v3057 = vmul.f32 %v3055, 0.5
      %v3058 = vmul.f32 %v3036, %v3056
      %v3059 = vmul.f32 %v3039, %v3057
      %v3060 = vld [vmem:[%s49] sm:$0xf]
      %v3061 = vld [vmem:[%s49 + $0x4] sm:$0xf]
      %v3062 = vld [vmem:[%s49 + $0x8] sm:$0xf]
      %v3063 = vld [vmem:[%s49 + $0xc] sm:$0xf]
      %v3064 = vld [vmem:[%s49 + $0x10] sm:$0xf]
      %v3065 = vld [vmem:[%s49 + $0x14] sm:$0xf]
      %v3066 = vld [vmem:[%s49 + $0x18] sm:$0xf]
      %v3067 = vld [vmem:[%s49 + $0x1c] sm:$0xf]
      %v3068 = vpack.c.bf16 %v3059, %v3058
      %v3069 = vld [vmem:[%s51] sm:$0x1]
      %v3071 = vlaneseq
      %v3072 = vshrl.u32 %v3071, 7
      %v3073 = vsub.s32 0, %v3072
      %v3074 = vrot.slane %v3069, %v3073
      %v3084 = vunpack.c.l.b16 %v3060
      %v3085 = vunpack.c.l.b16 %v3061
      %v3086 = vunpack.c.l.b16 %v3062
      %v3087 = vunpack.c.l.b16 %v3063
      %v3088 = vunpack.c.l.b16 %v3064
      %v3089 = vunpack.c.l.b16 %v3065
      %v3090 = vunpack.c.l.b16 %v3066
      %v3091 = vunpack.c.l.b16 %v3067
      %v3092 = vpack.c.b16 %v3085, %v3084
      %v3093 = vpack.c.b16 %v3087, %v3086
      %v3094 = vpack.c.b16 %v3089, %v3088
      %v3095 = vpack.c.b16 %v3091, %v3090
      %v3101 = vsel %vm1114, %v3068, 0
      %3103 = vmatprep.subr.bf16.mxu0 0
      %3104 = vmatpush1.bf16.msra.mxu0 %v3092
      %3105 = vmatprep.subr.bf16.mxu0 0
      %3106 = vmatpush1.bf16.msra.mxu0 %v3093
      %3107 = vmatprep.subr.bf16.mxu0 0
      %3108 = vmatpush1.bf16.msra.mxu0 %v3094
      %3109 = vmatprep.subr.bf16.mxu0 0
      %3110 = vmatpush1.bf16.msra.mxu0 %v3095
      %3111 = vmatprep.subr.bf16.mxu0 0
      %3112 = vmatpush1.bf16.msra.mxu0 0
      %3113 = vmatprep.subr.bf16.mxu0 0
      %3114 = vmatpush1.bf16.msra.mxu0 0
      %3115 = vmatprep.subr.bf16.mxu0 0
      %3116 = vmatpush1.bf16.msra.mxu0 0
      %3117 = vmatprep.subr.bf16.mxu0 0
      %3118 = vmatpush1.bf16.msra.mxu0 0
      %3119 = vmatprep.subr.bf16.mxu0 0
      %3120 = vmatpush1.bf16.msra.mxu0 0
      %3121 = vmatprep.subr.bf16.mxu0 0
      %3122 = vmatpush1.bf16.msra.mxu0 0
      %3123 = vmatprep.subr.bf16.mxu0 0
      %3124 = vmatpush1.bf16.msra.mxu0 0
      %3125 = vmatprep.subr.bf16.mxu0 0
      %3126 = vmatpush1.bf16.msra.mxu0 0
      %3127 = vmatprep.subr.bf16.mxu0 0
      %3128 = vmatpush1.bf16.msra.mxu0 0
      %3129 = vmatprep.subr.bf16.mxu0 0
      %3130 = vmatpush1.bf16.msra.mxu0 0
      %3131 = vmatprep.subr.bf16.mxu0 0
      %3132 = vmatpush1.bf16.msra.mxu0 0
      %3133 = vmatprep.subr.bf16.mxu0 0
      %3134 = vmatpush1.bf16.msra.mxu0 0
      %3135 = vmatprep.mubr.bf16.mxu0 0
      %3136 = vmatmul.mubr.bf16.gmra.mrb[0].mxu0 %v3101
      %v3137 = vpop.f32.mrb[0].mxu0
      %v3138 = vadd.f32 %v3074, %v3137
      %v3139 = vpop.f32.mrb[0].mxu0
      %v3140 = vpop.f32.mrb[0].mxu0
      %v3141 = vadd.f32 %v3074, %v3140
      %v3142 = vpop.f32.mrb[0].mxu0
      %3143 = vdwg.mxu0
      %v3144 = vadd.f32 %v2942, %v3138
      %v3145 = vadd.f32 %v2943, %v3141
      %v3146 = vld [vmem:[%s53] sm:$0x1]
      %v3147 = vld [vmem:[%s55] sm:$0x1]
      %v3148 = vsel %vm959, %v3144, 0.0
      %3149 = vadd.xlane.f32.xlu0 %v3148
      %v3150 = vpop.xlane.xlu0 %3149
      %v3151 = vsel %vm959, %v3145, 0.0
      %3152 = vadd.xlane.f32.xlu0 %v3151
      %v3153 = vpop.xlane.xlu0 %3152
      %v3154 = vmul.f32 %v3150, %v2907
      %v3155 = vmul.f32 %v3153, %v2907
      %v3156 = vsub.f32 %v3144, %v3154
      %v3157 = vsub.f32 %v3145, %v3155
      %v3158 = vmul.f32 %v3156, %v3156
      %v3159 = vmul.f32 %v3157, %v3157
      %v3160 = vsel %vm959, %v3158, 0.0
      %3161 = vadd.xlane.f32.xlu0 %v3160
      %v3162 = vpop.xlane.xlu0 %3161
      %v3163 = vsel %vm959, %v3159, 0.0
      %3164 = vadd.xlane.f32.xlu0 %v3163
      %v3165 = vpop.xlane.xlu0 %3164
      %v3166 = vmul.f32 %v3162, %v2907
      %v3167 = vmul.f32 %v3165, %v2907
      %v3168 = vadd.f32 %v3166, 1e-05
      %v3169 = vadd.f32 %v3167, 1e-05
      %v3170 = vrsqrt.pop %v3168
      %v3171 = vrsqrt.pop %v3169
      %v3172 = vmul.f32 %v3156, %v3170
      %v3173 = vmul.f32 %v3157, %v3171
      %v3175 = vlaneseq
      %v3176 = vshrl.u32 %v3175, 7
      %v3177 = vsub.s32 0, %v3176
      %v3178 = vrot.slane %v3146, %v3177
      %v3180 = vmul.f32 %v3172, %v3178
      %v3181 = vmul.f32 %v3173, %v3178
      %v3183 = vlaneseq
      %v3184 = vshrl.u32 %v3183, 7
      %v3185 = vsub.s32 0, %v3184
      %v3186 = vrot.slane %v3147, %v3185
      %v3188 = vadd.f32 %v3180, %v3186
      %v3189 = vadd.f32 %v3181, %v3186
      %3190 = vst.msk [vmem:[%s926] sm:$0xff] %vm959, %v3188
      %3191 = vst.msk [vmem:[%s926 + $0x8] sm:$0xff] %vm959, %v3189
      %3192 = vst.msk [vmem:[%s930] sm:$0xff] %vm959, %v2973
      %p3193 = scmp.lt.s32.totalorder %s71, 1
      %s3194 = scalar_select %p3193, %s71, 1
      %s3195 = smul.addr %s3194, 2
      %s3196 = smul.addr %s3195, 8
      %s3197 = scalar_lea.vmem %s57, %s3196
      %p3198 = scmp.lt.s32.totalorder %s71, 1
      %s3199 = scalar_select %p3198, %s71, 1
      %s3200 = smul.addr %s3199, 8
      %s3201 = scalar_lea.vmem %s59, %s3200
      // Predicated region
      $region133: #{luna_transformer_forward.3} parent=131 // pred_check
        %p3202 = pneg %p687
      $region134: #{luna_transformer_forward.3} parent=131 // pred_check_branch
        %3204 = sbr.rel (%p3202) target = $region136
      $region135: #{luna_transformer_forward.3} parent=131 // pred_region
        _
      $region136: #{luna_transformer_forward.3} parent=131 // pred_fallthru
        _
      // Predicated region
      $region137: #{luna_transformer_forward.3} parent=131 // pred_check
        %p3205 = pneg %p713
      $region138: #{luna_transformer_forward.3} parent=131 // pred_check_branch
        %3207 = sbr.rel (%p3205) target = $region140
      $region139: #{luna_transformer_forward.3} parent=131 // pred_region
        _
      $region140: #{luna_transformer_forward.3} parent=131 // pred_fallthru
        _
    $region132: #{luna_transformer_forward.3} parent=5 // pred_fallthru
      _
    %p3208 = scmp.le.s32.totalorder 2, %s66
    // Predicated region
    $region141: #{luna_transformer_forward.3} parent=5 // pred_check
      %p3209 = pneg %p3208
    $region142: #{luna_transformer_forward.3} parent=5 // pred_check_branch
      %3211 = sbr.rel (%p3209) target = $region144
    $region143: #{luna_transformer_forward.3} parent=5 // pred_region
      %s3212 = ssub.s32 %s66, 2
      // Predicated region
      $region145: #{luna_transformer_forward.3} parent=143 // pred_check
        %p3213 = pneg %p693
      $region146: #{luna_transformer_forward.3} parent=143 // pred_check_branch
        %3215 = sbr.rel (%p3213) target = $region148
      $region147: #{luna_transformer_forward.3} parent=143 // pred_region
        %p3216 = scmp.lt.s32.totalorder %s72, 1
        %s3217 = scalar_select %p3216, %s72, 1
        %s3218 = smul.addr %s3217, 2
        %s3219 = smul.addr %s3218, 8
        %s3220 = scalar_lea.vmem %s57, %s3219
      $region148: #{luna_transformer_forward.3} parent=143 // pred_fallthru
        _
      // Predicated region
      $region149: #{luna_transformer_forward.3} parent=143 // pred_check
        %p3221 = pneg %p719
      $region150: #{luna_transformer_forward.3} parent=143 // pred_check_branch
        %3223 = sbr.rel (%p3221) target = $region152
      $region151: #{luna_transformer_forward.3} parent=143 // pred_region
        %p3224 = scmp.lt.s32.totalorder %s72, 1
        %s3225 = scalar_select %p3224, %s72, 1
        %s3226 = smul.addr %s3225, 8
        %s3227 = scalar_lea.vmem %s59, %s3226
      $region152: #{luna_transformer_forward.3} parent=143 // pred_fallthru
        _
    $region144: #{luna_transformer_forward.3} parent=5 // pred_fallthru
      _
  $region6: #{luna_transformer_forward.3} parent=0 // loop_footer
    %s70 = sadd.s32 1, %s66
  $region7: #{luna_transformer_forward.3} parent=0 // loop_footer_branch
    %65 = sbr.rel target = $region3
  $region8: #{luna_transformer_forward.3} parent=0 // loop_exit
    _

// kernel: luna_transformer_forward.4
$region0: #{luna_transformer_forward.4}
  #allocation0 [shape = 'u32[]', space=smem, size = 0x4, offset = 0x4, fixed_abs, tag = 'smem constant byte address 0x4 - core index']
  #allocation1 [shape = 'u32[144,128]{1,0:T(1,128)}', space=vmem, size = 0x12000, scoped, tag = 'internal scratch']
  %s0 = inlined_call_operand.smem [shape: u32[30], index: -1, kind: input, shape index: {}]
  %s1 = sld [smem:[%s0]]
  %s2 = scalar_lea.smem %s0, 1
  %s3 = sld [smem:[%s2]]
  %s4 = scalar_lea.smem %s0, 2
  %s5 = sld [smem:[%s4]]
  %s6 = scalar_lea.smem %s0, 3
  %s7 = sld [smem:[%s6]]
  %s8 = scalar_lea.smem %s0, 4
  %s9 = sld [smem:[%s8]]
  %s10 = scalar_lea.smem %s0, 5
  %s11 = sld [smem:[%s10]]
  %s12 = scalar_lea.smem %s0, 6
  %s13 = sld [smem:[%s12]]
  %s14 = scalar_lea.smem %s0, 7
  %s15 = sld [smem:[%s14]]
  %s16 = scalar_lea.smem %s0, 8
  %s17 = sld [smem:[%s16]]
  %s18 = scalar_lea.smem %s0, 9
  %s19 = sld [smem:[%s18]]
  %s20 = scalar_lea.smem %s0, 10
  %s21 = sld [smem:[%s20]]
  %s22 = scalar_lea.smem %s0, 11
  %s23 = sld [smem:[%s22]]
  %s24 = scalar_lea.smem %s0, 12
  %s25 = sld [smem:[%s24]]
  %s26 = scalar_lea.smem %s0, 13
  %s27 = sld [smem:[%s26]]
  %s28 = scalar_lea.smem %s0, 14
  %s29 = sld [smem:[%s28]]
  %s30 = scalar_lea.smem %s0, 15
  %s31 = sld [smem:[%s30]]
  %s32 = scalar_lea.smem %s0, 16
  %s33 = sld [smem:[%s32]]
  %s34 = scalar_lea.smem %s0, 17
  %s35 = sld [smem:[%s34]]
  %s36 = scalar_lea.smem %s0, 18
  %s37 = sld [smem:[%s36]]
  %s38 = scalar_lea.smem %s0, 19
  %s39 = sld [smem:[%s38]]
  %s40 = scalar_lea.smem %s0, 20
  %s41 = sld [smem:[%s40]]
  %s42 = scalar_lea.smem %s0, 21
  %s43 = sld [smem:[%s42]]
  %s44 = scalar_lea.smem %s0, 22
  %s45 = sld [smem:[%s44]]
  %s46 = scalar_lea.smem %s0, 23
  %s47 = sld [smem:[%s46]]
  %s48 = scalar_lea.smem %s0, 24
  %s49 = sld [smem:[%s48]]
  %s50 = scalar_lea.smem %s0, 25
  %s51 = sld [smem:[%s50]]
  %s52 = scalar_lea.smem %s0, 26
  %s53 = sld [smem:[%s52]]
  %s54 = scalar_lea.smem %s0, 27
  %s55 = sld [smem:[%s54]]
  %s56 = scalar_lea.smem %s0, 28
  %s57 = sld [smem:[%s56]]
  %s58 = scalar_lea.smem %s0, 29
  %s59 = sld [smem:[%s58]]
  %60 = xla_tuple %s57, %s59
  %s61 = sld [smem:[#allocation0]]
  $region189: #{luna_transformer_forward.4} parent=0
    _
  %s63 = ssub.s32 1, %s61
  %s64 = scalar_select 0, %s63, %s61
  $region1: #{luna_transformer_forward.4} parent=0
    #allocation2 [shape = 'u8[512]{0}', space=vmem, size = 0x400, scoped, tag = 'input window, operand 17, single buffered']
    #allocation3 [shape = 's32[2]{0}', space=sflag, size = 0x8, scoped, tag = 'scoped memory for luna_transformer_forward.4']
    #allocation4 [shape = 's32[2]{0}', space=sflag, size = 0x8, scoped, tag = 'scoped memory for luna_transformer_forward.4']
    #allocation5 [shape = 'u8[512]{0}', space=vmem, size = 0x400, scoped, tag = 'input window, operand 18, single buffered']
    #allocation6 [shape = 's32[1]{0}', space=sflag, size = 0x4, scoped, tag = 'scoped memory for luna_transformer_forward.4']
    #allocation7 [shape = 'u8[512]{0}', space=vmem, size = 0x400, scoped, tag = 'input window, operand 19, single buffered']
    #allocation8 [shape = 'u8[512]{0}', space=vmem, size = 0x400, scoped, tag = 'input window, operand 20, single buffered']
    #allocation9 [shape = 's32[1]{0}', space=sflag, size = 0x4, scoped, tag = 'scoped memory for luna_transformer_forward.4']
    #allocation10 [shape = 'u8[512]{0}', space=vmem, size = 0x400, scoped, tag = 'input window, operand 21, single buffered']
    #allocation11 [shape = 'u8[512]{0}', space=vmem, size = 0x400, scoped, tag = 'input window, operand 23, single buffered']
    #allocation12 [shape = 's32[1]{0}', space=sflag, size = 0x4, scoped, tag = 'scoped memory for luna_transformer_forward.4']
    #allocation13 [shape = 'u8[512]{0}', space=vmem, size = 0x400, scoped, tag = 'input window, operand 25, single buffered']
    #allocation14 [shape = 'u8[512]{0}', space=vmem, size = 0x400, scoped, tag = 'input window, operand 26, single buffered']
    #allocation15 [shape = 's32[1]{0}', space=sflag, size = 0x4, scoped, tag = 'scoped memory for luna_transformer_forward.4']
    #allocation16 [shape = 'u8[512]{0}', space=vmem, size = 0x400, scoped, tag = 'input window, operand 27, single buffered']
    #allocation17 [shape = 'u8[8192]{0}', space=vmem, size = 0x2000, scoped, tag = 'output window, operand 1']
    %65 = vsyncpa [#allocation3], 0
    %66 = vsyncpa [#allocation6], 0
    %67 = vsyncpa [#allocation9], 0
    %68 = vsyncpa [#allocation12], 0
    %69 = vsyncpa [#allocation15], 0
    %70 = vsyncpa [#allocation4], 0
    %s71 = scalar_lea.sflag [#allocation4], 1
    %72 = vsyncpa %s71, 0
    loop: start=0, step=1, limit=4
    $region2: #{luna_transformer_forward.4} parent=1 // loop_pre_header
      _
    $region3: #{luna_transformer_forward.4} parent=1 // loop_header
      %s74 = sphi 0, %s78
      %p75 = scmp.ge.s32.totalorder %s74, 4
      %s84 = sphi 0, %s86
      %s87 = sphi 0, %s84
      %s88 = sphi 0, %s87
      %s104 = sphi 0, %s88
      %s110 = sphi 0, %s112
      %s113 = sphi 0, %s110
      %s114 = sphi 0, %s113
      %s130 = sphi 0, %s114
      %s134 = sphi 0, %s134
      %s136 = sphi 0, %s134
      %s137 = sphi 0, %s136
      %s151 = sphi 0, %s137
      %s155 = sphi 0, %s155
      %s157 = sphi 0, %s155
      %s158 = sphi 0, %s157
      %s172 = sphi 0, %s158
      %s176 = sphi 0, %s176
      %s178 = sphi 0, %s176
      %s179 = sphi 0, %s178
      %s193 = sphi 0, %s179
      %s197 = sphi 0, %s197
      %s199 = sphi 0, %s197
      %s200 = sphi 0, %s199
      %s214 = sphi 0, %s200
      %s218 = sphi 0, %s218
      %s220 = sphi 0, %s218
      %s221 = sphi 0, %s220
      %s235 = sphi 0, %s221
      %s239 = sphi 0, %s239
      %s241 = sphi 0, %s239
      %s242 = sphi 0, %s241
      %s256 = sphi 0, %s242
      %s260 = sphi 0, %s260
      %s262 = sphi 0, %s260
      %s263 = sphi 0, %s262
      %s277 = sphi 0, %s263
      %s281 = sphi 0, %s281
      %s283 = sphi 0, %s281
      %s284 = sphi 0, %s283
      %s298 = sphi 0, %s284
      %s302 = sphi 0, %s302
      %s304 = sphi 0, %s302
      %s305 = sphi 0, %s304
      %s319 = sphi 0, %s305
      %s323 = sphi 0, %s323
      %s325 = sphi 0, %s323
      %s326 = sphi 0, %s325
      %s340 = sphi 0, %s326
      %s344 = sphi 0, %s344
      %s346 = sphi 0, %s344
      %s347 = sphi 0, %s346
      %s361 = sphi 0, %s347
      %s365 = sphi 0, %s365
      %s367 = sphi 0, %s365
      %s368 = sphi 0, %s367
      %s382 = sphi 0, %s368
      %s386 = sphi 0, %s386
      %s388 = sphi 0, %s386
      %s389 = sphi 0, %s388
      %s403 = sphi 0, %s389
      %s407 = sphi 0, %s407
      %s409 = sphi 0, %s407
      %s410 = sphi 0, %s409
      %s424 = sphi 0, %s410
      %s428 = sphi 0, %s428
      %s430 = sphi 0, %s428
      %s431 = sphi 0, %s430
      %s445 = sphi 0, %s431
      %s449 = sphi 0, %s449
      %s451 = sphi 0, %s449
      %s452 = sphi 0, %s451
      %s466 = sphi 0, %s452
      %s470 = sphi 0, %s470
      %s472 = sphi 0, %s470
      %s473 = sphi 0, %s472
      %s487 = sphi 0, %s473
      %s491 = sphi 0, %s491
      %s493 = sphi 0, %s491
      %s494 = sphi 0, %s493
      %s508 = sphi 0, %s494
      %s512 = sphi 0, %s512
      %s514 = sphi 0, %s512
      %s515 = sphi 0, %s514
      %s529 = sphi 0, %s515
      %s533 = sphi 0, %s533
      %s535 = sphi 0, %s533
      %s536 = sphi 0, %s535
      %s550 = sphi 0, %s536
      %s554 = sphi 0, %s554
      %s556 = sphi 0, %s554
      %s557 = sphi 0, %s556
      %s571 = sphi 0, %s557
      %s575 = sphi 0, %s575
      %s577 = sphi 0, %s575
      %s578 = sphi 0, %s577
      %s592 = sphi 0, %s578
      %s596 = sphi 0, %s596
      %s598 = sphi 0, %s596
      %s599 = sphi 0, %s598
      %s613 = sphi 0, %s599
      %s617 = sphi 0, %s617
      %s619 = sphi 0, %s617
      %s620 = sphi 0, %s619
      %s634 = sphi 0, %s620
      %s638 = sphi 0, %s638
      %s640 = sphi 0, %s638
      %s641 = sphi 0, %s640
      %s655 = sphi 0, %s641
      %s659 = sphi 0, %s659
      %s661 = sphi 0, %s659
      %s662 = sphi 0, %s661
      %s676 = sphi 0, %s662
      %s682 = sphi 0, %s684
      %s685 = sphi 0, %s682
      %s686 = sphi 0, %s685
      %s702 = sphi 0, %s686
      %s708 = sphi 0, %s710
      %s711 = sphi 0, %s708
      %s712 = sphi 0, %s711
      %s728 = sphi 0, %s712
    $region4: #{luna_transformer_forward.4} parent=1 // loop_header_branch
      %77 = sbr.rel (%p75) target = $region8
    $region5: #{luna_transformer_forward.4} parent=1 // loop_body
      %s79 = ssub.s32 %s74, 1
      %s80 = ssub.s32 %s74, 2
      %s81 = sadd.s32 %s74, 1
      %s82 = ssub.s32 %s74, %s81
      %p83 = scmp.eq.s32.totalorder %s82, 0
      %s85 = sadd.s32 %s84, 1
      %s86 = scalar_select %p83, %s84, %s85
      %p89 = pneg %p83
      %p90 = scmp.eq.s32.totalorder %s74, 1
      %p91 = por %p89, %p90
      %p92 = scmp.ne.s32.totalorder %s84, %s87
      %p93 = scmp.eq.s32.totalorder %s74, 0
      %p94 = por %p92, %p93
      %p95 = scmp.ne.s32.totalorder %s84, %s87
      %p96 = scmp.eq.s32.totalorder %s79, 1
      %p97 = por %p95, %p96
      %p98 = scmp.ne.s32.totalorder %s87, %s88
      %p99 = scmp.eq.s32.totalorder %s79, 0
      %p100 = por %p98, %p99
      %p101 = scmp.ne.s32.totalorder %s87, %s88
      %p102 = scmp.eq.s32.totalorder %s80, 1
      %p103 = por %p101, %p102
      %p105 = scmp.ne.s32.totalorder %s88, %s104
      %p106 = scmp.eq.s32.totalorder %s80, 0
      %p107 = por %p105, %p106
      %s108 = ssub.s32 %s74, %s81
      %p109 = scmp.eq.s32.totalorder %s108, 0
      %s111 = sadd.s32 %s110, 1
      %s112 = scalar_select %p109, %s110, %s111
      %p115 = pneg %p109
      %p116 = scmp.eq.s32.totalorder %s74, 1
      %p117 = por %p115, %p116
      %p118 = scmp.ne.s32.totalorder %s110, %s113
      %p119 = scmp.eq.s32.totalorder %s74, 0
      %p120 = por %p118, %p119
      %p121 = scmp.ne.s32.totalorder %s110, %s113
      %p122 = scmp.eq.s32.totalorder %s79, 1
      %p123 = por %p121, %p122
      %p124 = scmp.ne.s32.totalorder %s113, %s114
      %p125 = scmp.eq.s32.totalorder %s79, 0
      %p126 = por %p124, %p125
      %p127 = scmp.ne.s32.totalorder %s113, %s114
      %p128 = scmp.eq.s32.totalorder %s80, 1
      %p129 = por %p127, %p128
      %p131 = scmp.ne.s32.totalorder %s114, %s130
      %p132 = scmp.eq.s32.totalorder %s80, 0
      %p133 = por %p131, %p132
      %s135 = sadd.s32 %s134, 1
      %p138 = scmp.eq.s32.totalorder %s74, 1
      %p139 = scmp.ne.s32.totalorder %s134, %s136
      %p140 = scmp.eq.s32.totalorder %s74, 0
      %p141 = por %p139, %p140
      %p142 = scmp.ne.s32.totalorder %s134, %s136
      %p143 = scmp.eq.s32.totalorder %s79, 1
      %p144 = por %p142, %p143
      %p145 = scmp.ne.s32.totalorder %s136, %s137
      %p146 = scmp.eq.s32.totalorder %s79, 0
      %p147 = por %p145, %p146
      %p148 = scmp.ne.s32.totalorder %s136, %s137
      %p149 = scmp.eq.s32.totalorder %s80, 1
      %p150 = por %p148, %p149
      %p152 = scmp.ne.s32.totalorder %s137, %s151
      %p153 = scmp.eq.s32.totalorder %s80, 0
      %p154 = por %p152, %p153
      %s156 = sadd.s32 %s155, 1
      %p159 = scmp.eq.s32.totalorder %s74, 1
      %p160 = scmp.ne.s32.totalorder %s155, %s157
      %p161 = scmp.eq.s32.totalorder %s74, 0
      %p162 = por %p160, %p161
      %p163 = scmp.ne.s32.totalorder %s155, %s157
      %p164 = scmp.eq.s32.totalorder %s79, 1
      %p165 = por %p163, %p164
      %p166 = scmp.ne.s32.totalorder %s157, %s158
      %p167 = scmp.eq.s32.totalorder %s79, 0
      %p168 = por %p166, %p167
      %p169 = scmp.ne.s32.totalorder %s157, %s158
      %p170 = scmp.eq.s32.totalorder %s80, 1
      %p171 = por %p169, %p170
      %p173 = scmp.ne.s32.totalorder %s158, %s172
      %p174 = scmp.eq.s32.totalorder %s80, 0
      %p175 = por %p173, %p174
      %s177 = sadd.s32 %s176, 1
      %p180 = scmp.eq.s32.totalorder %s74, 1
      %p181 = scmp.ne.s32.totalorder %s176, %s178
      %p182 = scmp.eq.s32.totalorder %s74, 0
      %p183 = por %p181, %p182
      %p184 = scmp.ne.s32.totalorder %s176, %s178
      %p185 = scmp.eq.s32.totalorder %s79, 1
      %p186 = por %p184, %p185
      %p187 = scmp.ne.s32.totalorder %s178, %s179
      %p188 = scmp.eq.s32.totalorder %s79, 0
      %p189 = por %p187, %p188
      %p190 = scmp.ne.s32.totalorder %s178, %s179
      %p191 = scmp.eq.s32.totalorder %s80, 1
      %p192 = por %p190, %p191
      %p194 = scmp.ne.s32.totalorder %s179, %s193
      %p195 = scmp.eq.s32.totalorder %s80, 0
      %p196 = por %p194, %p195
      %s198 = sadd.s32 %s197, 1
      %p201 = scmp.eq.s32.totalorder %s74, 1
      %p202 = scmp.ne.s32.totalorder %s197, %s199
      %p203 = scmp.eq.s32.totalorder %s74, 0
      %p204 = por %p202, %p203
      %p205 = scmp.ne.s32.totalorder %s197, %s199
      %p206 = scmp.eq.s32.totalorder %s79, 1
      %p207 = por %p205, %p206
      %p208 = scmp.ne.s32.totalorder %s199, %s200
      %p209 = scmp.eq.s32.totalorder %s79, 0
      %p210 = por %p208, %p209
      %p211 = scmp.ne.s32.totalorder %s199, %s200
      %p212 = scmp.eq.s32.totalorder %s80, 1
      %p213 = por %p211, %p212
      %p215 = scmp.ne.s32.totalorder %s200, %s214
      %p216 = scmp.eq.s32.totalorder %s80, 0
      %p217 = por %p215, %p216
      %s219 = sadd.s32 %s218, 1
      %p222 = scmp.eq.s32.totalorder %s74, 1
      %p223 = scmp.ne.s32.totalorder %s218, %s220
      %p224 = scmp.eq.s32.totalorder %s74, 0
      %p225 = por %p223, %p224
      %p226 = scmp.ne.s32.totalorder %s218, %s220
      %p227 = scmp.eq.s32.totalorder %s79, 1
      %p228 = por %p226, %p227
      %p229 = scmp.ne.s32.totalorder %s220, %s221
      %p230 = scmp.eq.s32.totalorder %s79, 0
      %p231 = por %p229, %p230
      %p232 = scmp.ne.s32.totalorder %s220, %s221
      %p233 = scmp.eq.s32.totalorder %s80, 1
      %p234 = por %p232, %p233
      %p236 = scmp.ne.s32.totalorder %s221, %s235
      %p237 = scmp.eq.s32.totalorder %s80, 0
      %p238 = por %p236, %p237
      %s240 = sadd.s32 %s239, 1
      %p243 = scmp.eq.s32.totalorder %s74, 1
      %p244 = scmp.ne.s32.totalorder %s239, %s241
      %p245 = scmp.eq.s32.totalorder %s74, 0
      %p246 = por %p244, %p245
      %p247 = scmp.ne.s32.totalorder %s239, %s241
      %p248 = scmp.eq.s32.totalorder %s79, 1
      %p249 = por %p247, %p248
      %p250 = scmp.ne.s32.totalorder %s241, %s242
      %p251 = scmp.eq.s32.totalorder %s79, 0
      %p252 = por %p250, %p251
      %p253 = scmp.ne.s32.totalorder %s241, %s242
      %p254 = scmp.eq.s32.totalorder %s80, 1
      %p255 = por %p253, %p254
      %p257 = scmp.ne.s32.totalorder %s242, %s256
      %p258 = scmp.eq.s32.totalorder %s80, 0
      %p259 = por %p257, %p258
      %s261 = sadd.s32 %s260, 1
      %p264 = scmp.eq.s32.totalorder %s74, 1
      %p265 = scmp.ne.s32.totalorder %s260, %s262
      %p266 = scmp.eq.s32.totalorder %s74, 0
      %p267 = por %p265, %p266
      %p268 = scmp.ne.s32.totalorder %s260, %s262
      %p269 = scmp.eq.s32.totalorder %s79, 1
      %p270 = por %p268, %p269
      %p271 = scmp.ne.s32.totalorder %s262, %s263
      %p272 = scmp.eq.s32.totalorder %s79, 0
      %p273 = por %p271, %p272
      %p274 = scmp.ne.s32.totalorder %s262, %s263
      %p275 = scmp.eq.s32.totalorder %s80, 1
      %p276 = por %p274, %p275
      %p278 = scmp.ne.s32.totalorder %s263, %s277
      %p279 = scmp.eq.s32.totalorder %s80, 0
      %p280 = por %p278, %p279
      %s282 = sadd.s32 %s281, 1
      %p285 = scmp.eq.s32.totalorder %s74, 1
      %p286 = scmp.ne.s32.totalorder %s281, %s283
      %p287 = scmp.eq.s32.totalorder %s74, 0
      %p288 = por %p286, %p287
      %p289 = scmp.ne.s32.totalorder %s281, %s283
      %p290 = scmp.eq.s32.totalorder %s79, 1
      %p291 = por %p289, %p290
      %p292 = scmp.ne.s32.totalorder %s283, %s284
      %p293 = scmp.eq.s32.totalorder %s79, 0
      %p294 = por %p292, %p293
      %p295 = scmp.ne.s32.totalorder %s283, %s284
      %p296 = scmp.eq.s32.totalorder %s80, 1
      %p297 = por %p295, %p296
      %p299 = scmp.ne.s32.totalorder %s284, %s298
      %p300 = scmp.eq.s32.totalorder %s80, 0
      %p301 = por %p299, %p300
      %s303 = sadd.s32 %s302, 1
      %p306 = scmp.eq.s32.totalorder %s74, 1
      %p307 = scmp.ne.s32.totalorder %s302, %s304
      %p308 = scmp.eq.s32.totalorder %s74, 0
      %p309 = por %p307, %p308
      %p310 = scmp.ne.s32.totalorder %s302, %s304
      %p311 = scmp.eq.s32.totalorder %s79, 1
      %p312 = por %p310, %p311
      %p313 = scmp.ne.s32.totalorder %s304, %s305
      %p314 = scmp.eq.s32.totalorder %s79, 0
      %p315 = por %p313, %p314
      %p316 = scmp.ne.s32.totalorder %s304, %s305
      %p317 = scmp.eq.s32.totalorder %s80, 1
      %p318 = por %p316, %p317
      %p320 = scmp.ne.s32.totalorder %s305, %s319
      %p321 = scmp.eq.s32.totalorder %s80, 0
      %p322 = por %p320, %p321
      %s324 = sadd.s32 %s323, 1
      %p327 = scmp.eq.s32.totalorder %s74, 1
      %p328 = scmp.ne.s32.totalorder %s323, %s325
      %p329 = scmp.eq.s32.totalorder %s74, 0
      %p330 = por %p328, %p329
      %p331 = scmp.ne.s32.totalorder %s323, %s325
      %p332 = scmp.eq.s32.totalorder %s79, 1
      %p333 = por %p331, %p332
      %p334 = scmp.ne.s32.totalorder %s325, %s326
      %p335 = scmp.eq.s32.totalorder %s79, 0
      %p336 = por %p334, %p335
      %p337 = scmp.ne.s32.totalorder %s325, %s326
      %p338 = scmp.eq.s32.totalorder %s80, 1
      %p339 = por %p337, %p338
      %p341 = scmp.ne.s32.totalorder %s326, %s340
      %p342 = scmp.eq.s32.totalorder %s80, 0
      %p343 = por %p341, %p342
      %s345 = sadd.s32 %s344, 1
      %p348 = scmp.eq.s32.totalorder %s74, 1
      %p349 = scmp.ne.s32.totalorder %s344, %s346
      %p350 = scmp.eq.s32.totalorder %s74, 0
      %p351 = por %p349, %p350
      %p352 = scmp.ne.s32.totalorder %s344, %s346
      %p353 = scmp.eq.s32.totalorder %s79, 1
      %p354 = por %p352, %p353
      %p355 = scmp.ne.s32.totalorder %s346, %s347
      %p356 = scmp.eq.s32.totalorder %s79, 0
      %p357 = por %p355, %p356
      %p358 = scmp.ne.s32.totalorder %s346, %s347
      %p359 = scmp.eq.s32.totalorder %s80, 1
      %p360 = por %p358, %p359
      %p362 = scmp.ne.s32.totalorder %s347, %s361
      %p363 = scmp.eq.s32.totalorder %s80, 0
      %p364 = por %p362, %p363
      %s366 = sadd.s32 %s365, 1
      %p369 = scmp.eq.s32.totalorder %s74, 1
      %p370 = scmp.ne.s32.totalorder %s365, %s367
      %p371 = scmp.eq.s32.totalorder %s74, 0
      %p372 = por %p370, %p371
      %p373 = scmp.ne.s32.totalorder %s365, %s367
      %p374 = scmp.eq.s32.totalorder %s79, 1
      %p375 = por %p373, %p374
      %p376 = scmp.ne.s32.totalorder %s367, %s368
      %p377 = scmp.eq.s32.totalorder %s79, 0
      %p378 = por %p376, %p377
      %p379 = scmp.ne.s32.totalorder %s367, %s368
      %p380 = scmp.eq.s32.totalorder %s80, 1
      %p381 = por %p379, %p380
      %p383 = scmp.ne.s32.totalorder %s368, %s382
      %p384 = scmp.eq.s32.totalorder %s80, 0
      %p385 = por %p383, %p384
      %s387 = sadd.s32 %s386, 1
      %p390 = scmp.eq.s32.totalorder %s74, 1
      %p391 = scmp.ne.s32.totalorder %s386, %s388
      %p392 = scmp.eq.s32.totalorder %s74, 0
      %p393 = por %p391, %p392
      %p394 = scmp.ne.s32.totalorder %s386, %s388
      %p395 = scmp.eq.s32.totalorder %s79, 1
      %p396 = por %p394, %p395
      %p397 = scmp.ne.s32.totalorder %s388, %s389
      %p398 = scmp.eq.s32.totalorder %s79, 0
      %p399 = por %p397, %p398
      %p400 = scmp.ne.s32.totalorder %s388, %s389
      %p401 = scmp.eq.s32.totalorder %s80, 1
      %p402 = por %p400, %p401
      %p404 = scmp.ne.s32.totalorder %s389, %s403
      %p405 = scmp.eq.s32.totalorder %s80, 0
      %p406 = por %p404, %p405
      %s408 = sadd.s32 %s407, 1
      %p411 = scmp.eq.s32.totalorder %s74, 1
      %p412 = scmp.ne.s32.totalorder %s407, %s409
      %p413 = scmp.eq.s32.totalorder %s74, 0
      %p414 = por %p412, %p413
      %p415 = scmp.ne.s32.totalorder %s407, %s409
      %p416 = scmp.eq.s32.totalorder %s79, 1
      %p417 = por %p415, %p416
      %p418 = scmp.ne.s32.totalorder %s409, %s410
      %p419 = scmp.eq.s32.totalorder %s79, 0
      %p420 = por %p418, %p419
      %p421 = scmp.ne.s32.totalorder %s409, %s410
      %p422 = scmp.eq.s32.totalorder %s80, 1
      %p423 = por %p421, %p422
      %p425 = scmp.ne.s32.totalorder %s410, %s424
      %p426 = scmp.eq.s32.totalorder %s80, 0
      %p427 = por %p425, %p426
      %s429 = sadd.s32 %s428, 1
      %p432 = scmp.eq.s32.totalorder %s74, 1
      %p433 = scmp.ne.s32.totalorder %s428, %s430
      %p434 = scmp.eq.s32.totalorder %s74, 0
      %p435 = por %p433, %p434
      %p436 = scmp.ne.s32.totalorder %s428, %s430
      %p437 = scmp.eq.s32.totalorder %s79, 1
      %p438 = por %p436, %p437
      %p439 = scmp.ne.s32.totalorder %s430, %s431
      %p440 = scmp.eq.s32.totalorder %s79, 0
      %p441 = por %p439, %p440
      %p442 = scmp.ne.s32.totalorder %s430, %s431
      %p443 = scmp.eq.s32.totalorder %s80, 1
      %p444 = por %p442, %p443
      %p446 = scmp.ne.s32.totalorder %s431, %s445
      %p447 = scmp.eq.s32.totalorder %s80, 0
      %p448 = por %p446, %p447
      %s450 = sadd.s32 %s449, 1
      %p453 = scmp.eq.s32.totalorder %s74, 1
      %p454 = scmp.ne.s32.totalorder %s449, %s451
      %p455 = scmp.eq.s32.totalorder %s74, 0
      %p456 = por %p454, %p455
      %p457 = scmp.ne.s32.totalorder %s449, %s451
      %p458 = scmp.eq.s32.totalorder %s79, 1
      %p459 = por %p457, %p458
      %p460 = scmp.ne.s32.totalorder %s451, %s452
      %p461 = scmp.eq.s32.totalorder %s79, 0
      %p462 = por %p460, %p461
      %p463 = scmp.ne.s32.totalorder %s451, %s452
      %p464 = scmp.eq.s32.totalorder %s80, 1
      %p465 = por %p463, %p464
      %p467 = scmp.ne.s32.totalorder %s452, %s466
      %p468 = scmp.eq.s32.totalorder %s80, 0
      %p469 = por %p467, %p468
      %s471 = sadd.s32 %s470, 1
      %p474 = scmp.eq.s32.totalorder %s74, 1
      %p475 = scmp.ne.s32.totalorder %s470, %s472
      %p476 = scmp.eq.s32.totalorder %s74, 0
      %p477 = por %p475, %p476
      %p478 = scmp.ne.s32.totalorder %s470, %s472
      %p479 = scmp.eq.s32.totalorder %s79, 1
      %p480 = por %p478, %p479
      %p481 = scmp.ne.s32.totalorder %s472, %s473
      %p482 = scmp.eq.s32.totalorder %s79, 0
      %p483 = por %p481, %p482
      %p484 = scmp.ne.s32.totalorder %s472, %s473
      %p485 = scmp.eq.s32.totalorder %s80, 1
      %p486 = por %p484, %p485
      %p488 = scmp.ne.s32.totalorder %s473, %s487
      %p489 = scmp.eq.s32.totalorder %s80, 0
      %p490 = por %p488, %p489
      %s492 = sadd.s32 %s491, 1
      %p495 = scmp.eq.s32.totalorder %s74, 1
      %p496 = scmp.ne.s32.totalorder %s491, %s493
      %p497 = scmp.eq.s32.totalorder %s74, 0
      %p498 = por %p496, %p497
      %p499 = scmp.ne.s32.totalorder %s491, %s493
      %p500 = scmp.eq.s32.totalorder %s79, 1
      %p501 = por %p499, %p500
      %p502 = scmp.ne.s32.totalorder %s493, %s494
      %p503 = scmp.eq.s32.totalorder %s79, 0
      %p504 = por %p502, %p503
      %p505 = scmp.ne.s32.totalorder %s493, %s494
      %p506 = scmp.eq.s32.totalorder %s80, 1
      %p507 = por %p505, %p506
      %p509 = scmp.ne.s32.totalorder %s494, %s508
      %p510 = scmp.eq.s32.totalorder %s80, 0
      %p511 = por %p509, %p510
      %s513 = sadd.s32 %s512, 1
      %p516 = scmp.eq.s32.totalorder %s74, 1
      %p517 = scmp.ne.s32.totalorder %s512, %s514
      %p518 = scmp.eq.s32.totalorder %s74, 0
      %p519 = por %p517, %p518
      %p520 = scmp.ne.s32.totalorder %s512, %s514
      %p521 = scmp.eq.s32.totalorder %s79, 1
      %p522 = por %p520, %p521
      %p523 = scmp.ne.s32.totalorder %s514, %s515
      %p524 = scmp.eq.s32.totalorder %s79, 0
      %p525 = por %p523, %p524
      %p526 = scmp.ne.s32.totalorder %s514, %s515
      %p527 = scmp.eq.s32.totalorder %s80, 1
      %p528 = por %p526, %p527
      %p530 = scmp.ne.s32.totalorder %s515, %s529
      %p531 = scmp.eq.s32.totalorder %s80, 0
      %p532 = por %p530, %p531
      %s534 = sadd.s32 %s533, 1
      %p537 = scmp.eq.s32.totalorder %s74, 1
      %p538 = scmp.ne.s32.totalorder %s533, %s535
      %p539 = scmp.eq.s32.totalorder %s74, 0
      %p540 = por %p538, %p539
      %p541 = scmp.ne.s32.totalorder %s533, %s535
      %p542 = scmp.eq.s32.totalorder %s79, 1
      %p543 = por %p541, %p542
      %p544 = scmp.ne.s32.totalorder %s535, %s536
      %p545 = scmp.eq.s32.totalorder %s79, 0
      %p546 = por %p544, %p545
      %p547 = scmp.ne.s32.totalorder %s535, %s536
      %p548 = scmp.eq.s32.totalorder %s80, 1
      %p549 = por %p547, %p548
      %p551 = scmp.ne.s32.totalorder %s536, %s550
      %p552 = scmp.eq.s32.totalorder %s80, 0
      %p553 = por %p551, %p552
      %s555 = sadd.s32 %s554, 1
      %p558 = scmp.eq.s32.totalorder %s74, 1
      %p559 = scmp.ne.s32.totalorder %s554, %s556
      %p560 = scmp.eq.s32.totalorder %s74, 0
      %p561 = por %p559, %p560
      %p562 = scmp.ne.s32.totalorder %s554, %s556
      %p563 = scmp.eq.s32.totalorder %s79, 1
      %p564 = por %p562, %p563
      %p565 = scmp.ne.s32.totalorder %s556, %s557
      %p566 = scmp.eq.s32.totalorder %s79, 0
      %p567 = por %p565, %p566
      %p568 = scmp.ne.s32.totalorder %s556, %s557
      %p569 = scmp.eq.s32.totalorder %s80, 1
      %p570 = por %p568, %p569
      %p572 = scmp.ne.s32.totalorder %s557, %s571
      %p573 = scmp.eq.s32.totalorder %s80, 0
      %p574 = por %p572, %p573
      %s576 = sadd.s32 %s575, 1
      %p579 = scmp.eq.s32.totalorder %s74, 1
      %p580 = scmp.ne.s32.totalorder %s575, %s577
      %p581 = scmp.eq.s32.totalorder %s74, 0
      %p582 = por %p580, %p581
      %p583 = scmp.ne.s32.totalorder %s575, %s577
      %p584 = scmp.eq.s32.totalorder %s79, 1
      %p585 = por %p583, %p584
      %p586 = scmp.ne.s32.totalorder %s577, %s578
      %p587 = scmp.eq.s32.totalorder %s79, 0
      %p588 = por %p586, %p587
      %p589 = scmp.ne.s32.totalorder %s577, %s578
      %p590 = scmp.eq.s32.totalorder %s80, 1
      %p591 = por %p589, %p590
      %p593 = scmp.ne.s32.totalorder %s578, %s592
      %p594 = scmp.eq.s32.totalorder %s80, 0
      %p595 = por %p593, %p594
      %s597 = sadd.s32 %s596, 1
      %p600 = scmp.eq.s32.totalorder %s74, 1
      %p601 = scmp.ne.s32.totalorder %s596, %s598
      %p602 = scmp.eq.s32.totalorder %s74, 0
      %p603 = por %p601, %p602
      %p604 = scmp.ne.s32.totalorder %s596, %s598
      %p605 = scmp.eq.s32.totalorder %s79, 1
      %p606 = por %p604, %p605
      %p607 = scmp.ne.s32.totalorder %s598, %s599
      %p608 = scmp.eq.s32.totalorder %s79, 0
      %p609 = por %p607, %p608
      %p610 = scmp.ne.s32.totalorder %s598, %s599
      %p611 = scmp.eq.s32.totalorder %s80, 1
      %p612 = por %p610, %p611
      %p614 = scmp.ne.s32.totalorder %s599, %s613
      %p615 = scmp.eq.s32.totalorder %s80, 0
      %p616 = por %p614, %p615
      %s618 = sadd.s32 %s617, 1
      %p621 = scmp.eq.s32.totalorder %s74, 1
      %p622 = scmp.ne.s32.totalorder %s617, %s619
      %p623 = scmp.eq.s32.totalorder %s74, 0
      %p624 = por %p622, %p623
      %p625 = scmp.ne.s32.totalorder %s617, %s619
      %p626 = scmp.eq.s32.totalorder %s79, 1
      %p627 = por %p625, %p626
      %p628 = scmp.ne.s32.totalorder %s619, %s620
      %p629 = scmp.eq.s32.totalorder %s79, 0
      %p630 = por %p628, %p629
      %p631 = scmp.ne.s32.totalorder %s619, %s620
      %p632 = scmp.eq.s32.totalorder %s80, 1
      %p633 = por %p631, %p632
      %p635 = scmp.ne.s32.totalorder %s620, %s634
      %p636 = scmp.eq.s32.totalorder %s80, 0
      %p637 = por %p635, %p636
      %s639 = sadd.s32 %s638, 1
      %p642 = scmp.eq.s32.totalorder %s74, 1
      %p643 = scmp.ne.s32.totalorder %s638, %s640
      %p644 = scmp.eq.s32.totalorder %s74, 0
      %p645 = por %p643, %p644
      %p646 = scmp.ne.s32.totalorder %s638, %s640
      %p647 = scmp.eq.s32.totalorder %s79, 1
      %p648 = por %p646, %p647
      %p649 = scmp.ne.s32.totalorder %s640, %s641
      %p650 = scmp.eq.s32.totalorder %s79, 0
      %p651 = por %p649, %p650
      %p652 = scmp.ne.s32.totalorder %s640, %s641
      %p653 = scmp.eq.s32.totalorder %s80, 1
      %p654 = por %p652, %p653
      %p656 = scmp.ne.s32.totalorder %s641, %s655
      %p657 = scmp.eq.s32.totalorder %s80, 0
      %p658 = por %p656, %p657
      %s660 = sadd.s32 %s659, 1
      %p663 = scmp.eq.s32.totalorder %s74, 1
      %p664 = scmp.ne.s32.totalorder %s659, %s661
      %p665 = scmp.eq.s32.totalorder %s74, 0
      %p666 = por %p664, %p665
      %p667 = scmp.ne.s32.totalorder %s659, %s661
      %p668 = scmp.eq.s32.totalorder %s79, 1
      %p669 = por %p667, %p668
      %p670 = scmp.ne.s32.totalorder %s661, %s662
      %p671 = scmp.eq.s32.totalorder %s79, 0
      %p672 = por %p670, %p671
      %p673 = scmp.ne.s32.totalorder %s661, %s662
      %p674 = scmp.eq.s32.totalorder %s80, 1
      %p675 = por %p673, %p674
      %p677 = scmp.ne.s32.totalorder %s662, %s676
      %p678 = scmp.eq.s32.totalorder %s80, 0
      %p679 = por %p677, %p678
      %s680 = ssub.s32 %s74, %s81
      %p681 = scmp.eq.s32.totalorder %s680, 0
      %s683 = sadd.s32 %s682, 1
      %s684 = scalar_select %p681, %s682, %s683
      %p687 = pneg %p681
      %p688 = scmp.eq.s32.totalorder %s74, 1
      %p689 = por %p687, %p688
      %p690 = scmp.ne.s32.totalorder %s682, %s685
      %p691 = scmp.eq.s32.totalorder %s74, 0
      %p692 = por %p690, %p691
      %p693 = scmp.ne.s32.totalorder %s682, %s685
      %p694 = scmp.eq.s32.totalorder %s79, 1
      %p695 = por %p693, %p694
      %p696 = scmp.ne.s32.totalorder %s685, %s686
      %p697 = scmp.eq.s32.totalorder %s79, 0
      %p698 = por %p696, %p697
      %p699 = scmp.ne.s32.totalorder %s685, %s686
      %p700 = scmp.eq.s32.totalorder %s80, 1
      %p701 = por %p699, %p700
      %p703 = scmp.ne.s32.totalorder %s686, %s702
      %p704 = scmp.eq.s32.totalorder %s80, 0
      %p705 = por %p703, %p704
      %s706 = ssub.s32 %s74, %s81
      %p707 = scmp.eq.s32.totalorder %s706, 0
      %s709 = sadd.s32 %s708, 1
      %s710 = scalar_select %p707, %s708, %s709
      %p713 = pneg %p707
      %p714 = scmp.eq.s32.totalorder %s74, 1
      %p715 = por %p713, %p714
      %p716 = scmp.ne.s32.totalorder %s708, %s711
      %p717 = scmp.eq.s32.totalorder %s74, 0
      %p718 = por %p716, %p717
      %p719 = scmp.ne.s32.totalorder %s708, %s711
      %p720 = scmp.eq.s32.totalorder %s79, 1
      %p721 = por %p719, %p720
      %p722 = scmp.ne.s32.totalorder %s711, %s712
      %p723 = scmp.eq.s32.totalorder %s79, 0
      %p724 = por %p722, %p723
      %p725 = scmp.ne.s32.totalorder %s711, %s712
      %p726 = scmp.eq.s32.totalorder %s80, 1
      %p727 = por %p725, %p726
      %p729 = scmp.ne.s32.totalorder %s712, %s728
      %p730 = scmp.eq.s32.totalorder %s80, 0
      %p731 = por %p729, %p730
      %p732 = scmp.le.s32.totalorder 1, %s74
      %p733 = scmp.lt.s32.totalorder %s74, 3
      %p734 = pnand %p732, %p733
      %p735 = pneg %p734
      // Predicated region
      $region9: #{luna_transformer_forward.4} parent=5 // pred_check
        _
      $region10: #{luna_transformer_forward.4} parent=5 // pred_check_branch
        %737 = sbr.rel (%p734) target = $region12
      $region11: #{luna_transformer_forward.4} parent=5 // pred_region
        %s738 = ssub.s32 %s74, 1
        // Predicated region
        $region13: #{luna_transformer_forward.4} parent=11 // pred_check
          %p739 = pneg %p147
        $region14: #{luna_transformer_forward.4} parent=11 // pred_check_branch
          %741 = sbr.rel (%p739) target = $region16
        $region15: #{luna_transformer_forward.4} parent=11 // pred_region
          _
        $region16: #{luna_transformer_forward.4} parent=11 // pred_fallthru
          _
        // Predicated region
        $region17: #{luna_transformer_forward.4} parent=11 // pred_check
          %p742 = pneg %p168
        $region18: #{luna_transformer_forward.4} parent=11 // pred_check_branch
          %744 = sbr.rel (%p742) target = $region20
        $region19: #{luna_transformer_forward.4} parent=11 // pred_region
          _
        $region20: #{luna_transformer_forward.4} parent=11 // pred_fallthru
          _
        // Predicated region
        $region21: #{luna_transformer_forward.4} parent=11 // pred_check
          %p745 = pneg %p189
        $region22: #{luna_transformer_forward.4} parent=11 // pred_check_branch
          %747 = sbr.rel (%p745) target = $region24
        $region23: #{luna_transformer_forward.4} parent=11 // pred_region
          _
        $region24: #{luna_transformer_forward.4} parent=11 // pred_fallthru
          _
        // Predicated region
        $region25: #{luna_transformer_forward.4} parent=11 // pred_check
          %p748 = pneg %p210
        $region26: #{luna_transformer_forward.4} parent=11 // pred_check_branch
          %750 = sbr.rel (%p748) target = $region28
        $region27: #{luna_transformer_forward.4} parent=11 // pred_region
          _
        $region28: #{luna_transformer_forward.4} parent=11 // pred_fallthru
          _
        // Predicated region
        $region29: #{luna_transformer_forward.4} parent=11 // pred_check
          %p751 = pneg %p231
        $region30: #{luna_transformer_forward.4} parent=11 // pred_check_branch
          %753 = sbr.rel (%p751) target = $region32
        $region31: #{luna_transformer_forward.4} parent=11 // pred_region
          _
        $region32: #{luna_transformer_forward.4} parent=11 // pred_fallthru
          _
        // Predicated region
        $region33: #{luna_transformer_forward.4} parent=11 // pred_check
          %p754 = pneg %p252
        $region34: #{luna_transformer_forward.4} parent=11 // pred_check_branch
          %756 = sbr.rel (%p754) target = $region36
        $region35: #{luna_transformer_forward.4} parent=11 // pred_region
          _
        $region36: #{luna_transformer_forward.4} parent=11 // pred_fallthru
          _
        // Predicated region
        $region37: #{luna_transformer_forward.4} parent=11 // pred_check
          %p757 = pneg %p273
        $region38: #{luna_transformer_forward.4} parent=11 // pred_check_branch
          %759 = sbr.rel (%p757) target = $region40
        $region39: #{luna_transformer_forward.4} parent=11 // pred_region
          _
        $region40: #{luna_transformer_forward.4} parent=11 // pred_fallthru
          _
        // Predicated region
        $region41: #{luna_transformer_forward.4} parent=11 // pred_check
          %p760 = pneg %p294
        $region42: #{luna_transformer_forward.4} parent=11 // pred_check_branch
          %762 = sbr.rel (%p760) target = $region44
        $region43: #{luna_transformer_forward.4} parent=11 // pred_region
          _
        $region44: #{luna_transformer_forward.4} parent=11 // pred_fallthru
          _
        // Predicated region
        $region45: #{luna_transformer_forward.4} parent=11 // pred_check
          %p763 = pneg %p315
        $region46: #{luna_transformer_forward.4} parent=11 // pred_check_branch
          %765 = sbr.rel (%p763) target = $region48
        $region47: #{luna_transformer_forward.4} parent=11 // pred_region
          _
        $region48: #{luna_transformer_forward.4} parent=11 // pred_fallthru
          _
        // Predicated region
        $region49: #{luna_transformer_forward.4} parent=11 // pred_check
          %p766 = pneg %p336
        $region50: #{luna_transformer_forward.4} parent=11 // pred_check_branch
          %768 = sbr.rel (%p766) target = $region52
        $region51: #{luna_transformer_forward.4} parent=11 // pred_region
          _
        $region52: #{luna_transformer_forward.4} parent=11 // pred_fallthru
          _
        // Predicated region
        $region53: #{luna_transformer_forward.4} parent=11 // pred_check
          %p769 = pneg %p357
        $region54: #{luna_transformer_forward.4} parent=11 // pred_check_branch
          %771 = sbr.rel (%p769) target = $region56
        $region55: #{luna_transformer_forward.4} parent=11 // pred_region
          _
        $region56: #{luna_transformer_forward.4} parent=11 // pred_fallthru
          _
        // Predicated region
        $region57: #{luna_transformer_forward.4} parent=11 // pred_check
          %p772 = pneg %p378
        $region58: #{luna_transformer_forward.4} parent=11 // pred_check_branch
          %774 = sbr.rel (%p772) target = $region60
        $region59: #{luna_transformer_forward.4} parent=11 // pred_region
          _
        $region60: #{luna_transformer_forward.4} parent=11 // pred_fallthru
          _
        // Predicated region
        $region61: #{luna_transformer_forward.4} parent=11 // pred_check
          %p775 = pneg %p399
        $region62: #{luna_transformer_forward.4} parent=11 // pred_check_branch
          %777 = sbr.rel (%p775) target = $region64
        $region63: #{luna_transformer_forward.4} parent=11 // pred_region
          _
        $region64: #{luna_transformer_forward.4} parent=11 // pred_fallthru
          _
        // Predicated region
        $region65: #{luna_transformer_forward.4} parent=11 // pred_check
          %p778 = pneg %p420
        $region66: #{luna_transformer_forward.4} parent=11 // pred_check_branch
          %780 = sbr.rel (%p778) target = $region68
        $region67: #{luna_transformer_forward.4} parent=11 // pred_region
          _
        $region68: #{luna_transformer_forward.4} parent=11 // pred_fallthru
          _
        // Predicated region
        $region69: #{luna_transformer_forward.4} parent=11 // pred_check
          %p781 = pneg %p441
        $region70: #{luna_transformer_forward.4} parent=11 // pred_check_branch
          %783 = sbr.rel (%p781) target = $region72
        $region71: #{luna_transformer_forward.4} parent=11 // pred_region
          _
        $region72: #{luna_transformer_forward.4} parent=11 // pred_fallthru
          _
        // Predicated region
        $region73: #{luna_transformer_forward.4} parent=11 // pred_check
          %p784 = pneg %p462
        $region74: #{luna_transformer_forward.4} parent=11 // pred_check_branch
          %786 = sbr.rel (%p784) target = $region76
        $region75: #{luna_transformer_forward.4} parent=11 // pred_region
          %s788 = ssub.s32 16, 16
          %789 = vsyncadd [#allocation3], %s788
          %s791 = sshll.u32 [#allocation2], 4
          %s792 = int_to_ptr.vmem [resolvable:$true] %s791
          %794 = dma.hbm_to_vmem [thread:$0]  %s35, 16, %s792, [#allocation3]
        $region76: #{luna_transformer_forward.4} parent=11 // pred_fallthru
          _
        // Predicated region
        $region77: #{luna_transformer_forward.4} parent=11 // pred_check
          %p795 = pneg %p483
        $region78: #{luna_transformer_forward.4} parent=11 // pred_check_branch
          %797 = sbr.rel (%p795) target = $region80
        $region79: #{luna_transformer_forward.4} parent=11 // pred_region
          %s799 = ssub.s32 16, 16
          %800 = vsyncadd [#allocation6], %s799
          %s802 = sshll.u32 [#allocation5], 4
          %s803 = int_to_ptr.vmem [resolvable:$true] %s802
          %805 = dma.hbm_to_vmem [thread:$0]  %s37, 16, %s803, [#allocation6]
        $region80: #{luna_transformer_forward.4} parent=11 // pred_fallthru
          _
        // Predicated region
        $region81: #{luna_transformer_forward.4} parent=11 // pred_check
          %p806 = pneg %p504
        $region82: #{luna_transformer_forward.4} parent=11 // pred_check_branch
          %808 = sbr.rel (%p806) target = $region84
        $region83: #{luna_transformer_forward.4} parent=11 // pred_region
          %s810 = ssub.s32 16, 16
          %811 = vsyncadd [#allocation6], %s810
          %s813 = sshll.u32 [#allocation7], 4
          %s814 = int_to_ptr.vmem [resolvable:$true] %s813
          %816 = dma.hbm_to_vmem [thread:$0]  %s39, 16, %s814, [#allocation6]
        $region84: #{luna_transformer_forward.4} parent=11 // pred_fallthru
          _
        // Predicated region
        $region85: #{luna_transformer_forward.4} parent=11 // pred_check
          %p817 = pneg %p525
        $region86: #{luna_transformer_forward.4} parent=11 // pred_check_branch
          %819 = sbr.rel (%p817) target = $region88
        $region87: #{luna_transformer_forward.4} parent=11 // pred_region
          %s821 = ssub.s32 16, 16
          %822 = vsyncadd [#allocation9], %s821
          %s824 = sshll.u32 [#allocation8], 4
          %s825 = int_to_ptr.vmem [resolvable:$true] %s824
          %827 = dma.hbm_to_vmem [thread:$0]  %s41, 16, %s825, [#allocation9]
        $region88: #{luna_transformer_forward.4} parent=11 // pred_fallthru
          _
        // Predicated region
        $region89: #{luna_transformer_forward.4} parent=11 // pred_check
          %p828 = pneg %p546
        $region90: #{luna_transformer_forward.4} parent=11 // pred_check_branch
          %830 = sbr.rel (%p828) target = $region92
        $region91: #{luna_transformer_forward.4} parent=11 // pred_region
          %s832 = ssub.s32 16, 16
          %833 = vsyncadd [#allocation9], %s832
          %s835 = sshll.u32 [#allocation10], 4
          %s836 = int_to_ptr.vmem [resolvable:$true] %s835
          %838 = dma.hbm_to_vmem [thread:$0]  %s43, 16, %s836, [#allocation9]
        $region92: #{luna_transformer_forward.4} parent=11 // pred_fallthru
          _
        // Predicated region
        $region93: #{luna_transformer_forward.4} parent=11 // pred_check
          %p839 = pneg %p567
        $region94: #{luna_transformer_forward.4} parent=11 // pred_check_branch
          %841 = sbr.rel (%p839) target = $region96
        $region95: #{luna_transformer_forward.4} parent=11 // pred_region
          _
        $region96: #{luna_transformer_forward.4} parent=11 // pred_fallthru
          _
        // Predicated region
        $region97: #{luna_transformer_forward.4} parent=11 // pred_check
          %p842 = pneg %p588
        $region98: #{luna_transformer_forward.4} parent=11 // pred_check_branch
          %844 = sbr.rel (%p842) target = $region100
        $region99: #{luna_transformer_forward.4} parent=11 // pred_region
          %s846 = ssub.s32 16, 16
          %847 = vsyncadd [#allocation12], %s846
          %s849 = sshll.u32 [#allocation11], 4
          %s850 = int_to_ptr.vmem [resolvable:$true] %s849
          %852 = dma.hbm_to_vmem [thread:$0]  %s47, 16, %s850, [#allocation12]
        $region100: #{luna_transformer_forward.4} parent=11 // pred_fallthru
          _
        // Predicated region
        $region101: #{luna_transformer_forward.4} parent=11 // pred_check
          %p853 = pneg %p609
        $region102: #{luna_transformer_forward.4} parent=11 // pred_check_branch
          %855 = sbr.rel (%p853) target = $region104
        $region103: #{luna_transformer_forward.4} parent=11 // pred_region
          _
        $region104: #{luna_transformer_forward.4} parent=11 // pred_fallthru
          _
        // Predicated region
        $region105: #{luna_transformer_forward.4} parent=11 // pred_check
          %p856 = pneg %p630
        $region106: #{luna_transformer_forward.4} parent=11 // pred_check_branch
          %858 = sbr.rel (%p856) target = $region108
        $region107: #{luna_transformer_forward.4} parent=11 // pred_region
          %s860 = ssub.s32 16, 16
          %861 = vsyncadd [#allocation12], %s860
          %s863 = sshll.u32 [#allocation13], 4
          %s864 = int_to_ptr.vmem [resolvable:$true] %s863
          %866 = dma.hbm_to_vmem [thread:$0]  %s51, 16, %s864, [#allocation12]
        $region108: #{luna_transformer_forward.4} parent=11 // pred_fallthru
          _
        // Predicated region
        $region109: #{luna_transformer_forward.4} parent=11 // pred_check
          %p867 = pneg %p651
        $region110: #{luna_transformer_forward.4} parent=11 // pred_check_branch
          %869 = sbr.rel (%p867) target = $region112
        $region111: #{luna_transformer_forward.4} parent=11 // pred_region
          %s871 = ssub.s32 16, 16
          %872 = vsyncadd [#allocation15], %s871
          %s874 = sshll.u32 [#allocation14], 4
          %s875 = int_to_ptr.vmem [resolvable:$true] %s874
          %877 = dma.hbm_to_vmem [thread:$0]  %s53, 16, %s875, [#allocation15]
        $region112: #{luna_transformer_forward.4} parent=11 // pred_fallthru
          _
        // Predicated region
        $region113: #{luna_transformer_forward.4} parent=11 // pred_check
          %p878 = pneg %p672
        $region114: #{luna_transformer_forward.4} parent=11 // pred_check_branch
          %880 = sbr.rel (%p878) target = $region116
        $region115: #{luna_transformer_forward.4} parent=11 // pred_region
          %s882 = ssub.s32 16, 16
          %883 = vsyncadd [#allocation15], %s882
          %s885 = sshll.u32 [#allocation16], 4
          %s886 = int_to_ptr.vmem [resolvable:$true] %s885
          %888 = dma.hbm_to_vmem [thread:$0]  %s55, 16, %s886, [#allocation15]
        $region116: #{luna_transformer_forward.4} parent=11 // pred_fallthru
          _
      $region12: #{luna_transformer_forward.4} parent=5 // pred_fallthru
        _
      %p889 = scmp.lt.s32.totalorder %s74, 2
      // Predicated region
      $region117: #{luna_transformer_forward.4} parent=5 // pred_check
        %p890 = pneg %p889
      $region118: #{luna_transformer_forward.4} parent=5 // pred_check_branch
        %892 = sbr.rel (%p890) target = $region120
      $region119: #{luna_transformer_forward.4} parent=5 // pred_region
        // Predicated region
        $region121: #{luna_transformer_forward.4} parent=119 // pred_check
          %p893 = pneg %p94
        $region122: #{luna_transformer_forward.4} parent=119 // pred_check_branch
          %895 = sbr.rel (%p893) target = $region124
        $region123: #{luna_transformer_forward.4} parent=119 // pred_region
          %p896 = scmp.lt.s32.totalorder %s74, 1
          %s897 = scalar_select %p896, %s74, 1
          %s898 = smul.addr %s897, 2
          %s899 = smul.addr %s898, 8
          %s900 = scalar_lea.vmem %s1, %s899
        $region124: #{luna_transformer_forward.4} parent=119 // pred_fallthru
          _
        // Predicated region
        $region125: #{luna_transformer_forward.4} parent=119 // pred_check
          %p901 = pneg %p120
        $region126: #{luna_transformer_forward.4} parent=119 // pred_check_branch
          %903 = sbr.rel (%p901) target = $region128
        $region127: #{luna_transformer_forward.4} parent=119 // pred_region
          %p904 = scmp.lt.s32.totalorder %s74, 1
          %s905 = scalar_select %p904, %s74, 1
          %s906 = smul.addr %s905, 8
          %s907 = scalar_lea.vmem %s3, %s906
        $region128: #{luna_transformer_forward.4} parent=119 // pred_fallthru
          _
      $region120: #{luna_transformer_forward.4} parent=5 // pred_fallthru
        _
      %p908 = scmp.le.s32.totalorder 1, %s74
      %p909 = scmp.lt.s32.totalorder %s74, 3
      %p910 = pnand %p908, %p909
      %p911 = pneg %p910
      // Predicated region
      $region129: #{luna_transformer_forward.4} parent=5 // pred_check
        _
      $region130: #{luna_transformer_forward.4} parent=5 // pred_check_branch
        %913 = sbr.rel (%p910) target = $region132
      $region131: #{luna_transformer_forward.4} parent=5 // pred_region
        %s914 = ssub.s32 %s74, 1
        // Predicated region
        $region133: #{luna_transformer_forward.4} parent=131 // pred_check
          %p915 = pneg %p462
        $region134: #{luna_transformer_forward.4} parent=131 // pred_check_branch
          %917 = sbr.rel (%p915) target = $region136
        $region135: #{luna_transformer_forward.4} parent=131 // pred_region
          %918 = dma.done [#allocation3], 16
        $region136: #{luna_transformer_forward.4} parent=131 // pred_fallthru
          _
        // Predicated region
        $region137: #{luna_transformer_forward.4} parent=131 // pred_check
          %p919 = pneg %p483
        $region138: #{luna_transformer_forward.4} parent=131 // pred_check_branch
          %921 = sbr.rel (%p919) target = $region140
        $region139: #{luna_transformer_forward.4} parent=131 // pred_region
          %922 = dma.done [#allocation6], 16
        $region140: #{luna_transformer_forward.4} parent=131 // pred_fallthru
          _
        // Predicated region
        $region141: #{luna_transformer_forward.4} parent=131 // pred_check
          %p923 = pneg %p504
        $region142: #{luna_transformer_forward.4} parent=131 // pred_check_branch
          %925 = sbr.rel (%p923) target = $region144
        $region143: #{luna_transformer_forward.4} parent=131 // pred_region
          %926 = dma.done [#allocation6], 16
        $region144: #{luna_transformer_forward.4} parent=131 // pred_fallthru
          _
        // Predicated region
        $region145: #{luna_transformer_forward.4} parent=131 // pred_check
          %p927 = pneg %p525
        $region146: #{luna_transformer_forward.4} parent=131 // pred_check_branch
          %929 = sbr.rel (%p927) target = $region148
        $region147: #{luna_transformer_forward.4} parent=131 // pred_region
          %930 = dma.done [#allocation9], 16
        $region148: #{luna_transformer_forward.4} parent=131 // pred_fallthru
          _
        // Predicated region
        $region149: #{luna_transformer_forward.4} parent=131 // pred_check
          %p931 = pneg %p546
        $region150: #{luna_transformer_forward.4} parent=131 // pred_check_branch
          %933 = sbr.rel (%p931) target = $region152
        $region151: #{luna_transformer_forward.4} parent=131 // pred_region
          %934 = dma.done [#allocation9], 16
        $region152: #{luna_transformer_forward.4} parent=131 // pred_fallthru
          _
        // Predicated region
        $region153: #{luna_transformer_forward.4} parent=131 // pred_check
          %p935 = pneg %p588
        $region154: #{luna_transformer_forward.4} parent=131 // pred_check_branch
          %937 = sbr.rel (%p935) target = $region156
        $region155: #{luna_transformer_forward.4} parent=131 // pred_region
          %938 = dma.done [#allocation12], 16
        $region156: #{luna_transformer_forward.4} parent=131 // pred_fallthru
          _
        // Predicated region
        $region157: #{luna_transformer_forward.4} parent=131 // pred_check
          %p939 = pneg %p630
        $region158: #{luna_transformer_forward.4} parent=131 // pred_check_branch
          %941 = sbr.rel (%p939) target = $region160
        $region159: #{luna_transformer_forward.4} parent=131 // pred_region
          %942 = dma.done [#allocation12], 16
        $region160: #{luna_transformer_forward.4} parent=131 // pred_fallthru
          _
        // Predicated region
        $region161: #{luna_transformer_forward.4} parent=131 // pred_check
          %p943 = pneg %p651
        $region162: #{luna_transformer_forward.4} parent=131 // pred_check_branch
          %945 = sbr.rel (%p943) target = $region164
        $region163: #{luna_transformer_forward.4} parent=131 // pred_region
          %946 = dma.done [#allocation15], 16
        $region164: #{luna_transformer_forward.4} parent=131 // pred_fallthru
          _
        // Predicated region
        $region165: #{luna_transformer_forward.4} parent=131 // pred_check
          %p947 = pneg %p672
        $region166: #{luna_transformer_forward.4} parent=131 // pred_check_branch
          %949 = sbr.rel (%p947) target = $region168
        $region167: #{luna_transformer_forward.4} parent=131 // pred_region
          %950 = dma.done [#allocation15], 16
        $region168: #{luna_transformer_forward.4} parent=131 // pred_fallthru
          _
        %p951 = scmp.lt.s32.totalorder %s79, 1
        %s952 = scalar_select %p951, %s79, 1
        %s953 = smul.addr %s952, 2
        %s954 = smul.addr %s953, 8
        %s955 = scalar_lea.vmem %s1, %s954
        %p956 = pneg %p100
        %p957 = pneg %p97
        %p958 = scmp.lt.s32.totalorder %s79, 1
        %s959 = scalar_select %p958, %s79, 1
        %s960 = smul.addr %s959, 8
        %s961 = scalar_lea.vmem %s3, %s960
        %p962 = pneg %p126
        %p963 = pneg %p123
        %p964 = pneg %p147
        %p965 = pneg %p144
        %p966 = pneg %p168
        %p967 = pneg %p165
        %p968 = pneg %p189
        %p969 = pneg %p186
        %p970 = pneg %p210
        %p971 = pneg %p207
        %p972 = pneg %p231
        %p973 = pneg %p228
        %p974 = pneg %p252
        %p975 = pneg %p249
        %p976 = pneg %p273
        %p977 = pneg %p270
        %p978 = pneg %p294
        %p979 = pneg %p291
        %p980 = pneg %p315
        %p981 = pneg %p312
        %p982 = pneg %p336
        %p983 = pneg %p333
        %p984 = pneg %p357
        %p985 = pneg %p354
        %p986 = pneg %p378
        %p987 = pneg %p375
        %p988 = pneg %p399
        %p989 = pneg %p396
        %p990 = pneg %p420
        %p991 = pneg %p417
        %p992 = pneg %p441
        %p993 = pneg %p438
        %p994 = pneg %p462
        %p995 = pneg %p459
        %p996 = pneg %p483
        %p997 = pneg %p480
        %p998 = pneg %p504
        %p999 = pneg %p501
        %p1000 = pneg %p525
        %p1001 = pneg %p522
        %p1002 = pneg %p546
        %p1003 = pneg %p543
        %p1004 = pneg %p567
        %p1005 = pneg %p564
        %p1006 = pneg %p588
        %p1007 = pneg %p585
        %p1008 = pneg %p609
        %p1009 = pneg %p606
        %p1010 = pneg %p630
        %p1011 = pneg %p627
        %p1012 = pneg %p651
        %p1013 = pneg %p648
        %p1014 = pneg %p672
        %p1015 = pneg %p669
        %p1016 = pneg %p698
        %p1017 = pneg %p695
        %p1018 = scmp.lt.s32.totalorder %s79, 1
        %s1019 = scalar_select %p1018, %s79, 1
        %s1020 = smul.addr %s1019, 2
        %s1021 = smul.addr %s1020, 8
        %s1022 = scalar_lea.vmem %s57, %s1021
        %p1023 = pneg %p724
        %p1024 = pneg %p721
        %s1025 = sand.u32 %s711, 1
        %s1026 = scalar_lea.sflag [#allocation4], %s1025
        %s1027 = sand.u32 %s711, 1
        %s1028 = smul.addr %s1027, 8
        %s1029 = scalar_lea.vmem [#allocation17], %s1028
        %p1030 = scmp.lt.s32.totalorder %s79, 1
        %s1031 = scalar_select %p1030, %s79, 1
        %s1032 = smul.addr %s1031, 2
        %s1033 = smul.addr %s1032, 8
        %s1034 = scalar_lea.vmem %s1, %s1033
        %p1035 = scmp.lt.s32.totalorder %s79, 1
        %s1036 = scalar_select %p1035, %s79, 1
        %s1037 = smul.addr %s1036, 8
        %s1038 = scalar_lea.vmem %s3, %s1037
        %p1039 = scmp.lt.s32.totalorder %s79, 1
        %s1040 = scalar_select %p1039, %s79, 1
        %s1041 = smul.addr %s1040, 2
        %s1042 = smul.addr %s1041, 8
        %s1043 = scalar_lea.vmem %s57, %s1042
        %v1045 = vld [vmem:[%s1034] sm:$0xff]
        %v1046 = vld [vmem:[%s1034 + $0x8] sm:$0xff]
        %v1047 = vld [vmem:[%s1038] sm:$0xff]
        %v1048 = vld [vmem:[%s5] sm:$0xf]
        %v1049 = vld [vmem:[%s5 + $0x4] sm:$0xf]
        %v1050 = vld [vmem:[%s5 + $0x8] sm:$0xf]
        %v1051 = vld [vmem:[%s5 + $0xc] sm:$0xf]
        %v1052 = vpack.c.bf16 %v1046, %v1045
        %v1053 = vld [vmem:[%s7] sm:$0x1]
        %v1055 = vlaneseq
        %v1056 = vshrl.u32 %v1055, 7
        %v1057 = vsub.s32 0, %v1056
        %v1058 = vrot.slane %v1053, %v1057
        %v1064 = vunpack.c.l.b16 %v1048
        %v1065 = vunpack.c.l.b16 %v1049
        %v1066 = vunpack.c.l.b16 %v1050
        %v1067 = vunpack.c.l.b16 %v1051
        %v1068 = vpack.c.b16 %v1065, %v1064
        %v1069 = vpack.c.b16 %v1067, %v1066
        %vm1072 = vcmask 261120
        %v1074 = vsel %vm1072, %v1052, 0
        %1076 = vmatprep.subr.bf16.mxu0 0
        %1077 = vmatpush1.bf16.msra.mxu0 %v1068
        %1078 = vmatprep.subr.bf16.mxu0 0
        %1079 = vmatpush1.bf16.msra.mxu0 %v1069
        %1080 = vmatprep.subr.bf16.mxu0 0
        %1081 = vmatpush1.bf16.msra.mxu0 0
        %1082 = vmatprep.subr.bf16.mxu0 0
        %1083 = vmatpush1.bf16.msra.mxu0 0
        %1084 = vmatprep.subr.bf16.mxu0 0
        %1085 = vmatpush1.bf16.msra.mxu0 0
        %1086 = vmatprep.subr.bf16.mxu0 0
        %1087 = vmatpush1.bf16.msra.mxu0 0
        %1088 = vmatprep.subr.bf16.mxu0 0
        %1089 = vmatpush1.bf16.msra.mxu0 0
        %1090 = vmatprep.subr.bf16.mxu0 0
        %1091 = vmatpush1.bf16.msra.mxu0 0
        %1092 = vmatprep.subr.bf16.mxu0 0
        %1093 = vmatpush1.bf16.msra.mxu0 0
        %1094 = vmatprep.subr.bf16.mxu0 0
        %1095 = vmatpush1.bf16.msra.mxu0 0
        %1096 = vmatprep.subr.bf16.mxu0 0
        %1097 = vmatpush1.bf16.msra.mxu0 0
        %1098 = vmatprep.subr.bf16.mxu0 0
        %1099 = vmatpush1.bf16.msra.mxu0 0
        %1100 = vmatprep.subr.bf16.mxu0 0
        %1101 = vmatpush1.bf16.msra.mxu0 0
        %1102 = vmatprep.subr.bf16.mxu0 0
        %1103 = vmatpush1.bf16.msra.mxu0 0
        %1104 = vmatprep.subr.bf16.mxu0 0
        %1105 = vmatpush1.bf16.msra.mxu0 0
        %1106 = vmatprep.subr.bf16.mxu0 0
        %1107 = vmatpush1.bf16.msra.mxu0 0
        %1108 = vmatprep.mubr.bf16.mxu0 0
        %1109 = vmatmul.mubr.bf16.gmra.mrb[0].mxu0 %v1074
        %v1110 = vpop.f32.mrb[0].mxu0
        %v1111 = vadd.f32 %v1058, %v1110
        %v1112 = vpop.f32.mrb[0].mxu0
        %v1113 = vpop.f32.mrb[0].mxu0
        %v1114 = vadd.f32 %v1058, %v1113
        %v1115 = vpop.f32.mrb[0].mxu0
        %1116 = vdwg.mxu0
        %v1117 = vld [vmem:[%s9] sm:$0xf]
        %v1118 = vld [vmem:[%s9 + $0x4] sm:$0xf]
        %v1119 = vld [vmem:[%s9 + $0x8] sm:$0xf]
        %v1120 = vld [vmem:[%s9 + $0xc] sm:$0xf]
        %v1121 = vpack.c.bf16 %v1047, %v1047
        %v1122 = vld [vmem:[%s11] sm:$0x1]
        %v1124 = vlaneseq
        %v1125 = vshrl.u32 %v1124, 7
        %v1126 = vsub.s32 0, %v1125
        %v1127 = vrot.slane %v1122, %v1126
        %v1133 = vunpack.c.l.b16 %v1117
        %v1134 = vunpack.c.l.b16 %v1118
        %v1135 = vunpack.c.l.b16 %v1119
        %v1136 = vunpack.c.l.b16 %v1120
        %v1137 = vpack.c.b16 %v1134, %v1133
        %v1138 = vpack.c.b16 %v1136, %v1135
        %v1142 = vsel %vm1072, %v1121, 0
        %1144 = vmatprep.subr.bf16.mxu0 0
        %1145 = vmatpush1.bf16.msra.mxu0 %v1137
        %1146 = vmatprep.subr.bf16.mxu0 0
        %1147 = vmatpush1.bf16.msra.mxu0 %v1138
        %1148 = vmatprep.subr.bf16.mxu0 0
        %1149 = vmatpush1.bf16.msra.mxu0 0
        %1150 = vmatprep.subr.bf16.mxu0 0
        %1151 = vmatpush1.bf16.msra.mxu0 0
        %1152 = vmatprep.subr.bf16.mxu0 0
        %1153 = vmatpush1.bf16.msra.mxu0 0
        %1154 = vmatprep.subr.bf16.mxu0 0
        %1155 = vmatpush1.bf16.msra.mxu0 0
        %1156 = vmatprep.subr.bf16.mxu0 0
        %1157 = vmatpush1.bf16.msra.mxu0 0
        %1158 = vmatprep.subr.bf16.mxu0 0
        %1159 = vmatpush1.bf16.msra.mxu0 0
        %1160 = vmatprep.subr.bf16.mxu0 0
        %1161 = vmatpush1.bf16.msra.mxu0 0
        %1162 = vmatprep.subr.bf16.mxu0 0
        %1163 = vmatpush1.bf16.msra.mxu0 0
        %1164 = vmatprep.subr.bf16.mxu0 0
        %1165 = vmatpush1.bf16.msra.mxu0 0
        %1166 = vmatprep.subr.bf16.mxu0 0
        %1167 = vmatpush1.bf16.msra.mxu0 0
        %1168 = vmatprep.subr.bf16.mxu0 0
        %1169 = vmatpush1.bf16.msra.mxu0 0
        %1170 = vmatprep.subr.bf16.mxu0 0
        %1171 = vmatpush1.bf16.msra.mxu0 0
        %1172 = vmatprep.subr.bf16.mxu0 0
        %1173 = vmatpush1.bf16.msra.mxu0 0
        %1174 = vmatprep.subr.bf16.mxu0 0
        %1175 = vmatpush1.bf16.msra.mxu0 0
        %1176 = vmatprep.mubr.bf16.mxu0 0
        %1177 = vmatmul.mubr.bf16.gmra.mrb[0].mxu0 %v1142
        %v1178 = vpop.f32.mrb[0].mxu0
        %v1179 = vadd.f32 %v1127, %v1178
        %v1180 = vpop.f32.mrb[0].mxu0
        %v1181 = vpop.f32.mrb[0].mxu0
        %v1182 = vpop.f32.mrb[0].mxu0
        %1183 = vdwg.mxu0
        %v1184 = vld [vmem:[%s17] sm:$0xf]
        %v1185 = vld [vmem:[%s17 + $0x4] sm:$0xf]
        %v1186 = vld [vmem:[%s17 + $0x8] sm:$0xf]
        %v1187 = vld [vmem:[%s17 + $0xc] sm:$0xf]
        %v1188 = vld [vmem:[%s17 + $0x10] sm:$0xf]
        %v1189 = vld [vmem:[%s17 + $0x14] sm:$0xf]
        %v1190 = vld [vmem:[%s17 + $0x18] sm:$0xf]
        %v1191 = vld [vmem:[%s17 + $0x1c] sm:$0xf]
        %v1192 = vpack.c.bf16 %v1114, %v1111
        %v1193 = vld [vmem:[%s19] sm:$0x1]
        %v1195 = vlaneseq
        %v1196 = vshrl.u32 %v1195, 7
        %v1197 = vsub.s32 0, %v1196
        %v1198 = vrot.slane %v1193, %v1197
        %1201 = vrot.lane.b32.xlu0 %v1192, 64
        %v1202 = vpop.permute.xlu0 %1201
        %v1211 = vunpack.c.l.b16 %v1184
        %v1212 = vunpack.c.l.b16 %v1185
        %v1213 = vunpack.c.l.b16 %v1186
        %v1214 = vunpack.c.l.b16 %v1187
        %v1215 = vunpack.c.l.b16 %v1188
        %v1216 = vunpack.c.l.b16 %v1189
        %v1217 = vunpack.c.l.b16 %v1190
        %v1218 = vunpack.c.l.b16 %v1191
        %v1219 = vpack.c.b16 %v1212, %v1211
        %v1220 = vpack.c.b16 %v1214, %v1213
        %v1221 = vpack.c.b16 %v1216, %v1215
        %v1222 = vpack.c.b16 %v1218, %v1217
        %vm1227 = vcmask 523264
        %v1229 = vsel %vm1227, %v1202, 0
        %1231 = vmatprep.subr.bf16.mxu0 0
        %1232 = vmatpush1.bf16.msra.mxu0 %v1219
        %1233 = vmatprep.subr.bf16.mxu0 0
        %1234 = vmatpush1.bf16.msra.mxu0 %v1220
        %1235 = vmatprep.subr.bf16.mxu0 0
        %1236 = vmatpush1.bf16.msra.mxu0 %v1221
        %1237 = vmatprep.subr.bf16.mxu0 0
        %1238 = vmatpush1.bf16.msra.mxu0 %v1222
        %1239 = vmatprep.subr.bf16.mxu0 0
        %1240 = vmatpush1.bf16.msra.mxu0 0
        %1241 = vmatprep.subr.bf16.mxu0 0
        %1242 = vmatpush1.bf16.msra.mxu0 0
        %1243 = vmatprep.subr.bf16.mxu0 0
        %1244 = vmatpush1.bf16.msra.mxu0 0
        %1245 = vmatprep.subr.bf16.mxu0 0
        %1246 = vmatpush1.bf16.msra.mxu0 0
        %1247 = vmatprep.subr.bf16.mxu0 0
        %1248 = vmatpush1.bf16.msra.mxu0 0
        %1249 = vmatprep.subr.bf16.mxu0 0
        %1250 = vmatpush1.bf16.msra.mxu0 0
        %1251 = vmatprep.subr.bf16.mxu0 0
        %1252 = vmatpush1.bf16.msra.mxu0 0
        %1253 = vmatprep.subr.bf16.mxu0 0
        %1254 = vmatpush1.bf16.msra.mxu0 0
        %1255 = vmatprep.subr.bf16.mxu0 0
        %1256 = vmatpush1.bf16.msra.mxu0 0
        %1257 = vmatprep.subr.bf16.mxu0 0
        %1258 = vmatpush1.bf16.msra.mxu0 0
        %1259 = vmatprep.subr.bf16.mxu0 0
        %1260 = vmatpush1.bf16.msra.mxu0 0
        %1261 = vmatprep.subr.bf16.mxu0 0
        %1262 = vmatpush1.bf16.msra.mxu0 0
        %1263 = vmatprep.mubr.bf16.mxu0 0
        %1264 = vmatmul.mubr.bf16.gmra.mrb[0].mxu0 %v1229
        %v1265 = vpop.f32.mrb[0].mxu0
        %v1266 = vadd.f32 %v1198, %v1265
        %v1267 = vpop.f32.mrb[0].mxu0
        %v1268 = vpop.f32.mrb[0].mxu0
        %v1269 = vadd.f32 %v1198, %v1268
        %v1270 = vpop.f32.mrb[0].mxu0
        %1271 = vdwg.mxu0
        %v1272 = vld [vmem:[%s13] sm:$0xf]
        %v1273 = vld [vmem:[%s13 + $0x4] sm:$0xf]
        %v1274 = vld [vmem:[%s13 + $0x8] sm:$0xf]
        %v1275 = vld [vmem:[%s13 + $0xc] sm:$0xf]
        %v1276 = vld [vmem:[%s13 + $0x10] sm:$0xf]
        %v1277 = vld [vmem:[%s13 + $0x14] sm:$0xf]
        %v1278 = vld [vmem:[%s13 + $0x18] sm:$0xf]
        %v1279 = vld [vmem:[%s13 + $0x1c] sm:$0xf]
        %v1280 = vpack.c.bf16 %v1179, %v1179
        %v1281 = vld [vmem:[%s15] sm:$0x1]
        %v1283 = vlaneseq
        %v1284 = vshrl.u32 %v1283, 7
        %v1285 = vsub.s32 0, %v1284
        %v1286 = vrot.slane %v1281, %v1285
        %v1296 = vunpack.c.l.b16 %v1272
        %v1297 = vunpack.c.l.b16 %v1273
        %v1298 = vunpack.c.l.b16 %v1274
        %v1299 = vunpack.c.l.b16 %v1275
        %v1300 = vunpack.c.l.b16 %v1276
        %v1301 = vunpack.c.l.b16 %v1277
        %v1302 = vunpack.c.l.b16 %v1278
        %v1303 = vunpack.c.l.b16 %v1279
        %v1304 = vpack.c.b16 %v1297, %v1296
        %v1305 = vpack.c.b16 %v1299, %v1298
        %v1306 = vpack.c.b16 %v1301, %v1300
        %v1307 = vpack.c.b16 %v1303, %v1302
        %v1313 = vsel %vm1227, %v1280, 0
        %1315 = vmatprep.subr.bf16.mxu0 0
        %1316 = vmatpush1.bf16.msra.mxu0 %v1304
        %1317 = vmatprep.subr.bf16.mxu0 0
        %1318 = vmatpush1.bf16.msra.mxu0 %v1305
        %1319 = vmatprep.subr.bf16.mxu0 0
        %1320 = vmatpush1.bf16.msra.mxu0 %v1306
        %1321 = vmatprep.subr.bf16.mxu0 0
        %1322 = vmatpush1.bf16.msra.mxu0 %v1307
        %1323 = vmatprep.subr.bf16.mxu0 0
        %1324 = vmatpush1.bf16.msra.mxu0 0
        %1325 = vmatprep.subr.bf16.mxu0 0
        %1326 = vmatpush1.bf16.msra.mxu0 0
        %1327 = vmatprep.subr.bf16.mxu0 0
        %1328 = vmatpush1.bf16.msra.mxu0 0
        %1329 = vmatprep.subr.bf16.mxu0 0
        %1330 = vmatpush1.bf16.msra.mxu0 0
        %1331 = vmatprep.subr.bf16.mxu0 0
        %1332 = vmatpush1.bf16.msra.mxu0 0
        %1333 = vmatprep.subr.bf16.mxu0 0
        %1334 = vmatpush1.bf16.msra.mxu0 0
        %1335 = vmatprep.subr.bf16.mxu0 0
        %1336 = vmatpush1.bf16.msra.mxu0 0
        %1337 = vmatprep.subr.bf16.mxu0 0
        %1338 = vmatpush1.bf16.msra.mxu0 0
        %1339 = vmatprep.subr.bf16.mxu0 0
        %1340 = vmatpush1.bf16.msra.mxu0 0
        %1341 = vmatprep.subr.bf16.mxu0 0
        %1342 = vmatpush1.bf16.msra.mxu0 0
        %1343 = vmatprep.subr.bf16.mxu0 0
        %1344 = vmatpush1.bf16.msra.mxu0 0
        %1345 = vmatprep.subr.bf16.mxu0 0
        %1346 = vmatpush1.bf16.msra.mxu0 0
        %1347 = vmatprep.mubr.bf16.mxu0 0
        %1348 = vmatmul.mubr.bf16.gmra.mrb[0].mxu0 %v1313
        %v1349 = vpop.f32.mrb[0].mxu0
        %v1350 = vadd.f32 %v1286, %v1349
        %v1351 = vpop.f32.mrb[0].mxu0
        %v1352 = vpop.f32.mrb[0].mxu0
        %v1353 = vpop.f32.mrb[0].mxu0
        %1354 = vdwg.mxu0
        %v1355 = vpack.c.bf16 %v1350, %v1350
        %v1356 = vpack.c.bf16 %v1269, %v1266
        %vm1357 = vcmask 130048
        %v1359 = vsel %vm1357, %v1355, 0
        %v1362 = vsel %vm1357, %v1356, 0
        %1364 = vmatprep.subr.bf16.mxu0 0
        %1365 = vmatpush1.bf16.xpose.msra.mxu0 %v1362
        %1366 = vmatprep.subr.bf16.mxu0 0
        %1367 = vmatpush1.bf16.xpose.msra.mxu0 0
        %1368 = vmatprep.subr.bf16.mxu0 0
        %1369 = vmatpush1.bf16.xpose.msra.mxu0 0
        %1370 = vmatprep.subr.bf16.mxu0 0
        %1371 = vmatpush1.bf16.xpose.msra.mxu0 0
        %1372 = vmatprep.subr.bf16.mxu0 0
        %1373 = vmatpush1.bf16.xpose.msra.mxu0 0
        %1374 = vmatprep.subr.bf16.mxu0 0
        %1375 = vmatpush1.bf16.xpose.msra.mxu0 0
        %1376 = vmatprep.subr.bf16.mxu0 0
        %1377 = vmatpush1.bf16.xpose.msra.mxu0 0
        %1378 = vmatprep.subr.bf16.mxu0 0
        %1379 = vmatpush1.bf16.xpose.msra.mxu0 0
        %1380 = vmatprep.subr.bf16.mxu0 0
        %1381 = vmatpush1.bf16.xpose.msra.mxu0 0
        %1382 = vmatprep.subr.bf16.mxu0 0
        %1383 = vmatpush1.bf16.xpose.msra.mxu0 0
        %1384 = vmatprep.subr.bf16.mxu0 0
        %1385 = vmatpush1.bf16.xpose.msra.mxu0 0
        %1386 = vmatprep.subr.bf16.mxu0 0
        %1387 = vmatpush1.bf16.xpose.msra.mxu0 0
        %1388 = vmatprep.subr.bf16.mxu0 0
        %1389 = vmatpush1.bf16.xpose.msra.mxu0 0
        %1390 = vmatprep.subr.bf16.mxu0 0
        %1391 = vmatpush1.bf16.xpose.msra.mxu0 0
        %1392 = vmatprep.subr.bf16.mxu0 0
        %1393 = vmatpush1.bf16.xpose.msra.mxu0 0
        %1394 = vmatprep.subr.bf16.mxu0 0
        %1395 = vmatpush1.bf16.xpose.msra.mxu0 0
        %1396 = vmatprep.mubr.bf16.mxu0 0
        %1397 = vmatmul.mubr.bf16.gmra.mrb[0].mxu0 %v1359
        %v1398 = vpop.f32.mrb[0].mxu0
        %v1399 = vadd.f32 0.0, %v1398
        %v1400 = vpop.f32.mrb[0].mxu0
        %v1401 = vpop.f32.mrb[0].mxu0
        %v1402 = vpop.f32.mrb[0].mxu0
        %1403 = vdwg.mxu0
        %v1404 = vsel %vm1357, %v1399, -inf
        %1405 = vmax.xlane.f32.xlu0 %v1404
        %v1406 = vpop.xlane.xlu0 %1405
        %v1407 = vsub.f32 %v1399, %v1406
        %v1408 = vmul.f32 %v1407, 1.442695
        %v1409 = vpow.pop %v1408
        %v1410 = vsel %vm1357, %v1409, 0.0
        %1411 = vadd.xlane.f32.xlu0 %v1410
        %v1412 = vpop.xlane.xlu0 %1411
        %v1413 = vrcp.pop %v1412
        %v1414 = vmul.f32 %v1409, %v1413
        %v1415 = vpack.c.bf16 %v1414, %v1414
        %1417 = vrot.lane.b32.xlu0 %v1356, 64
        %v1418 = vpop.permute.xlu0 %1417
        %v1421 = vsel %vm1357, %v1415, 0
        %1423 = vmatprep.subr.bf16.mxu0 0
        %1424 = vmatpush1.bf16.msra.mxu0 %v1418
        %1425 = vmatprep.subr.bf16.mxu0 0
        %1426 = vmatpush1.bf16.msra.mxu0 0
        %1427 = vmatprep.subr.bf16.mxu0 0
        %1428 = vmatpush1.bf16.msra.mxu0 0
        %1429 = vmatprep.subr.bf16.mxu0 0
        %1430 = vmatpush1.bf16.msra.mxu0 0
        %1431 = vmatprep.subr.bf16.mxu0 0
        %1432 = vmatpush1.bf16.msra.mxu0 0
        %1433 = vmatprep.subr.bf16.mxu0 0
        %1434 = vmatpush1.bf16.msra.mxu0 0
        %1435 = vmatprep.subr.bf16.mxu0 0
        %1436 = vmatpush1.bf16.msra.mxu0 0
        %1437 = vmatprep.subr.bf16.mxu0 0
        %1438 = vmatpush1.bf16.msra.mxu0 0
        %1439 = vmatprep.subr.bf16.mxu0 0
        %1440 = vmatpush1.bf16.msra.mxu0 0
        %1441 = vmatprep.subr.bf16.mxu0 0
        %1442 = vmatpush1.bf16.msra.mxu0 0
        %1443 = vmatprep.subr.bf16.mxu0 0
        %1444 = vmatpush1.bf16.msra.mxu0 0
        %1445 = vmatprep.subr.bf16.mxu0 0
        %1446 = vmatpush1.bf16.msra.mxu0 0
        %1447 = vmatprep.subr.bf16.mxu0 0
        %1448 = vmatpush1.bf16.msra.mxu0 0
        %1449 = vmatprep.subr.bf16.mxu0 0
        %1450 = vmatpush1.bf16.msra.mxu0 0
        %1451 = vmatprep.subr.bf16.mxu0 0
        %1452 = vmatpush1.bf16.msra.mxu0 0
        %1453 = vmatprep.subr.bf16.mxu0 0
        %1454 = vmatpush1.bf16.msra.mxu0 0
        %1455 = vmatprep.mubr.bf16.mxu0 0
        %1456 = vmatmul.mubr.bf16.gmra.mrb[0].mxu0 %v1421
        %v1457 = vpop.f32.mrb[0].mxu0
        %v1458 = vadd.f32 0.0, %v1457
        %v1459 = vpop.f32.mrb[0].mxu0
        %v1460 = vpop.f32.mrb[0].mxu0
        %v1461 = vpop.f32.mrb[0].mxu0
        %1462 = vdwg.mxu0
        %1464 = vrot.lane.b32.xlu0 %v1355, 112
        %v1465 = vpop.permute.xlu0 %1464
        %1466 = vrot.lane.b32.xlu0 %v1356, 112
        %v1467 = vpop.permute.xlu0 %1466
        %v1469 = vsel %vm1357, %v1465, 0
        %v1472 = vsel %vm1357, %v1467, 0
        %1474 = vmatprep.subr.bf16.mxu0 0
        %1475 = vmatpush1.bf16.xpose.msra.mxu0 %v1472
        %1476 = vmatprep.subr.bf16.mxu0 0
        %1477 = vmatpush1.bf16.xpose.msra.mxu0 0
        %1478 = vmatprep.subr.bf16.mxu0 0
        %1479 = vmatpush1.bf16.xpose.msra.mxu0 0
        %1480 = vmatprep.subr.bf16.mxu0 0
        %1481 = vmatpush1.bf16.xpose.msra.mxu0 0
        %1482 = vmatprep.subr.bf16.mxu0 0
        %1483 = vmatpush1.bf16.xpose.msra.mxu0 0
        %1484 = vmatprep.subr.bf16.mxu0 0
        %1485 = vmatpush1.bf16.xpose.msra.mxu0 0
        %1486 = vmatprep.subr.bf16.mxu0 0
        %1487 = vmatpush1.bf16.xpose.msra.mxu0 0
        %1488 = vmatprep.subr.bf16.mxu0 0
        %1489 = vmatpush1.bf16.xpose.msra.mxu0 0
        %1490 = vmatprep.subr.bf16.mxu0 0
        %1491 = vmatpush1.bf16.xpose.msra.mxu0 0
        %1492 = vmatprep.subr.bf16.mxu0 0
        %1493 = vmatpush1.bf16.xpose.msra.mxu0 0
        %1494 = vmatprep.subr.bf16.mxu0 0
        %1495 = vmatpush1.bf16.xpose.msra.mxu0 0
        %1496 = vmatprep.subr.bf16.mxu0 0
        %1497 = vmatpush1.bf16.xpose.msra.mxu0 0
        %1498 = vmatprep.subr.bf16.mxu0 0
        %1499 = vmatpush1.bf16.xpose.msra.mxu0 0
        %1500 = vmatprep.subr.bf16.mxu0 0
        %1501 = vmatpush1.bf16.xpose.msra.mxu0 0
        %1502 = vmatprep.subr.bf16.mxu0 0
        %1503 = vmatpush1.bf16.xpose.msra.mxu0 0
        %1504 = vmatprep.subr.bf16.mxu0 0
        %1505 = vmatpush1.bf16.xpose.msra.mxu0 0
        %1506 = vmatprep.mubr.bf16.mxu0 0
        %1507 = vmatmul.mubr.bf16.gmra.mrb[0].mxu0 %v1469
        %v1508 = vpop.f32.mrb[0].mxu0
        %v1509 = vadd.f32 0.0, %v1508
        %v1510 = vpop.f32.mrb[0].mxu0
        %v1511 = vpop.f32.mrb[0].mxu0
        %v1512 = vpop.f32.mrb[0].mxu0
        %1513 = vdwg.mxu0
        %v1514 = vsel %vm1357, %v1509, -inf
        %1515 = vmax.xlane.f32.xlu0 %v1514
        %v1516 = vpop.xlane.xlu0 %1515
        %v1517 = vsub.f32 %v1509, %v1516
        %v1518 = vmul.f32 %v1517, 1.442695
        %v1519 = vpow.pop %v1518
        %v1520 = vsel %vm1357, %v1519, 0.0
        %1521 = vadd.xlane.f32.xlu0 %v1520
        %v1522 = vpop.xlane.xlu0 %1521
        %v1523 = vrcp.pop %v1522
        %v1524 = vmul.f32 %v1519, %v1523
        %v1525 = vpack.c.bf16 %v1524, %v1524
        %1526 = vrot.lane.b32.xlu0 %v1356, 48
        %v1527 = vpop.permute.xlu0 %1526
        %v1530 = vsel %vm1357, %v1525, 0
        %1532 = vmatprep.subr.bf16.mxu0 0
        %1533 = vmatpush1.bf16.msra.mxu0 %v1527
        %1534 = vmatprep.subr.bf16.mxu0 0
        %1535 = vmatpush1.bf16.msra.mxu0 0
        %1536 = vmatprep.subr.bf16.mxu0 0
        %1537 = vmatpush1.bf16.msra.mxu0 0
        %1538 = vmatprep.subr.bf16.mxu0 0
        %1539 = vmatpush1.bf16.msra.mxu0 0
        %1540 = vmatprep.subr.bf16.mxu0 0
        %1541 = vmatpush1.bf16.msra.mxu0 0
        %1542 = vmatprep.subr.bf16.mxu0 0
        %1543 = vmatpush1.bf16.msra.mxu0 0
        %1544 = vmatprep.subr.bf16.mxu0 0
        %1545 = vmatpush1.bf16.msra.mxu0 0
        %1546 = vmatprep.subr.bf16.mxu0 0
        %1547 = vmatpush1.bf16.msra.mxu0 0
        %1548 = vmatprep.subr.bf16.mxu0 0
        %1549 = vmatpush1.bf16.msra.mxu0 0
        %1550 = vmatprep.subr.bf16.mxu0 0
        %1551 = vmatpush1.bf16.msra.mxu0 0
        %1552 = vmatprep.subr.bf16.mxu0 0
        %1553 = vmatpush1.bf16.msra.mxu0 0
        %1554 = vmatprep.subr.bf16.mxu0 0
        %1555 = vmatpush1.bf16.msra.mxu0 0
        %1556 = vmatprep.subr.bf16.mxu0 0
        %1557 = vmatpush1.bf16.msra.mxu0 0
        %1558 = vmatprep.subr.bf16.mxu0 0
        %1559 = vmatpush1.bf16.msra.mxu0 0
        %1560 = vmatprep.subr.bf16.mxu0 0
        %1561 = vmatpush1.bf16.msra.mxu0 0
        %1562 = vmatprep.subr.bf16.mxu0 0
        %1563 = vmatpush1.bf16.msra.mxu0 0
        %1564 = vmatprep.mubr.bf16.mxu0 0
        %1565 = vmatmul.mubr.bf16.gmra.mrb[0].mxu0 %v1530
        %v1566 = vpop.f32.mrb[0].mxu0
        %v1567 = vadd.f32 0.0, %v1566
        %v1568 = vpop.f32.mrb[0].mxu0
        %v1569 = vpop.f32.mrb[0].mxu0
        %v1570 = vpop.f32.mrb[0].mxu0
        %1571 = vdwg.mxu0
        %1572 = vrot.lane.b32.xlu0 %v1355, 96
        %v1573 = vpop.permute.xlu0 %1572
        %1574 = vrot.lane.b32.xlu0 %v1356, 96
        %v1575 = vpop.permute.xlu0 %1574
        %v1577 = vsel %vm1357, %v1573, 0
        %v1580 = vsel %vm1357, %v1575, 0
        %1582 = vmatprep.subr.bf16.mxu0 0
        %1583 = vmatpush1.bf16.xpose.msra.mxu0 %v1580
        %1584 = vmatprep.subr.bf16.mxu0 0
        %1585 = vmatpush1.bf16.xpose.msra.mxu0 0
        %1586 = vmatprep.subr.bf16.mxu0 0
        %1587 = vmatpush1.bf16.xpose.msra.mxu0 0
        %1588 = vmatprep.subr.bf16.mxu0 0
        %1589 = vmatpush1.bf16.xpose.msra.mxu0 0
        %1590 = vmatprep.subr.bf16.mxu0 0
        %1591 = vmatpush1.bf16.xpose.msra.mxu0 0
        %1592 = vmatprep.subr.bf16.mxu0 0
        %1593 = vmatpush1.bf16.xpose.msra.mxu0 0
        %1594 = vmatprep.subr.bf16.mxu0 0
        %1595 = vmatpush1.bf16.xpose.msra.mxu0 0
        %1596 = vmatprep.subr.bf16.mxu0 0
        %1597 = vmatpush1.bf16.xpose.msra.mxu0 0
        %1598 = vmatprep.subr.bf16.mxu0 0
        %1599 = vmatpush1.bf16.xpose.msra.mxu0 0
        %1600 = vmatprep.subr.bf16.mxu0 0
        %1601 = vmatpush1.bf16.xpose.msra.mxu0 0
        %1602 = vmatprep.subr.bf16.mxu0 0
        %1603 = vmatpush1.bf16.xpose.msra.mxu0 0
        %1604 = vmatprep.subr.bf16.mxu0 0
        %1605 = vmatpush1.bf16.xpose.msra.mxu0 0
        %1606 = vmatprep.subr.bf16.mxu0 0
        %1607 = vmatpush1.bf16.xpose.msra.mxu0 0
        %1608 = vmatprep.subr.bf16.mxu0 0
        %1609 = vmatpush1.bf16.xpose.msra.mxu0 0
        %1610 = vmatprep.subr.bf16.mxu0 0
        %1611 = vmatpush1.bf16.xpose.msra.mxu0 0
        %1612 = vmatprep.subr.bf16.mxu0 0
        %1613 = vmatpush1.bf16.xpose.msra.mxu0 0
        %1614 = vmatprep.mubr.bf16.mxu0 0
        %1615 = vmatmul.mubr.bf16.gmra.mrb[0].mxu0 %v1577
        %v1616 = vpop.f32.mrb[0].mxu0
        %v1617 = vadd.f32 0.0, %v1616
        %v1618 = vpop.f32.mrb[0].mxu0
        %v1619 = vpop.f32.mrb[0].mxu0
        %v1620 = vpop.f32.mrb[0].mxu0
        %1621 = vdwg.mxu0
        %v1622 = vsel %vm1357, %v1617, -inf
        %1623 = vmax.xlane.f32.xlu0 %v1622
        %v1624 = vpop.xlane.xlu0 %1623
        %v1625 = vsub.f32 %v1617, %v1624
        %v1626 = vmul.f32 %v1625, 1.442695
        %v1627 = vpow.pop %v1626
        %v1628 = vsel %vm1357, %v1627, 0.0
        %1629 = vadd.xlane.f32.xlu0 %v1628
        %v1630 = vpop.xlane.xlu0 %1629
        %v1631 = vrcp.pop %v1630
        %v1632 = vmul.f32 %v1627, %v1631
        %v1633 = vpack.c.bf16 %v1632, %v1632
        %1634 = vrot.lane.b32.xlu0 %v1356, 32
        %v1635 = vpop.permute.xlu0 %1634
        %v1638 = vsel %vm1357, %v1633, 0
        %1640 = vmatprep.subr.bf16.mxu0 0
        %1641 = vmatpush1.bf16.msra.mxu0 %v1635
        %1642 = vmatprep.subr.bf16.mxu0 0
        %1643 = vmatpush1.bf16.msra.mxu0 0
        %1644 = vmatprep.subr.bf16.mxu0 0
        %1645 = vmatpush1.bf16.msra.mxu0 0
        %1646 = vmatprep.subr.bf16.mxu0 0
        %1647 = vmatpush1.bf16.msra.mxu0 0
        %1648 = vmatprep.subr.bf16.mxu0 0
        %1649 = vmatpush1.bf16.msra.mxu0 0
        %1650 = vmatprep.subr.bf16.mxu0 0
        %1651 = vmatpush1.bf16.msra.mxu0 0
        %1652 = vmatprep.subr.bf16.mxu0 0
        %1653 = vmatpush1.bf16.msra.mxu0 0
        %1654 = vmatprep.subr.bf16.mxu0 0
        %1655 = vmatpush1.bf16.msra.mxu0 0
        %1656 = vmatprep.subr.bf16.mxu0 0
        %1657 = vmatpush1.bf16.msra.mxu0 0
        %1658 = vmatprep.subr.bf16.mxu0 0
        %1659 = vmatpush1.bf16.msra.mxu0 0
        %1660 = vmatprep.subr.bf16.mxu0 0
        %1661 = vmatpush1.bf16.msra.mxu0 0
        %1662 = vmatprep.subr.bf16.mxu0 0
        %1663 = vmatpush1.bf16.msra.mxu0 0
        %1664 = vmatprep.subr.bf16.mxu0 0
        %1665 = vmatpush1.bf16.msra.mxu0 0
        %1666 = vmatprep.subr.bf16.mxu0 0
        %1667 = vmatpush1.bf16.msra.mxu0 0
        %1668 = vmatprep.subr.bf16.mxu0 0
        %1669 = vmatpush1.bf16.msra.mxu0 0
        %1670 = vmatprep.subr.bf16.mxu0 0
        %1671 = vmatpush1.bf16.msra.mxu0 0
        %1672 = vmatprep.mubr.bf16.mxu0 0
        %1673 = vmatmul.mubr.bf16.gmra.mrb[0].mxu0 %v1638
        %v1674 = vpop.f32.mrb[0].mxu0
        %v1675 = vadd.f32 0.0, %v1674
        %v1676 = vpop.f32.mrb[0].mxu0
        %v1677 = vpop.f32.mrb[0].mxu0
        %v1678 = vpop.f32.mrb[0].mxu0
        %1679 = vdwg.mxu0
        %1680 = vrot.lane.b32.xlu0 %v1355, 80
        %v1681 = vpop.permute.xlu0 %1680
        %1682 = vrot.lane.b32.xlu0 %v1356, 80
        %v1683 = vpop.permute.xlu0 %1682
        %v1685 = vsel %vm1357, %v1681, 0
        %v1688 = vsel %vm1357, %v1683, 0
        %1690 = vmatprep.subr.bf16.mxu0 0
        %1691 = vmatpush1.bf16.xpose.msra.mxu0 %v1688
        %1692 = vmatprep.subr.bf16.mxu0 0
        %1693 = vmatpush1.bf16.xpose.msra.mxu0 0
        %1694 = vmatprep.subr.bf16.mxu0 0
        %1695 = vmatpush1.bf16.xpose.msra.mxu0 0
        %1696 = vmatprep.subr.bf16.mxu0 0
        %1697 = vmatpush1.bf16.xpose.msra.mxu0 0
        %1698 = vmatprep.subr.bf16.mxu0 0
        %1699 = vmatpush1.bf16.xpose.msra.mxu0 0
        %1700 = vmatprep.subr.bf16.mxu0 0
        %1701 = vmatpush1.bf16.xpose.msra.mxu0 0
        %1702 = vmatprep.subr.bf16.mxu0 0
        %1703 = vmatpush1.bf16.xpose.msra.mxu0 0
        %1704 = vmatprep.subr.bf16.mxu0 0
        %1705 = vmatpush1.bf16.xpose.msra.mxu0 0
        %1706 = vmatprep.subr.bf16.mxu0 0
        %1707 = vmatpush1.bf16.xpose.msra.mxu0 0
        %1708 = vmatprep.subr.bf16.mxu0 0
        %1709 = vmatpush1.bf16.xpose.msra.mxu0 0
        %1710 = vmatprep.subr.bf16.mxu0 0
        %1711 = vmatpush1.bf16.xpose.msra.mxu0 0
        %1712 = vmatprep.subr.bf16.mxu0 0
        %1713 = vmatpush1.bf16.xpose.msra.mxu0 0
        %1714 = vmatprep.subr.bf16.mxu0 0
        %1715 = vmatpush1.bf16.xpose.msra.mxu0 0
        %1716 = vmatprep.subr.bf16.mxu0 0
        %1717 = vmatpush1.bf16.xpose.msra.mxu0 0
        %1718 = vmatprep.subr.bf16.mxu0 0
        %1719 = vmatpush1.bf16.xpose.msra.mxu0 0
        %1720 = vmatprep.subr.bf16.mxu0 0
        %1721 = vmatpush1.bf16.xpose.msra.mxu0 0
        %1722 = vmatprep.mubr.bf16.mxu0 0
        %1723 = vmatmul.mubr.bf16.gmra.mrb[0].mxu0 %v1685
        %v1724 = vpop.f32.mrb[0].mxu0
        %v1725 = vadd.f32 0.0, %v1724
        %v1726 = vpop.f32.mrb[0].mxu0
        %v1727 = vpop.f32.mrb[0].mxu0
        %v1728 = vpop.f32.mrb[0].mxu0
        %1729 = vdwg.mxu0
        %v1730 = vsel %vm1357, %v1725, -inf
        %1731 = vmax.xlane.f32.xlu0 %v1730
        %v1732 = vpop.xlane.xlu0 %1731
        %v1733 = vsub.f32 %v1725, %v1732
        %v1734 = vmul.f32 %v1733, 1.442695
        %v1735 = vpow.pop %v1734
        %v1736 = vsel %vm1357, %v1735, 0.0
        %1737 = vadd.xlane.f32.xlu0 %v1736
        %v1738 = vpop.xlane.xlu0 %1737
        %v1739 = vrcp.pop %v1738
        %v1740 = vmul.f32 %v1735, %v1739
        %v1741 = vpack.c.bf16 %v1740, %v1740
        %1742 = vrot.lane.b32.xlu0 %v1356, 16
        %v1743 = vpop.permute.xlu0 %1742
        %v1746 = vsel %vm1357, %v1741, 0
        %1748 = vmatprep.subr.bf16.mxu0 0
        %1749 = vmatpush1.bf16.msra.mxu0 %v1743
        %1750 = vmatprep.subr.bf16.mxu0 0
        %1751 = vmatpush1.bf16.msra.mxu0 0
        %1752 = vmatprep.subr.bf16.mxu0 0
        %1753 = vmatpush1.bf16.msra.mxu0 0
        %1754 = vmatprep.subr.bf16.mxu0 0
        %1755 = vmatpush1.bf16.msra.mxu0 0
        %1756 = vmatprep.subr.bf16.mxu0 0
        %1757 = vmatpush1.bf16.msra.mxu0 0
        %1758 = vmatprep.subr.bf16.mxu0 0
        %1759 = vmatpush1.bf16.msra.mxu0 0
        %1760 = vmatprep.subr.bf16.mxu0 0
        %1761 = vmatpush1.bf16.msra.mxu0 0
        %1762 = vmatprep.subr.bf16.mxu0 0
        %1763 = vmatpush1.bf16.msra.mxu0 0
        %1764 = vmatprep.subr.bf16.mxu0 0
        %1765 = vmatpush1.bf16.msra.mxu0 0
        %1766 = vmatprep.subr.bf16.mxu0 0
        %1767 = vmatpush1.bf16.msra.mxu0 0
        %1768 = vmatprep.subr.bf16.mxu0 0
        %1769 = vmatpush1.bf16.msra.mxu0 0
        %1770 = vmatprep.subr.bf16.mxu0 0
        %1771 = vmatpush1.bf16.msra.mxu0 0
        %1772 = vmatprep.subr.bf16.mxu0 0
        %1773 = vmatpush1.bf16.msra.mxu0 0
        %1774 = vmatprep.subr.bf16.mxu0 0
        %1775 = vmatpush1.bf16.msra.mxu0 0
        %1776 = vmatprep.subr.bf16.mxu0 0
        %1777 = vmatpush1.bf16.msra.mxu0 0
        %1778 = vmatprep.subr.bf16.mxu0 0
        %1779 = vmatpush1.bf16.msra.mxu0 0
        %1780 = vmatprep.mubr.bf16.mxu0 0
        %1781 = vmatmul.mubr.bf16.gmra.mrb[0].mxu0 %v1746
        %v1782 = vpop.f32.mrb[0].mxu0
        %v1783 = vadd.f32 0.0, %v1782
        %v1784 = vpop.f32.mrb[0].mxu0
        %v1785 = vpop.f32.mrb[0].mxu0
        %v1786 = vpop.f32.mrb[0].mxu0
        %1787 = vdwg.mxu0
        %v1788 = vld [vmem:[%s21] sm:$0xf]
        %v1789 = vld [vmem:[%s21 + $0x4] sm:$0xf]
        %v1790 = vld [vmem:[%s21 + $0x8] sm:$0xf]
        %v1791 = vld [vmem:[%s21 + $0xc] sm:$0xf]
        %v1792 = vld [vmem:[%s21 + $0x10] sm:$0xf]
        %v1793 = vld [vmem:[%s21 + $0x14] sm:$0xf]
        %v1794 = vld [vmem:[%s21 + $0x18] sm:$0xf]
        %v1795 = vld [vmem:[%s21 + $0x1c] sm:$0xf]
        %v1796 = vld [vmem:[%s23] sm:$0x1]
        %v1798 = vlaneseq
        %v1799 = vshrl.u32 %v1798, 7
        %v1800 = vsub.s32 0, %v1799
        %v1801 = vrot.slane %v1796, %v1800
        %v1811 = vunpack.c.l.b16 %v1788
        %v1812 = vunpack.c.l.b16 %v1789
        %v1813 = vunpack.c.l.b16 %v1790
        %v1814 = vunpack.c.l.b16 %v1791
        %v1815 = vunpack.c.l.b16 %v1792
        %v1816 = vunpack.c.l.b16 %v1793
        %v1817 = vunpack.c.l.b16 %v1794
        %v1818 = vunpack.c.l.b16 %v1795
        %v1819 = vpack.c.b16 %v1812, %v1811
        %v1820 = vpack.c.b16 %v1814, %v1813
        %v1821 = vpack.c.b16 %v1816, %v1815
        %v1822 = vpack.c.b16 %v1818, %v1817
        %v1828 = vsel %vm1227, %v1192, 0
        %1830 = vmatprep.subr.bf16.mxu0 0
        %1831 = vmatpush1.bf16.msra.mxu0 %v1819
        %1832 = vmatprep.subr.bf16.mxu0 0
        %1833 = vmatpush1.bf16.msra.mxu0 %v1820
        %1834 = vmatprep.subr.bf16.mxu0 0
        %1835 = vmatpush1.bf16.msra.mxu0 %v1821
        %1836 = vmatprep.subr.bf16.mxu0 0
        %1837 = vmatpush1.bf16.msra.mxu0 %v1822
        %1838 = vmatprep.subr.bf16.mxu0 0
        %1839 = vmatpush1.bf16.msra.mxu0 0
        %1840 = vmatprep.subr.bf16.mxu0 0
        %1841 = vmatpush1.bf16.msra.mxu0 0
        %1842 = vmatprep.subr.bf16.mxu0 0
        %1843 = vmatpush1.bf16.msra.mxu0 0
        %1844 = vmatprep.subr.bf16.mxu0 0
        %1845 = vmatpush1.bf16.msra.mxu0 0
        %1846 = vmatprep.subr.bf16.mxu0 0
        %1847 = vmatpush1.bf16.msra.mxu0 0
        %1848 = vmatprep.subr.bf16.mxu0 0
        %1849 = vmatpush1.bf16.msra.mxu0 0
        %1850 = vmatprep.subr.bf16.mxu0 0
        %1851 = vmatpush1.bf16.msra.mxu0 0
        %1852 = vmatprep.subr.bf16.mxu0 0
        %1853 = vmatpush1.bf16.msra.mxu0 0
        %1854 = vmatprep.subr.bf16.mxu0 0
        %1855 = vmatpush1.bf16.msra.mxu0 0
        %1856 = vmatprep.subr.bf16.mxu0 0
        %1857 = vmatpush1.bf16.msra.mxu0 0
        %1858 = vmatprep.subr.bf16.mxu0 0
        %1859 = vmatpush1.bf16.msra.mxu0 0
        %1860 = vmatprep.subr.bf16.mxu0 0
        %1861 = vmatpush1.bf16.msra.mxu0 0
        %1862 = vmatprep.mubr.bf16.mxu0 0
        %1863 = vmatmul.mubr.bf16.gmra.mrb[0].mxu0 %v1828
        %v1864 = vpop.f32.mrb[0].mxu0
        %v1865 = vadd.f32 %v1801, %v1864
        %v1866 = vpop.f32.mrb[0].mxu0
        %v1867 = vpop.f32.mrb[0].mxu0
        %v1868 = vadd.f32 %v1801, %v1867
        %v1869 = vpop.f32.mrb[0].mxu0
        %1870 = vdwg.mxu0
        %v1871 = vld [vmem:[%s25] sm:$0xf]
        %v1872 = vld [vmem:[%s25 + $0x4] sm:$0xf]
        %v1873 = vpack.c.bf16 %v1458, %v1458
        %v1874 = vld [vmem:[%s25 + $0x8] sm:$0xf]
        %v1875 = vld [vmem:[%s25 + $0xc] sm:$0xf]
        %v1876 = vpack.c.bf16 %v1567, %v1567
        %v1879 = vunpack.c.l.b16 %v1874
        %v1880 = vunpack.c.l.b16 %v1875
        %v1881 = vpack.c.b16 %v1880, %v1879
        %v1884 = vsel %vm1357, %v1876, 0
        %1886 = vmatprep.subr.bf16.mxu0 0
        %1887 = vmatpush1.bf16.msra.mxu0 %v1881
        %1888 = vmatprep.subr.bf16.mxu0 0
        %1889 = vmatpush1.bf16.msra.mxu0 0
        %1890 = vmatprep.subr.bf16.mxu0 0
        %1891 = vmatpush1.bf16.msra.mxu0 0
        %1892 = vmatprep.subr.bf16.mxu0 0
        %1893 = vmatpush1.bf16.msra.mxu0 0
        %1894 = vmatprep.subr.bf16.mxu0 0
        %1895 = vmatpush1.bf16.msra.mxu0 0
        %1896 = vmatprep.subr.bf16.mxu0 0
        %1897 = vmatpush1.bf16.msra.mxu0 0
        %1898 = vmatprep.subr.bf16.mxu0 0
        %1899 = vmatpush1.bf16.msra.mxu0 0
        %1900 = vmatprep.subr.bf16.mxu0 0
        %1901 = vmatpush1.bf16.msra.mxu0 0
        %1902 = vmatprep.subr.bf16.mxu0 0
        %1903 = vmatpush1.bf16.msra.mxu0 0
        %1904 = vmatprep.subr.bf16.mxu0 0
        %1905 = vmatpush1.bf16.msra.mxu0 0
        %1906 = vmatprep.subr.bf16.mxu0 0
        %1907 = vmatpush1.bf16.msra.mxu0 0
        %1908 = vmatprep.subr.bf16.mxu0 0
        %1909 = vmatpush1.bf16.msra.mxu0 0
        %1910 = vmatprep.subr.bf16.mxu0 0
        %1911 = vmatpush1.bf16.msra.mxu0 0
        %1912 = vmatprep.subr.bf16.mxu0 0
        %1913 = vmatpush1.bf16.msra.mxu0 0
        %1914 = vmatprep.subr.bf16.mxu0 0
        %1915 = vmatpush1.bf16.msra.mxu0 0
        %1916 = vmatprep.subr.bf16.mxu0 0
        %1917 = vmatpush1.bf16.msra.mxu0 0
        %1918 = vmatprep.mubr.bf16.mxu0 0
        %1919 = vmatmul.mubr.bf16.gmra.mrb[0].mxu0 %v1884
        %v1920 = vpop.f32.mrb[0].mxu0
        %v1921 = vadd.f32 0.0, %v1920
        %v1922 = vpop.f32.mrb[0].mxu0
        %v1923 = vpop.f32.mrb[0].mxu0
        %v1924 = vpop.f32.mrb[0].mxu0
        %1925 = vdwg.mxu0
        %v1928 = vunpack.c.l.b16 %v1871
        %v1929 = vunpack.c.l.b16 %v1872
        %v1930 = vpack.c.b16 %v1929, %v1928
        %v1933 = vsel %vm1357, %v1873, 0
        %1935 = vmatprep.subr.bf16.mxu0 0
        %1936 = vmatpush1.bf16.msra.mxu0 %v1930
        %1937 = vmatprep.subr.bf16.mxu0 0
        %1938 = vmatpush1.bf16.msra.mxu0 0
        %1939 = vmatprep.subr.bf16.mxu0 0
        %1940 = vmatpush1.bf16.msra.mxu0 0
        %1941 = vmatprep.subr.bf16.mxu0 0
        %1942 = vmatpush1.bf16.msra.mxu0 0
        %1943 = vmatprep.subr.bf16.mxu0 0
        %1944 = vmatpush1.bf16.msra.mxu0 0
        %1945 = vmatprep.subr.bf16.mxu0 0
        %1946 = vmatpush1.bf16.msra.mxu0 0
        %1947 = vmatprep.subr.bf16.mxu0 0
        %1948 = vmatpush1.bf16.msra.mxu0 0
        %1949 = vmatprep.subr.bf16.mxu0 0
        %1950 = vmatpush1.bf16.msra.mxu0 0
        %1951 = vmatprep.subr.bf16.mxu0 0
        %1952 = vmatpush1.bf16.msra.mxu0 0
        %1953 = vmatprep.subr.bf16.mxu0 0
        %1954 = vmatpush1.bf16.msra.mxu0 0
        %1955 = vmatprep.subr.bf16.mxu0 0
        %1956 = vmatpush1.bf16.msra.mxu0 0
        %1957 = vmatprep.subr.bf16.mxu0 0
        %1958 = vmatpush1.bf16.msra.mxu0 0
        %1959 = vmatprep.subr.bf16.mxu0 0
        %1960 = vmatpush1.bf16.msra.mxu0 0
        %1961 = vmatprep.subr.bf16.mxu0 0
        %1962 = vmatpush1.bf16.msra.mxu0 0
        %1963 = vmatprep.subr.bf16.mxu0 0
        %1964 = vmatpush1.bf16.msra.mxu0 0
        %1965 = vmatprep.subr.bf16.mxu0 0
        %1966 = vmatpush1.bf16.msra.mxu0 0
        %1967 = vmatprep.mubr.bf16.mxu0 0
        %1968 = vmatmul.mubr.bf16.gmra.mrb[0].mxu0 %v1933
        %v1969 = vpop.f32.mrb[0].mxu0
        %v1970 = vadd.f32 %v1921, %v1969
        %v1971 = vpop.f32.mrb[0].mxu0
        %v1972 = vpop.f32.mrb[0].mxu0
        %v1973 = vpop.f32.mrb[0].mxu0
        %1974 = vdwg.mxu0
        %v1975 = vld [vmem:[%s25 + $0x10] sm:$0xf]
        %v1976 = vld [vmem:[%s25 + $0x14] sm:$0xf]
        %v1977 = vpack.c.bf16 %v1675, %v1675
        %v1980 = vunpack.c.l.b16 %v1975
        %v1981 = vunpack.c.l.b16 %v1976
        %v1982 = vpack.c.b16 %v1981, %v1980
        %v1985 = vsel %vm1357, %v1977, 0
        %1987 = vmatprep.subr.bf16.mxu0 0
        %1988 = vmatpush1.bf16.msra.mxu0 %v1982
        %1989 = vmatprep.subr.bf16.mxu0 0
        %1990 = vmatpush1.bf16.msra.mxu0 0
        %1991 = vmatprep.subr.bf16.mxu0 0
        %1992 = vmatpush1.bf16.msra.mxu0 0
        %1993 = vmatprep.subr.bf16.mxu0 0
        %1994 = vmatpush1.bf16.msra.mxu0 0
        %1995 = vmatprep.subr.bf16.mxu0 0
        %1996 = vmatpush1.bf16.msra.mxu0 0
        %1997 = vmatprep.subr.bf16.mxu0 0
        %1998 = vmatpush1.bf16.msra.mxu0 0
        %1999 = vmatprep.subr.bf16.mxu0 0
        %2000 = vmatpush1.bf16.msra.mxu0 0
        %2001 = vmatprep.subr.bf16.mxu0 0
        %2002 = vmatpush1.bf16.msra.mxu0 0
        %2003 = vmatprep.subr.bf16.mxu0 0
        %2004 = vmatpush1.bf16.msra.mxu0 0
        %2005 = vmatprep.subr.bf16.mxu0 0
        %2006 = vmatpush1.bf16.msra.mxu0 0
        %2007 = vmatprep.subr.bf16.mxu0 0
        %2008 = vmatpush1.bf16.msra.mxu0 0
        %2009 = vmatprep.subr.bf16.mxu0 0
        %2010 = vmatpush1.bf16.msra.mxu0 0
        %2011 = vmatprep.subr.bf16.mxu0 0
        %2012 = vmatpush1.bf16.msra.mxu0 0
        %2013 = vmatprep.subr.bf16.mxu0 0
        %2014 = vmatpush1.bf16.msra.mxu0 0
        %2015 = vmatprep.subr.bf16.mxu0 0
        %2016 = vmatpush1.bf16.msra.mxu0 0
        %2017 = vmatprep.subr.bf16.mxu0 0
        %2018 = vmatpush1.bf16.msra.mxu0 0
        %2019 = vmatprep.mubr.bf16.mxu0 0
        %2020 = vmatmul.mubr.bf16.gmra.mrb[0].mxu0 %v1985
        %v2021 = vpop.f32.mrb[0].mxu0
        %v2022 = vadd.f32 0.0, %v2021
        %v2023 = vpop.f32.mrb[0].mxu0
        %v2024 = vpop.f32.mrb[0].mxu0
        %v2025 = vpop.f32.mrb[0].mxu0
        %2026 = vdwg.mxu0
        %v2027 = vadd.f32 %v1970, %v2022
        %v2028 = vld [vmem:[%s25 + $0x18] sm:$0xf]
        %v2029 = vld [vmem:[%s25 + $0x1c] sm:$0xf]
        %v2030 = vpack.c.bf16 %v1783, %v1783
        %v2033 = vunpack.c.l.b16 %v2028
        %v2034 = vunpack.c.l.b16 %v2029
        %v2035 = vpack.c.b16 %v2034, %v2033
        %v2038 = vsel %vm1357, %v2030, 0
        %2040 = vmatprep.subr.bf16.mxu0 0
        %2041 = vmatpush1.bf16.msra.mxu0 %v2035
        %2042 = vmatprep.subr.bf16.mxu0 0
        %2043 = vmatpush1.bf16.msra.mxu0 0
        %2044 = vmatprep.subr.bf16.mxu0 0
        %2045 = vmatpush1.bf16.msra.mxu0 0
        %2046 = vmatprep.subr.bf16.mxu0 0
        %2047 = vmatpush1.bf16.msra.mxu0 0
        %2048 = vmatprep.subr.bf16.mxu0 0
        %2049 = vmatpush1.bf16.msra.mxu0 0
        %2050 = vmatprep.subr.bf16.mxu0 0
        %2051 = vmatpush1.bf16.msra.mxu0 0
        %2052 = vmatprep.subr.bf16.mxu0 0
        %2053 = vmatpush1.bf16.msra.mxu0 0
        %2054 = vmatprep.subr.bf16.mxu0 0
        %2055 = vmatpush1.bf16.msra.mxu0 0
        %2056 = vmatprep.subr.bf16.mxu0 0
        %2057 = vmatpush1.bf16.msra.mxu0 0
        %2058 = vmatprep.subr.bf16.mxu0 0
        %2059 = vmatpush1.bf16.msra.mxu0 0
        %2060 = vmatprep.subr.bf16.mxu0 0
        %2061 = vmatpush1.bf16.msra.mxu0 0
        %2062 = vmatprep.subr.bf16.mxu0 0
        %2063 = vmatpush1.bf16.msra.mxu0 0
        %2064 = vmatprep.subr.bf16.mxu0 0
        %2065 = vmatpush1.bf16.msra.mxu0 0
        %2066 = vmatprep.subr.bf16.mxu0 0
        %2067 = vmatpush1.bf16.msra.mxu0 0
        %2068 = vmatprep.subr.bf16.mxu0 0
        %2069 = vmatpush1.bf16.msra.mxu0 0
        %2070 = vmatprep.subr.bf16.mxu0 0
        %2071 = vmatpush1.bf16.msra.mxu0 0
        %2072 = vmatprep.mubr.bf16.mxu0 0
        %2073 = vmatmul.mubr.bf16.gmra.mrb[0].mxu0 %v2038
        %v2074 = vpop.f32.mrb[0].mxu0
        %v2075 = vadd.f32 0.0, %v2074
        %v2076 = vpop.f32.mrb[0].mxu0
        %v2077 = vpop.f32.mrb[0].mxu0
        %v2078 = vpop.f32.mrb[0].mxu0
        %2079 = vdwg.mxu0
        %v2080 = vadd.f32 %v2027, %v2075
        %v2081 = vld [vmem:[%s27] sm:$0x1]
        %v2083 = vlaneseq
        %v2084 = vshrl.u32 %v2083, 7
        %v2085 = vsub.s32 0, %v2084
        %v2086 = vrot.slane %v2081, %v2085
        %v2088 = vadd.f32 %v2080, %v2086
        %v2089 = vpack.c.bf16 %v1868, %v1865
        %v2090 = vpack.c.bf16 %v2088, %v2088
        %v2092 = vsel %vm1357, %v2089, 0
        %v2095 = vsel %vm1357, %v2090, 0
        %2097 = vmatprep.subr.bf16.mxu0 0
        %2098 = vmatpush1.bf16.xpose.msra.mxu0 %v2095
        %2099 = vmatprep.subr.bf16.mxu0 0
        %2100 = vmatpush1.bf16.xpose.msra.mxu0 0
        %2101 = vmatprep.subr.bf16.mxu0 0
        %2102 = vmatpush1.bf16.xpose.msra.mxu0 0
        %2103 = vmatprep.subr.bf16.mxu0 0
        %2104 = vmatpush1.bf16.xpose.msra.mxu0 0
        %2105 = vmatprep.subr.bf16.mxu0 0
        %2106 = vmatpush1.bf16.xpose.msra.mxu0 0
        %2107 = vmatprep.subr.bf16.mxu0 0
        %2108 = vmatpush1.bf16.xpose.msra.mxu0 0
        %2109 = vmatprep.subr.bf16.mxu0 0
        %2110 = vmatpush1.bf16.xpose.msra.mxu0 0
        %2111 = vmatprep.subr.bf16.mxu0 0
        %2112 = vmatpush1.bf16.xpose.msra.mxu0 0
        %2113 = vmatprep.subr.bf16.mxu0 0
        %2114 = vmatpush1.bf16.xpose.msra.mxu0 0
        %2115 = vmatprep.subr.bf16.mxu0 0
        %2116 = vmatpush1.bf16.xpose.msra.mxu0 0
        %2117 = vmatprep.subr.bf16.mxu0 0
        %2118 = vmatpush1.bf16.xpose.msra.mxu0 0
        %2119 = vmatprep.subr.bf16.mxu0 0
        %2120 = vmatpush1.bf16.xpose.msra.mxu0 0
        %2121 = vmatprep.subr.bf16.mxu0 0
        %2122 = vmatpush1.bf16.xpose.msra.mxu0 0
        %2123 = vmatprep.subr.bf16.mxu0 0
        %2124 = vmatpush1.bf16.xpose.msra.mxu0 0
        %2125 = vmatprep.subr.bf16.mxu0 0
        %2126 = vmatpush1.bf16.xpose.msra.mxu0 0
        %2127 = vmatprep.subr.bf16.mxu0 0
        %2128 = vmatpush1.bf16.xpose.msra.mxu0 0
        %2129 = vmatprep.mubr.bf16.mxu0 0
        %2130 = vmatmul.mubr.bf16.gmra.mrb[0].mxu0 %v2092
        %v2131 = vpop.f32.mrb[0].mxu0
        %v2132 = vadd.f32 0.0, %v2131
        %v2133 = vpop.f32.mrb[0].mxu0
        %v2134 = vpop.f32.mrb[0].mxu0
        %v2135 = vadd.f32 0.0, %v2134
        %v2136 = vpop.f32.mrb[0].mxu0
        %2137 = vdwg.mxu0
        %vm2138 = vcmask 64512
        %v2139 = vsel %vm2138, %v2132, -inf
        %2140 = vmax.xlane.f32.xlu0 %v2139
        %v2141 = vpop.xlane.xlu0 %2140
        %v2142 = vsel %vm2138, %v2135, -inf
        %2143 = vmax.xlane.f32.xlu0 %v2142
        %v2144 = vpop.xlane.xlu0 %2143
        %v2145 = vsub.f32 %v2132, %v2141
        %v2146 = vsub.f32 %v2135, %v2144
        %v2147 = vmul.f32 %v2145, 1.442695
        %v2148 = vpow.pop %v2147
        %v2149 = vmul.f32 %v2146, 1.442695
        %v2150 = vpow.pop %v2149
        %v2151 = vsel %vm2138, %v2148, 0.0
        %2152 = vadd.xlane.f32.xlu0 %v2151
        %v2153 = vpop.xlane.xlu0 %2152
        %v2154 = vsel %vm2138, %v2150, 0.0
        %2155 = vadd.xlane.f32.xlu0 %v2154
        %v2156 = vpop.xlane.xlu0 %2155
        %v2157 = vrcp.pop %v2153
        %v2158 = vrcp.pop %v2156
        %v2159 = vmul.f32 %v2148, %v2157
        %v2160 = vmul.f32 %v2150, %v2158
        %v2161 = vpack.c.bf16 %v2160, %v2159
        %2163 = vrot.lane.b32.xlu0 %v2090, 64
        %v2164 = vpop.permute.xlu0 %2163
        %v2166 = vsel %vm2138, %v2161, 0
        %vm2168 = vcmask 1043456
        %v2170 = vsel %vm2168, %v2164, 0
        %2172 = vmatprep.subr.bf16.mxu0 0
        %2173 = vmatpush1.bf16.msra.mxu0 %v2170
        %2174 = vmatprep.subr.bf16.mxu0 0
        %2175 = vmatpush1.bf16.msra.mxu0 0
        %2176 = vmatprep.subr.bf16.mxu0 0
        %2177 = vmatpush1.bf16.msra.mxu0 0
        %2178 = vmatprep.subr.bf16.mxu0 0
        %2179 = vmatpush1.bf16.msra.mxu0 0
        %2180 = vmatprep.subr.bf16.mxu0 0
        %2181 = vmatpush1.bf16.msra.mxu0 0
        %2182 = vmatprep.subr.bf16.mxu0 0
        %2183 = vmatpush1.bf16.msra.mxu0 0
        %2184 = vmatprep.subr.bf16.mxu0 0
        %2185 = vmatpush1.bf16.msra.mxu0 0
        %2186 = vmatprep.subr.bf16.mxu0 0
        %2187 = vmatpush1.bf16.msra.mxu0 0
        %2188 = vmatprep.subr.bf16.mxu0 0
        %2189 = vmatpush1.bf16.msra.mxu0 0
        %2190 = vmatprep.subr.bf16.mxu0 0
        %2191 = vmatpush1.bf16.msra.mxu0 0
        %2192 = vmatprep.subr.bf16.mxu0 0
        %2193 = vmatpush1.bf16.msra.mxu0 0
        %2194 = vmatprep.subr.bf16.mxu0 0
        %2195 = vmatpush1.bf16.msra.mxu0 0
        %2196 = vmatprep.subr.bf16.mxu0 0
        %2197 = vmatpush1.bf16.msra.mxu0 0
        %2198 = vmatprep.subr.bf16.mxu0 0
        %2199 = vmatpush1.bf16.msra.mxu0 0
        %2200 = vmatprep.subr.bf16.mxu0 0
        %2201 = vmatpush1.bf16.msra.mxu0 0
        %2202 = vmatprep.subr.bf16.mxu0 0
        %2203 = vmatpush1.bf16.msra.mxu0 0
        %2204 = vmatprep.mubr.bf16.mxu0 0
        %2205 = vmatmul.mubr.bf16.gmra.mrb[0].mxu0 %v2166
        %v2206 = vpop.f32.mrb[0].mxu0
        %v2207 = vadd.f32 0.0, %v2206
        %v2208 = vpop.f32.mrb[0].mxu0
        %v2209 = vpop.f32.mrb[0].mxu0
        %v2210 = vadd.f32 0.0, %v2209
        %v2211 = vpop.f32.mrb[0].mxu0
        %2212 = vdwg.mxu0
        %2214 = vrot.lane.b32.xlu0 %v2089, 112
        %v2215 = vpop.permute.xlu0 %2214
        %2216 = vrot.lane.b32.xlu0 %v2090, 112
        %v2217 = vpop.permute.xlu0 %2216
        %v2219 = vsel %vm1357, %v2215, 0
        %v2222 = vsel %vm1357, %v2217, 0
        %2224 = vmatprep.subr.bf16.mxu0 0
        %2225 = vmatpush1.bf16.xpose.msra.mxu0 %v2222
        %2226 = vmatprep.subr.bf16.mxu0 0
        %2227 = vmatpush1.bf16.xpose.msra.mxu0 0
        %2228 = vmatprep.subr.bf16.mxu0 0
        %2229 = vmatpush1.bf16.xpose.msra.mxu0 0
        %2230 = vmatprep.subr.bf16.mxu0 0
        %2231 = vmatpush1.bf16.xpose.msra.mxu0 0
        %2232 = vmatprep.subr.bf16.mxu0 0
        %2233 = vmatpush1.bf16.xpose.msra.mxu0 0
        %2234 = vmatprep.subr.bf16.mxu0 0
        %2235 = vmatpush1.bf16.xpose.msra.mxu0 0
        %2236 = vmatprep.subr.bf16.mxu0 0
        %2237 = vmatpush1.bf16.xpose.msra.mxu0 0
        %2238 = vmatprep.subr.bf16.mxu0 0
        %2239 = vmatpush1.bf16.xpose.msra.mxu0 0
        %2240 = vmatprep.subr.bf16.mxu0 0
        %2241 = vmatpush1.bf16.xpose.msra.mxu0 0
        %2242 = vmatprep.subr.bf16.mxu0 0
        %2243 = vmatpush1.bf16.xpose.msra.mxu0 0
        %2244 = vmatprep.subr.bf16.mxu0 0
        %2245 = vmatpush1.bf16.xpose.msra.mxu0 0
        %2246 = vmatprep.subr.bf16.mxu0 0
        %2247 = vmatpush1.bf16.xpose.msra.mxu0 0
        %2248 = vmatprep.subr.bf16.mxu0 0
        %2249 = vmatpush1.bf16.xpose.msra.mxu0 0
        %2250 = vmatprep.subr.bf16.mxu0 0
        %2251 = vmatpush1.bf16.xpose.msra.mxu0 0
        %2252 = vmatprep.subr.bf16.mxu0 0
        %2253 = vmatpush1.bf16.xpose.msra.mxu0 0
        %2254 = vmatprep.subr.bf16.mxu0 0
        %2255 = vmatpush1.bf16.xpose.msra.mxu0 0
        %2256 = vmatprep.mubr.bf16.mxu0 0
        %2257 = vmatmul.mubr.bf16.gmra.mrb[0].mxu0 %v2219
        %v2258 = vpop.f32.mrb[0].mxu0
        %v2259 = vadd.f32 0.0, %v2258
        %v2260 = vpop.f32.mrb[0].mxu0
        %v2261 = vpop.f32.mrb[0].mxu0
        %v2262 = vadd.f32 0.0, %v2261
        %v2263 = vpop.f32.mrb[0].mxu0
        %2264 = vdwg.mxu0
        %v2265 = vsel %vm2138, %v2259, -inf
        %2266 = vmax.xlane.f32.xlu0 %v2265
        %v2267 = vpop.xlane.xlu0 %2266
        %v2268 = vsel %vm2138, %v2262, -inf
        %2269 = vmax.xlane.f32.xlu0 %v2268
        %v2270 = vpop.xlane.xlu0 %2269
        %v2271 = vsub.f32 %v2259, %v2267
        %v2272 = vsub.f32 %v2262, %v2270
        %v2273 = vmul.f32 %v2271, 1.442695
        %v2274 = vpow.pop %v2273
        %v2275 = vmul.f32 %v2272, 1.442695
        %v2276 = vpow.pop %v2275
        %v2277 = vsel %vm2138, %v2274, 0.0
        %2278 = vadd.xlane.f32.xlu0 %v2277
        %v2279 = vpop.xlane.xlu0 %2278
        %v2280 = vsel %vm2138, %v2276, 0.0
        %2281 = vadd.xlane.f32.xlu0 %v2280
        %v2282 = vpop.xlane.xlu0 %2281
        %v2283 = vrcp.pop %v2279
        %v2284 = vrcp.pop %v2282
        %v2285 = vmul.f32 %v2274, %v2283
        %v2286 = vmul.f32 %v2276, %v2284
        %v2287 = vpack.c.bf16 %v2286, %v2285
        %2288 = vrot.lane.b32.xlu0 %v2090, 48
        %v2289 = vpop.permute.xlu0 %2288
        %v2291 = vsel %vm2138, %v2287, 0
        %v2294 = vsel %vm2168, %v2289, 0
        %2296 = vmatprep.subr.bf16.mxu0 0
        %2297 = vmatpush1.bf16.msra.mxu0 %v2294
        %2298 = vmatprep.subr.bf16.mxu0 0
        %2299 = vmatpush1.bf16.msra.mxu0 0
        %2300 = vmatprep.subr.bf16.mxu0 0
        %2301 = vmatpush1.bf16.msra.mxu0 0
        %2302 = vmatprep.subr.bf16.mxu0 0
        %2303 = vmatpush1.bf16.msra.mxu0 0
        %2304 = vmatprep.subr.bf16.mxu0 0
        %2305 = vmatpush1.bf16.msra.mxu0 0
        %2306 = vmatprep.subr.bf16.mxu0 0
        %2307 = vmatpush1.bf16.msra.mxu0 0
        %2308 = vmatprep.subr.bf16.mxu0 0
        %2309 = vmatpush1.bf16.msra.mxu0 0
        %2310 = vmatprep.subr.bf16.mxu0 0
        %2311 = vmatpush1.bf16.msra.mxu0 0
        %2312 = vmatprep.subr.bf16.mxu0 0
        %2313 = vmatpush1.bf16.msra.mxu0 0
        %2314 = vmatprep.subr.bf16.mxu0 0
        %2315 = vmatpush1.bf16.msra.mxu0 0
        %2316 = vmatprep.subr.bf16.mxu0 0
        %2317 = vmatpush1.bf16.msra.mxu0 0
        %2318 = vmatprep.subr.bf16.mxu0 0
        %2319 = vmatpush1.bf16.msra.mxu0 0
        %2320 = vmatprep.subr.bf16.mxu0 0
        %2321 = vmatpush1.bf16.msra.mxu0 0
        %2322 = vmatprep.subr.bf16.mxu0 0
        %2323 = vmatpush1.bf16.msra.mxu0 0
        %2324 = vmatprep.subr.bf16.mxu0 0
        %2325 = vmatpush1.bf16.msra.mxu0 0
        %2326 = vmatprep.subr.bf16.mxu0 0
        %2327 = vmatpush1.bf16.msra.mxu0 0
        %2328 = vmatprep.mubr.bf16.mxu0 0
        %2329 = vmatmul.mubr.bf16.gmra.mrb[0].mxu0 %v2291
        %v2330 = vpop.f32.mrb[0].mxu0
        %v2331 = vadd.f32 0.0, %v2330
        %v2332 = vpop.f32.mrb[0].mxu0
        %v2333 = vpop.f32.mrb[0].mxu0
        %v2334 = vadd.f32 0.0, %v2333
        %v2335 = vpop.f32.mrb[0].mxu0
        %2336 = vdwg.mxu0
        %2337 = vrot.lane.b32.xlu0 %v2089, 96
        %v2338 = vpop.permute.xlu0 %2337
        %2339 = vrot.lane.b32.xlu0 %v2090, 96
        %v2340 = vpop.permute.xlu0 %2339
        %v2342 = vsel %vm1357, %v2338, 0
        %v2345 = vsel %vm1357, %v2340, 0
        %2347 = vmatprep.subr.bf16.mxu0 0
        %2348 = vmatpush1.bf16.xpose.msra.mxu0 %v2345
        %2349 = vmatprep.subr.bf16.mxu0 0
        %2350 = vmatpush1.bf16.xpose.msra.mxu0 0
        %2351 = vmatprep.subr.bf16.mxu0 0
        %2352 = vmatpush1.bf16.xpose.msra.mxu0 0
        %2353 = vmatprep.subr.bf16.mxu0 0
        %2354 = vmatpush1.bf16.xpose.msra.mxu0 0
        %2355 = vmatprep.subr.bf16.mxu0 0
        %2356 = vmatpush1.bf16.xpose.msra.mxu0 0
        %2357 = vmatprep.subr.bf16.mxu0 0
        %2358 = vmatpush1.bf16.xpose.msra.mxu0 0
        %2359 = vmatprep.subr.bf16.mxu0 0
        %2360 = vmatpush1.bf16.xpose.msra.mxu0 0
        %2361 = vmatprep.subr.bf16.mxu0 0
        %2362 = vmatpush1.bf16.xpose.msra.mxu0 0
        %2363 = vmatprep.subr.bf16.mxu0 0
        %2364 = vmatpush1.bf16.xpose.msra.mxu0 0
        %2365 = vmatprep.subr.bf16.mxu0 0
        %2366 = vmatpush1.bf16.xpose.msra.mxu0 0
        %2367 = vmatprep.subr.bf16.mxu0 0
        %2368 = vmatpush1.bf16.xpose.msra.mxu0 0
        %2369 = vmatprep.subr.bf16.mxu0 0
        %2370 = vmatpush1.bf16.xpose.msra.mxu0 0
        %2371 = vmatprep.subr.bf16.mxu0 0
        %2372 = vmatpush1.bf16.xpose.msra.mxu0 0
        %2373 = vmatprep.subr.bf16.mxu0 0
        %2374 = vmatpush1.bf16.xpose.msra.mxu0 0
        %2375 = vmatprep.subr.bf16.mxu0 0
        %2376 = vmatpush1.bf16.xpose.msra.mxu0 0
        %2377 = vmatprep.subr.bf16.mxu0 0
        %2378 = vmatpush1.bf16.xpose.msra.mxu0 0
        %2379 = vmatprep.mubr.bf16.mxu0 0
        %2380 = vmatmul.mubr.bf16.gmra.mrb[0].mxu0 %v2342
        %v2381 = vpop.f32.mrb[0].mxu0
        %v2382 = vadd.f32 0.0, %v2381
        %v2383 = vpop.f32.mrb[0].mxu0
        %v2384 = vpop.f32.mrb[0].mxu0
        %v2385 = vadd.f32 0.0, %v2384
        %v2386 = vpop.f32.mrb[0].mxu0
        %2387 = vdwg.mxu0
        %v2388 = vsel %vm2138, %v2382, -inf
        %2389 = vmax.xlane.f32.xlu0 %v2388
        %v2390 = vpop.xlane.xlu0 %2389
        %v2391 = vsel %vm2138, %v2385, -inf
        %2392 = vmax.xlane.f32.xlu0 %v2391
        %v2393 = vpop.xlane.xlu0 %2392
        %v2394 = vsub.f32 %v2382, %v2390
        %v2395 = vsub.f32 %v2385, %v2393
        %v2396 = vmul.f32 %v2394, 1.442695
        %v2397 = vpow.pop %v2396
        %v2398 = vmul.f32 %v2395, 1.442695
        %v2399 = vpow.pop %v2398
        %v2400 = vsel %vm2138, %v2397, 0.0
        %2401 = vadd.xlane.f32.xlu0 %v2400
        %v2402 = vpop.xlane.xlu0 %2401
        %v2403 = vsel %vm2138, %v2399, 0.0
        %2404 = vadd.xlane.f32.xlu0 %v2403
        %v2405 = vpop.xlane.xlu0 %2404
        %v2406 = vrcp.pop %v2402
        %v2407 = vrcp.pop %v2405
        %v2408 = vmul.f32 %v2397, %v2406
        %v2409 = vmul.f32 %v2399, %v2407
        %v2410 = vpack.c.bf16 %v2409, %v2408
        %2411 = vrot.lane.b32.xlu0 %v2090, 32
        %v2412 = vpop.permute.xlu0 %2411
        %v2414 = vsel %vm2138, %v2410, 0
        %v2417 = vsel %vm2168, %v2412, 0
        %2419 = vmatprep.subr.bf16.mxu0 0
        %2420 = vmatpush1.bf16.msra.mxu0 %v2417
        %2421 = vmatprep.subr.bf16.mxu0 0
        %2422 = vmatpush1.bf16.msra.mxu0 0
        %2423 = vmatprep.subr.bf16.mxu0 0
        %2424 = vmatpush1.bf16.msra.mxu0 0
        %2425 = vmatprep.subr.bf16.mxu0 0
        %2426 = vmatpush1.bf16.msra.mxu0 0
        %2427 = vmatprep.subr.bf16.mxu0 0
        %2428 = vmatpush1.bf16.msra.mxu0 0
        %2429 = vmatprep.subr.bf16.mxu0 0
        %2430 = vmatpush1.bf16.msra.mxu0 0
        %2431 = vmatprep.subr.bf16.mxu0 0
        %2432 = vmatpush1.bf16.msra.mxu0 0
        %2433 = vmatprep.subr.bf16.mxu0 0
        %2434 = vmatpush1.bf16.msra.mxu0 0
        %2435 = vmatprep.subr.bf16.mxu0 0
        %2436 = vmatpush1.bf16.msra.mxu0 0
        %2437 = vmatprep.subr.bf16.mxu0 0
        %2438 = vmatpush1.bf16.msra.mxu0 0
        %2439 = vmatprep.subr.bf16.mxu0 0
        %2440 = vmatpush1.bf16.msra.mxu0 0
        %2441 = vmatprep.subr.bf16.mxu0 0
        %2442 = vmatpush1.bf16.msra.mxu0 0
        %2443 = vmatprep.subr.bf16.mxu0 0
        %2444 = vmatpush1.bf16.msra.mxu0 0
        %2445 = vmatprep.subr.bf16.mxu0 0
        %2446 = vmatpush1.bf16.msra.mxu0 0
        %2447 = vmatprep.subr.bf16.mxu0 0
        %2448 = vmatpush1.bf16.msra.mxu0 0
        %2449 = vmatprep.subr.bf16.mxu0 0
        %2450 = vmatpush1.bf16.msra.mxu0 0
        %2451 = vmatprep.mubr.bf16.mxu0 0
        %2452 = vmatmul.mubr.bf16.gmra.mrb[0].mxu0 %v2414
        %v2453 = vpop.f32.mrb[0].mxu0
        %v2454 = vadd.f32 0.0, %v2453
        %v2455 = vpop.f32.mrb[0].mxu0
        %v2456 = vpop.f32.mrb[0].mxu0
        %v2457 = vadd.f32 0.0, %v2456
        %v2458 = vpop.f32.mrb[0].mxu0
        %2459 = vdwg.mxu0
        %2460 = vrot.lane.b32.xlu0 %v2089, 80
        %v2461 = vpop.permute.xlu0 %2460
        %2462 = vrot.lane.b32.xlu0 %v2090, 80
        %v2463 = vpop.permute.xlu0 %2462
        %v2465 = vsel %vm1357, %v2461, 0
        %v2468 = vsel %vm1357, %v2463, 0
        %2470 = vmatprep.subr.bf16.mxu0 0
        %2471 = vmatpush1.bf16.xpose.msra.mxu0 %v2468
        %2472 = vmatprep.subr.bf16.mxu0 0
        %2473 = vmatpush1.bf16.xpose.msra.mxu0 0
        %2474 = vmatprep.subr.bf16.mxu0 0
        %2475 = vmatpush1.bf16.xpose.msra.mxu0 0
        %2476 = vmatprep.subr.bf16.mxu0 0
        %2477 = vmatpush1.bf16.xpose.msra.mxu0 0
        %2478 = vmatprep.subr.bf16.mxu0 0
        %2479 = vmatpush1.bf16.xpose.msra.mxu0 0
        %2480 = vmatprep.subr.bf16.mxu0 0
        %2481 = vmatpush1.bf16.xpose.msra.mxu0 0
        %2482 = vmatprep.subr.bf16.mxu0 0
        %2483 = vmatpush1.bf16.xpose.msra.mxu0 0
        %2484 = vmatprep.subr.bf16.mxu0 0
        %2485 = vmatpush1.bf16.xpose.msra.mxu0 0
        %2486 = vmatprep.subr.bf16.mxu0 0
        %2487 = vmatpush1.bf16.xpose.msra.mxu0 0
        %2488 = vmatprep.subr.bf16.mxu0 0
        %2489 = vmatpush1.bf16.xpose.msra.mxu0 0
        %2490 = vmatprep.subr.bf16.mxu0 0
        %2491 = vmatpush1.bf16.xpose.msra.mxu0 0
        %2492 = vmatprep.subr.bf16.mxu0 0
        %2493 = vmatpush1.bf16.xpose.msra.mxu0 0
        %2494 = vmatprep.subr.bf16.mxu0 0
        %2495 = vmatpush1.bf16.xpose.msra.mxu0 0
        %2496 = vmatprep.subr.bf16.mxu0 0
        %2497 = vmatpush1.bf16.xpose.msra.mxu0 0
        %2498 = vmatprep.subr.bf16.mxu0 0
        %2499 = vmatpush1.bf16.xpose.msra.mxu0 0
        %2500 = vmatprep.subr.bf16.mxu0 0
        %2501 = vmatpush1.bf16.xpose.msra.mxu0 0
        %2502 = vmatprep.mubr.bf16.mxu0 0
        %2503 = vmatmul.mubr.bf16.gmra.mrb[0].mxu0 %v2465
        %v2504 = vpop.f32.mrb[0].mxu0
        %v2505 = vadd.f32 0.0, %v2504
        %v2506 = vpop.f32.mrb[0].mxu0
        %v2507 = vpop.f32.mrb[0].mxu0
        %v2508 = vadd.f32 0.0, %v2507
        %v2509 = vpop.f32.mrb[0].mxu0
        %2510 = vdwg.mxu0
        %v2511 = vsel %vm2138, %v2505, -inf
        %2512 = vmax.xlane.f32.xlu0 %v2511
        %v2513 = vpop.xlane.xlu0 %2512
        %v2514 = vsel %vm2138, %v2508, -inf
        %2515 = vmax.xlane.f32.xlu0 %v2514
        %v2516 = vpop.xlane.xlu0 %2515
        %v2517 = vsub.f32 %v2505, %v2513
        %v2518 = vsub.f32 %v2508, %v2516
        %v2519 = vmul.f32 %v2517, 1.442695
        %v2520 = vpow.pop %v2519
        %v2521 = vmul.f32 %v2518, 1.442695
        %v2522 = vpow.pop %v2521
        %v2523 = vsel %vm2138, %v2520, 0.0
        %2524 = vadd.xlane.f32.xlu0 %v2523
        %v2525 = vpop.xlane.xlu0 %2524
        %v2526 = vsel %vm2138, %v2522, 0.0
        %2527 = vadd.xlane.f32.xlu0 %v2526
        %v2528 = vpop.xlane.xlu0 %2527
        %v2529 = vrcp.pop %v2525
        %v2530 = vrcp.pop %v2528
        %v2531 = vmul.f32 %v2520, %v2529
        %v2532 = vmul.f32 %v2522, %v2530
        %v2533 = vpack.c.bf16 %v2532, %v2531
        %2534 = vrot.lane.b32.xlu0 %v2090, 16
        %v2535 = vpop.permute.xlu0 %2534
        %v2537 = vsel %vm2138, %v2533, 0
        %v2540 = vsel %vm2168, %v2535, 0
        %2542 = vmatprep.subr.bf16.mxu0 0
        %2543 = vmatpush1.bf16.msra.mxu0 %v2540
        %2544 = vmatprep.subr.bf16.mxu0 0
        %2545 = vmatpush1.bf16.msra.mxu0 0
        %2546 = vmatprep.subr.bf16.mxu0 0
        %2547 = vmatpush1.bf16.msra.mxu0 0
        %2548 = vmatprep.subr.bf16.mxu0 0
        %2549 = vmatpush1.bf16.msra.mxu0 0
        %2550 = vmatprep.subr.bf16.mxu0 0
        %2551 = vmatpush1.bf16.msra.mxu0 0
        %2552 = vmatprep.subr.bf16.mxu0 0
        %2553 = vmatpush1.bf16.msra.mxu0 0
        %2554 = vmatprep.subr.bf16.mxu0 0
        %2555 = vmatpush1.bf16.msra.mxu0 0
        %2556 = vmatprep.subr.bf16.mxu0 0
        %2557 = vmatpush1.bf16.msra.mxu0 0
        %2558 = vmatprep.subr.bf16.mxu0 0
        %2559 = vmatpush1.bf16.msra.mxu0 0
        %2560 = vmatprep.subr.bf16.mxu0 0
        %2561 = vmatpush1.bf16.msra.mxu0 0
        %2562 = vmatprep.subr.bf16.mxu0 0
        %2563 = vmatpush1.bf16.msra.mxu0 0
        %2564 = vmatprep.subr.bf16.mxu0 0
        %2565 = vmatpush1.bf16.msra.mxu0 0
        %2566 = vmatprep.subr.bf16.mxu0 0
        %2567 = vmatpush1.bf16.msra.mxu0 0
        %2568 = vmatprep.subr.bf16.mxu0 0
        %2569 = vmatpush1.bf16.msra.mxu0 0
        %2570 = vmatprep.subr.bf16.mxu0 0
        %2571 = vmatpush1.bf16.msra.mxu0 0
        %2572 = vmatprep.subr.bf16.mxu0 0
        %2573 = vmatpush1.bf16.msra.mxu0 0
        %2574 = vmatprep.mubr.bf16.mxu0 0
        %2575 = vmatmul.mubr.bf16.gmra.mrb[0].mxu0 %v2537
        %v2576 = vpop.f32.mrb[0].mxu0
        %v2577 = vadd.f32 0.0, %v2576
        %v2578 = vpop.f32.mrb[0].mxu0
        %v2579 = vpop.f32.mrb[0].mxu0
        %v2580 = vadd.f32 0.0, %v2579
        %v2581 = vpop.f32.mrb[0].mxu0
        %2582 = vdwg.mxu0
        %v2583 = vld [vmem:[%s29] sm:$0xf]
        %v2584 = vld [vmem:[%s29 + $0x4] sm:$0xf]
        %v2585 = vpack.c.bf16 %v2210, %v2207
        %v2586 = vld [vmem:[%s29 + $0x8] sm:$0xf]
        %v2587 = vld [vmem:[%s29 + $0xc] sm:$0xf]
        %v2588 = vpack.c.bf16 %v2334, %v2331
        %v2591 = vunpack.c.l.b16 %v2586
        %v2592 = vunpack.c.l.b16 %v2587
        %v2593 = vpack.c.b16 %v2592, %v2591
        %v2596 = vsel %vm1357, %v2588, 0
        %2598 = vmatprep.subr.bf16.mxu0 0
        %2599 = vmatpush1.bf16.msra.mxu0 %v2593
        %2600 = vmatprep.subr.bf16.mxu0 0
        %2601 = vmatpush1.bf16.msra.mxu0 0
        %2602 = vmatprep.subr.bf16.mxu0 0
        %2603 = vmatpush1.bf16.msra.mxu0 0
        %2604 = vmatprep.subr.bf16.mxu0 0
        %2605 = vmatpush1.bf16.msra.mxu0 0
        %2606 = vmatprep.subr.bf16.mxu0 0
        %2607 = vmatpush1.bf16.msra.mxu0 0
        %2608 = vmatprep.subr.bf16.mxu0 0
        %2609 = vmatpush1.bf16.msra.mxu0 0
        %2610 = vmatprep.subr.bf16.mxu0 0
        %2611 = vmatpush1.bf16.msra.mxu0 0
        %2612 = vmatprep.subr.bf16.mxu0 0
        %2613 = vmatpush1.bf16.msra.mxu0 0
        %2614 = vmatprep.subr.bf16.mxu0 0
        %2615 = vmatpush1.bf16.msra.mxu0 0
        %2616 = vmatprep.subr.bf16.mxu0 0
        %2617 = vmatpush1.bf16.msra.mxu0 0
        %2618 = vmatprep.subr.bf16.mxu0 0
        %2619 = vmatpush1.bf16.msra.mxu0 0
        %2620 = vmatprep.subr.bf16.mxu0 0
        %2621 = vmatpush1.bf16.msra.mxu0 0
        %2622 = vmatprep.subr.bf16.mxu0 0
        %2623 = vmatpush1.bf16.msra.mxu0 0
        %2624 = vmatprep.subr.bf16.mxu0 0
        %2625 = vmatpush1.bf16.msra.mxu0 0
        %2626 = vmatprep.subr.bf16.mxu0 0
        %2627 = vmatpush1.bf16.msra.mxu0 0
        %2628 = vmatprep.subr.bf16.mxu0 0
        %2629 = vmatpush1.bf16.msra.mxu0 0
        %2630 = vmatprep.mubr.bf16.mxu0 0
        %2631 = vmatmul.mubr.bf16.gmra.mrb[0].mxu0 %v2596
        %v2632 = vpop.f32.mrb[0].mxu0
        %v2633 = vadd.f32 0.0, %v2632
        %v2634 = vpop.f32.mrb[0].mxu0
        %v2635 = vpop.f32.mrb[0].mxu0
        %v2636 = vadd.f32 0.0, %v2635
        %v2637 = vpop.f32.mrb[0].mxu0
        %2638 = vdwg.mxu0
        %v2641 = vunpack.c.l.b16 %v2583
        %v2642 = vunpack.c.l.b16 %v2584
        %v2643 = vpack.c.b16 %v2642, %v2641
        %v2646 = vsel %vm1357, %v2585, 0
        %2648 = vmatprep.subr.bf16.mxu0 0
        %2649 = vmatpush1.bf16.msra.mxu0 %v2643
        %2650 = vmatprep.subr.bf16.mxu0 0
        %2651 = vmatpush1.bf16.msra.mxu0 0
        %2652 = vmatprep.subr.bf16.mxu0 0
        %2653 = vmatpush1.bf16.msra.mxu0 0
        %2654 = vmatprep.subr.bf16.mxu0 0
        %2655 = vmatpush1.bf16.msra.mxu0 0
        %2656 = vmatprep.subr.bf16.mxu0 0
        %2657 = vmatpush1.bf16.msra.mxu0 0
        %2658 = vmatprep.subr.bf16.mxu0 0
        %2659 = vmatpush1.bf16.msra.mxu0 0
        %2660 = vmatprep.subr.bf16.mxu0 0
        %2661 = vmatpush1.bf16.msra.mxu0 0
        %2662 = vmatprep.subr.bf16.mxu0 0
        %2663 = vmatpush1.bf16.msra.mxu0 0
        %2664 = vmatprep.subr.bf16.mxu0 0
        %2665 = vmatpush1.bf16.msra.mxu0 0
        %2666 = vmatprep.subr.bf16.mxu0 0
        %2667 = vmatpush1.bf16.msra.mxu0 0
        %2668 = vmatprep.subr.bf16.mxu0 0
        %2669 = vmatpush1.bf16.msra.mxu0 0
        %2670 = vmatprep.subr.bf16.mxu0 0
        %2671 = vmatpush1.bf16.msra.mxu0 0
        %2672 = vmatprep.subr.bf16.mxu0 0
        %2673 = vmatpush1.bf16.msra.mxu0 0
        %2674 = vmatprep.subr.bf16.mxu0 0
        %2675 = vmatpush1.bf16.msra.mxu0 0
        %2676 = vmatprep.subr.bf16.mxu0 0
        %2677 = vmatpush1.bf16.msra.mxu0 0
        %2678 = vmatprep.subr.bf16.mxu0 0
        %2679 = vmatpush1.bf16.msra.mxu0 0
        %2680 = vmatprep.mubr.bf16.mxu0 0
        %2681 = vmatmul.mubr.bf16.gmra.mrb[0].mxu0 %v2646
        %v2682 = vpop.f32.mrb[0].mxu0
        %v2683 = vadd.f32 %v2633, %v2682
        %v2684 = vpop.f32.mrb[0].mxu0
        %v2685 = vpop.f32.mrb[0].mxu0
        %v2686 = vadd.f32 %v2636, %v2685
        %v2687 = vpop.f32.mrb[0].mxu0
        %2688 = vdwg.mxu0
        %v2689 = vld [vmem:[%s29 + $0x10] sm:$0xf]
        %v2690 = vld [vmem:[%s29 + $0x14] sm:$0xf]
        %v2691 = vpack.c.bf16 %v2457, %v2454
        %v2694 = vunpack.c.l.b16 %v2689
        %v2695 = vunpack.c.l.b16 %v2690
        %v2696 = vpack.c.b16 %v2695, %v2694
        %v2699 = vsel %vm1357, %v2691, 0
        %2701 = vmatprep.subr.bf16.mxu0 0
        %2702 = vmatpush1.bf16.msra.mxu0 %v2696
        %2703 = vmatprep.subr.bf16.mxu0 0
        %2704 = vmatpush1.bf16.msra.mxu0 0
        %2705 = vmatprep.subr.bf16.mxu0 0
        %2706 = vmatpush1.bf16.msra.mxu0 0
        %2707 = vmatprep.subr.bf16.mxu0 0
        %2708 = vmatpush1.bf16.msra.mxu0 0
        %2709 = vmatprep.subr.bf16.mxu0 0
        %2710 = vmatpush1.bf16.msra.mxu0 0
        %2711 = vmatprep.subr.bf16.mxu0 0
        %2712 = vmatpush1.bf16.msra.mxu0 0
        %2713 = vmatprep.subr.bf16.mxu0 0
        %2714 = vmatpush1.bf16.msra.mxu0 0
        %2715 = vmatprep.subr.bf16.mxu0 0
        %2716 = vmatpush1.bf16.msra.mxu0 0
        %2717 = vmatprep.subr.bf16.mxu0 0
        %2718 = vmatpush1.bf16.msra.mxu0 0
        %2719 = vmatprep.subr.bf16.mxu0 0
        %2720 = vmatpush1.bf16.msra.mxu0 0
        %2721 = vmatprep.subr.bf16.mxu0 0
        %2722 = vmatpush1.bf16.msra.mxu0 0
        %2723 = vmatprep.subr.bf16.mxu0 0
        %2724 = vmatpush1.bf16.msra.mxu0 0
        %2725 = vmatprep.subr.bf16.mxu0 0
        %2726 = vmatpush1.bf16.msra.mxu0 0
        %2727 = vmatprep.subr.bf16.mxu0 0
        %2728 = vmatpush1.bf16.msra.mxu0 0
        %2729 = vmatprep.subr.bf16.mxu0 0
        %2730 = vmatpush1.bf16.msra.mxu0 0
        %2731 = vmatprep.subr.bf16.mxu0 0
        %2732 = vmatpush1.bf16.msra.mxu0 0
        %2733 = vmatprep.mubr.bf16.mxu0 0
        %2734 = vmatmul.mubr.bf16.gmra.mrb[0].mxu0 %v2699
        %v2735 = vpop.f32.mrb[0].mxu0
        %v2736 = vadd.f32 0.0, %v2735
        %v2737 = vpop.f32.mrb[0].mxu0
        %v2738 = vpop.f32.mrb[0].mxu0
        %v2739 = vadd.f32 0.0, %v2738
        %v2740 = vpop.f32.mrb[0].mxu0
        %2741 = vdwg.mxu0
        %v2742 = vadd.f32 %v2683, %v2736
        %v2743 = vadd.f32 %v2686, %v2739
        %v2744 = vld [vmem:[%s29 + $0x18] sm:$0xf]
        %v2745 = vld [vmem:[%s29 + $0x1c] sm:$0xf]
        %v2746 = vpack.c.bf16 %v2580, %v2577
        %v2749 = vunpack.c.l.b16 %v2744
        %v2750 = vunpack.c.l.b16 %v2745
        %v2751 = vpack.c.b16 %v2750, %v2749
        %v2754 = vsel %vm1357, %v2746, 0
        %2756 = vmatprep.subr.bf16.mxu0 0
        %2757 = vmatpush1.bf16.msra.mxu0 %v2751
        %2758 = vmatprep.subr.bf16.mxu0 0
        %2759 = vmatpush1.bf16.msra.mxu0 0
        %2760 = vmatprep.subr.bf16.mxu0 0
        %2761 = vmatpush1.bf16.msra.mxu0 0
        %2762 = vmatprep.subr.bf16.mxu0 0
        %2763 = vmatpush1.bf16.msra.mxu0 0
        %2764 = vmatprep.subr.bf16.mxu0 0
        %2765 = vmatpush1.bf16.msra.mxu0 0
        %2766 = vmatprep.subr.bf16.mxu0 0
        %2767 = vmatpush1.bf16.msra.mxu0 0
        %2768 = vmatprep.subr.bf16.mxu0 0
        %2769 = vmatpush1.bf16.msra.mxu0 0
        %2770 = vmatprep.subr.bf16.mxu0 0
        %2771 = vmatpush1.bf16.msra.mxu0 0
        %2772 = vmatprep.subr.bf16.mxu0 0
        %2773 = vmatpush1.bf16.msra.mxu0 0
        %2774 = vmatprep.subr.bf16.mxu0 0
        %2775 = vmatpush1.bf16.msra.mxu0 0
        %2776 = vmatprep.subr.bf16.mxu0 0
        %2777 = vmatpush1.bf16.msra.mxu0 0
        %2778 = vmatprep.subr.bf16.mxu0 0
        %2779 = vmatpush1.bf16.msra.mxu0 0
        %2780 = vmatprep.subr.bf16.mxu0 0
        %2781 = vmatpush1.bf16.msra.mxu0 0
        %2782 = vmatprep.subr.bf16.mxu0 0
        %2783 = vmatpush1.bf16.msra.mxu0 0
        %2784 = vmatprep.subr.bf16.mxu0 0
        %2785 = vmatpush1.bf16.msra.mxu0 0
        %2786 = vmatprep.subr.bf16.mxu0 0
        %2787 = vmatpush1.bf16.msra.mxu0 0
        %2788 = vmatprep.mubr.bf16.mxu0 0
        %2789 = vmatmul.mubr.bf16.gmra.mrb[0].mxu0 %v2754
        %v2790 = vpop.f32.mrb[0].mxu0
        %v2791 = vadd.f32 0.0, %v2790
        %v2792 = vpop.f32.mrb[0].mxu0
        %v2793 = vpop.f32.mrb[0].mxu0
        %v2794 = vadd.f32 0.0, %v2793
        %v2795 = vpop.f32.mrb[0].mxu0
        %2796 = vdwg.mxu0
        %v2797 = vadd.f32 %v2742, %v2791
        %v2798 = vadd.f32 %v2743, %v2794
        %v2799 = vld [vmem:[%s31] sm:$0x1]
        %v2801 = vlaneseq
        %v2802 = vshrl.u32 %v2801, 7
        %v2803 = vsub.s32 0, %v2802
        %v2804 = vrot.slane %v2799, %v2803
        %v2806 = vadd.f32 %v2797, %v2804
        %v2807 = vadd.f32 %v2798, %v2804
        %v2808 = vld [vmem:[%s33] sm:$0xf]
        %v2809 = vld [vmem:[%s33 + $0x4] sm:$0xf]
        %v2810 = vld [vmem:[%s33 + $0x8] sm:$0xf]
        %v2811 = vld [vmem:[%s33 + $0xc] sm:$0xf]
        %v2814 = vunpack.c.l.b16 %v2810
        %v2815 = vunpack.c.l.b16 %v2811
        %v2816 = vpack.c.b16 %v2815, %v2814
        %2818 = vmatprep.subr.bf16.mxu0 0
        %2819 = vmatpush1.bf16.msra.mxu0 %v2816
        %2820 = vmatprep.subr.bf16.mxu0 0
        %2821 = vmatpush1.bf16.msra.mxu0 0
        %2822 = vmatprep.subr.bf16.mxu0 0
        %2823 = vmatpush1.bf16.msra.mxu0 0
        %2824 = vmatprep.subr.bf16.mxu0 0
        %2825 = vmatpush1.bf16.msra.mxu0 0
        %2826 = vmatprep.subr.bf16.mxu0 0
        %2827 = vmatpush1.bf16.msra.mxu0 0
        %2828 = vmatprep.subr.bf16.mxu0 0
        %2829 = vmatpush1.bf16.msra.mxu0 0
        %2830 = vmatprep.subr.bf16.mxu0 0
        %2831 = vmatpush1.bf16.msra.mxu0 0
        %2832 = vmatprep.subr.bf16.mxu0 0
        %2833 = vmatpush1.bf16.msra.mxu0 0
        %2834 = vmatprep.subr.bf16.mxu0 0
        %2835 = vmatpush1.bf16.msra.mxu0 0
        %2836 = vmatprep.subr.bf16.mxu0 0
        %2837 = vmatpush1.bf16.msra.mxu0 0
        %2838 = vmatprep.subr.bf16.mxu0 0
        %2839 = vmatpush1.bf16.msra.mxu0 0
        %2840 = vmatprep.subr.bf16.mxu0 0
        %2841 = vmatpush1.bf16.msra.mxu0 0
        %2842 = vmatprep.subr.bf16.mxu0 0
        %2843 = vmatpush1.bf16.msra.mxu0 0
        %2844 = vmatprep.subr.bf16.mxu0 0
        %2845 = vmatpush1.bf16.msra.mxu0 0
        %2846 = vmatprep.subr.bf16.mxu0 0
        %2847 = vmatpush1.bf16.msra.mxu0 0
        %2848 = vmatprep.subr.bf16.mxu0 0
        %2849 = vmatpush1.bf16.msra.mxu0 0
        %2850 = vmatprep.mubr.bf16.mxu0 0
        %2851 = vmatmul.mubr.bf16.gmra.mrb[0].mxu0 %v1884
        %v2852 = vpop.f32.mrb[0].mxu0
        %v2853 = vadd.f32 0.0, %v2852
        %v2854 = vpop.f32.mrb[0].mxu0
        %v2855 = vpop.f32.mrb[0].mxu0
        %v2856 = vpop.f32.mrb[0].mxu0
        %2857 = vdwg.mxu0
        %v2860 = vunpack.c.l.b16 %v2808
        %v2861 = vunpack.c.l.b16 %v2809
        %v2862 = vpack.c.b16 %v2861, %v2860
        %2864 = vmatprep.subr.bf16.mxu0 0
        %2865 = vmatpush1.bf16.msra.mxu0 %v2862
        %2866 = vmatprep.subr.bf16.mxu0 0
        %2867 = vmatpush1.bf16.msra.mxu0 0
        %2868 = vmatprep.subr.bf16.mxu0 0
        %2869 = vmatpush1.bf16.msra.mxu0 0
        %2870 = vmatprep.subr.bf16.mxu0 0
        %2871 = vmatpush1.bf16.msra.mxu0 0
        %2872 = vmatprep.subr.bf16.mxu0 0
        %2873 = vmatpush1.bf16.msra.mxu0 0
        %2874 = vmatprep.subr.bf16.mxu0 0
        %2875 = vmatpush1.bf16.msra.mxu0 0
        %2876 = vmatprep.subr.bf16.mxu0 0
        %2877 = vmatpush1.bf16.msra.mxu0 0
        %2878 = vmatprep.subr.bf16.mxu0 0
        %2879 = vmatpush1.bf16.msra.mxu0 0
        %2880 = vmatprep.subr.bf16.mxu0 0
        %2881 = vmatpush1.bf16.msra.mxu0 0
        %2882 = vmatprep.subr.bf16.mxu0 0
        %2883 = vmatpush1.bf16.msra.mxu0 0
        %2884 = vmatprep.subr.bf16.mxu0 0
        %2885 = vmatpush1.bf16.msra.mxu0 0
        %2886 = vmatprep.subr.bf16.mxu0 0
        %2887 = vmatpush1.bf16.msra.mxu0 0
        %2888 = vmatprep.subr.bf16.mxu0 0
        %2889 = vmatpush1.bf16.msra.mxu0 0
        %2890 = vmatprep.subr.bf16.mxu0 0
        %2891 = vmatpush1.bf16.msra.mxu0 0
        %2892 = vmatprep.subr.bf16.mxu0 0
        %2893 = vmatpush1.bf16.msra.mxu0 0
        %2894 = vmatprep.subr.bf16.mxu0 0
        %2895 = vmatpush1.bf16.msra.mxu0 0
        %2896 = vmatprep.mubr.bf16.mxu0 0
        %2897 = vmatmul.mubr.bf16.gmra.mrb[0].mxu0 %v1933
        %v2898 = vpop.f32.mrb[0].mxu0
        %v2899 = vadd.f32 %v2853, %v2898
        %v2900 = vpop.f32.mrb[0].mxu0
        %v2901 = vpop.f32.mrb[0].mxu0
        %v2902 = vpop.f32.mrb[0].mxu0
        %2903 = vdwg.mxu0
        %v2904 = vld [vmem:[%s33 + $0x10] sm:$0xf]
        %v2905 = vld [vmem:[%s33 + $0x14] sm:$0xf]
        %v2908 = vunpack.c.l.b16 %v2904
        %v2909 = vunpack.c.l.b16 %v2905
        %v2910 = vpack.c.b16 %v2909, %v2908
        %2912 = vmatprep.subr.bf16.mxu0 0
        %2913 = vmatpush1.bf16.msra.mxu0 %v2910
        %2914 = vmatprep.subr.bf16.mxu0 0
        %2915 = vmatpush1.bf16.msra.mxu0 0
        %2916 = vmatprep.subr.bf16.mxu0 0
        %2917 = vmatpush1.bf16.msra.mxu0 0
        %2918 = vmatprep.subr.bf16.mxu0 0
        %2919 = vmatpush1.bf16.msra.mxu0 0
        %2920 = vmatprep.subr.bf16.mxu0 0
        %2921 = vmatpush1.bf16.msra.mxu0 0
        %2922 = vmatprep.subr.bf16.mxu0 0
        %2923 = vmatpush1.bf16.msra.mxu0 0
        %2924 = vmatprep.subr.bf16.mxu0 0
        %2925 = vmatpush1.bf16.msra.mxu0 0
        %2926 = vmatprep.subr.bf16.mxu0 0
        %2927 = vmatpush1.bf16.msra.mxu0 0
        %2928 = vmatprep.subr.bf16.mxu0 0
        %2929 = vmatpush1.bf16.msra.mxu0 0
        %2930 = vmatprep.subr.bf16.mxu0 0
        %2931 = vmatpush1.bf16.msra.mxu0 0
        %2932 = vmatprep.subr.bf16.mxu0 0
        %2933 = vmatpush1.bf16.msra.mxu0 0
        %2934 = vmatprep.subr.bf16.mxu0 0
        %2935 = vmatpush1.bf16.msra.mxu0 0
        %2936 = vmatprep.subr.bf16.mxu0 0
        %2937 = vmatpush1.bf16.msra.mxu0 0
        %2938 = vmatprep.subr.bf16.mxu0 0
        %2939 = vmatpush1.bf16.msra.mxu0 0
        %2940 = vmatprep.subr.bf16.mxu0 0
        %2941 = vmatpush1.bf16.msra.mxu0 0
        %2942 = vmatprep.subr.bf16.mxu0 0
        %2943 = vmatpush1.bf16.msra.mxu0 0
        %2944 = vmatprep.mubr.bf16.mxu0 0
        %2945 = vmatmul.mubr.bf16.gmra.mrb[0].mxu0 %v1985
        %v2946 = vpop.f32.mrb[0].mxu0
        %v2947 = vadd.f32 0.0, %v2946
        %v2948 = vpop.f32.mrb[0].mxu0
        %v2949 = vpop.f32.mrb[0].mxu0
        %v2950 = vpop.f32.mrb[0].mxu0
        %2951 = vdwg.mxu0
        %v2952 = vadd.f32 %v2899, %v2947
        %v2953 = vld [vmem:[%s33 + $0x18] sm:$0xf]
        %v2954 = vld [vmem:[%s33 + $0x1c] sm:$0xf]
        %v2957 = vunpack.c.l.b16 %v2953
        %v2958 = vunpack.c.l.b16 %v2954
        %v2959 = vpack.c.b16 %v2958, %v2957
        %2961 = vmatprep.subr.bf16.mxu0 0
        %2962 = vmatpush1.bf16.msra.mxu0 %v2959
        %2963 = vmatprep.subr.bf16.mxu0 0
        %2964 = vmatpush1.bf16.msra.mxu0 0
        %2965 = vmatprep.subr.bf16.mxu0 0
        %2966 = vmatpush1.bf16.msra.mxu0 0
        %2967 = vmatprep.subr.bf16.mxu0 0
        %2968 = vmatpush1.bf16.msra.mxu0 0
        %2969 = vmatprep.subr.bf16.mxu0 0
        %2970 = vmatpush1.bf16.msra.mxu0 0
        %2971 = vmatprep.subr.bf16.mxu0 0
        %2972 = vmatpush1.bf16.msra.mxu0 0
        %2973 = vmatprep.subr.bf16.mxu0 0
        %2974 = vmatpush1.bf16.msra.mxu0 0
        %2975 = vmatprep.subr.bf16.mxu0 0
        %2976 = vmatpush1.bf16.msra.mxu0 0
        %2977 = vmatprep.subr.bf16.mxu0 0
        %2978 = vmatpush1.bf16.msra.mxu0 0
        %2979 = vmatprep.subr.bf16.mxu0 0
        %2980 = vmatpush1.bf16.msra.mxu0 0
        %2981 = vmatprep.subr.bf16.mxu0 0
        %2982 = vmatpush1.bf16.msra.mxu0 0
        %2983 = vmatprep.subr.bf16.mxu0 0
        %2984 = vmatpush1.bf16.msra.mxu0 0
        %2985 = vmatprep.subr.bf16.mxu0 0
        %2986 = vmatpush1.bf16.msra.mxu0 0
        %2987 = vmatprep.subr.bf16.mxu0 0
        %2988 = vmatpush1.bf16.msra.mxu0 0
        %2989 = vmatprep.subr.bf16.mxu0 0
        %2990 = vmatpush1.bf16.msra.mxu0 0
        %2991 = vmatprep.subr.bf16.mxu0 0
        %2992 = vmatpush1.bf16.msra.mxu0 0
        %2993 = vmatprep.mubr.bf16.mxu0 0
        %2994 = vmatmul.mubr.bf16.gmra.mrb[0].mxu0 %v2038
        %v2995 = vpop.f32.mrb[0].mxu0
        %v2996 = vadd.f32 0.0, %v2995
        %v2997 = vpop.f32.mrb[0].mxu0
        %v2998 = vpop.f32.mrb[0].mxu0
        %v2999 = vpop.f32.mrb[0].mxu0
        %3000 = vdwg.mxu0
        %v3001 = vadd.f32 %v2952, %v2996
        %v3002 = vld [vmem:[#allocation2] sm:$0x1]
        %v3004 = vlaneseq
        %v3005 = vshrl.u32 %v3004, 7
        %v3006 = vsub.s32 0, %v3005
        %v3007 = vrot.slane %v3002, %v3006
        %v3009 = vadd.f32 %v3001, %v3007
        %v3010 = vadd.f32 %v1045, %v2806
        %v3011 = vadd.f32 %v1046, %v2807
        %v3012 = vld [vmem:[#allocation5] sm:$0x1]
        %v3013 = vld [vmem:[#allocation7] sm:$0x1]
        %v3014 = vsel %vm1072, %v3010, 0.0
        %3015 = vadd.xlane.f32.xlu0 %v3014
        %v3016 = vpop.xlane.xlu0 %3015
        %v3017 = vsel %vm1072, %v3011, 0.0
        %3018 = vadd.xlane.f32.xlu0 %v3017
        %v3019 = vpop.xlane.xlu0 %3018
        %v3020 = vrcp.pop 32.0
        %v3021 = vmul.f32 %v3016, %v3020
        %v3022 = vmul.f32 %v3019, %v3020
        %v3023 = vsub.f32 %v3010, %v3021
        %v3024 = vsub.f32 %v3011, %v3022
        %v3025 = vmul.f32 %v3023, %v3023
        %v3026 = vmul.f32 %v3024, %v3024
        %v3027 = vsel %vm1072, %v3025, 0.0
        %3028 = vadd.xlane.f32.xlu0 %v3027
        %v3029 = vpop.xlane.xlu0 %3028
        %v3030 = vsel %vm1072, %v3026, 0.0
        %3031 = vadd.xlane.f32.xlu0 %v3030
        %v3032 = vpop.xlane.xlu0 %3031
        %v3033 = vmul.f32 %v3029, %v3020
        %v3034 = vmul.f32 %v3032, %v3020
        %v3035 = vadd.f32 %v3033, 1e-05
        %v3036 = vadd.f32 %v3034, 1e-05
        %v3037 = vrsqrt.pop %v3035
        %v3038 = vrsqrt.pop %v3036
        %v3039 = vmul.f32 %v3023, %v3037
        %v3040 = vmul.f32 %v3024, %v3038
        %v3042 = vlaneseq
        %v3043 = vshrl.u32 %v3042, 7
        %v3044 = vsub.s32 0, %v3043
        %v3045 = vrot.slane %v3012, %v3044
        %v3047 = vmul.f32 %v3039, %v3045
        %v3048 = vmul.f32 %v3040, %v3045
        %v3050 = vlaneseq
        %v3051 = vshrl.u32 %v3050, 7
        %v3052 = vsub.s32 0, %v3051
        %v3053 = vrot.slane %v3013, %v3052
        %v3055 = vadd.f32 %v3047, %v3053
        %v3056 = vadd.f32 %v3048, %v3053
        %v3057 = vadd.f32 %v1047, %v3009
        %v3058 = vld [vmem:[#allocation8] sm:$0x1]
        %v3059 = vld [vmem:[#allocation10] sm:$0x1]
        %v3060 = vsel %vm1072, %v3057, 0.0
        %3061 = vadd.xlane.f32.xlu0 %v3060
        %v3062 = vpop.xlane.xlu0 %3061
        %v3063 = vmul.f32 %v3062, %v3020
        %v3064 = vsub.f32 %v3057, %v3063
        %v3065 = vmul.f32 %v3064, %v3064
        %v3066 = vsel %vm1072, %v3065, 0.0
        %3067 = vadd.xlane.f32.xlu0 %v3066
        %v3068 = vpop.xlane.xlu0 %3067
        %v3069 = vmul.f32 %v3068, %v3020
        %v3070 = vadd.f32 %v3069, 1e-05
        %v3071 = vrsqrt.pop %v3070
        %v3072 = vmul.f32 %v3064, %v3071
        %v3074 = vlaneseq
        %v3075 = vshrl.u32 %v3074, 7
        %v3076 = vsub.s32 0, %v3075
        %v3077 = vrot.slane %v3058, %v3076
        %v3079 = vmul.f32 %v3072, %v3077
        %v3081 = vlaneseq
        %v3082 = vshrl.u32 %v3081, 7
        %v3083 = vsub.s32 0, %v3082
        %v3084 = vrot.slane %v3059, %v3083
        %v3086 = vadd.f32 %v3079, %v3084
        %v3087 = vld [vmem:[%s45] sm:$0xf]
        %v3088 = vld [vmem:[%s45 + $0x4] sm:$0xf]
        %v3089 = vld [vmem:[%s45 + $0x8] sm:$0xf]
        %v3090 = vld [vmem:[%s45 + $0xc] sm:$0xf]
        %v3091 = vpack.c.bf16 %v3056, %v3055
        %v3092 = vld [vmem:[#allocation11] sm:$0x1]
        %v3094 = vlaneseq
        %v3095 = vshrl.u32 %v3094, 7
        %v3096 = vsub.s32 0, %v3095
        %v3097 = vrot.slane %v3092, %v3096
        %v3103 = vunpack.c.l.b16 %v3087
        %v3104 = vunpack.c.l.b16 %v3088
        %v3105 = vunpack.c.l.b16 %v3089
        %v3106 = vunpack.c.l.b16 %v3090
        %v3107 = vpack.c.b16 %v3104, %v3103
        %v3108 = vpack.c.b16 %v3106, %v3105
        %v3112 = vsel %vm1072, %v3091, 0
        %3114 = vmatprep.subr.bf16.mxu0 0
        %3115 = vmatpush1.bf16.msra.mxu0 %v3107
        %3116 = vmatprep.subr.bf16.mxu0 0
        %3117 = vmatpush1.bf16.msra.mxu0 %v3108
        %3118 = vmatprep.subr.bf16.mxu0 0
        %3119 = vmatpush1.bf16.msra.mxu0 0
        %3120 = vmatprep.subr.bf16.mxu0 0
        %3121 = vmatpush1.bf16.msra.mxu0 0
        %3122 = vmatprep.subr.bf16.mxu0 0
        %3123 = vmatpush1.bf16.msra.mxu0 0
        %3124 = vmatprep.subr.bf16.mxu0 0
        %3125 = vmatpush1.bf16.msra.mxu0 0
        %3126 = vmatprep.subr.bf16.mxu0 0
        %3127 = vmatpush1.bf16.msra.mxu0 0
        %3128 = vmatprep.subr.bf16.mxu0 0
        %3129 = vmatpush1.bf16.msra.mxu0 0
        %3130 = vmatprep.subr.bf16.mxu0 0
        %3131 = vmatpush1.bf16.msra.mxu0 0
        %3132 = vmatprep.subr.bf16.mxu0 0
        %3133 = vmatpush1.bf16.msra.mxu0 0
        %3134 = vmatprep.subr.bf16.mxu0 0
        %3135 = vmatpush1.bf16.msra.mxu0 0
        %3136 = vmatprep.subr.bf16.mxu0 0
        %3137 = vmatpush1.bf16.msra.mxu0 0
        %3138 = vmatprep.subr.bf16.mxu0 0
        %3139 = vmatpush1.bf16.msra.mxu0 0
        %3140 = vmatprep.subr.bf16.mxu0 0
        %3141 = vmatpush1.bf16.msra.mxu0 0
        %3142 = vmatprep.subr.bf16.mxu0 0
        %3143 = vmatpush1.bf16.msra.mxu0 0
        %3144 = vmatprep.subr.bf16.mxu0 0
        %3145 = vmatpush1.bf16.msra.mxu0 0
        %3146 = vmatprep.mubr.bf16.mxu0 0
        %3147 = vmatmul.mubr.bf16.gmra.mrb[0].mxu0 %v3112
        %v3148 = vpop.f32.mrb[0].mxu0
        %v3149 = vadd.f32 %v3097, %v3148
        %v3150 = vpop.f32.mrb[0].mxu0
        %v3151 = vpop.f32.mrb[0].mxu0
        %v3152 = vadd.f32 %v3097, %v3151
        %v3153 = vpop.f32.mrb[0].mxu0
        %3154 = vdwg.mxu0
        %v3155 = vmul.f32 %v3149, %v3149
        %v3156 = vmul.f32 %v3152, %v3152
        %v3157 = vmul.f32 %v3149, %v3155
        %v3158 = vmul.f32 %v3152, %v3156
        %v3159 = vmul.f32 %v3157, 0.044715
        %v3160 = vmul.f32 %v3158, 0.044715
        %v3161 = vadd.f32 %v3149, %v3159
        %v3162 = vadd.f32 %v3152, %v3160
        %v3163 = vmul.f32 %v3161, 0.7978846
        %v3164 = vmul.f32 %v3162, 0.7978846
        %v3165 = vtanh.pop %v3163
        %v3166 = vtanh.pop %v3164
        %v3167 = vadd.f32 %v3165, 1.0
        %v3168 = vadd.f32 %v3166, 1.0
        %v3169 = vmul.f32 %v3167, 0.5
        %v3170 = vmul.f32 %v3168, 0.5
        %v3171 = vmul.f32 %v3149, %v3169
        %v3172 = vmul.f32 %v3152, %v3170
        %v3173 = vld [vmem:[%s49] sm:$0xf]
        %v3174 = vld [vmem:[%s49 + $0x4] sm:$0xf]
        %v3175 = vld [vmem:[%s49 + $0x8] sm:$0xf]
        %v3176 = vld [vmem:[%s49 + $0xc] sm:$0xf]
        %v3177 = vld [vmem:[%s49 + $0x10] sm:$0xf]
        %v3178 = vld [vmem:[%s49 + $0x14] sm:$0xf]
        %v3179 = vld [vmem:[%s49 + $0x18] sm:$0xf]
        %v3180 = vld [vmem:[%s49 + $0x1c] sm:$0xf]
        %v3181 = vpack.c.bf16 %v3172, %v3171
        %v3182 = vld [vmem:[#allocation13] sm:$0x1]
        %v3184 = vlaneseq
        %v3185 = vshrl.u32 %v3184, 7
        %v3186 = vsub.s32 0, %v3185
        %v3187 = vrot.slane %v3182, %v3186
        %v3197 = vunpack.c.l.b16 %v3173
        %v3198 = vunpack.c.l.b16 %v3174
        %v3199 = vunpack.c.l.b16 %v3175
        %v3200 = vunpack.c.l.b16 %v3176
        %v3201 = vunpack.c.l.b16 %v3177
        %v3202 = vunpack.c.l.b16 %v3178
        %v3203 = vunpack.c.l.b16 %v3179
        %v3204 = vunpack.c.l.b16 %v3180
        %v3205 = vpack.c.b16 %v3198, %v3197
        %v3206 = vpack.c.b16 %v3200, %v3199
        %v3207 = vpack.c.b16 %v3202, %v3201
        %v3208 = vpack.c.b16 %v3204, %v3203
        %v3214 = vsel %vm1227, %v3181, 0
        %3216 = vmatprep.subr.bf16.mxu0 0
        %3217 = vmatpush1.bf16.msra.mxu0 %v3205
        %3218 = vmatprep.subr.bf16.mxu0 0
        %3219 = vmatpush1.bf16.msra.mxu0 %v3206
        %3220 = vmatprep.subr.bf16.mxu0 0
        %3221 = vmatpush1.bf16.msra.mxu0 %v3207
        %3222 = vmatprep.subr.bf16.mxu0 0
        %3223 = vmatpush1.bf16.msra.mxu0 %v3208
        %3224 = vmatprep.subr.bf16.mxu0 0
        %3225 = vmatpush1.bf16.msra.mxu0 0
        %3226 = vmatprep.subr.bf16.mxu0 0
        %3227 = vmatpush1.bf16.msra.mxu0 0
        %3228 = vmatprep.subr.bf16.mxu0 0
        %3229 = vmatpush1.bf16.msra.mxu0 0
        %3230 = vmatprep.subr.bf16.mxu0 0
        %3231 = vmatpush1.bf16.msra.mxu0 0
        %3232 = vmatprep.subr.bf16.mxu0 0
        %3233 = vmatpush1.bf16.msra.mxu0 0
        %3234 = vmatprep.subr.bf16.mxu0 0
        %3235 = vmatpush1.bf16.msra.mxu0 0
        %3236 = vmatprep.subr.bf16.mxu0 0
        %3237 = vmatpush1.bf16.msra.mxu0 0
        %3238 = vmatprep.subr.bf16.mxu0 0
        %3239 = vmatpush1.bf16.msra.mxu0 0
        %3240 = vmatprep.subr.bf16.mxu0 0
        %3241 = vmatpush1.bf16.msra.mxu0 0
        %3242 = vmatprep.subr.bf16.mxu0 0
        %3243 = vmatpush1.bf16.msra.mxu0 0
        %3244 = vmatprep.subr.bf16.mxu0 0
        %3245 = vmatpush1.bf16.msra.mxu0 0
        %3246 = vmatprep.subr.bf16.mxu0 0
        %3247 = vmatpush1.bf16.msra.mxu0 0
        %3248 = vmatprep.mubr.bf16.mxu0 0
        %3249 = vmatmul.mubr.bf16.gmra.mrb[0].mxu0 %v3214
        %v3250 = vpop.f32.mrb[0].mxu0
        %v3251 = vadd.f32 %v3187, %v3250
        %v3252 = vpop.f32.mrb[0].mxu0
        %v3253 = vpop.f32.mrb[0].mxu0
        %v3254 = vadd.f32 %v3187, %v3253
        %v3255 = vpop.f32.mrb[0].mxu0
        %3256 = vdwg.mxu0
        %v3257 = vadd.f32 %v3055, %v3251
        %v3258 = vadd.f32 %v3056, %v3254
        %v3259 = vld [vmem:[#allocation14] sm:$0x1]
        %v3260 = vld [vmem:[#allocation16] sm:$0x1]
        %v3261 = vsel %vm1072, %v3257, 0.0
        %3262 = vadd.xlane.f32.xlu0 %v3261
        %v3263 = vpop.xlane.xlu0 %3262
        %v3264 = vsel %vm1072, %v3258, 0.0
        %3265 = vadd.xlane.f32.xlu0 %v3264
        %v3266 = vpop.xlane.xlu0 %3265
        %v3267 = vmul.f32 %v3263, %v3020
        %v3268 = vmul.f32 %v3266, %v3020
        %v3269 = vsub.f32 %v3257, %v3267
        %v3270 = vsub.f32 %v3258, %v3268
        %v3271 = vmul.f32 %v3269, %v3269
        %v3272 = vmul.f32 %v3270, %v3270
        %v3273 = vsel %vm1072, %v3271, 0.0
        %3274 = vadd.xlane.f32.xlu0 %v3273
        %v3275 = vpop.xlane.xlu0 %3274
        %v3276 = vsel %vm1072, %v3272, 0.0
        %3277 = vadd.xlane.f32.xlu0 %v3276
        %v3278 = vpop.xlane.xlu0 %3277
        %v3279 = vmul.f32 %v3275, %v3020
        %v3280 = vmul.f32 %v3278, %v3020
        %v3281 = vadd.f32 %v3279, 1e-05
        %v3282 = vadd.f32 %v3280, 1e-05
        %v3283 = vrsqrt.pop %v3281
        %v3284 = vrsqrt.pop %v3282
        %v3285 = vmul.f32 %v3269, %v3283
        %v3286 = vmul.f32 %v3270, %v3284
        %v3288 = vlaneseq
        %v3289 = vshrl.u32 %v3288, 7
        %v3290 = vsub.s32 0, %v3289
        %v3291 = vrot.slane %v3259, %v3290
        %v3293 = vmul.f32 %v3285, %v3291
        %v3294 = vmul.f32 %v3286, %v3291
        %v3296 = vlaneseq
        %v3297 = vshrl.u32 %v3296, 7
        %v3298 = vsub.s32 0, %v3297
        %v3299 = vrot.slane %v3260, %v3298
        %v3301 = vadd.f32 %v3293, %v3299
        %v3302 = vadd.f32 %v3294, %v3299
        %3303 = vst.msk [vmem:[%s1043] sm:$0xff] %vm1072, %v3301
        %3304 = vst.msk [vmem:[%s1043 + $0x8] sm:$0xff] %vm1072, %v3302
        %3305 = vst.msk [vmem:[%s1029] sm:$0xff] %vm1072, %v3086
        %p3306 = scmp.lt.s32.totalorder %s79, 1
        %s3307 = scalar_select %p3306, %s79, 1
        %s3308 = smul.addr %s3307, 2
        %s3309 = smul.addr %s3308, 8
        %s3310 = scalar_lea.vmem %s57, %s3309
        %s3311 = sand.u32 %s711, 1
        %s3312 = scalar_lea.sflag [#allocation4], %s3311
        %s3313 = sand.u32 %s711, 1
        %s3314 = smul.addr %s3313, 8
        %s3315 = scalar_lea.vmem [#allocation17], %s3314
        // Predicated region
        $region169: #{luna_transformer_forward.4} parent=131 // pred_check
          %p3316 = pneg %p695
        $region170: #{luna_transformer_forward.4} parent=131 // pred_check_branch
          %3318 = sbr.rel (%p3316) target = $region172
        $region171: #{luna_transformer_forward.4} parent=131 // pred_region
          _
        $region172: #{luna_transformer_forward.4} parent=131 // pred_fallthru
          _
        // Predicated region
        $region173: #{luna_transformer_forward.4} parent=131 // pred_check
          %p3319 = pneg %p721
        $region174: #{luna_transformer_forward.4} parent=131 // pred_check_branch
          %3321 = sbr.rel (%p3319) target = $region176
        $region175: #{luna_transformer_forward.4} parent=131 // pred_region
          %s3323 = ssub.s32 128, 128
          %3324 = vsyncadd %s3312, %s3323
          %s3325 = smul.addr %s79, 128
          %s3326 = scalar_lea.hbm %s59, %s3325
          %s3328 = sshll.u32 %s3315, 4
          %s3329 = int_to_ptr.vmem [resolvable:$true] %s3328
          %3331 = dma.vmem_to_hbm [thread:$0]  %s3329, 128, %s3326, %s3312
        $region176: #{luna_transformer_forward.4} parent=131 // pred_fallthru
          _
      $region132: #{luna_transformer_forward.4} parent=5 // pred_fallthru
        _
      %p3332 = scmp.le.s32.totalorder 2, %s74
      // Predicated region
      $region177: #{luna_transformer_forward.4} parent=5 // pred_check
        %p3333 = pneg %p3332
      $region178: #{luna_transformer_forward.4} parent=5 // pred_check_branch
        %3335 = sbr.rel (%p3333) target = $region180
      $region179: #{luna_transformer_forward.4} parent=5 // pred_region
        %s3336 = ssub.s32 %s74, 2
        // Predicated region
        $region181: #{luna_transformer_forward.4} parent=179 // pred_check
          %p3337 = pneg %p701
        $region182: #{luna_transformer_forward.4} parent=179 // pred_check_branch
          %3339 = sbr.rel (%p3337) target = $region184
        $region183: #{luna_transformer_forward.4} parent=179 // pred_region
          %p3340 = scmp.lt.s32.totalorder %s80, 1
          %s3341 = scalar_select %p3340, %s80, 1
          %s3342 = smul.addr %s3341, 2
          %s3343 = smul.addr %s3342, 8
          %s3344 = scalar_lea.vmem %s57, %s3343
        $region184: #{luna_transformer_forward.4} parent=179 // pred_fallthru
          _
        // Predicated region
        $region185: #{luna_transformer_forward.4} parent=179 // pred_check
          %p3345 = pneg %p727
        $region186: #{luna_transformer_forward.4} parent=179 // pred_check_branch
          %3347 = sbr.rel (%p3345) target = $region188
        $region187: #{luna_transformer_forward.4} parent=179 // pred_region
          %s3348 = sand.u32 %s712, 1
          %s3349 = scalar_lea.sflag [#allocation4], %s3348
          %s3350 = sand.u32 %s712, 1
          %s3351 = smul.addr %s3350, 8
          %s3352 = scalar_lea.vmem [#allocation17], %s3351
          %3353 = dma.done %s3349, 128
        $region188: #{luna_transformer_forward.4} parent=179 // pred_fallthru
          _
      $region180: #{luna_transformer_forward.4} parent=5 // pred_fallthru
        _
    $region6: #{luna_transformer_forward.4} parent=1 // loop_footer
      %s78 = sadd.s32 1, %s74
    $region7: #{luna_transformer_forward.4} parent=1 // loop_footer_branch
      %73 = sbr.rel target = $region3
    $region8: #{luna_transformer_forward.4} parent=1 // loop_exit
      _
    %3354 = vsyncpa [#allocation3], 1
    %s3355 = scalar_lea.sflag [#allocation3], 1
    %3356 = vsyncpa %s3355, 1
    %3357 = vsyncpa [#allocation6], 1
    %3358 = vsyncpa [#allocation9], 1
    %3359 = vsyncpa [#allocation12], 1
    %3360 = vsyncpa [#allocation15], 1
    %3361 = vsyncpa [#allocation4], 1
    %s3362 = scalar_lea.sflag [#allocation4], 1
    %3363 = vsyncpa %s3362, 1

</llo_original>
